<compile_context>
chip_gen: v6e
topology: v6e:2x2x1
jax: 0.10.0
libtpu: 0.0.40
codegen_flags: <defaults>
</compile_context>

<pallas_src>
import functools
import jax
import jax.numpy as jnp
from jax import lax
from jax.experimental import pallas as pl
from jax.experimental.pallas import tpu as pltpu


# ----------------------------------------------------------------------------
# helpers
# ----------------------------------------------------------------------------

def _cdiv(a, b):
    return -(-a // b)


def _round_up(x, m):
    return (x + m - 1) // m * m


def _pad2d(a, rows, cols):
    r, c = a.shape
    if r == rows and c == cols:
        return a
    return jnp.pad(a, ((0, rows - r), (0, cols - c)))


def _pick_tile(dim, t_max, align):
    """Tile for an M/N axis: full-dim resident when it fits, else a t_max-class
    tile aligned to `align` chosen to minimize padding of `dim`."""
    if dim <= t_max:
        d = _round_up(dim, align)
        return d, d
    nt = _cdiv(dim, t_max)
    t = _round_up(_cdiv(dim, nt), align)
    return t, _round_up(dim, t)


def _pick_tk(K, tk_max):
    """Contraction tile: keep K fully resident when it fits; otherwise pick a
    128-aligned tile that (near-)divides K so K is not padded up (avoids
    multiply-by-zero MXU work and wasted DMA, e.g. K=768 -> tk=384)."""
    if K <= tk_max:
        return K, K
    nk = _cdiv(K, tk_max)
    tk = _round_up(_cdiv(K, nk), 128)
    return tk, _round_up(K, tk)


# ----------------------------------------------------------------------------
# Pallas kernels
# ----------------------------------------------------------------------------

def tiled_matmul(x, w, b, *, activation=None, residual=None,
                 out_dtype=jnp.float32, tm=512, tn=512, tk=1024):
    """out = act(x @ w + b) [+ residual].

    x:[M,K], w:[K,N], b:[N], residual:[M,N] (optional). Tiled over (M,N,K) with
    bf16 MXU inputs and an f32 VMEM accumulator. Bias / activation / residual
    are applied exactly once in the k==last finalize step; the output is cast
    to `out_dtype` (bf16 when it only feeds another matmul).
    NOTE: when both activation and residual are given, residual is added AFTER
    the activation (out = relu(xW+b) + res); current call sites never combine.
    """
    M, K = x.shape
    K2, N = w.shape
    assert K == K2

    tm, Mp = _pick_tile(M, tm, 16)
    tn, Np = _pick_tile(N, tn, 128)
    tk, Kp = _pick_tk(K, tk)
    nk = Kp // tk

    x_p = _pad2d(x.astype(jnp.bfloat16), Mp, Kp)
    w_p = _pad2d(w.astype(jnp.bfloat16), Kp, Np)
    b_p = jnp.pad(b.astype(jnp.float32), (0, Np - N)).reshape(1, Np)
    has_res = residual is not None
    if has_res:
        r_p = _pad2d(residual.astype(jnp.float32), Mp, Np)

    def kernel(*refs):
        if has_res:
            x_ref, w_ref, b_ref, r_ref, o_ref, acc_ref = refs
        else:
            x_ref, w_ref, b_ref, o_ref, acc_ref = refs
        k = pl.program_id(2)

        @pl.when(k == 0)
        def _():
            acc_ref[...] = jnp.zeros_like(acc_ref)

        acc_ref[...] += jnp.dot(x_ref[...], w_ref[...],
                                preferred_element_type=jnp.float32)

        @pl.when(k == nk - 1)
        def _():
            acc = acc_ref[...] + b_ref[...]
            if activation == "relu":
                acc = jnp.maximum(acc, 0.0)
            if has_res:
                acc = acc + r_ref[...]
            o_ref[...] = acc.astype(o_ref.dtype)

    in_specs = [
        pl.BlockSpec((tm, tk), lambda i, j, k: (i, k)),
        pl.BlockSpec((tk, tn), lambda i, j, k: (k, j)),
        pl.BlockSpec((1, tn), lambda i, j, k: (0, j)),
    ]
    inputs = [x_p, w_p, b_p]
    if has_res:
        in_specs.append(pl.BlockSpec((tm, tn), lambda i, j, k: (i, j)))
        inputs.append(r_p)

    out = pl.pallas_call(
        kernel,
        out_shape=jax.ShapeDtypeStruct((Mp, Np), out_dtype),
        grid=(Mp // tm, Np // tn, nk),
        in_specs=in_specs,
        out_specs=pl.BlockSpec((tm, tn), lambda i, j, k: (i, j)),
        scratch_shapes=[pltpu.VMEM((tm, tn), jnp.float32)],
        compiler_params=pltpu.CompilerParams(
            dimension_semantics=("parallel", "parallel", "arbitrary")),
    )(*inputs)
    return out[:M, :N]


def fused_ln_matmul(x, gamma, beta, w, b, *, activation=None, eps=1e-5,
                    out_dtype=jnp.float32, tm=512, tn=512,
                    full_n_budget_bytes=24 * 1024 * 1024):
    """out = act(layernorm(x) @ w + b).

    LayerNorm (over the full K feature dim) is fused into the matmul prologue
    (K = embed_dim stays resident).  When the full N width fits the VMEM budget
    (qkv / ff1 / head at ViT sizes) the grid is 1-D over M, so LN statistics
    and the f32 x tile are computed / read exactly once per row tile.  LN stats
    are f32; the normalized tile is cast to bf16 for the MXU; f32 accumulation.
    """
    M, K = x.shape
    K2, N = w.shape
    assert K == K2

    tm, Mp = _pick_tile(M, tm, 16)
    Np_full = _round_up(N, 128)

    x_p = _pad2d(x.astype(jnp.float32), Mp, K)
    g2 = gamma.astype(jnp.float32).reshape(1, K)
    be2 = beta.astype(jnp.float32).reshape(1, K)

    # Double-buffered working-set estimate with full N resident.
    full_n_bytes = (2 * tm * K * 4 + 2 * K * Np_full * 2 + 2 * tm * Np_full * 4)

    if full_n_bytes <= full_n_budget_bytes:
        w_p = _pad2d(w.astype(jnp.bfloat16), K, Np_full)
        b_p = jnp.pad(b.astype(jnp.float32), (0, Np_full - N)).reshape(1, Np_full)

        def kernel(x_ref, g_ref, bt_ref, w_ref, b_ref, o_ref):
            xv = x_ref[...]
            mean = jnp.mean(xv, axis=-1, keepdims=True)
            var = jnp.mean(jnp.square(xv - mean), axis=-1, keepdims=True)
            xn = (xv - mean) * lax.rsqrt(var + eps)
            xn = xn * g_ref[...] + bt_ref[...]
            acc = jnp.dot(xn.astype(jnp.bfloat16), w_ref[...],
                          preferred_element_type=jnp.float32)
            acc = acc + b_ref[...]
            if activation == "relu":
                acc = jnp.maximum(acc, 0.0)
            o_ref[...] = acc.astype(o_ref.dtype)

        out = pl.pallas_call(
            kernel,
            out_shape=jax.ShapeDtypeStruct((Mp, Np_full), out_dtype),
            grid=(Mp // tm,),
            in_specs=[
                pl.BlockSpec((tm, K), lambda i: (i, 0)),
                pl.BlockSpec((1, K), lambda i: (0, 0)),
                pl.BlockSpec((1, K), lambda i: (0, 0)),
                pl.BlockSpec((K, Np_full), lambda i: (0, 0)),
                pl.BlockSpec((1, Np_full), lambda i: (0, 0)),
            ],
            out_specs=pl.BlockSpec((tm, Np_full), lambda i: (i, 0)),
            compiler_params=pltpu.CompilerParams(
                dimension_semantics=("parallel",)),
        )(x_p, g2, be2, w_p, b_p)
        return out[:M, :N]

    # Fallback: tile N (LayerNorm recomputed per N tile; only used for very
    # large N where the full-N weight block would not fit the VMEM budget).
    tn, Np = _pick_tile(N, tn, 128)
    w_p = _pad2d(w.astype(jnp.bfloat16), K, Np)
    b_p = jnp.pad(b.astype(jnp.float32), (0, Np - N)).reshape(1, Np)

    def kernel2(x_ref, g_ref, bt_ref, w_ref, b_ref, o_ref):
        xv = x_ref[...]
        mean = jnp.mean(xv, axis=-1, keepdims=True)
        var = jnp.mean(jnp.square(xv - mean), axis=-1, keepdims=True)
        xn = (xv - mean) * lax.rsqrt(var + eps)
        xn = xn * g_ref[...] + bt_ref[...]
        acc = jnp.dot(xn.astype(jnp.bfloat16), w_ref[...],
                      preferred_element_type=jnp.float32)
        acc = acc + b_ref[...]
        if activation == "relu":
            acc = jnp.maximum(acc, 0.0)
        o_ref[...] = acc.astype(o_ref.dtype)

    out = pl.pallas_call(
        kernel2,
        out_shape=jax.ShapeDtypeStruct((Mp, Np), out_dtype),
        grid=(Mp // tm, Np // tn),
        in_specs=[
            pl.BlockSpec((tm, K), lambda i, j: (i, 0)),
            pl.BlockSpec((1, K), lambda i, j: (0, 0)),
            pl.BlockSpec((1, K), lambda i, j: (0, 0)),
            pl.BlockSpec((K, tn), lambda i, j: (0, j)),
            pl.BlockSpec((1, tn), lambda i, j: (0, j)),
        ],
        out_specs=pl.BlockSpec((tm, tn), lambda i, j: (i, j)),
        compiler_params=pltpu.CompilerParams(
            dimension_semantics=("parallel", "parallel")),
    )(x_p, g2, be2, w_p, b_p)
    return out[:M, :N]


def attention_core(q, k, v, scale, *, heads_per_block=256,
                   out_dtype=jnp.bfloat16):
    """Scaled-dot-product attention, batched over heads.

    q, k, v: [NH, L, hd] (bf16) -> out [NH, L, hd].  MXU matmuls run in bf16
    with f32 accumulation; softmax (max/exp/sum/reciprocal) stays in f32.
    For this module L = B (batch-first input into seq-first MHA), so L and hd
    are small; all heads of a grid step go through one batched einsum.
    """
    NH, L, hd = q.shape
    G = min(heads_per_block, NH)
    NHp = _round_up(NH, G)
    if NHp != NH:
        pad = ((0, NHp - NH), (0, 0), (0, 0))
        q, k, v = jnp.pad(q, pad), jnp.pad(k, pad), jnp.pad(v, pad)

    def kernel(q_ref, k_ref, v_ref, o_ref):
        s = jnp.einsum("gld,gmd->glm", q_ref[...], k_ref[...],
                       preferred_element_type=jnp.float32)      # [G, L, L] f32
        s = s * scale
        s = s - jnp.max(s, axis=-1, keepdims=True)
        p = jnp.exp(s)
        denom = jnp.sum(p, axis=-1, keepdims=True)
        p = p * pl.reciprocal(denom, approx=True)
        o = jnp.einsum("glm,gmd->gld", p.astype(jnp.bfloat16), v_ref[...],
                       preferred_element_type=jnp.float32)
        o_ref[...] = o.astype(o_ref.dtype)

    out = pl.pallas_call(
        kernel,
        out_shape=jax.ShapeDtypeStruct((NHp, L, hd), out_dtype),
        grid=(NHp // G,),
        in_specs=[pl.BlockSpec((G, L, hd), lambda n: (n, 0, 0))] * 3,
        out_specs=pl.BlockSpec((G, L, hd), lambda n: (n, 0, 0)),
        compiler_params=pltpu.CompilerParams(dimension_semantics=("parallel",)),
    )(q.astype(jnp.bfloat16), k.astype(jnp.bfloat16), v.astype(jnp.bfloat16))
    return out[:NH]


# ----------------------------------------------------------------------------
# Parameter init (deterministic, synthetic)
# ----------------------------------------------------------------------------

def init_params(key, *, img_size, patch_size, in_channels, embed_dim,
                num_heads, num_layers, num_classes, ff_dim):
    num_patches = (img_size // patch_size) ** 2

    def nrm(k, shape, scale=0.02):
        return (scale * jax.random.normal(k, shape)).astype(jnp.float32)

    keys = jax.random.split(key, 4 + num_layers)
    params = {
        "patch_w": nrm(keys[0], (in_channels * patch_size * patch_size, embed_dim)),
        "patch_b": nrm(keys[1], (embed_dim,)),
        # cls_token / pos_embedding are nn.Parameter(torch.zeros(...)) in the module
        "cls_token": jnp.zeros((1, 1, embed_dim), jnp.float32),
        "pos_embed": jnp.zeros((1, num_patches + 1, embed_dim), jnp.float32),
        "norm_g": jnp.ones((embed_dim,), jnp.float32),
        "norm_b": jnp.zeros((embed_dim,), jnp.float32),
        "head_w": nrm(keys[2], (embed_dim, num_classes)),
        "head_b": nrm(keys[3], (num_classes,)),
        "layers": [],
    }
    for li in range(num_layers):
        lk = jax.random.split(keys[4 + li], 8)
        params["layers"].append({
            "ln1_g": jnp.ones((embed_dim,), jnp.float32),
            "ln1_b": jnp.zeros((embed_dim,), jnp.float32),
            "in_proj_w": nrm(lk[0], (embed_dim, 3 * embed_dim)),
            "in_proj_b": nrm(lk[1], (3 * embed_dim,)),
            "out_proj_w": nrm(lk[2], (embed_dim, embed_dim)),
            "out_proj_b": nrm(lk[3], (embed_dim,)),
            "ln2_g": jnp.ones((embed_dim,), jnp.float32),
            "ln2_b": jnp.zeros((embed_dim,), jnp.float32),
            "ff1_w": nrm(lk[4], (embed_dim, ff_dim)),
            "ff1_b": nrm(lk[5], (ff_dim,)),
            "ff2_w": nrm(lk[6], (ff_dim, embed_dim)),
            "ff2_b": nrm(lk[7], (embed_dim,)),
        })
    return params


# ----------------------------------------------------------------------------
# Forward pass (glue in JAX, hot paths in Pallas kernels)
# ----------------------------------------------------------------------------

def vit_forward(params, x_nchw, *, patch_size, embed_dim, num_heads):
    B, C, Himg, Wimg = x_nchw.shape
    p = patch_size
    D = embed_dim
    Hh = num_heads
    hd = D // Hh
    gh, gw = Himg // p, Wimg // p
    num_patches = gh * gw

    # --- PatchEmbed: strided conv == patch extraction + matmul --------------
    xp = (x_nchw.reshape(B, C, gh, p, gw, p)
                 .transpose(0, 2, 4, 1, 3, 5)          # [B, gh, gw, C, p, p]
                 .reshape(B * num_patches, C * p * p))
    x = tiled_matmul(xp, params["patch_w"], params["patch_b"],
                     out_dtype=jnp.float32)             # residual stream: f32
    x = x.reshape(B, num_patches, D)

    # --- cls token + positional embedding ------------------------------------
    cls = jnp.broadcast_to(params["cls_token"], (B, 1, D))
    x = jnp.concatenate([cls, x], axis=1)                        # [B, S, D]
    S = x.shape[1]
    x = x + params["pos_embed"][:, :S, :]
    x = x.reshape(B * S, D)                                      # flat tokens

    scale = float(hd) ** -0.5

    def to_heads(t_flat):   # [B*S, D] -> [S*H, B, hd]  (torch MHA reshape)
        return (t_flat.reshape(B, S, Hh, hd)
                      .transpose(1, 2, 0, 3)
                      .reshape(S * Hh, B, hd))

    def from_heads(t):      # [S*H, B, hd] -> [B*S, D]
        return (t.reshape(S, Hh, B, hd)
                 .transpose(2, 0, 1, 3)
                 .reshape(B * S, D))

    for layer in params["layers"]:
        # x = x + dropout(self_attn(norm1(x)))    (dropout = identity, eval)
        qkv = fused_ln_matmul(x, layer["ln1_g"], layer["ln1_b"],
                              layer["in_proj_w"], layer["in_proj_b"],
                              out_dtype=jnp.bfloat16)            # [B*S, 3D] bf16
        q, k, v = jnp.split(qkv, 3, axis=-1)
        # NOTE: batch-first tensor into seq-first nn.MultiheadAttention => L = B.
        oh = attention_core(to_heads(q), to_heads(k), to_heads(v), scale,
                            out_dtype=jnp.bfloat16)
        o = from_heads(oh)                                       # bf16
        x = tiled_matmul(o, layer["out_proj_w"], layer["out_proj_b"],
                         residual=x, out_dtype=jnp.float32)      # fused residual

        # x = x + dropout(ffn(norm2(x)))
        f1 = fused_ln_matmul(x, layer["ln2_g"], layer["ln2_b"],
                             layer["ff1_w"], layer["ff1_b"],
                             activation="relu", out_dtype=jnp.bfloat16)
        x = tiled_matmul(f1, layer["ff2_w"], layer["ff2_b"],
                         residual=x, out_dtype=jnp.float32)

    # --- final norm + classification head (only cls rows are needed) ---------
    x = x.reshape(B, S, D)
    cls_final = x[:, 0]                                           # [B, D]
    out = fused_ln_matmul(cls_final, params["norm_g"], params["norm_b"],
                          params["head_w"], params["head_b"],
                          out_dtype=jnp.float32)                  # [B, classes]
    return out


# ----------------------------------------------------------------------------
# Main
# ----------------------------------------------------------------------------

if __name__ == "__main__":
    B = 2
    IMG_SIZE = 16
    PATCH_SIZE = 4
    IN_CHANNELS = 4
    EMBED_DIM = 32
    NUM_HEADS = 4
    NUM_LAYERS = 2
    NUM_CLASSES = 10
    FF_DIM = 64

    key = jax.random.PRNGKey(0)
    k_x, k_p = jax.random.split(key)
    x = jax.random.normal(k_x, (B, IN_CHANNELS, IMG_SIZE, IMG_SIZE), dtype=jnp.float32)

    params = init_params(
        k_p,
        img_size=IMG_SIZE, patch_size=PATCH_SIZE, in_channels=IN_CHANNELS,
        embed_dim=EMBED_DIM, num_heads=NUM_HEADS, num_layers=NUM_LAYERS,
        num_classes=NUM_CLASSES, ff_dim=FF_DIM,
    )

    fwd = jax.jit(functools.partial(
        vit_forward, patch_size=PATCH_SIZE, embed_dim=EMBED_DIM, num_heads=NUM_HEADS))

    out = fwd(params, x)
    out = jax.block_until_ready(out)
    assert out.shape == (B, NUM_CLASSES), out.shape
    assert bool(jnp.all(jnp.isfinite(out)))
    print("KERNEL_OK")
</pallas_src>

<mosaic_0001>
module attributes {stable_mosaic.version = 11 : i64} {
  func.func @kernel(%arg0: i32, %arg1: i32, %arg2: i32, %arg3: memref<32x64xbf16, #tpu.memory_space<vmem>>, %arg4: memref<64x128xbf16, #tpu.memory_space<vmem>>, %arg5: memref<1x128xf32, #tpu.memory_space<vmem>>, %arg6: memref<32x128xf32, #tpu.memory_space<vmem>>, %arg7: memref<32x128xf32, #tpu.memory_space<vmem>>) attributes {dimension_semantics = [#tpu.dimension_semantics<parallel>, #tpu.dimension_semantics<parallel>, #tpu.dimension_semantics<arbitrary>], iteration_bounds = array<i64: 1, 1, 1>, scalar_prefetch = 0 : i64, scratch_operands = 1 : i64, tpu.core_type = #tpu.core_type<tc>, window_params = [{transform_indices = @transform_0, window_bounds = array<i64: 32, 64>}, {transform_indices = @transform_1, window_bounds = array<i64: 64, 128>}, {transform_indices = @transform_2, window_bounds = array<i64: 1, 128>}, {transform_indices = @transform_3, window_bounds = array<i64: 32, 128>}]} {
    %c0_i32 = arith.constant 0 : i32
    %0 = arith.cmpi eq, %arg2, %c0_i32 : i32
    %1 = arith.extui %0 : i1 to i32
    %c0_i32_0 = arith.constant 0 : i32
    %2 = arith.cmpi ne, %1, %c0_i32_0 : i32
    scf.if %2 {
      %cst_10 = arith.constant 0.000000e+00 : f32
      %12 = vector.broadcast %cst_10 : f32 to vector<32x128xf32>
      %c0_11 = arith.constant 0 : index
      %c0_12 = arith.constant 0 : index
      %13 = vector.load %arg7[%c0_11, %c0_12] : memref<32x128xf32, #tpu.memory_space<vmem>>, vector<32x128xf32>
      tpu.vector_store %arg7[%c0_11, %c0_12], %12 {strides = array<i32>} : memref<32x128xf32, #tpu.memory_space<vmem>>, vector<32x128xf32>,
    } else {
    }
    %c0 = arith.constant 0 : index
    %c0_1 = arith.constant 0 : index
    %3 = vector.load %arg7[%c0, %c0_1] : memref<32x128xf32, #tpu.memory_space<vmem>>, vector<32x128xf32>
    %c0_2 = arith.constant 0 : index
    %c0_3 = arith.constant 0 : index
    %4 = vector.load %arg3[%c0_2, %c0_3] : memref<32x64xbf16, #tpu.memory_space<vmem>>, vector<32x64xbf16>
    %c0_4 = arith.constant 0 : index
    %c0_5 = arith.constant 0 : index
    %5 = vector.load %arg4[%c0_4, %c0_5] : memref<64x128xbf16, #tpu.memory_space<vmem>>, vector<64x128xbf16>
    %cst = arith.constant dense<0.000000e+00> : vector<32x128xf32>
    %6 = tpu.matmul %4, %5, %cst {dimension_numbers = #tpu.dot_dimension_numbers<[1], [0], [0], [1], [0, 0, 1, 1], [], []>} : vector<32x64xbf16>, vector<64x128xbf16>, vector<32x128xf32> -> vector<32x128xf32>
    %7 = arith.addf %3, %6 : vector<32x128xf32>
    %c0_6 = arith.constant 0 : index
    %c0_7 = arith.constant 0 : index
    %8 = vector.load %arg7[%c0_6, %c0_7] : memref<32x128xf32, #tpu.memory_space<vmem>>, vector<32x128xf32>
    tpu.vector_store %arg7[%c0_6, %c0_7], %7 {strides = array<i32>} : memref<32x128xf32, #tpu.memory_space<vmem>>, vector<32x128xf32>,
    %c0_i32_8 = arith.constant 0 : i32
    %9 = arith.cmpi eq, %arg2, %c0_i32_8 : i32
    %10 = arith.extui %9 : i1 to i32
    %c0_i32_9 = arith.constant 0 : i32
    %11 = arith.cmpi ne, %10, %c0_i32_9 : i32
    scf.if %11 {
      %c0_10 = arith.constant 0 : index
      %c0_11 = arith.constant 0 : index
      %12 = vector.load %arg7[%c0_10, %c0_11] : memref<32x128xf32, #tpu.memory_space<vmem>>, vector<32x128xf32>
      %c0_12 = arith.constant 0 : index
      %c0_13 = arith.constant 0 : index
      %13 = vector.load %arg5[%c0_12, %c0_13] : memref<1x128xf32, #tpu.memory_space<vmem>>, vector<1x128xf32>
      %14 = vector.broadcast %13 : vector<1x128xf32> to vector<32x128xf32>
      %15 = arith.addf %12, %14 : vector<32x128xf32>
      %c0_14 = arith.constant 0 : index
      %c0_15 = arith.constant 0 : index
      %16 = vector.load %arg6[%c0_14, %c0_15] : memref<32x128xf32, #tpu.memory_space<vmem>>, vector<32x128xf32>
      tpu.vector_store %arg6[%c0_14, %c0_15], %15 {strides = array<i32>} : memref<32x128xf32, #tpu.memory_space<vmem>>, vector<32x128xf32>,
    } else {
    }
    return
  }
  func.func @transform_0(%arg0: i32, %arg1: i32, %arg2: i32) -> (i32, i32) {
    %c0_i32 = arith.constant 0 : i32
    return %arg0, %arg2 : i32, i32
  }
  func.func @transform_1(%arg0: i32, %arg1: i32, %arg2: i32) -> (i32, i32) {
    %c0_i32 = arith.constant 0 : i32
    return %arg2, %arg1 : i32, i32
  }
  func.func @transform_2(%arg0: i32, %arg1: i32, %arg2: i32) -> (i32, i32) {
    %c0_i32 = arith.constant 0 : i32
    %c0_i32_0 = arith.constant 0 : i32
    return %c0_i32, %arg1 : i32, i32
  }
  func.func @transform_3(%arg0: i32, %arg1: i32, %arg2: i32) -> (i32, i32) {
    %c0_i32 = arith.constant 0 : i32
    return %arg0, %arg1 : i32, i32
  }
}

module attributes {stable_mosaic.version = 11 : i64} {
  func.func @kernel(%arg0: i32, %arg1: memref<48x32xf32, #tpu.memory_space<vmem>>, %arg2: memref<1x32xf32, #tpu.memory_space<vmem>>, %arg3: memref<1x32xf32, #tpu.memory_space<vmem>>, %arg4: memref<32x128xbf16, #tpu.memory_space<vmem>>, %arg5: memref<1x128xf32, #tpu.memory_space<vmem>>, %arg6: memref<48x128xbf16, #tpu.memory_space<vmem>>) attributes {dimension_semantics = [#tpu.dimension_semantics<parallel>], iteration_bounds = array<i64: 1>, scalar_prefetch = 0 : i64, scratch_operands = 0 : i64, tpu.core_type = #tpu.core_type<tc>, window_params = [{transform_indices = @transform_0, window_bounds = array<i64: 48, 32>}, {pipeline_mode = #tpu.pipeline_mode<synchronous>, transform_indices = @transform_1, window_bounds = array<i64: 1, 32>}, {pipeline_mode = #tpu.pipeline_mode<synchronous>, transform_indices = @transform_2, window_bounds = array<i64: 1, 32>}, {pipeline_mode = #tpu.pipeline_mode<synchronous>, transform_indices = @transform_3, window_bounds = array<i64: 32, 128>}, {pipeline_mode = #tpu.pipeline_mode<synchronous>, transform_indices = @transform_4, window_bounds = array<i64: 1, 128>}, {transform_indices = @transform_5, window_bounds = array<i64: 48, 128>}]} {
    %c0 = arith.constant 0 : index
    %c0_0 = arith.constant 0 : index
    %0 = vector.load %arg1[%c0, %c0_0] : memref<48x32xf32, #tpu.memory_space<vmem>>, vector<48x32xf32>
    %cst = arith.constant dense<0.000000e+00> : vector<48xf32>
    %1 = vector.multi_reduction <add>, %0, %cst [1] : vector<48x32xf32> to vector<48xf32>
    %2 = vector.shape_cast %1 : vector<48xf32> to vector<48x1xf32>
    %cst_1 = arith.constant 3.200000e+01 : f32
    %3 = vector.broadcast %cst_1 : f32 to vector<48x1xf32>
    %4 = arith.divf %2, %3 : vector<48x1xf32>
    %5 = vector.broadcast %4 : vector<48x1xf32> to vector<48x32xf32>
    %6 = arith.subf %0, %5 : vector<48x32xf32>
    %7 = arith.mulf %6, %6 : vector<48x32xf32>
    %cst_2 = arith.constant dense<0.000000e+00> : vector<48xf32>
    %8 = vector.multi_reduction <add>, %7, %cst_2 [1] : vector<48x32xf32> to vector<48xf32>
    %9 = vector.shape_cast %8 : vector<48xf32> to vector<48x1xf32>
    %cst_3 = arith.constant 3.200000e+01 : f32
    %10 = vector.broadcast %cst_3 : f32 to vector<48x1xf32>
    %11 = arith.divf %9, %10 : vector<48x1xf32>
    %12 = vector.broadcast %4 : vector<48x1xf32> to vector<48x32xf32>
    %13 = arith.subf %0, %12 : vector<48x32xf32>
    %cst_4 = arith.constant 9.99999974E-6 : f32
    %14 = vector.broadcast %cst_4 : f32 to vector<48x1xf32>
    %15 = arith.addf %11, %14 : vector<48x1xf32>
    %16 = math.rsqrt %15 : vector<48x1xf32>
    %17 = vector.broadcast %16 : vector<48x1xf32> to vector<48x32xf32>
    %18 = arith.mulf %13, %17 : vector<48x32xf32>
    %c0_5 = arith.constant 0 : index
    %c0_6 = arith.constant 0 : index
    %19 = vector.load %arg2[%c0_5, %c0_6] : memref<1x32xf32, #tpu.memory_space<vmem>>, vector<1x32xf32>
    %20 = vector.broadcast %19 : vector<1x32xf32> to vector<48x32xf32>
    %21 = arith.mulf %18, %20 : vector<48x32xf32>
    %c0_7 = arith.constant 0 : index
    %c0_8 = arith.constant 0 : index
    %22 = vector.load %arg3[%c0_7, %c0_8] : memref<1x32xf32, #tpu.memory_space<vmem>>, vector<1x32xf32>
    %23 = vector.broadcast %22 : vector<1x32xf32> to vector<48x32xf32>
    %24 = arith.addf %21, %23 : vector<48x32xf32>
    %25 = arith.truncf %24 : vector<48x32xf32> to vector<48x32xbf16>
    %c0_9 = arith.constant 0 : index
    %c0_10 = arith.constant 0 : index
    %26 = vector.load %arg4[%c0_9, %c0_10] : memref<32x128xbf16, #tpu.memory_space<vmem>>, vector<32x128xbf16>
    %cst_11 = arith.constant dense<0.000000e+00> : vector<48x128xf32>
    %27 = tpu.matmul %25, %26, %cst_11 {dimension_numbers = #tpu.dot_dimension_numbers<[1], [0], [0], [1], [0, 0, 1, 1], [], []>} : vector<48x32xbf16>, vector<32x128xbf16>, vector<48x128xf32> -> vector<48x128xf32>
    %c0_12 = arith.constant 0 : index
    %c0_13 = arith.constant 0 : index
    %28 = vector.load %arg5[%c0_12, %c0_13] : memref<1x128xf32, #tpu.memory_space<vmem>>, vector<1x128xf32>
    %29 = vector.broadcast %28 : vector<1x128xf32> to vector<48x128xf32>
    %30 = arith.addf %27, %29 : vector<48x128xf32>
    %31 = arith.truncf %30 : vector<48x128xf32> to vector<48x128xbf16>
    %c0_14 = arith.constant 0 : index
    %c0_15 = arith.constant 0 : index
    %32 = vector.load %arg6[%c0_14, %c0_15] : memref<48x128xbf16, #tpu.memory_space<vmem>>, vector<48x128xbf16>
    tpu.vector_store %arg6[%c0_14, %c0_15], %31 {strides = array<i32>} : memref<48x128xbf16, #tpu.memory_space<vmem>>, vector<48x128xbf16>,
    return
  }
  func.func @transform_0(%arg0: i32) -> (i32, i32) {
    %c0_i32 = arith.constant 0 : i32
    %c0_i32_0 = arith.constant 0 : i32
    return %arg0, %c0_i32 : i32, i32
  }
  func.func @transform_1(%arg0: i32) -> (i32, i32) {
    %c0_i32 = arith.constant 0 : i32
    %c0_i32_0 = arith.constant 0 : i32
    %c0_i32_1 = arith.constant 0 : i32
    return %c0_i32, %c0_i32_0 : i32, i32
  }
  func.func @transform_2(%arg0: i32) -> (i32, i32) {
    %c0_i32 = arith.constant 0 : i32
    %c0_i32_0 = arith.constant 0 : i32
    %c0_i32_1 = arith.constant 0 : i32
    return %c0_i32, %c0_i32_0 : i32, i32
  }
  func.func @transform_3(%arg0: i32) -> (i32, i32) {
    %c0_i32 = arith.constant 0 : i32
    %c0_i32_0 = arith.constant 0 : i32
    %c0_i32_1 = arith.constant 0 : i32
    return %c0_i32, %c0_i32_0 : i32, i32
  }
  func.func @transform_4(%arg0: i32) -> (i32, i32) {
    %c0_i32 = arith.constant 0 : i32
    %c0_i32_0 = arith.constant 0 : i32
    %c0_i32_1 = arith.constant 0 : i32
    return %c0_i32, %c0_i32_0 : i32, i32
  }
  func.func @transform_5(%arg0: i32) -> (i32, i32) {
    %c0_i32 = arith.constant 0 : i32
    %c0_i32_0 = arith.constant 0 : i32
    return %arg0, %c0_i32 : i32, i32
  }
}

module attributes {stable_mosaic.version = 11 : i64} {
  func.func @kernel(%arg0: i32, %arg1: memref<68x2x8xbf16, #tpu.memory_space<vmem>>, %arg2: memref<68x2x8xbf16, #tpu.memory_space<vmem>>, %arg3: memref<68x2x8xbf16, #tpu.memory_space<vmem>>, %arg4: memref<68x2x8xbf16, #tpu.memory_space<vmem>>) attributes {dimension_semantics = [#tpu.dimension_semantics<parallel>], iteration_bounds = array<i64: 1>, scalar_prefetch = 0 : i64, scratch_operands = 0 : i64, tpu.core_type = #tpu.core_type<tc>, window_params = [{transform_indices = @transform_0, window_bounds = array<i64: 68, 2, 8>}, {transform_indices = @transform_1, window_bounds = array<i64: 68, 2, 8>}, {transform_indices = @transform_2, window_bounds = array<i64: 68, 2, 8>}, {transform_indices = @transform_3, window_bounds = array<i64: 68, 2, 8>}]} {
    %c0 = arith.constant 0 : index
    %c0_0 = arith.constant 0 : index
    %c0_1 = arith.constant 0 : index
    %0 = vector.load %arg1[%c0, %c0_0, %c0_1] : memref<68x2x8xbf16, #tpu.memory_space<vmem>>, vector<68x2x8xbf16>
    %c0_2 = arith.constant 0 : index
    %c0_3 = arith.constant 0 : index
    %c0_4 = arith.constant 0 : index
    %1 = vector.load %arg2[%c0_2, %c0_3, %c0_4] : memref<68x2x8xbf16, #tpu.memory_space<vmem>>, vector<68x2x8xbf16>
    "tpu.trace_start"() <{level = 10 : i32, message = "gld,gmd->glm"}> : () -> ()
    %cst = arith.constant dense<0.000000e+00> : vector<68x2x2xf32>
    %2 = tpu.matmul %0, %1, %cst {dimension_numbers = #tpu.dot_dimension_numbers<[2], [2], [1], [1], [0, 0, 0, 1, 1, 1], [0], [0]>} : vector<68x2x8xbf16>, vector<68x2x8xbf16>, vector<68x2x2xf32> -> vector<68x2x2xf32>
    "tpu.trace_stop"() : () -> ()
    %cst_5 = arith.constant 0.353553385 : f32
    %3 = vector.broadcast %cst_5 : f32 to vector<68x2x2xf32>
    %4 = arith.mulf %2, %3 : vector<68x2x2xf32>
    %cst_6 = arith.constant dense<0xFF800000> : vector<68x2xf32>
    %5 = vector.multi_reduction <maximumf>, %4, %cst_6 [2] : vector<68x2x2xf32> to vector<68x2xf32>
    %6 = vector.shape_cast %5 : vector<68x2xf32> to vector<68x2x1xf32>
    %7 = vector.broadcast %6 : vector<68x2x1xf32> to vector<68x2x2xf32>
    %8 = arith.subf %4, %7 : vector<68x2x2xf32>
    %9 = math.exp %8 : vector<68x2x2xf32>
    %cst_7 = arith.constant dense<0.000000e+00> : vector<68x2xf32>
    %10 = vector.multi_reduction <add>, %9, %cst_7 [2] : vector<68x2x2xf32> to vector<68x2xf32>
    %11 = vector.shape_cast %10 : vector<68x2xf32> to vector<68x2x1xf32>
    %12 = tpu.reciprocal %11 {approx = true} : vector<68x2x1xf32> -> vector<68x2x1xf32>
    %13 = vector.broadcast %12 : vector<68x2x1xf32> to vector<68x2x2xf32>
    %14 = arith.mulf %9, %13 : vector<68x2x2xf32>
    %15 = arith.truncf %14 : vector<68x2x2xf32> to vector<68x2x2xbf16>
    %c0_8 = arith.constant 0 : index
    %c0_9 = arith.constant 0 : index
    %c0_10 = arith.constant 0 : index
    %16 = vector.load %arg3[%c0_8, %c0_9, %c0_10] : memref<68x2x8xbf16, #tpu.memory_space<vmem>>, vector<68x2x8xbf16>
    "tpu.trace_start"() <{level = 10 : i32, message = "glm,gmd->gld"}> : () -> ()
    %cst_11 = arith.constant dense<0.000000e+00> : vector<68x2x8xf32>
    %17 = tpu.matmul %15, %16, %cst_11 {dimension_numbers = #tpu.dot_dimension_numbers<[2], [1], [1], [2], [0, 0, 0, 1, 1, 2], [0], [0]>} : vector<68x2x2xbf16>, vector<68x2x8xbf16>, vector<68x2x8xf32> -> vector<68x2x8xf32>
    "tpu.trace_stop"() : () -> ()
    %18 = arith.truncf %17 : vector<68x2x8xf32> to vector<68x2x8xbf16>
    %c0_12 = arith.constant 0 : index
    %c0_13 = arith.constant 0 : index
    %c0_14 = arith.constant 0 : index
    %19 = vector.load %arg4[%c0_12, %c0_13, %c0_14] : memref<68x2x8xbf16, #tpu.memory_space<vmem>>, vector<68x2x8xbf16>
    tpu.vector_store %arg4[%c0_12, %c0_13, %c0_14], %18 {strides = array<i32>} : memref<68x2x8xbf16, #tpu.memory_space<vmem>>, vector<68x2x8xbf16>,
    return
  }
  func.func @transform_0(%arg0: i32) -> (i32, i32, i32) {
    %c0_i32 = arith.constant 0 : i32
    %c0_i32_0 = arith.constant 0 : i32
    %c0_i32_1 = arith.constant 0 : i32
    return %arg0, %c0_i32, %c0_i32_0 : i32, i32, i32
  }
  func.func @transform_1(%arg0: i32) -> (i32, i32, i32) {
    %c0_i32 = arith.constant 0 : i32
    %c0_i32_0 = arith.constant 0 : i32
    %c0_i32_1 = arith.constant 0 : i32
    return %arg0, %c0_i32, %c0_i32_0 : i32, i32, i32
  }
  func.func @transform_2(%arg0: i32) -> (i32, i32, i32) {
    %c0_i32 = arith.constant 0 : i32
    %c0_i32_0 = arith.constant 0 : i32
    %c0_i32_1 = arith.constant 0 : i32
    return %arg0, %c0_i32, %c0_i32_0 : i32, i32, i32
  }
  func.func @transform_3(%arg0: i32) -> (i32, i32, i32) {
    %c0_i32 = arith.constant 0 : i32
    %c0_i32_0 = arith.constant 0 : i32
    %c0_i32_1 = arith.constant 0 : i32
    return %arg0, %c0_i32, %c0_i32_0 : i32, i32, i32
  }
}

module attributes {stable_mosaic.version = 11 : i64} {
  func.func @kernel(%arg0: i32, %arg1: memref<48x32xf32, #tpu.memory_space<vmem>>, %arg2: memref<1x32xf32, #tpu.memory_space<vmem>>, %arg3: memref<1x32xf32, #tpu.memory_space<vmem>>, %arg4: memref<32x128xbf16, #tpu.memory_space<vmem>>, %arg5: memref<1x128xf32, #tpu.memory_space<vmem>>, %arg6: memref<48x128xbf16, #tpu.memory_space<vmem>>) attributes {dimension_semantics = [#tpu.dimension_semantics<parallel>], iteration_bounds = array<i64: 1>, scalar_prefetch = 0 : i64, scratch_operands = 0 : i64, tpu.core_type = #tpu.core_type<tc>, window_params = [{transform_indices = @transform_0, window_bounds = array<i64: 48, 32>}, {pipeline_mode = #tpu.pipeline_mode<synchronous>, transform_indices = @transform_1, window_bounds = array<i64: 1, 32>}, {pipeline_mode = #tpu.pipeline_mode<synchronous>, transform_indices = @transform_2, window_bounds = array<i64: 1, 32>}, {pipeline_mode = #tpu.pipeline_mode<synchronous>, transform_indices = @transform_3, window_bounds = array<i64: 32, 128>}, {pipeline_mode = #tpu.pipeline_mode<synchronous>, transform_indices = @transform_4, window_bounds = array<i64: 1, 128>}, {transform_indices = @transform_5, window_bounds = array<i64: 48, 128>}]} {
    %c0 = arith.constant 0 : index
    %c0_0 = arith.constant 0 : index
    %0 = vector.load %arg1[%c0, %c0_0] : memref<48x32xf32, #tpu.memory_space<vmem>>, vector<48x32xf32>
    %cst = arith.constant dense<0.000000e+00> : vector<48xf32>
    %1 = vector.multi_reduction <add>, %0, %cst [1] : vector<48x32xf32> to vector<48xf32>
    %2 = vector.shape_cast %1 : vector<48xf32> to vector<48x1xf32>
    %cst_1 = arith.constant 3.200000e+01 : f32
    %3 = vector.broadcast %cst_1 : f32 to vector<48x1xf32>
    %4 = arith.divf %2, %3 : vector<48x1xf32>
    %5 = vector.broadcast %4 : vector<48x1xf32> to vector<48x32xf32>
    %6 = arith.subf %0, %5 : vector<48x32xf32>
    %7 = arith.mulf %6, %6 : vector<48x32xf32>
    %cst_2 = arith.constant dense<0.000000e+00> : vector<48xf32>
    %8 = vector.multi_reduction <add>, %7, %cst_2 [1] : vector<48x32xf32> to vector<48xf32>
    %9 = vector.shape_cast %8 : vector<48xf32> to vector<48x1xf32>
    %cst_3 = arith.constant 3.200000e+01 : f32
    %10 = vector.broadcast %cst_3 : f32 to vector<48x1xf32>
    %11 = arith.divf %9, %10 : vector<48x1xf32>
    %12 = vector.broadcast %4 : vector<48x1xf32> to vector<48x32xf32>
    %13 = arith.subf %0, %12 : vector<48x32xf32>
    %cst_4 = arith.constant 9.99999974E-6 : f32
    %14 = vector.broadcast %cst_4 : f32 to vector<48x1xf32>
    %15 = arith.addf %11, %14 : vector<48x1xf32>
    %16 = math.rsqrt %15 : vector<48x1xf32>
    %17 = vector.broadcast %16 : vector<48x1xf32> to vector<48x32xf32>
    %18 = arith.mulf %13, %17 : vector<48x32xf32>
    %c0_5 = arith.constant 0 : index
    %c0_6 = arith.constant 0 : index
    %19 = vector.load %arg2[%c0_5, %c0_6] : memref<1x32xf32, #tpu.memory_space<vmem>>, vector<1x32xf32>
    %20 = vector.broadcast %19 : vector<1x32xf32> to vector<48x32xf32>
    %21 = arith.mulf %18, %20 : vector<48x32xf32>
    %c0_7 = arith.constant 0 : index
    %c0_8 = arith.constant 0 : index
    %22 = vector.load %arg3[%c0_7, %c0_8] : memref<1x32xf32, #tpu.memory_space<vmem>>, vector<1x32xf32>
    %23 = vector.broadcast %22 : vector<1x32xf32> to vector<48x32xf32>
    %24 = arith.addf %21, %23 : vector<48x32xf32>
    %25 = arith.truncf %24 : vector<48x32xf32> to vector<48x32xbf16>
    %c0_9 = arith.constant 0 : index
    %c0_10 = arith.constant 0 : index
    %26 = vector.load %arg4[%c0_9, %c0_10] : memref<32x128xbf16, #tpu.memory_space<vmem>>, vector<32x128xbf16>
    %cst_11 = arith.constant dense<0.000000e+00> : vector<48x128xf32>
    %27 = tpu.matmul %25, %26, %cst_11 {dimension_numbers = #tpu.dot_dimension_numbers<[1], [0], [0], [1], [0, 0, 1, 1], [], []>} : vector<48x32xbf16>, vector<32x128xbf16>, vector<48x128xf32> -> vector<48x128xf32>
    %c0_12 = arith.constant 0 : index
    %c0_13 = arith.constant 0 : index
    %28 = vector.load %arg5[%c0_12, %c0_13] : memref<1x128xf32, #tpu.memory_space<vmem>>, vector<1x128xf32>
    %29 = vector.broadcast %28 : vector<1x128xf32> to vector<48x128xf32>
    %30 = arith.addf %27, %29 : vector<48x128xf32>
    %cst_14 = arith.constant 0.000000e+00 : f32
    %31 = vector.broadcast %cst_14 : f32 to vector<48x128xf32>
    %32 = arith.maximumf %30, %31 : vector<48x128xf32>
    %33 = arith.truncf %32 : vector<48x128xf32> to vector<48x128xbf16>
    %c0_15 = arith.constant 0 : index
    %c0_16 = arith.constant 0 : index
    %34 = vector.load %arg6[%c0_15, %c0_16] : memref<48x128xbf16, #tpu.memory_space<vmem>>, vector<48x128xbf16>
    tpu.vector_store %arg6[%c0_15, %c0_16], %33 {strides = array<i32>} : memref<48x128xbf16, #tpu.memory_space<vmem>>, vector<48x128xbf16>,
    return
  }
  func.func @transform_0(%arg0: i32) -> (i32, i32) {
    %c0_i32 = arith.constant 0 : i32
    %c0_i32_0 = arith.constant 0 : i32
    return %arg0, %c0_i32 : i32, i32
  }
  func.func @transform_1(%arg0: i32) -> (i32, i32) {
    %c0_i32 = arith.constant 0 : i32
    %c0_i32_0 = arith.constant 0 : i32
    %c0_i32_1 = arith.constant 0 : i32
    return %c0_i32, %c0_i32_0 : i32, i32
  }
  func.func @transform_2(%arg0: i32) -> (i32, i32) {
    %c0_i32 = arith.constant 0 : i32
    %c0_i32_0 = arith.constant 0 : i32
    %c0_i32_1 = arith.constant 0 : i32
    return %c0_i32, %c0_i32_0 : i32, i32
  }
  func.func @transform_3(%arg0: i32) -> (i32, i32) {
    %c0_i32 = arith.constant 0 : i32
    %c0_i32_0 = arith.constant 0 : i32
    %c0_i32_1 = arith.constant 0 : i32
    return %c0_i32, %c0_i32_0 : i32, i32
  }
  func.func @transform_4(%arg0: i32) -> (i32, i32) {
    %c0_i32 = arith.constant 0 : i32
    %c0_i32_0 = arith.constant 0 : i32
    %c0_i32_1 = arith.constant 0 : i32
    return %c0_i32, %c0_i32_0 : i32, i32
  }
  func.func @transform_5(%arg0: i32) -> (i32, i32) {
    %c0_i32 = arith.constant 0 : i32
    %c0_i32_0 = arith.constant 0 : i32
    return %arg0, %c0_i32 : i32, i32
  }
}

module attributes {stable_mosaic.version = 11 : i64} {
  func.func @kernel(%arg0: i32, %arg1: i32, %arg2: i32, %arg3: memref<48x32xbf16, #tpu.memory_space<vmem>>, %arg4: memref<32x128xbf16, #tpu.memory_space<vmem>>, %arg5: memref<1x128xf32, #tpu.memory_space<vmem>>, %arg6: memref<48x128xf32, #tpu.memory_space<vmem>>, %arg7: memref<48x128xf32, #tpu.memory_space<vmem>>, %arg8: memref<48x128xf32, #tpu.memory_space<vmem>>) attributes {dimension_semantics = [#tpu.dimension_semantics<parallel>, #tpu.dimension_semantics<parallel>, #tpu.dimension_semantics<arbitrary>], iteration_bounds = array<i64: 1, 1, 1>, scalar_prefetch = 0 : i64, scratch_operands = 1 : i64, tpu.core_type = #tpu.core_type<tc>, window_params = [{transform_indices = @transform_0, window_bounds = array<i64: 48, 32>}, {transform_indices = @transform_1, window_bounds = array<i64: 32, 128>}, {transform_indices = @transform_2, window_bounds = array<i64: 1, 128>}, {transform_indices = @transform_3, window_bounds = array<i64: 48, 128>}, {transform_indices = @transform_4, window_bounds = array<i64: 48, 128>}]} {
    %c0_i32 = arith.constant 0 : i32
    %0 = arith.cmpi eq, %arg2, %c0_i32 : i32
    %1 = arith.extui %0 : i1 to i32
    %c0_i32_0 = arith.constant 0 : i32
    %2 = arith.cmpi ne, %1, %c0_i32_0 : i32
    scf.if %2 {
      %cst_10 = arith.constant 0.000000e+00 : f32
      %12 = vector.broadcast %cst_10 : f32 to vector<48x128xf32>
      %c0_11 = arith.constant 0 : index
      %c0_12 = arith.constant 0 : index
      %13 = vector.load %arg8[%c0_11, %c0_12] : memref<48x128xf32, #tpu.memory_space<vmem>>, vector<48x128xf32>
      tpu.vector_store %arg8[%c0_11, %c0_12], %12 {strides = array<i32>} : memref<48x128xf32, #tpu.memory_space<vmem>>, vector<48x128xf32>,
    } else {
    }
    %c0 = arith.constant 0 : index
    %c0_1 = arith.constant 0 : index
    %3 = vector.load %arg8[%c0, %c0_1] : memref<48x128xf32, #tpu.memory_space<vmem>>, vector<48x128xf32>
    %c0_2 = arith.constant 0 : index
    %c0_3 = arith.constant 0 : index
    %4 = vector.load %arg3[%c0_2, %c0_3] : memref<48x32xbf16, #tpu.memory_space<vmem>>, vector<48x32xbf16>
    %c0_4 = arith.constant 0 : index
    %c0_5 = arith.constant 0 : index
    %5 = vector.load %arg4[%c0_4, %c0_5] : memref<32x128xbf16, #tpu.memory_space<vmem>>, vector<32x128xbf16>
    %cst = arith.constant dense<0.000000e+00> : vector<48x128xf32>
    %6 = tpu.matmul %4, %5, %cst {dimension_numbers = #tpu.dot_dimension_numbers<[1], [0], [0], [1], [0, 0, 1, 1], [], []>} : vector<48x32xbf16>, vector<32x128xbf16>, vector<48x128xf32> -> vector<48x128xf32>
    %7 = arith.addf %3, %6 : vector<48x128xf32>
    %c0_6 = arith.constant 0 : index
    %c0_7 = arith.constant 0 : index
    %8 = vector.load %arg8[%c0_6, %c0_7] : memref<48x128xf32, #tpu.memory_space<vmem>>, vector<48x128xf32>
    tpu.vector_store %arg8[%c0_6, %c0_7], %7 {strides = array<i32>} : memref<48x128xf32, #tpu.memory_space<vmem>>, vector<48x128xf32>,
    %c0_i32_8 = arith.constant 0 : i32
    %9 = arith.cmpi eq, %arg2, %c0_i32_8 : i32
    %10 = arith.extui %9 : i1 to i32
    %c0_i32_9 = arith.constant 0 : i32
    %11 = arith.cmpi ne, %10, %c0_i32_9 : i32
    scf.if %11 {
      %c0_10 = arith.constant 0 : index
      %c0_11 = arith.constant 0 : index
      %12 = vector.load %arg8[%c0_10, %c0_11] : memref<48x128xf32, #tpu.memory_space<vmem>>, vector<48x128xf32>
      %c0_12 = arith.constant 0 : index
      %c0_13 = arith.constant 0 : index
      %13 = vector.load %arg5[%c0_12, %c0_13] : memref<1x128xf32, #tpu.memory_space<vmem>>, vector<1x128xf32>
      %14 = vector.broadcast %13 : vector<1x128xf32> to vector<48x128xf32>
      %15 = arith.addf %12, %14 : vector<48x128xf32>
      %c0_14 = arith.constant 0 : index
      %c0_15 = arith.constant 0 : index
      %16 = vector.load %arg6[%c0_14, %c0_15] : memref<48x128xf32, #tpu.memory_space<vmem>>, vector<48x128xf32>
      %17 = arith.addf %15, %16 : vector<48x128xf32>
      %c0_16 = arith.constant 0 : index
      %c0_17 = arith.constant 0 : index
      %18 = vector.load %arg7[%c0_16, %c0_17] : memref<48x128xf32, #tpu.memory_space<vmem>>, vector<48x128xf32>
      tpu.vector_store %arg7[%c0_16, %c0_17], %17 {strides = array<i32>} : memref<48x128xf32, #tpu.memory_space<vmem>>, vector<48x128xf32>,
    } else {
    }
    return
  }
  func.func @transform_0(%arg0: i32, %arg1: i32, %arg2: i32) -> (i32, i32) {
    %c0_i32 = arith.constant 0 : i32
    return %arg0, %arg2 : i32, i32
  }
  func.func @transform_1(%arg0: i32, %arg1: i32, %arg2: i32) -> (i32, i32) {
    %c0_i32 = arith.constant 0 : i32
    return %arg2, %arg1 : i32, i32
  }
  func.func @transform_2(%arg0: i32, %arg1: i32, %arg2: i32) -> (i32, i32) {
    %c0_i32 = arith.constant 0 : i32
    %c0_i32_0 = arith.constant 0 : i32
    return %c0_i32, %arg1 : i32, i32
  }
  func.func @transform_3(%arg0: i32, %arg1: i32, %arg2: i32) -> (i32, i32) {
    %c0_i32 = arith.constant 0 : i32
    return %arg0, %arg1 : i32, i32
  }
  func.func @transform_4(%arg0: i32, %arg1: i32, %arg2: i32) -> (i32, i32) {
    %c0_i32 = arith.constant 0 : i32
    return %arg0, %arg1 : i32, i32
  }
}

module attributes {stable_mosaic.version = 11 : i64} {
  func.func @kernel(%arg0: i32, %arg1: i32, %arg2: i32, %arg3: memref<48x64xbf16, #tpu.memory_space<vmem>>, %arg4: memref<64x128xbf16, #tpu.memory_space<vmem>>, %arg5: memref<1x128xf32, #tpu.memory_space<vmem>>, %arg6: memref<48x128xf32, #tpu.memory_space<vmem>>, %arg7: memref<48x128xf32, #tpu.memory_space<vmem>>, %arg8: memref<48x128xf32, #tpu.memory_space<vmem>>) attributes {dimension_semantics = [#tpu.dimension_semantics<parallel>, #tpu.dimension_semantics<parallel>, #tpu.dimension_semantics<arbitrary>], iteration_bounds = array<i64: 1, 1, 1>, scalar_prefetch = 0 : i64, scratch_operands = 1 : i64, tpu.core_type = #tpu.core_type<tc>, window_params = [{transform_indices = @transform_0, window_bounds = array<i64: 48, 64>}, {transform_indices = @transform_1, window_bounds = array<i64: 64, 128>}, {transform_indices = @transform_2, window_bounds = array<i64: 1, 128>}, {transform_indices = @transform_3, window_bounds = array<i64: 48, 128>}, {transform_indices = @transform_4, window_bounds = array<i64: 48, 128>}]} {
    %c0_i32 = arith.constant 0 : i32
    %0 = arith.cmpi eq, %arg2, %c0_i32 : i32
    %1 = arith.extui %0 : i1 to i32
    %c0_i32_0 = arith.constant 0 : i32
    %2 = arith.cmpi ne, %1, %c0_i32_0 : i32
    scf.if %2 {
      %cst_10 = arith.constant 0.000000e+00 : f32
      %12 = vector.broadcast %cst_10 : f32 to vector<48x128xf32>
      %c0_11 = arith.constant 0 : index
      %c0_12 = arith.constant 0 : index
      %13 = vector.load %arg8[%c0_11, %c0_12] : memref<48x128xf32, #tpu.memory_space<vmem>>, vector<48x128xf32>
      tpu.vector_store %arg8[%c0_11, %c0_12], %12 {strides = array<i32>} : memref<48x128xf32, #tpu.memory_space<vmem>>, vector<48x128xf32>,
    } else {
    }
    %c0 = arith.constant 0 : index
    %c0_1 = arith.constant 0 : index
    %3 = vector.load %arg8[%c0, %c0_1] : memref<48x128xf32, #tpu.memory_space<vmem>>, vector<48x128xf32>
    %c0_2 = arith.constant 0 : index
    %c0_3 = arith.constant 0 : index
    %4 = vector.load %arg3[%c0_2, %c0_3] : memref<48x64xbf16, #tpu.memory_space<vmem>>, vector<48x64xbf16>
    %c0_4 = arith.constant 0 : index
    %c0_5 = arith.constant 0 : index
    %5 = vector.load %arg4[%c0_4, %c0_5] : memref<64x128xbf16, #tpu.memory_space<vmem>>, vector<64x128xbf16>
    %cst = arith.constant dense<0.000000e+00> : vector<48x128xf32>
    %6 = tpu.matmul %4, %5, %cst {dimension_numbers = #tpu.dot_dimension_numbers<[1], [0], [0], [1], [0, 0, 1, 1], [], []>} : vector<48x64xbf16>, vector<64x128xbf16>, vector<48x128xf32> -> vector<48x128xf32>
    %7 = arith.addf %3, %6 : vector<48x128xf32>
    %c0_6 = arith.constant 0 : index
    %c0_7 = arith.constant 0 : index
    %8 = vector.load %arg8[%c0_6, %c0_7] : memref<48x128xf32, #tpu.memory_space<vmem>>, vector<48x128xf32>
    tpu.vector_store %arg8[%c0_6, %c0_7], %7 {strides = array<i32>} : memref<48x128xf32, #tpu.memory_space<vmem>>, vector<48x128xf32>,
    %c0_i32_8 = arith.constant 0 : i32
    %9 = arith.cmpi eq, %arg2, %c0_i32_8 : i32
    %10 = arith.extui %9 : i1 to i32
    %c0_i32_9 = arith.constant 0 : i32
    %11 = arith.cmpi ne, %10, %c0_i32_9 : i32
    scf.if %11 {
      %c0_10 = arith.constant 0 : index
      %c0_11 = arith.constant 0 : index
      %12 = vector.load %arg8[%c0_10, %c0_11] : memref<48x128xf32, #tpu.memory_space<vmem>>, vector<48x128xf32>
      %c0_12 = arith.constant 0 : index
      %c0_13 = arith.constant 0 : index
      %13 = vector.load %arg5[%c0_12, %c0_13] : memref<1x128xf32, #tpu.memory_space<vmem>>, vector<1x128xf32>
      %14 = vector.broadcast %13 : vector<1x128xf32> to vector<48x128xf32>
      %15 = arith.addf %12, %14 : vector<48x128xf32>
      %c0_14 = arith.constant 0 : index
      %c0_15 = arith.constant 0 : index
      %16 = vector.load %arg6[%c0_14, %c0_15] : memref<48x128xf32, #tpu.memory_space<vmem>>, vector<48x128xf32>
      %17 = arith.addf %15, %16 : vector<48x128xf32>
      %c0_16 = arith.constant 0 : index
      %c0_17 = arith.constant 0 : index
      %18 = vector.load %arg7[%c0_16, %c0_17] : memref<48x128xf32, #tpu.memory_space<vmem>>, vector<48x128xf32>
      tpu.vector_store %arg7[%c0_16, %c0_17], %17 {strides = array<i32>} : memref<48x128xf32, #tpu.memory_space<vmem>>, vector<48x128xf32>,
    } else {
    }
    return
  }
  func.func @transform_0(%arg0: i32, %arg1: i32, %arg2: i32) -> (i32, i32) {
    %c0_i32 = arith.constant 0 : i32
    return %arg0, %arg2 : i32, i32
  }
  func.func @transform_1(%arg0: i32, %arg1: i32, %arg2: i32) -> (i32, i32) {
    %c0_i32 = arith.constant 0 : i32
    return %arg2, %arg1 : i32, i32
  }
  func.func @transform_2(%arg0: i32, %arg1: i32, %arg2: i32) -> (i32, i32) {
    %c0_i32 = arith.constant 0 : i32
    %c0_i32_0 = arith.constant 0 : i32
    return %c0_i32, %arg1 : i32, i32
  }
  func.func @transform_3(%arg0: i32, %arg1: i32, %arg2: i32) -> (i32, i32) {
    %c0_i32 = arith.constant 0 : i32
    return %arg0, %arg1 : i32, i32
  }
  func.func @transform_4(%arg0: i32, %arg1: i32, %arg2: i32) -> (i32, i32) {
    %c0_i32 = arith.constant 0 : i32
    return %arg0, %arg1 : i32, i32
  }
}

module attributes {stable_mosaic.version = 11 : i64} {
  func.func @kernel(%arg0: i32, %arg1: memref<16x32xf32, #tpu.memory_space<vmem>>, %arg2: memref<1x32xf32, #tpu.memory_space<vmem>>, %arg3: memref<1x32xf32, #tpu.memory_space<vmem>>, %arg4: memref<32x128xbf16, #tpu.memory_space<vmem>>, %arg5: memref<1x128xf32, #tpu.memory_space<vmem>>, %arg6: memref<16x128xf32, #tpu.memory_space<vmem>>) attributes {dimension_semantics = [#tpu.dimension_semantics<parallel>], iteration_bounds = array<i64: 1>, scalar_prefetch = 0 : i64, scratch_operands = 0 : i64, tpu.core_type = #tpu.core_type<tc>, window_params = [{transform_indices = @transform_0, window_bounds = array<i64: 16, 32>}, {pipeline_mode = #tpu.pipeline_mode<synchronous>, transform_indices = @transform_1, window_bounds = array<i64: 1, 32>}, {pipeline_mode = #tpu.pipeline_mode<synchronous>, transform_indices = @transform_2, window_bounds = array<i64: 1, 32>}, {pipeline_mode = #tpu.pipeline_mode<synchronous>, transform_indices = @transform_3, window_bounds = array<i64: 32, 128>}, {pipeline_mode = #tpu.pipeline_mode<synchronous>, transform_indices = @transform_4, window_bounds = array<i64: 1, 128>}, {transform_indices = @transform_5, window_bounds = array<i64: 16, 128>}]} {
    %c0 = arith.constant 0 : index
    %c0_0 = arith.constant 0 : index
    %0 = vector.load %arg1[%c0, %c0_0] : memref<16x32xf32, #tpu.memory_space<vmem>>, vector<16x32xf32>
    %cst = arith.constant dense<0.000000e+00> : vector<16xf32>
    %1 = vector.multi_reduction <add>, %0, %cst [1] : vector<16x32xf32> to vector<16xf32>
    %2 = vector.shape_cast %1 : vector<16xf32> to vector<16x1xf32>
    %cst_1 = arith.constant 3.200000e+01 : f32
    %3 = vector.broadcast %cst_1 : f32 to vector<16x1xf32>
    %4 = arith.divf %2, %3 : vector<16x1xf32>
    %5 = vector.broadcast %4 : vector<16x1xf32> to vector<16x32xf32>
    %6 = arith.subf %0, %5 : vector<16x32xf32>
    %7 = arith.mulf %6, %6 : vector<16x32xf32>
    %cst_2 = arith.constant dense<0.000000e+00> : vector<16xf32>
    %8 = vector.multi_reduction <add>, %7, %cst_2 [1] : vector<16x32xf32> to vector<16xf32>
    %9 = vector.shape_cast %8 : vector<16xf32> to vector<16x1xf32>
    %cst_3 = arith.constant 3.200000e+01 : f32
    %10 = vector.broadcast %cst_3 : f32 to vector<16x1xf32>
    %11 = arith.divf %9, %10 : vector<16x1xf32>
    %12 = vector.broadcast %4 : vector<16x1xf32> to vector<16x32xf32>
    %13 = arith.subf %0, %12 : vector<16x32xf32>
    %cst_4 = arith.constant 9.99999974E-6 : f32
    %14 = vector.broadcast %cst_4 : f32 to vector<16x1xf32>
    %15 = arith.addf %11, %14 : vector<16x1xf32>
    %16 = math.rsqrt %15 : vector<16x1xf32>
    %17 = vector.broadcast %16 : vector<16x1xf32> to vector<16x32xf32>
    %18 = arith.mulf %13, %17 : vector<16x32xf32>
    %c0_5 = arith.constant 0 : index
    %c0_6 = arith.constant 0 : index
    %19 = vector.load %arg2[%c0_5, %c0_6] : memref<1x32xf32, #tpu.memory_space<vmem>>, vector<1x32xf32>
    %20 = vector.broadcast %19 : vector<1x32xf32> to vector<16x32xf32>
    %21 = arith.mulf %18, %20 : vector<16x32xf32>
    %c0_7 = arith.constant 0 : index
    %c0_8 = arith.constant 0 : index
    %22 = vector.load %arg3[%c0_7, %c0_8] : memref<1x32xf32, #tpu.memory_space<vmem>>, vector<1x32xf32>
    %23 = vector.broadcast %22 : vector<1x32xf32> to vector<16x32xf32>
    %24 = arith.addf %21, %23 : vector<16x32xf32>
    %25 = arith.truncf %24 : vector<16x32xf32> to vector<16x32xbf16>
    %c0_9 = arith.constant 0 : index
    %c0_10 = arith.constant 0 : index
    %26 = vector.load %arg4[%c0_9, %c0_10] : memref<32x128xbf16, #tpu.memory_space<vmem>>, vector<32x128xbf16>
    %cst_11 = arith.constant dense<0.000000e+00> : vector<16x128xf32>
    %27 = tpu.matmul %25, %26, %cst_11 {dimension_numbers = #tpu.dot_dimension_numbers<[1], [0], [0], [1], [0, 0, 1, 1], [], []>} : vector<16x32xbf16>, vector<32x128xbf16>, vector<16x128xf32> -> vector<16x128xf32>
    %c0_12 = arith.constant 0 : index
    %c0_13 = arith.constant 0 : index
    %28 = vector.load %arg5[%c0_12, %c0_13] : memref<1x128xf32, #tpu.memory_space<vmem>>, vector<1x128xf32>
    %29 = vector.broadcast %28 : vector<1x128xf32> to vector<16x128xf32>
    %30 = arith.addf %27, %29 : vector<16x128xf32>
    %c0_14 = arith.constant 0 : index
    %c0_15 = arith.constant 0 : index
    %31 = vector.load %arg6[%c0_14, %c0_15] : memref<16x128xf32, #tpu.memory_space<vmem>>, vector<16x128xf32>
    tpu.vector_store %arg6[%c0_14, %c0_15], %30 {strides = array<i32>} : memref<16x128xf32, #tpu.memory_space<vmem>>, vector<16x128xf32>,
    return
  }
  func.func @transform_0(%arg0: i32) -> (i32, i32) {
    %c0_i32 = arith.constant 0 : i32
    %c0_i32_0 = arith.constant 0 : i32
    return %arg0, %c0_i32 : i32, i32
  }
  func.func @transform_1(%arg0: i32) -> (i32, i32) {
    %c0_i32 = arith.constant 0 : i32
    %c0_i32_0 = arith.constant 0 : i32
    %c0_i32_1 = arith.constant 0 : i32
    return %c0_i32, %c0_i32_0 : i32, i32
  }
  func.func @transform_2(%arg0: i32) -> (i32, i32) {
    %c0_i32 = arith.constant 0 : i32
    %c0_i32_0 = arith.constant 0 : i32
    %c0_i32_1 = arith.constant 0 : i32
    return %c0_i32, %c0_i32_0 : i32, i32
  }
  func.func @transform_3(%arg0: i32) -> (i32, i32) {
    %c0_i32 = arith.constant 0 : i32
    %c0_i32_0 = arith.constant 0 : i32
    %c0_i32_1 = arith.constant 0 : i32
    return %c0_i32, %c0_i32_0 : i32, i32
  }
  func.func @transform_4(%arg0: i32) -> (i32, i32) {
    %c0_i32 = arith.constant 0 : i32
    %c0_i32_0 = arith.constant 0 : i32
    %c0_i32_1 = arith.constant 0 : i32
    return %c0_i32, %c0_i32_0 : i32, i32
  }
  func.func @transform_5(%arg0: i32) -> (i32, i32) {
    %c0_i32 = arith.constant 0 : i32
    %c0_i32_0 = arith.constant 0 : i32
    return %arg0, %c0_i32 : i32, i32
  }
}

</mosaic_0001>

<llo_original>
// kernel: vit_forward.13
$region0: #{vit_forward.13}
  #allocation0 [shape = 'u32[]', space=smem, size = 0x4, offset = 0x4, fixed_abs, tag = 'smem constant byte address 0x4 - core index']
  #allocation1 [shape = 'u32[144,128]{1,0:T(1,128)}', space=vmem, size = 0x12000, scoped, tag = 'internal scratch']
  %s0 = inlined_call_operand.vmem [shape: f32[48,32], index: 0, kind: input, shape index: {}]
  %s1 = inlined_call_operand.vmem [shape: f32[1,32], index: 1, kind: input, shape index: {}]
  %s2 = inlined_call_operand.vmem [shape: f32[1,32], index: 2, kind: input, shape index: {}]
  %s3 = inlined_call_operand.vmem [shape: bf16[32,128], index: 3, kind: input, shape index: {}]
  %s4 = inlined_call_operand.vmem [shape: f32[1,128], index: 4, kind: input, shape index: {}]
  %s5 = inlined_call_operand.vmem [shape: bf16[48,128], index: 5, kind: output, shape index: {}]
  %s6 = sld [smem:[#allocation0]]
  $region30: #{vit_forward.13} parent=0
    _
  %s8 = ssub.s32 1, %s6
  %s9 = scalar_select 0, %s8, %s6
  // Predicated region
  $region2: #{vit_forward.13} parent=0 // pred_check
    _
  $region3: #{vit_forward.13} parent=0 // pred_check_branch
    %11 = sbr.rel (0) target = $region5
  $region4: #{vit_forward.13} parent=0 // pred_region
    _
  $region5: #{vit_forward.13} parent=0 // pred_fallthru
    _
  // Predicated region
  $region6: #{vit_forward.13} parent=0 // pred_check
    _
  $region7: #{vit_forward.13} parent=0 // pred_check_branch
    %13 = sbr.rel (0) target = $region9
  $region8: #{vit_forward.13} parent=0 // pred_region
    _
  $region9: #{vit_forward.13} parent=0 // pred_fallthru
    _
  // Predicated region
  $region10: #{vit_forward.13} parent=0 // pred_check
    _
  $region11: #{vit_forward.13} parent=0 // pred_check_branch
    %15 = sbr.rel (0) target = $region13
  $region12: #{vit_forward.13} parent=0 // pred_region
    _
  $region13: #{vit_forward.13} parent=0 // pred_fallthru
    _
  // Predicated region
  $region14: #{vit_forward.13} parent=0 // pred_check
    _
  $region15: #{vit_forward.13} parent=0 // pred_check_branch
    %17 = sbr.rel (0) target = $region17
  $region16: #{vit_forward.13} parent=0 // pred_region
    _
  $region17: #{vit_forward.13} parent=0 // pred_fallthru
    _
  // Predicated region
  $region18: #{vit_forward.13} parent=0 // pred_check
    _
  $region19: #{vit_forward.13} parent=0 // pred_check_branch
    %19 = sbr.rel (0) target = $region21
  $region20: #{vit_forward.13} parent=0 // pred_region
    _
  $region21: #{vit_forward.13} parent=0 // pred_fallthru
    _
  %v21 = vld [vmem:[%s0] sm:$0xff]
  %v22 = vld [vmem:[%s0 + $0x8] sm:$0xff]
  %v23 = vld [vmem:[%s0 + $0x10] sm:$0xff]
  %v24 = vld [vmem:[%s0 + $0x18] sm:$0xff]
  %v25 = vld [vmem:[%s0 + $0x20] sm:$0xff]
  %v26 = vld [vmem:[%s0 + $0x28] sm:$0xff]
  %vm27 = vcmask 261120
  %v28 = vsel %vm27, %v21, 0.0
  %29 = vadd.xlane.f32.xlu0 %v28
  %v30 = vpop.xlane.xlu0 %29
  %v31 = vsel %vm27, %v22, 0.0
  %32 = vadd.xlane.f32.xlu0 %v31
  %v33 = vpop.xlane.xlu0 %32
  %v34 = vsel %vm27, %v23, 0.0
  %35 = vadd.xlane.f32.xlu0 %v34
  %v36 = vpop.xlane.xlu0 %35
  %v37 = vsel %vm27, %v24, 0.0
  %38 = vadd.xlane.f32.xlu0 %v37
  %v39 = vpop.xlane.xlu0 %38
  %v40 = vsel %vm27, %v25, 0.0
  %41 = vadd.xlane.f32.xlu0 %v40
  %v42 = vpop.xlane.xlu0 %41
  %v43 = vsel %vm27, %v26, 0.0
  %44 = vadd.xlane.f32.xlu0 %v43
  %v45 = vpop.xlane.xlu0 %44
  %v46 = vrcp.pop 32.0
  %v47 = vmul.f32 %v30, %v46
  %v48 = vmul.f32 %v33, %v46
  %v49 = vmul.f32 %v36, %v46
  %v50 = vmul.f32 %v39, %v46
  %v51 = vmul.f32 %v42, %v46
  %v52 = vmul.f32 %v45, %v46
  %v53 = vsub.f32 %v21, %v47
  %v54 = vsub.f32 %v22, %v48
  %v55 = vsub.f32 %v23, %v49
  %v56 = vsub.f32 %v24, %v50
  %v57 = vsub.f32 %v25, %v51
  %v58 = vsub.f32 %v26, %v52
  %v59 = vmul.f32 %v53, %v53
  %v60 = vmul.f32 %v54, %v54
  %v61 = vmul.f32 %v55, %v55
  %v62 = vmul.f32 %v56, %v56
  %v63 = vmul.f32 %v57, %v57
  %v64 = vmul.f32 %v58, %v58
  %v65 = vsel %vm27, %v59, 0.0
  %66 = vadd.xlane.f32.xlu0 %v65
  %v67 = vpop.xlane.xlu0 %66
  %v68 = vsel %vm27, %v60, 0.0
  %69 = vadd.xlane.f32.xlu0 %v68
  %v70 = vpop.xlane.xlu0 %69
  %v71 = vsel %vm27, %v61, 0.0
  %72 = vadd.xlane.f32.xlu0 %v71
  %v73 = vpop.xlane.xlu0 %72
  %v74 = vsel %vm27, %v62, 0.0
  %75 = vadd.xlane.f32.xlu0 %v74
  %v76 = vpop.xlane.xlu0 %75
  %v77 = vsel %vm27, %v63, 0.0
  %78 = vadd.xlane.f32.xlu0 %v77
  %v79 = vpop.xlane.xlu0 %78
  %v80 = vsel %vm27, %v64, 0.0
  %81 = vadd.xlane.f32.xlu0 %v80
  %v82 = vpop.xlane.xlu0 %81
  %v83 = vmul.f32 %v67, %v46
  %v84 = vmul.f32 %v70, %v46
  %v85 = vmul.f32 %v73, %v46
  %v86 = vmul.f32 %v76, %v46
  %v87 = vmul.f32 %v79, %v46
  %v88 = vmul.f32 %v82, %v46
  %v89 = vadd.f32 %v83, 1e-05
  %v90 = vadd.f32 %v84, 1e-05
  %v91 = vadd.f32 %v85, 1e-05
  %v92 = vadd.f32 %v86, 1e-05
  %v93 = vadd.f32 %v87, 1e-05
  %v94 = vadd.f32 %v88, 1e-05
  %v95 = vrsqrt.pop %v89
  %v96 = vrsqrt.pop %v90
  %v97 = vrsqrt.pop %v91
  %v98 = vrsqrt.pop %v92
  %v99 = vrsqrt.pop %v93
  %v100 = vrsqrt.pop %v94
  %v101 = vmul.f32 %v53, %v95
  %v102 = vmul.f32 %v54, %v96
  %v103 = vmul.f32 %v55, %v97
  %v104 = vmul.f32 %v56, %v98
  %v105 = vmul.f32 %v57, %v99
  %v106 = vmul.f32 %v58, %v100
  %v107 = vld [vmem:[%s1] sm:$0x1]
  %v109 = vlaneseq
  %v110 = vshrl.u32 %v109, 7
  %v111 = vsub.s32 0, %v110
  %v112 = vrot.slane %v107, %v111
  %v114 = vmul.f32 %v101, %v112
  %v115 = vmul.f32 %v102, %v112
  %v116 = vmul.f32 %v103, %v112
  %v117 = vmul.f32 %v104, %v112
  %v118 = vmul.f32 %v105, %v112
  %v119 = vmul.f32 %v106, %v112
  %v120 = vld [vmem:[%s2] sm:$0x1]
  %v122 = vlaneseq
  %v123 = vshrl.u32 %v122, 7
  %v124 = vsub.s32 0, %v123
  %v125 = vrot.slane %v120, %v124
  %v127 = vadd.f32 %v114, %v125
  %v128 = vadd.f32 %v115, %v125
  %v129 = vadd.f32 %v116, %v125
  %v130 = vadd.f32 %v117, %v125
  %v131 = vadd.f32 %v118, %v125
  %v132 = vadd.f32 %v119, %v125
  %v133 = vpack.c.bf16 %v128, %v127
  %v134 = vpack.c.bf16 %v130, %v129
  %v135 = vpack.c.bf16 %v132, %v131
  %v136 = vld [vmem:[%s3] sm:$0xf]
  %v137 = vld [vmem:[%s3 + $0x4] sm:$0xf]
  %v138 = vld [vmem:[%s3 + $0x8] sm:$0xf]
  %v139 = vld [vmem:[%s3 + $0xc] sm:$0xf]
  %v140 = vld [vmem:[%s4] sm:$0x1]
  %v142 = vlaneseq
  %v143 = vshrl.u32 %v142, 7
  %v144 = vsub.s32 0, %v143
  %v145 = vrot.slane %v140, %v144
  %v151 = vunpack.c.l.b16 %v136
  %v152 = vunpack.c.l.b16 %v137
  %v153 = vunpack.c.l.b16 %v138
  %v154 = vunpack.c.l.b16 %v139
  %v155 = vpack.c.b16 %v152, %v151
  %v156 = vpack.c.b16 %v154, %v153
  %v160 = vsel %vm27, %v133, 0
  %v163 = vsel %vm27, %v134, 0
  %v166 = vsel %vm27, %v135, 0
  %168 = vmatprep.subr.bf16.mxu0 0
  %169 = vmatpush1.bf16.msra.mxu0 0
  %170 = vmatprep.subr.bf16.mxu0 0
  %171 = vmatpush1.bf16.msra.mxu0 0
  %172 = vmatprep.subr.bf16.mxu0 0
  %173 = vmatpush1.bf16.msra.mxu0 0
  %174 = vmatprep.subr.bf16.mxu0 0
  %175 = vmatpush1.bf16.msra.mxu0 0
  %176 = vmatprep.subr.bf16.mxu0 0
  %177 = vmatpush1.bf16.msra.mxu0 0
  %178 = vmatprep.subr.bf16.mxu0 0
  %179 = vmatpush1.bf16.msra.mxu0 0
  %180 = vmatprep.subr.bf16.mxu0 0
  %181 = vmatpush1.bf16.msra.mxu0 %v156
  %182 = vmatprep.subr.bf16.mxu0 0
  %183 = vmatpush1.bf16.msra.mxu0 %v155
  %184 = vmatprep.subr.bf16.mxu0 0
  %185 = vmatpush2.bf16.msra.mxu0 0
  %186 = vmatprep.subr.bf16.mxu0 0
  %187 = vmatpush2.bf16.msra.mxu0 0
  %188 = vmatprep.subr.bf16.mxu0 0
  %189 = vmatpush2.bf16.msra.mxu0 0
  %190 = vmatprep.subr.bf16.mxu0 0
  %191 = vmatpush2.bf16.msra.mxu0 0
  %192 = vmatprep.subr.bf16.mxu0 0
  %193 = vmatpush2.bf16.msra.mxu0 0
  %194 = vmatprep.subr.bf16.mxu0 0
  %195 = vmatpush2.bf16.msra.mxu0 0
  %196 = vmatprep.subr.bf16.mxu0 0
  %197 = vmatpush2.bf16.msra.mxu0 0
  %198 = vmatprep.subr.bf16.mxu0 0
  %199 = vmatpush2.bf16.msra.mxu0 0
  %200 = vmatprep.mubr.bf16.mxu0 0
  %201 = vmatmul.mubr.bf16.gmra.mxu0 %v160
  %v202 = vpop.f32.mrf.mxu0
  %v203 = vadd.f32 %v145, %v202
  %v204 = vpop.f32.mrf.mxu0
  %v205 = vpop.f32.mrf.mxu0
  %v206 = vadd.f32 %v145, %v205
  %v207 = vpop.f32.mrf.mxu0
  %208 = vmatprep.mubr.bf16.mxu0 0
  %209 = vmatmul.mubr.bf16.gmra.mxu0 %v163
  %v210 = vpop.f32.mrf.mxu0
  %v211 = vadd.f32 %v145, %v210
  %v212 = vpop.f32.mrf.mxu0
  %v213 = vpop.f32.mrf.mxu0
  %v214 = vadd.f32 %v145, %v213
  %v215 = vpop.f32.mrf.mxu0
  %216 = vmatprep.mubr.bf16.mxu0 0
  %217 = vmatmul.mubr.bf16.gmra.mxu0 %v166
  %v218 = vpop.f32.mrf.mxu0
  %v219 = vadd.f32 %v145, %v218
  %v220 = vpop.f32.mrf.mxu0
  %v221 = vpop.f32.mrf.mxu0
  %v222 = vadd.f32 %v145, %v221
  %v223 = vpop.f32.mrf.mxu0
  %224 = vdwg.mxu0
  %v225 = vpack.c.bf16 %v206, %v203
  %v226 = vpack.c.bf16 %v214, %v211
  %v227 = vpack.c.bf16 %v222, %v219
  %v231 = vunpack.c.l.b16 %v225
  %v232 = vunpack.c.h.b16 %v225
  %v233 = vunpack.c.l.b16 %v226
  %v234 = vunpack.c.h.b16 %v226
  %v235 = vunpack.c.l.b16 %v227
  %v236 = vunpack.c.h.b16 %v227
  %v237 = vpack.c.b16 %v231, %v231
  %v238 = vpack.c.b16 %v232, %v232
  %v239 = vpack.c.b16 %v233, %v233
  %v240 = vpack.c.b16 %v234, %v234
  %v241 = vpack.c.b16 %v235, %v235
  %v242 = vpack.c.b16 %v236, %v236
  %249 = vst [vmem:[%s5] sm:$0xf] %v237
  %250 = vst [vmem:[%s5 + $0x4] sm:$0xf] %v238
  %251 = vst [vmem:[%s5 + $0x8] sm:$0xf] %v239
  %252 = vst [vmem:[%s5 + $0xc] sm:$0xf] %v240
  %253 = vst [vmem:[%s5 + $0x10] sm:$0xf] %v241
  %254 = vst [vmem:[%s5 + $0x14] sm:$0xf] %v242
  // Predicated region
  $region22: #{vit_forward.13} parent=0 // pred_check
    _
  $region23: #{vit_forward.13} parent=0 // pred_check_branch
    %256 = sbr.rel (0) target = $region25
  $region24: #{vit_forward.13} parent=0 // pred_region
    _
  $region25: #{vit_forward.13} parent=0 // pred_fallthru
    _
  // Predicated region
  $region26: #{vit_forward.13} parent=0 // pred_check
    _
  $region27: #{vit_forward.13} parent=0 // pred_check_branch
    %258 = sbr.rel (0) target = $region29
  $region28: #{vit_forward.13} parent=0 // pred_region
    _
  $region29: #{vit_forward.13} parent=0 // pred_fallthru
    _

// kernel: vit_forward.12
$region0: #{vit_forward.12}
  #allocation0 [shape = 'u32[]', space=smem, size = 0x4, offset = 0x4, fixed_abs, tag = 'smem constant byte address 0x4 - core index']
  #allocation1 [shape = 'u32[144,128]{1,0:T(1,128)}', space=vmem, size = 0x12000, scoped, tag = 'internal scratch']
  #allocation2 [shape = 'f32[32,128]{1,0:T(8,128)}', space=vmem, size = 0x4000, scoped, tag = 'scratch operand']
  %s0 = inlined_call_operand.vmem [shape: bf16[32,64], index: 0, kind: input, shape index: {}]
  %s1 = inlined_call_operand.vmem [shape: bf16[64,128], index: 1, kind: input, shape index: {}]
  %s2 = inlined_call_operand.vmem [shape: f32[1,128], index: 2, kind: input, shape index: {}]
  %s3 = inlined_call_operand.vmem [shape: f32[32,128], index: 3, kind: output, shape index: {}]
  %s4 = sld [smem:[#allocation0]]
  $region30: #{vit_forward.12} parent=0
    _
  %s6 = ssub.s32 1, %s4
  %s7 = scalar_select 0, %s6, %s4
  // Predicated region
  $region2: #{vit_forward.12} parent=0 // pred_check
    _
  $region3: #{vit_forward.12} parent=0 // pred_check_branch
    %9 = sbr.rel (0) target = $region5
  $region4: #{vit_forward.12} parent=0 // pred_region
    _
  $region5: #{vit_forward.12} parent=0 // pred_fallthru
    _
  // Predicated region
  $region6: #{vit_forward.12} parent=0 // pred_check
    _
  $region7: #{vit_forward.12} parent=0 // pred_check_branch
    %11 = sbr.rel (0) target = $region9
  $region8: #{vit_forward.12} parent=0 // pred_region
    _
  $region9: #{vit_forward.12} parent=0 // pred_fallthru
    _
  // Predicated region
  $region10: #{vit_forward.12} parent=0 // pred_check
    _
  $region11: #{vit_forward.12} parent=0 // pred_check_branch
    %13 = sbr.rel (0) target = $region13
  $region12: #{vit_forward.12} parent=0 // pred_region
    _
  $region13: #{vit_forward.12} parent=0 // pred_fallthru
    _
  %p15 = scmp.eq.s32.totalorder 0, 0
  // Predicated region
  $region14: #{vit_forward.12} parent=0 // pred_check
    %p16 = pneg %p15
  $region15: #{vit_forward.12} parent=0 // pred_check_branch
    %18 = sbr.rel (%p16) target = $region17
  $region16: #{vit_forward.12} parent=0 // pred_region
    %19 = vst [vmem:[#allocation2] sm:$0xff] 0.0
    %20 = vst [vmem:[#allocation2 + $0x8] sm:$0xff] 0.0
    %21 = vst [vmem:[#allocation2 + $0x10] sm:$0xff] 0.0
    %22 = vst [vmem:[#allocation2 + $0x18] sm:$0xff] 0.0
  $region17: #{vit_forward.12} parent=0 // pred_fallthru
    _
  %v23 = vld [vmem:[#allocation2] sm:$0xff]
  %v24 = vld [vmem:[#allocation2 + $0x8] sm:$0xff]
  %v25 = vld [vmem:[#allocation2 + $0x10] sm:$0xff]
  %v26 = vld [vmem:[#allocation2 + $0x18] sm:$0xff]
  %v27 = vld [vmem:[%s0] sm:$0xf]
  %v28 = vld [vmem:[%s0 + $0x4] sm:$0xf]
  %v29 = vld [vmem:[%s0 + $0x8] sm:$0xf]
  %v30 = vld [vmem:[%s0 + $0xc] sm:$0xf]
  %v31 = vld [vmem:[%s1] sm:$0xf]
  %v32 = vld [vmem:[%s1 + $0x4] sm:$0xf]
  %v33 = vld [vmem:[%s1 + $0x8] sm:$0xf]
  %v34 = vld [vmem:[%s1 + $0xc] sm:$0xf]
  %v35 = vld [vmem:[%s1 + $0x10] sm:$0xf]
  %v36 = vld [vmem:[%s1 + $0x14] sm:$0xf]
  %v37 = vld [vmem:[%s1 + $0x18] sm:$0xf]
  %v38 = vld [vmem:[%s1 + $0x1c] sm:$0xf]
  %v43 = vunpack.c.l.b16 %v27
  %v44 = vunpack.c.l.b16 %v28
  %v45 = vunpack.c.l.b16 %v29
  %v46 = vunpack.c.l.b16 %v30
  %v47 = vpack.c.b16 %v44, %v43
  %v48 = vpack.c.b16 %v46, %v45
  %v57 = vunpack.c.l.b16 %v31
  %v58 = vunpack.c.l.b16 %v32
  %v59 = vunpack.c.l.b16 %v33
  %v60 = vunpack.c.l.b16 %v34
  %v61 = vunpack.c.l.b16 %v35
  %v62 = vunpack.c.l.b16 %v36
  %v63 = vunpack.c.l.b16 %v37
  %v64 = vunpack.c.l.b16 %v38
  %v65 = vpack.c.b16 %v58, %v57
  %v66 = vpack.c.b16 %v60, %v59
  %v67 = vpack.c.b16 %v62, %v61
  %v68 = vpack.c.b16 %v64, %v63
  %vm73 = vcmask 523264
  %v75 = vsel %vm73, %v47, 0
  %v78 = vsel %vm73, %v48, 0
  %80 = vmatprep.subr.bf16.mxu0 0
  %81 = vmatpush1.bf16.msra.mxu0 0
  %82 = vmatprep.subr.bf16.mxu0 0
  %83 = vmatpush1.bf16.msra.mxu0 0
  %84 = vmatprep.subr.bf16.mxu0 0
  %85 = vmatpush1.bf16.msra.mxu0 0
  %86 = vmatprep.subr.bf16.mxu0 0
  %87 = vmatpush1.bf16.msra.mxu0 0
  %88 = vmatprep.subr.bf16.mxu0 0
  %89 = vmatpush1.bf16.msra.mxu0 %v68
  %90 = vmatprep.subr.bf16.mxu0 0
  %91 = vmatpush1.bf16.msra.mxu0 %v67
  %92 = vmatprep.subr.bf16.mxu0 0
  %93 = vmatpush1.bf16.msra.mxu0 %v66
  %94 = vmatprep.subr.bf16.mxu0 0
  %95 = vmatpush1.bf16.msra.mxu0 %v65
  %96 = vmatprep.subr.bf16.mxu0 0
  %97 = vmatpush2.bf16.msra.mxu0 0
  %98 = vmatprep.subr.bf16.mxu0 0
  %99 = vmatpush2.bf16.msra.mxu0 0
  %100 = vmatprep.subr.bf16.mxu0 0
  %101 = vmatpush2.bf16.msra.mxu0 0
  %102 = vmatprep.subr.bf16.mxu0 0
  %103 = vmatpush2.bf16.msra.mxu0 0
  %104 = vmatprep.subr.bf16.mxu0 0
  %105 = vmatpush2.bf16.msra.mxu0 0
  %106 = vmatprep.subr.bf16.mxu0 0
  %107 = vmatpush2.bf16.msra.mxu0 0
  %108 = vmatprep.subr.bf16.mxu0 0
  %109 = vmatpush2.bf16.msra.mxu0 0
  %110 = vmatprep.subr.bf16.mxu0 0
  %111 = vmatpush2.bf16.msra.mxu0 0
  %112 = vmatprep.mubr.bf16.mxu0 0
  %113 = vmatmul.mubr.bf16.gmra.mxu0 %v75
  %v114 = vpop.f32.mrf.mxu0
  %v115 = vadd.f32 0.0, %v114
  %v116 = vpop.f32.mrf.mxu0
  %v117 = vpop.f32.mrf.mxu0
  %v118 = vadd.f32 0.0, %v117
  %v119 = vpop.f32.mrf.mxu0
  %120 = vmatprep.mubr.bf16.mxu0 0
  %121 = vmatmul.mubr.bf16.gmra.mxu0 %v78
  %v122 = vpop.f32.mrf.mxu0
  %v123 = vadd.f32 0.0, %v122
  %v124 = vpop.f32.mrf.mxu0
  %v125 = vpop.f32.mrf.mxu0
  %v126 = vadd.f32 0.0, %v125
  %v127 = vpop.f32.mrf.mxu0
  %128 = vdwg.mxu0
  %v129 = vadd.f32 %v23, %v115
  %v130 = vadd.f32 %v24, %v118
  %v131 = vadd.f32 %v25, %v123
  %v132 = vadd.f32 %v26, %v126
  %133 = vst [vmem:[#allocation2] sm:$0xff] %v129
  %134 = vst [vmem:[#allocation2 + $0x8] sm:$0xff] %v130
  %135 = vst [vmem:[#allocation2 + $0x10] sm:$0xff] %v131
  %136 = vst [vmem:[#allocation2 + $0x18] sm:$0xff] %v132
  // Predicated region
  $region18: #{vit_forward.12} parent=0 // pred_check
    %p137 = pneg %p15
  $region19: #{vit_forward.12} parent=0 // pred_check_branch
    %139 = sbr.rel (%p137) target = $region21
  $region20: #{vit_forward.12} parent=0 // pred_region
    %v140 = vld [vmem:[#allocation2] sm:$0xff]
    %v141 = vld [vmem:[#allocation2 + $0x8] sm:$0xff]
    %v142 = vld [vmem:[#allocation2 + $0x10] sm:$0xff]
    %v143 = vld [vmem:[#allocation2 + $0x18] sm:$0xff]
    %v144 = vld [vmem:[%s2] sm:$0x1]
    %v146 = vlaneseq
    %v147 = vshrl.u32 %v146, 7
    %v148 = vsub.s32 0, %v147
    %v149 = vrot.slane %v144, %v148
    %v151 = vadd.f32 %v140, %v149
    %v152 = vadd.f32 %v141, %v149
    %v153 = vadd.f32 %v142, %v149
    %v154 = vadd.f32 %v143, %v149
    %155 = vst [vmem:[%s3] sm:$0xff] %v151
    %156 = vst [vmem:[%s3 + $0x8] sm:$0xff] %v152
    %157 = vst [vmem:[%s3 + $0x10] sm:$0xff] %v153
    %158 = vst [vmem:[%s3 + $0x18] sm:$0xff] %v154
  $region21: #{vit_forward.12} parent=0 // pred_fallthru
    _
  // Predicated region
  $region22: #{vit_forward.12} parent=0 // pred_check
    _
  $region23: #{vit_forward.12} parent=0 // pred_check_branch
    %160 = sbr.rel (0) target = $region25
  $region24: #{vit_forward.12} parent=0 // pred_region
    _
  $region25: #{vit_forward.12} parent=0 // pred_fallthru
    _
  // Predicated region
  $region26: #{vit_forward.12} parent=0 // pred_check
    _
  $region27: #{vit_forward.12} parent=0 // pred_check_branch
    %162 = sbr.rel (0) target = $region29
  $region28: #{vit_forward.12} parent=0 // pred_region
    _
  $region29: #{vit_forward.12} parent=0 // pred_fallthru
    _

// kernel: vit_forward.15
$region0: #{vit_forward.15}
  #allocation0 [shape = 'u32[]', space=smem, size = 0x4, offset = 0x4, fixed_abs, tag = 'smem constant byte address 0x4 - core index']
  #allocation1 [shape = 'u32[144,128]{1,0:T(1,128)}', space=vmem, size = 0x12000, scoped, tag = 'internal scratch']
  #allocation2 [shape = 'f32[48,128]{1,0:T(8,128)}', space=vmem, size = 0x6000, scoped, tag = 'scratch operand']
  %s0 = inlined_call_operand.vmem [shape: bf16[48,32], index: 0, kind: input, shape index: {}]
  %s1 = inlined_call_operand.vmem [shape: bf16[32,128], index: 1, kind: input, shape index: {}]
  %s2 = inlined_call_operand.vmem [shape: f32[1,128], index: 2, kind: input, shape index: {}]
  %s3 = inlined_call_operand.vmem [shape: f32[48,128], index: 3, kind: input, shape index: {}]
  %s4 = inlined_call_operand.vmem [shape: f32[48,128], index: 4, kind: output, shape index: {}]
  %s5 = sld [smem:[#allocation0]]
  $region34: #{vit_forward.15} parent=0
    _
  %s7 = ssub.s32 1, %s5
  %s8 = scalar_select 0, %s7, %s5
  // Predicated region
  $region2: #{vit_forward.15} parent=0 // pred_check
    _
  $region3: #{vit_forward.15} parent=0 // pred_check_branch
    %10 = sbr.rel (0) target = $region5
  $region4: #{vit_forward.15} parent=0 // pred_region
    _
  $region5: #{vit_forward.15} parent=0 // pred_fallthru
    _
  // Predicated region
  $region6: #{vit_forward.15} parent=0 // pred_check
    _
  $region7: #{vit_forward.15} parent=0 // pred_check_branch
    %12 = sbr.rel (0) target = $region9
  $region8: #{vit_forward.15} parent=0 // pred_region
    _
  $region9: #{vit_forward.15} parent=0 // pred_fallthru
    _
  // Predicated region
  $region10: #{vit_forward.15} parent=0 // pred_check
    _
  $region11: #{vit_forward.15} parent=0 // pred_check_branch
    %14 = sbr.rel (0) target = $region13
  $region12: #{vit_forward.15} parent=0 // pred_region
    _
  $region13: #{vit_forward.15} parent=0 // pred_fallthru
    _
  // Predicated region
  $region14: #{vit_forward.15} parent=0 // pred_check
    _
  $region15: #{vit_forward.15} parent=0 // pred_check_branch
    %16 = sbr.rel (0) target = $region17
  $region16: #{vit_forward.15} parent=0 // pred_region
    _
  $region17: #{vit_forward.15} parent=0 // pred_fallthru
    _
  %p18 = scmp.eq.s32.totalorder 0, 0
  // Predicated region
  $region18: #{vit_forward.15} parent=0 // pred_check
    %p19 = pneg %p18
  $region19: #{vit_forward.15} parent=0 // pred_check_branch
    %21 = sbr.rel (%p19) target = $region21
  $region20: #{vit_forward.15} parent=0 // pred_region
    %22 = vst [vmem:[#allocation2] sm:$0xff] 0.0
    %23 = vst [vmem:[#allocation2 + $0x8] sm:$0xff] 0.0
    %24 = vst [vmem:[#allocation2 + $0x10] sm:$0xff] 0.0
    %25 = vst [vmem:[#allocation2 + $0x18] sm:$0xff] 0.0
    %26 = vst [vmem:[#allocation2 + $0x20] sm:$0xff] 0.0
    %27 = vst [vmem:[#allocation2 + $0x28] sm:$0xff] 0.0
  $region21: #{vit_forward.15} parent=0 // pred_fallthru
    _
  %v28 = vld [vmem:[#allocation2] sm:$0xff]
  %v29 = vld [vmem:[#allocation2 + $0x8] sm:$0xff]
  %v30 = vld [vmem:[#allocation2 + $0x10] sm:$0xff]
  %v31 = vld [vmem:[#allocation2 + $0x18] sm:$0xff]
  %v32 = vld [vmem:[#allocation2 + $0x20] sm:$0xff]
  %v33 = vld [vmem:[#allocation2 + $0x28] sm:$0xff]
  %v34 = vld [vmem:[%s0] sm:$0xf]
  %v35 = vld [vmem:[%s0 + $0x4] sm:$0xf]
  %v36 = vld [vmem:[%s0 + $0x8] sm:$0xf]
  %v37 = vld [vmem:[%s0 + $0xc] sm:$0xf]
  %v38 = vld [vmem:[%s0 + $0x10] sm:$0xf]
  %v39 = vld [vmem:[%s0 + $0x14] sm:$0xf]
  %v40 = vld [vmem:[%s1] sm:$0xf]
  %v41 = vld [vmem:[%s1 + $0x4] sm:$0xf]
  %v42 = vld [vmem:[%s1 + $0x8] sm:$0xf]
  %v43 = vld [vmem:[%s1 + $0xc] sm:$0xf]
  %v50 = vunpack.c.l.b16 %v34
  %v51 = vunpack.c.l.b16 %v35
  %v52 = vunpack.c.l.b16 %v36
  %v53 = vunpack.c.l.b16 %v37
  %v54 = vunpack.c.l.b16 %v38
  %v55 = vunpack.c.l.b16 %v39
  %v56 = vpack.c.b16 %v51, %v50
  %v57 = vpack.c.b16 %v53, %v52
  %v58 = vpack.c.b16 %v55, %v54
  %v63 = vunpack.c.l.b16 %v40
  %v64 = vunpack.c.l.b16 %v41
  %v65 = vunpack.c.l.b16 %v42
  %v66 = vunpack.c.l.b16 %v43
  %v67 = vpack.c.b16 %v64, %v63
  %v68 = vpack.c.b16 %v66, %v65
  %vm71 = vcmask 261120
  %v73 = vsel %vm71, %v56, 0
  %v76 = vsel %vm71, %v57, 0
  %v79 = vsel %vm71, %v58, 0
  %81 = vmatprep.subr.bf16.mxu0 0
  %82 = vmatpush1.bf16.msra.mxu0 0
  %83 = vmatprep.subr.bf16.mxu0 0
  %84 = vmatpush1.bf16.msra.mxu0 0
  %85 = vmatprep.subr.bf16.mxu0 0
  %86 = vmatpush1.bf16.msra.mxu0 0
  %87 = vmatprep.subr.bf16.mxu0 0
  %88 = vmatpush1.bf16.msra.mxu0 0
  %89 = vmatprep.subr.bf16.mxu0 0
  %90 = vmatpush1.bf16.msra.mxu0 0
  %91 = vmatprep.subr.bf16.mxu0 0
  %92 = vmatpush1.bf16.msra.mxu0 0
  %93 = vmatprep.subr.bf16.mxu0 0
  %94 = vmatpush1.bf16.msra.mxu0 %v68
  %95 = vmatprep.subr.bf16.mxu0 0
  %96 = vmatpush1.bf16.msra.mxu0 %v67
  %97 = vmatprep.subr.bf16.mxu0 0
  %98 = vmatpush2.bf16.msra.mxu0 0
  %99 = vmatprep.subr.bf16.mxu0 0
  %100 = vmatpush2.bf16.msra.mxu0 0
  %101 = vmatprep.subr.bf16.mxu0 0
  %102 = vmatpush2.bf16.msra.mxu0 0
  %103 = vmatprep.subr.bf16.mxu0 0
  %104 = vmatpush2.bf16.msra.mxu0 0
  %105 = vmatprep.subr.bf16.mxu0 0
  %106 = vmatpush2.bf16.msra.mxu0 0
  %107 = vmatprep.subr.bf16.mxu0 0
  %108 = vmatpush2.bf16.msra.mxu0 0
  %109 = vmatprep.subr.bf16.mxu0 0
  %110 = vmatpush2.bf16.msra.mxu0 0
  %111 = vmatprep.subr.bf16.mxu0 0
  %112 = vmatpush2.bf16.msra.mxu0 0
  %113 = vmatprep.mubr.bf16.mxu0 0
  %114 = vmatmul.mubr.bf16.gmra.mxu0 %v73
  %v115 = vpop.f32.mrf.mxu0
  %v116 = vadd.f32 0.0, %v115
  %v117 = vpop.f32.mrf.mxu0
  %v118 = vpop.f32.mrf.mxu0
  %v119 = vadd.f32 0.0, %v118
  %v120 = vpop.f32.mrf.mxu0
  %121 = vmatprep.mubr.bf16.mxu0 0
  %122 = vmatmul.mubr.bf16.gmra.mxu0 %v76
  %v123 = vpop.f32.mrf.mxu0
  %v124 = vadd.f32 0.0, %v123
  %v125 = vpop.f32.mrf.mxu0
  %v126 = vpop.f32.mrf.mxu0
  %v127 = vadd.f32 0.0, %v126
  %v128 = vpop.f32.mrf.mxu0
  %129 = vmatprep.mubr.bf16.mxu0 0
  %130 = vmatmul.mubr.bf16.gmra.mxu0 %v79
  %v131 = vpop.f32.mrf.mxu0
  %v132 = vadd.f32 0.0, %v131
  %v133 = vpop.f32.mrf.mxu0
  %v134 = vpop.f32.mrf.mxu0
  %v135 = vadd.f32 0.0, %v134
  %v136 = vpop.f32.mrf.mxu0
  %137 = vdwg.mxu0
  %v138 = vadd.f32 %v28, %v116
  %v139 = vadd.f32 %v29, %v119
  %v140 = vadd.f32 %v30, %v124
  %v141 = vadd.f32 %v31, %v127
  %v142 = vadd.f32 %v32, %v132
  %v143 = vadd.f32 %v33, %v135
  %144 = vst [vmem:[#allocation2] sm:$0xff] %v138
  %145 = vst [vmem:[#allocation2 + $0x8] sm:$0xff] %v139
  %146 = vst [vmem:[#allocation2 + $0x10] sm:$0xff] %v140
  %147 = vst [vmem:[#allocation2 + $0x18] sm:$0xff] %v141
  %148 = vst [vmem:[#allocation2 + $0x20] sm:$0xff] %v142
  %149 = vst [vmem:[#allocation2 + $0x28] sm:$0xff] %v143
  // Predicated region
  $region22: #{vit_forward.15} parent=0 // pred_check
    %p150 = pneg %p18
  $region23: #{vit_forward.15} parent=0 // pred_check_branch
    %152 = sbr.rel (%p150) target = $region25
  $region24: #{vit_forward.15} parent=0 // pred_region
    %v153 = vld [vmem:[#allocation2] sm:$0xff]
    %v154 = vld [vmem:[#allocation2 + $0x8] sm:$0xff]
    %v155 = vld [vmem:[#allocation2 + $0x10] sm:$0xff]
    %v156 = vld [vmem:[#allocation2 + $0x18] sm:$0xff]
    %v157 = vld [vmem:[#allocation2 + $0x20] sm:$0xff]
    %v158 = vld [vmem:[#allocation2 + $0x28] sm:$0xff]
    %v159 = vld [vmem:[%s2] sm:$0x1]
    %v161 = vlaneseq
    %v162 = vshrl.u32 %v161, 7
    %v163 = vsub.s32 0, %v162
    %v164 = vrot.slane %v159, %v163
    %v166 = vadd.f32 %v153, %v164
    %v167 = vadd.f32 %v154, %v164
    %v168 = vadd.f32 %v155, %v164
    %v169 = vadd.f32 %v156, %v164
    %v170 = vadd.f32 %v157, %v164
    %v171 = vadd.f32 %v158, %v164
    %v172 = vld [vmem:[%s3] sm:$0xff]
    %v173 = vld [vmem:[%s3 + $0x8] sm:$0xff]
    %v174 = vld [vmem:[%s3 + $0x10] sm:$0xff]
    %v175 = vld [vmem:[%s3 + $0x18] sm:$0xff]
    %v176 = vld [vmem:[%s3 + $0x20] sm:$0xff]
    %v177 = vld [vmem:[%s3 + $0x28] sm:$0xff]
    %v178 = vadd.f32 %v166, %v172
    %v179 = vadd.f32 %v167, %v173
    %v180 = vadd.f32 %v168, %v174
    %v181 = vadd.f32 %v169, %v175
    %v182 = vadd.f32 %v170, %v176
    %v183 = vadd.f32 %v171, %v177
    %184 = vst [vmem:[%s4] sm:$0xff] %v178
    %185 = vst [vmem:[%s4 + $0x8] sm:$0xff] %v179
    %186 = vst [vmem:[%s4 + $0x10] sm:$0xff] %v180
    %187 = vst [vmem:[%s4 + $0x18] sm:$0xff] %v181
    %188 = vst [vmem:[%s4 + $0x20] sm:$0xff] %v182
    %189 = vst [vmem:[%s4 + $0x28] sm:$0xff] %v183
  $region25: #{vit_forward.15} parent=0 // pred_fallthru
    _
  // Predicated region
  $region26: #{vit_forward.15} parent=0 // pred_check
    _
  $region27: #{vit_forward.15} parent=0 // pred_check_branch
    %191 = sbr.rel (0) target = $region29
  $region28: #{vit_forward.15} parent=0 // pred_region
    _
  $region29: #{vit_forward.15} parent=0 // pred_fallthru
    _
  // Predicated region
  $region30: #{vit_forward.15} parent=0 // pred_check
    _
  $region31: #{vit_forward.15} parent=0 // pred_check_branch
    %193 = sbr.rel (0) target = $region33
  $region32: #{vit_forward.15} parent=0 // pred_region
    _
  $region33: #{vit_forward.15} parent=0 // pred_fallthru
    _

// kernel: vit_forward.16
$region0: #{vit_forward.16}
  #allocation0 [shape = 'u32[]', space=smem, size = 0x4, offset = 0x4, fixed_abs, tag = 'smem constant byte address 0x4 - core index']
  #allocation1 [shape = 'u32[144,128]{1,0:T(1,128)}', space=vmem, size = 0x12000, scoped, tag = 'internal scratch']
  %s0 = inlined_call_operand.vmem [shape: f32[48,32], index: 0, kind: input, shape index: {}]
  %s1 = inlined_call_operand.vmem [shape: f32[1,32], index: 1, kind: input, shape index: {}]
  %s2 = inlined_call_operand.vmem [shape: f32[1,32], index: 2, kind: input, shape index: {}]
  %s3 = inlined_call_operand.vmem [shape: bf16[32,128], index: 3, kind: input, shape index: {}]
  %s4 = inlined_call_operand.vmem [shape: f32[1,128], index: 4, kind: input, shape index: {}]
  %s5 = inlined_call_operand.vmem [shape: bf16[48,128], index: 5, kind: output, shape index: {}]
  %s6 = sld [smem:[#allocation0]]
  $region30: #{vit_forward.16} parent=0
    _
  %s8 = ssub.s32 1, %s6
  %s9 = scalar_select 0, %s8, %s6
  // Predicated region
  $region2: #{vit_forward.16} parent=0 // pred_check
    _
  $region3: #{vit_forward.16} parent=0 // pred_check_branch
    %11 = sbr.rel (0) target = $region5
  $region4: #{vit_forward.16} parent=0 // pred_region
    _
  $region5: #{vit_forward.16} parent=0 // pred_fallthru
    _
  // Predicated region
  $region6: #{vit_forward.16} parent=0 // pred_check
    _
  $region7: #{vit_forward.16} parent=0 // pred_check_branch
    %13 = sbr.rel (0) target = $region9
  $region8: #{vit_forward.16} parent=0 // pred_region
    _
  $region9: #{vit_forward.16} parent=0 // pred_fallthru
    _
  // Predicated region
  $region10: #{vit_forward.16} parent=0 // pred_check
    _
  $region11: #{vit_forward.16} parent=0 // pred_check_branch
    %15 = sbr.rel (0) target = $region13
  $region12: #{vit_forward.16} parent=0 // pred_region
    _
  $region13: #{vit_forward.16} parent=0 // pred_fallthru
    _
  // Predicated region
  $region14: #{vit_forward.16} parent=0 // pred_check
    _
  $region15: #{vit_forward.16} parent=0 // pred_check_branch
    %17 = sbr.rel (0) target = $region17
  $region16: #{vit_forward.16} parent=0 // pred_region
    _
  $region17: #{vit_forward.16} parent=0 // pred_fallthru
    _
  // Predicated region
  $region18: #{vit_forward.16} parent=0 // pred_check
    _
  $region19: #{vit_forward.16} parent=0 // pred_check_branch
    %19 = sbr.rel (0) target = $region21
  $region20: #{vit_forward.16} parent=0 // pred_region
    _
  $region21: #{vit_forward.16} parent=0 // pred_fallthru
    _
  %v21 = vld [vmem:[%s0] sm:$0xff]
  %v22 = vld [vmem:[%s0 + $0x8] sm:$0xff]
  %v23 = vld [vmem:[%s0 + $0x10] sm:$0xff]
  %v24 = vld [vmem:[%s0 + $0x18] sm:$0xff]
  %v25 = vld [vmem:[%s0 + $0x20] sm:$0xff]
  %v26 = vld [vmem:[%s0 + $0x28] sm:$0xff]
  %vm27 = vcmask 261120
  %v28 = vsel %vm27, %v21, 0.0
  %29 = vadd.xlane.f32.xlu0 %v28
  %v30 = vpop.xlane.xlu0 %29
  %v31 = vsel %vm27, %v22, 0.0
  %32 = vadd.xlane.f32.xlu0 %v31
  %v33 = vpop.xlane.xlu0 %32
  %v34 = vsel %vm27, %v23, 0.0
  %35 = vadd.xlane.f32.xlu0 %v34
  %v36 = vpop.xlane.xlu0 %35
  %v37 = vsel %vm27, %v24, 0.0
  %38 = vadd.xlane.f32.xlu0 %v37
  %v39 = vpop.xlane.xlu0 %38
  %v40 = vsel %vm27, %v25, 0.0
  %41 = vadd.xlane.f32.xlu0 %v40
  %v42 = vpop.xlane.xlu0 %41
  %v43 = vsel %vm27, %v26, 0.0
  %44 = vadd.xlane.f32.xlu0 %v43
  %v45 = vpop.xlane.xlu0 %44
  %v46 = vrcp.pop 32.0
  %v47 = vmul.f32 %v30, %v46
  %v48 = vmul.f32 %v33, %v46
  %v49 = vmul.f32 %v36, %v46
  %v50 = vmul.f32 %v39, %v46
  %v51 = vmul.f32 %v42, %v46
  %v52 = vmul.f32 %v45, %v46
  %v53 = vsub.f32 %v21, %v47
  %v54 = vsub.f32 %v22, %v48
  %v55 = vsub.f32 %v23, %v49
  %v56 = vsub.f32 %v24, %v50
  %v57 = vsub.f32 %v25, %v51
  %v58 = vsub.f32 %v26, %v52
  %v59 = vmul.f32 %v53, %v53
  %v60 = vmul.f32 %v54, %v54
  %v61 = vmul.f32 %v55, %v55
  %v62 = vmul.f32 %v56, %v56
  %v63 = vmul.f32 %v57, %v57
  %v64 = vmul.f32 %v58, %v58
  %v65 = vsel %vm27, %v59, 0.0
  %66 = vadd.xlane.f32.xlu0 %v65
  %v67 = vpop.xlane.xlu0 %66
  %v68 = vsel %vm27, %v60, 0.0
  %69 = vadd.xlane.f32.xlu0 %v68
  %v70 = vpop.xlane.xlu0 %69
  %v71 = vsel %vm27, %v61, 0.0
  %72 = vadd.xlane.f32.xlu0 %v71
  %v73 = vpop.xlane.xlu0 %72
  %v74 = vsel %vm27, %v62, 0.0
  %75 = vadd.xlane.f32.xlu0 %v74
  %v76 = vpop.xlane.xlu0 %75
  %v77 = vsel %vm27, %v63, 0.0
  %78 = vadd.xlane.f32.xlu0 %v77
  %v79 = vpop.xlane.xlu0 %78
  %v80 = vsel %vm27, %v64, 0.0
  %81 = vadd.xlane.f32.xlu0 %v80
  %v82 = vpop.xlane.xlu0 %81
  %v83 = vmul.f32 %v67, %v46
  %v84 = vmul.f32 %v70, %v46
  %v85 = vmul.f32 %v73, %v46
  %v86 = vmul.f32 %v76, %v46
  %v87 = vmul.f32 %v79, %v46
  %v88 = vmul.f32 %v82, %v46
  %v89 = vadd.f32 %v83, 1e-05
  %v90 = vadd.f32 %v84, 1e-05
  %v91 = vadd.f32 %v85, 1e-05
  %v92 = vadd.f32 %v86, 1e-05
  %v93 = vadd.f32 %v87, 1e-05
  %v94 = vadd.f32 %v88, 1e-05
  %v95 = vrsqrt.pop %v89
  %v96 = vrsqrt.pop %v90
  %v97 = vrsqrt.pop %v91
  %v98 = vrsqrt.pop %v92
  %v99 = vrsqrt.pop %v93
  %v100 = vrsqrt.pop %v94
  %v101 = vmul.f32 %v53, %v95
  %v102 = vmul.f32 %v54, %v96
  %v103 = vmul.f32 %v55, %v97
  %v104 = vmul.f32 %v56, %v98
  %v105 = vmul.f32 %v57, %v99
  %v106 = vmul.f32 %v58, %v100
  %v107 = vld [vmem:[%s1] sm:$0x1]
  %v109 = vlaneseq
  %v110 = vshrl.u32 %v109, 7
  %v111 = vsub.s32 0, %v110
  %v112 = vrot.slane %v107, %v111
  %v114 = vmul.f32 %v101, %v112
  %v115 = vmul.f32 %v102, %v112
  %v116 = vmul.f32 %v103, %v112
  %v117 = vmul.f32 %v104, %v112
  %v118 = vmul.f32 %v105, %v112
  %v119 = vmul.f32 %v106, %v112
  %v120 = vld [vmem:[%s2] sm:$0x1]
  %v122 = vlaneseq
  %v123 = vshrl.u32 %v122, 7
  %v124 = vsub.s32 0, %v123
  %v125 = vrot.slane %v120, %v124
  %v127 = vadd.f32 %v114, %v125
  %v128 = vadd.f32 %v115, %v125
  %v129 = vadd.f32 %v116, %v125
  %v130 = vadd.f32 %v117, %v125
  %v131 = vadd.f32 %v118, %v125
  %v132 = vadd.f32 %v119, %v125
  %v133 = vpack.c.bf16 %v128, %v127
  %v134 = vpack.c.bf16 %v130, %v129
  %v135 = vpack.c.bf16 %v132, %v131
  %v136 = vld [vmem:[%s3] sm:$0xf]
  %v137 = vld [vmem:[%s3 + $0x4] sm:$0xf]
  %v138 = vld [vmem:[%s3 + $0x8] sm:$0xf]
  %v139 = vld [vmem:[%s3 + $0xc] sm:$0xf]
  %v140 = vld [vmem:[%s4] sm:$0x1]
  %v142 = vlaneseq
  %v143 = vshrl.u32 %v142, 7
  %v144 = vsub.s32 0, %v143
  %v145 = vrot.slane %v140, %v144
  %v151 = vunpack.c.l.b16 %v136
  %v152 = vunpack.c.l.b16 %v137
  %v153 = vunpack.c.l.b16 %v138
  %v154 = vunpack.c.l.b16 %v139
  %v155 = vpack.c.b16 %v152, %v151
  %v156 = vpack.c.b16 %v154, %v153
  %v160 = vsel %vm27, %v133, 0
  %v163 = vsel %vm27, %v134, 0
  %v166 = vsel %vm27, %v135, 0
  %168 = vmatprep.subr.bf16.mxu0 0
  %169 = vmatpush1.bf16.msra.mxu0 0
  %170 = vmatprep.subr.bf16.mxu0 0
  %171 = vmatpush1.bf16.msra.mxu0 0
  %172 = vmatprep.subr.bf16.mxu0 0
  %173 = vmatpush1.bf16.msra.mxu0 0
  %174 = vmatprep.subr.bf16.mxu0 0
  %175 = vmatpush1.bf16.msra.mxu0 0
  %176 = vmatprep.subr.bf16.mxu0 0
  %177 = vmatpush1.bf16.msra.mxu0 0
  %178 = vmatprep.subr.bf16.mxu0 0
  %179 = vmatpush1.bf16.msra.mxu0 0
  %180 = vmatprep.subr.bf16.mxu0 0
  %181 = vmatpush1.bf16.msra.mxu0 %v156
  %182 = vmatprep.subr.bf16.mxu0 0
  %183 = vmatpush1.bf16.msra.mxu0 %v155
  %184 = vmatprep.subr.bf16.mxu0 0
  %185 = vmatpush2.bf16.msra.mxu0 0
  %186 = vmatprep.subr.bf16.mxu0 0
  %187 = vmatpush2.bf16.msra.mxu0 0
  %188 = vmatprep.subr.bf16.mxu0 0
  %189 = vmatpush2.bf16.msra.mxu0 0
  %190 = vmatprep.subr.bf16.mxu0 0
  %191 = vmatpush2.bf16.msra.mxu0 0
  %192 = vmatprep.subr.bf16.mxu0 0
  %193 = vmatpush2.bf16.msra.mxu0 0
  %194 = vmatprep.subr.bf16.mxu0 0
  %195 = vmatpush2.bf16.msra.mxu0 0
  %196 = vmatprep.subr.bf16.mxu0 0
  %197 = vmatpush2.bf16.msra.mxu0 0
  %198 = vmatprep.subr.bf16.mxu0 0
  %199 = vmatpush2.bf16.msra.mxu0 0
  %200 = vmatprep.mubr.bf16.mxu0 0
  %201 = vmatmul.mubr.bf16.gmra.mxu0 %v160
  %v202 = vpop.f32.mrf.mxu0
  %v203 = vadd.f32 %v145, %v202
  %v204 = vpop.f32.mrf.mxu0
  %v205 = vpop.f32.mrf.mxu0
  %v206 = vadd.f32 %v145, %v205
  %v207 = vpop.f32.mrf.mxu0
  %208 = vmatprep.mubr.bf16.mxu0 0
  %209 = vmatmul.mubr.bf16.gmra.mxu0 %v163
  %v210 = vpop.f32.mrf.mxu0
  %v211 = vadd.f32 %v145, %v210
  %v212 = vpop.f32.mrf.mxu0
  %v213 = vpop.f32.mrf.mxu0
  %v214 = vadd.f32 %v145, %v213
  %v215 = vpop.f32.mrf.mxu0
  %216 = vmatprep.mubr.bf16.mxu0 0
  %217 = vmatmul.mubr.bf16.gmra.mxu0 %v166
  %v218 = vpop.f32.mrf.mxu0
  %v219 = vadd.f32 %v145, %v218
  %v220 = vpop.f32.mrf.mxu0
  %v221 = vpop.f32.mrf.mxu0
  %v222 = vadd.f32 %v145, %v221
  %v223 = vpop.f32.mrf.mxu0
  %224 = vdwg.mxu0
  %v225 = vmax.f32 %v203, 0.0
  %v226 = vmax.f32 %v206, 0.0
  %v227 = vmax.f32 %v211, 0.0
  %v228 = vmax.f32 %v214, 0.0
  %v229 = vmax.f32 %v219, 0.0
  %v230 = vmax.f32 %v222, 0.0
  %v231 = vpack.c.bf16 %v226, %v225
  %v232 = vpack.c.bf16 %v228, %v227
  %v233 = vpack.c.bf16 %v230, %v229
  %v237 = vunpack.c.l.b16 %v231
  %v238 = vunpack.c.h.b16 %v231
  %v239 = vunpack.c.l.b16 %v232
  %v240 = vunpack.c.h.b16 %v232
  %v241 = vunpack.c.l.b16 %v233
  %v242 = vunpack.c.h.b16 %v233
  %v243 = vpack.c.b16 %v237, %v237
  %v244 = vpack.c.b16 %v238, %v238
  %v245 = vpack.c.b16 %v239, %v239
  %v246 = vpack.c.b16 %v240, %v240
  %v247 = vpack.c.b16 %v241, %v241
  %v248 = vpack.c.b16 %v242, %v242
  %255 = vst [vmem:[%s5] sm:$0xf] %v243
  %256 = vst [vmem:[%s5 + $0x4] sm:$0xf] %v244
  %257 = vst [vmem:[%s5 + $0x8] sm:$0xf] %v245
  %258 = vst [vmem:[%s5 + $0xc] sm:$0xf] %v246
  %259 = vst [vmem:[%s5 + $0x10] sm:$0xf] %v247
  %260 = vst [vmem:[%s5 + $0x14] sm:$0xf] %v248
  // Predicated region
  $region22: #{vit_forward.16} parent=0 // pred_check
    _
  $region23: #{vit_forward.16} parent=0 // pred_check_branch
    %262 = sbr.rel (0) target = $region25
  $region24: #{vit_forward.16} parent=0 // pred_region
    _
  $region25: #{vit_forward.16} parent=0 // pred_fallthru
    _
  // Predicated region
  $region26: #{vit_forward.16} parent=0 // pred_check
    _
  $region27: #{vit_forward.16} parent=0 // pred_check_branch
    %264 = sbr.rel (0) target = $region29
  $region28: #{vit_forward.16} parent=0 // pred_region
    _
  $region29: #{vit_forward.16} parent=0 // pred_fallthru
    _

// kernel: vit_forward.17
$region0: #{vit_forward.17}
  #allocation0 [shape = 'u32[]', space=smem, size = 0x4, offset = 0x4, fixed_abs, tag = 'smem constant byte address 0x4 - core index']
  #allocation1 [shape = 'u32[144,128]{1,0:T(1,128)}', space=vmem, size = 0x12000, scoped, tag = 'internal scratch']
  #allocation2 [shape = 'f32[48,128]{1,0:T(8,128)}', space=vmem, size = 0x6000, scoped, tag = 'scratch operand']
  %s0 = inlined_call_operand.vmem [shape: bf16[48,64], index: 0, kind: input, shape index: {}]
  %s1 = inlined_call_operand.vmem [shape: bf16[64,128], index: 1, kind: input, shape index: {}]
  %s2 = inlined_call_operand.vmem [shape: f32[1,128], index: 2, kind: input, shape index: {}]
  %s3 = inlined_call_operand.vmem [shape: f32[48,128], index: 3, kind: input, shape index: {}]
  %s4 = inlined_call_operand.vmem [shape: f32[48,128], index: 4, kind: output, shape index: {}]
  %s5 = sld [smem:[#allocation0]]
  $region34: #{vit_forward.17} parent=0
    _
  %s7 = ssub.s32 1, %s5
  %s8 = scalar_select 0, %s7, %s5
  // Predicated region
  $region2: #{vit_forward.17} parent=0 // pred_check
    _
  $region3: #{vit_forward.17} parent=0 // pred_check_branch
    %10 = sbr.rel (0) target = $region5
  $region4: #{vit_forward.17} parent=0 // pred_region
    _
  $region5: #{vit_forward.17} parent=0 // pred_fallthru
    _
  // Predicated region
  $region6: #{vit_forward.17} parent=0 // pred_check
    _
  $region7: #{vit_forward.17} parent=0 // pred_check_branch
    %12 = sbr.rel (0) target = $region9
  $region8: #{vit_forward.17} parent=0 // pred_region
    _
  $region9: #{vit_forward.17} parent=0 // pred_fallthru
    _
  // Predicated region
  $region10: #{vit_forward.17} parent=0 // pred_check
    _
  $region11: #{vit_forward.17} parent=0 // pred_check_branch
    %14 = sbr.rel (0) target = $region13
  $region12: #{vit_forward.17} parent=0 // pred_region
    _
  $region13: #{vit_forward.17} parent=0 // pred_fallthru
    _
  // Predicated region
  $region14: #{vit_forward.17} parent=0 // pred_check
    _
  $region15: #{vit_forward.17} parent=0 // pred_check_branch
    %16 = sbr.rel (0) target = $region17
  $region16: #{vit_forward.17} parent=0 // pred_region
    _
  $region17: #{vit_forward.17} parent=0 // pred_fallthru
    _
  %p18 = scmp.eq.s32.totalorder 0, 0
  // Predicated region
  $region18: #{vit_forward.17} parent=0 // pred_check
    %p19 = pneg %p18
  $region19: #{vit_forward.17} parent=0 // pred_check_branch
    %21 = sbr.rel (%p19) target = $region21
  $region20: #{vit_forward.17} parent=0 // pred_region
    %22 = vst [vmem:[#allocation2] sm:$0xff] 0.0
    %23 = vst [vmem:[#allocation2 + $0x8] sm:$0xff] 0.0
    %24 = vst [vmem:[#allocation2 + $0x10] sm:$0xff] 0.0
    %25 = vst [vmem:[#allocation2 + $0x18] sm:$0xff] 0.0
    %26 = vst [vmem:[#allocation2 + $0x20] sm:$0xff] 0.0
    %27 = vst [vmem:[#allocation2 + $0x28] sm:$0xff] 0.0
  $region21: #{vit_forward.17} parent=0 // pred_fallthru
    _
  %v28 = vld [vmem:[#allocation2] sm:$0xff]
  %v29 = vld [vmem:[#allocation2 + $0x8] sm:$0xff]
  %v30 = vld [vmem:[#allocation2 + $0x10] sm:$0xff]
  %v31 = vld [vmem:[#allocation2 + $0x18] sm:$0xff]
  %v32 = vld [vmem:[#allocation2 + $0x20] sm:$0xff]
  %v33 = vld [vmem:[#allocation2 + $0x28] sm:$0xff]
  %v34 = vld [vmem:[%s0] sm:$0xf]
  %v35 = vld [vmem:[%s0 + $0x4] sm:$0xf]
  %v36 = vld [vmem:[%s0 + $0x8] sm:$0xf]
  %v37 = vld [vmem:[%s0 + $0xc] sm:$0xf]
  %v38 = vld [vmem:[%s0 + $0x10] sm:$0xf]
  %v39 = vld [vmem:[%s0 + $0x14] sm:$0xf]
  %v40 = vld [vmem:[%s1] sm:$0xf]
  %v41 = vld [vmem:[%s1 + $0x4] sm:$0xf]
  %v42 = vld [vmem:[%s1 + $0x8] sm:$0xf]
  %v43 = vld [vmem:[%s1 + $0xc] sm:$0xf]
  %v44 = vld [vmem:[%s1 + $0x10] sm:$0xf]
  %v45 = vld [vmem:[%s1 + $0x14] sm:$0xf]
  %v46 = vld [vmem:[%s1 + $0x18] sm:$0xf]
  %v47 = vld [vmem:[%s1 + $0x1c] sm:$0xf]
  %v54 = vunpack.c.l.b16 %v34
  %v55 = vunpack.c.l.b16 %v35
  %v56 = vunpack.c.l.b16 %v36
  %v57 = vunpack.c.l.b16 %v37
  %v58 = vunpack.c.l.b16 %v38
  %v59 = vunpack.c.l.b16 %v39
  %v60 = vpack.c.b16 %v55, %v54
  %v61 = vpack.c.b16 %v57, %v56
  %v62 = vpack.c.b16 %v59, %v58
  %v71 = vunpack.c.l.b16 %v40
  %v72 = vunpack.c.l.b16 %v41
  %v73 = vunpack.c.l.b16 %v42
  %v74 = vunpack.c.l.b16 %v43
  %v75 = vunpack.c.l.b16 %v44
  %v76 = vunpack.c.l.b16 %v45
  %v77 = vunpack.c.l.b16 %v46
  %v78 = vunpack.c.l.b16 %v47
  %v79 = vpack.c.b16 %v72, %v71
  %v80 = vpack.c.b16 %v74, %v73
  %v81 = vpack.c.b16 %v76, %v75
  %v82 = vpack.c.b16 %v78, %v77
  %vm87 = vcmask 523264
  %v89 = vsel %vm87, %v60, 0
  %v92 = vsel %vm87, %v61, 0
  %v95 = vsel %vm87, %v62, 0
  %97 = vmatprep.subr.bf16.mxu0 0
  %98 = vmatpush1.bf16.msra.mxu0 0
  %99 = vmatprep.subr.bf16.mxu0 0
  %100 = vmatpush1.bf16.msra.mxu0 0
  %101 = vmatprep.subr.bf16.mxu0 0
  %102 = vmatpush1.bf16.msra.mxu0 0
  %103 = vmatprep.subr.bf16.mxu0 0
  %104 = vmatpush1.bf16.msra.mxu0 0
  %105 = vmatprep.subr.bf16.mxu0 0
  %106 = vmatpush1.bf16.msra.mxu0 %v82
  %107 = vmatprep.subr.bf16.mxu0 0
  %108 = vmatpush1.bf16.msra.mxu0 %v81
  %109 = vmatprep.subr.bf16.mxu0 0
  %110 = vmatpush1.bf16.msra.mxu0 %v80
  %111 = vmatprep.subr.bf16.mxu0 0
  %112 = vmatpush1.bf16.msra.mxu0 %v79
  %113 = vmatprep.subr.bf16.mxu0 0
  %114 = vmatpush2.bf16.msra.mxu0 0
  %115 = vmatprep.subr.bf16.mxu0 0
  %116 = vmatpush2.bf16.msra.mxu0 0
  %117 = vmatprep.subr.bf16.mxu0 0
  %118 = vmatpush2.bf16.msra.mxu0 0
  %119 = vmatprep.subr.bf16.mxu0 0
  %120 = vmatpush2.bf16.msra.mxu0 0
  %121 = vmatprep.subr.bf16.mxu0 0
  %122 = vmatpush2.bf16.msra.mxu0 0
  %123 = vmatprep.subr.bf16.mxu0 0
  %124 = vmatpush2.bf16.msra.mxu0 0
  %125 = vmatprep.subr.bf16.mxu0 0
  %126 = vmatpush2.bf16.msra.mxu0 0
  %127 = vmatprep.subr.bf16.mxu0 0
  %128 = vmatpush2.bf16.msra.mxu0 0
  %129 = vmatprep.mubr.bf16.mxu0 0
  %130 = vmatmul.mubr.bf16.gmra.mxu0 %v89
  %v131 = vpop.f32.mrf.mxu0
  %v132 = vadd.f32 0.0, %v131
  %v133 = vpop.f32.mrf.mxu0
  %v134 = vpop.f32.mrf.mxu0
  %v135 = vadd.f32 0.0, %v134
  %v136 = vpop.f32.mrf.mxu0
  %137 = vmatprep.mubr.bf16.mxu0 0
  %138 = vmatmul.mubr.bf16.gmra.mxu0 %v92
  %v139 = vpop.f32.mrf.mxu0
  %v140 = vadd.f32 0.0, %v139
  %v141 = vpop.f32.mrf.mxu0
  %v142 = vpop.f32.mrf.mxu0
  %v143 = vadd.f32 0.0, %v142
  %v144 = vpop.f32.mrf.mxu0
  %145 = vmatprep.mubr.bf16.mxu0 0
  %146 = vmatmul.mubr.bf16.gmra.mxu0 %v95
  %v147 = vpop.f32.mrf.mxu0
  %v148 = vadd.f32 0.0, %v147
  %v149 = vpop.f32.mrf.mxu0
  %v150 = vpop.f32.mrf.mxu0
  %v151 = vadd.f32 0.0, %v150
  %v152 = vpop.f32.mrf.mxu0
  %153 = vdwg.mxu0
  %v154 = vadd.f32 %v28, %v132
  %v155 = vadd.f32 %v29, %v135
  %v156 = vadd.f32 %v30, %v140
  %v157 = vadd.f32 %v31, %v143
  %v158 = vadd.f32 %v32, %v148
  %v159 = vadd.f32 %v33, %v151
  %160 = vst [vmem:[#allocation2] sm:$0xff] %v154
  %161 = vst [vmem:[#allocation2 + $0x8] sm:$0xff] %v155
  %162 = vst [vmem:[#allocation2 + $0x10] sm:$0xff] %v156
  %163 = vst [vmem:[#allocation2 + $0x18] sm:$0xff] %v157
  %164 = vst [vmem:[#allocation2 + $0x20] sm:$0xff] %v158
  %165 = vst [vmem:[#allocation2 + $0x28] sm:$0xff] %v159
  // Predicated region
  $region22: #{vit_forward.17} parent=0 // pred_check
    %p166 = pneg %p18
  $region23: #{vit_forward.17} parent=0 // pred_check_branch
    %168 = sbr.rel (%p166) target = $region25
  $region24: #{vit_forward.17} parent=0 // pred_region
    %v169 = vld [vmem:[#allocation2] sm:$0xff]
    %v170 = vld [vmem:[#allocation2 + $0x8] sm:$0xff]
    %v171 = vld [vmem:[#allocation2 + $0x10] sm:$0xff]
    %v172 = vld [vmem:[#allocation2 + $0x18] sm:$0xff]
    %v173 = vld [vmem:[#allocation2 + $0x20] sm:$0xff]
    %v174 = vld [vmem:[#allocation2 + $0x28] sm:$0xff]
    %v175 = vld [vmem:[%s2] sm:$0x1]
    %v177 = vlaneseq
    %v178 = vshrl.u32 %v177, 7
    %v179 = vsub.s32 0, %v178
    %v180 = vrot.slane %v175, %v179
    %v182 = vadd.f32 %v169, %v180
    %v183 = vadd.f32 %v170, %v180
    %v184 = vadd.f32 %v171, %v180
    %v185 = vadd.f32 %v172, %v180
    %v186 = vadd.f32 %v173, %v180
    %v187 = vadd.f32 %v174, %v180
    %v188 = vld [vmem:[%s3] sm:$0xff]
    %v189 = vld [vmem:[%s3 + $0x8] sm:$0xff]
    %v190 = vld [vmem:[%s3 + $0x10] sm:$0xff]
    %v191 = vld [vmem:[%s3 + $0x18] sm:$0xff]
    %v192 = vld [vmem:[%s3 + $0x20] sm:$0xff]
    %v193 = vld [vmem:[%s3 + $0x28] sm:$0xff]
    %v194 = vadd.f32 %v182, %v188
    %v195 = vadd.f32 %v183, %v189
    %v196 = vadd.f32 %v184, %v190
    %v197 = vadd.f32 %v185, %v191
    %v198 = vadd.f32 %v186, %v192
    %v199 = vadd.f32 %v187, %v193
    %200 = vst [vmem:[%s4] sm:$0xff] %v194
    %201 = vst [vmem:[%s4 + $0x8] sm:$0xff] %v195
    %202 = vst [vmem:[%s4 + $0x10] sm:$0xff] %v196
    %203 = vst [vmem:[%s4 + $0x18] sm:$0xff] %v197
    %204 = vst [vmem:[%s4 + $0x20] sm:$0xff] %v198
    %205 = vst [vmem:[%s4 + $0x28] sm:$0xff] %v199
  $region25: #{vit_forward.17} parent=0 // pred_fallthru
    _
  // Predicated region
  $region26: #{vit_forward.17} parent=0 // pred_check
    _
  $region27: #{vit_forward.17} parent=0 // pred_check_branch
    %207 = sbr.rel (0) target = $region29
  $region28: #{vit_forward.17} parent=0 // pred_region
    _
  $region29: #{vit_forward.17} parent=0 // pred_fallthru
    _
  // Predicated region
  $region30: #{vit_forward.17} parent=0 // pred_check
    _
  $region31: #{vit_forward.17} parent=0 // pred_check_branch
    %209 = sbr.rel (0) target = $region33
  $region32: #{vit_forward.17} parent=0 // pred_region
    _
  $region33: #{vit_forward.17} parent=0 // pred_fallthru
    _

// kernel: vit_forward.23
$region0: #{vit_forward.23}
  #allocation0 [shape = 'u32[]', space=smem, size = 0x4, offset = 0x4, fixed_abs, tag = 'smem constant byte address 0x4 - core index']
  #allocation1 [shape = 'u32[144,128]{1,0:T(1,128)}', space=vmem, size = 0x12000, scoped, tag = 'internal scratch']
  %s0 = inlined_call_operand.vmem [shape: f32[16,32], index: 0, kind: input, shape index: {}]
  %s1 = inlined_call_operand.vmem [shape: f32[1,32], index: 1, kind: input, shape index: {}]
  %s2 = inlined_call_operand.vmem [shape: f32[1,32], index: 2, kind: input, shape index: {}]
  %s3 = inlined_call_operand.vmem [shape: bf16[32,128], index: 3, kind: input, shape index: {}]
  %s4 = inlined_call_operand.vmem [shape: f32[1,128], index: 4, kind: input, shape index: {}]
  %s5 = inlined_call_operand.vmem [shape: f32[16,128], index: 5, kind: output, shape index: {}]
  %s6 = sld [smem:[#allocation0]]
  $region30: #{vit_forward.23} parent=0
    _
  %s8 = ssub.s32 1, %s6
  %s9 = scalar_select 0, %s8, %s6
  // Predicated region
  $region2: #{vit_forward.23} parent=0 // pred_check
    _
  $region3: #{vit_forward.23} parent=0 // pred_check_branch
    %11 = sbr.rel (0) target = $region5
  $region4: #{vit_forward.23} parent=0 // pred_region
    _
  $region5: #{vit_forward.23} parent=0 // pred_fallthru
    _
  // Predicated region
  $region6: #{vit_forward.23} parent=0 // pred_check
    _
  $region7: #{vit_forward.23} parent=0 // pred_check_branch
    %13 = sbr.rel (0) target = $region9
  $region8: #{vit_forward.23} parent=0 // pred_region
    _
  $region9: #{vit_forward.23} parent=0 // pred_fallthru
    _
  // Predicated region
  $region10: #{vit_forward.23} parent=0 // pred_check
    _
  $region11: #{vit_forward.23} parent=0 // pred_check_branch
    %15 = sbr.rel (0) target = $region13
  $region12: #{vit_forward.23} parent=0 // pred_region
    _
  $region13: #{vit_forward.23} parent=0 // pred_fallthru
    _
  // Predicated region
  $region14: #{vit_forward.23} parent=0 // pred_check
    _
  $region15: #{vit_forward.23} parent=0 // pred_check_branch
    %17 = sbr.rel (0) target = $region17
  $region16: #{vit_forward.23} parent=0 // pred_region
    _
  $region17: #{vit_forward.23} parent=0 // pred_fallthru
    _
  // Predicated region
  $region18: #{vit_forward.23} parent=0 // pred_check
    _
  $region19: #{vit_forward.23} parent=0 // pred_check_branch
    %19 = sbr.rel (0) target = $region21
  $region20: #{vit_forward.23} parent=0 // pred_region
    _
  $region21: #{vit_forward.23} parent=0 // pred_fallthru
    _
  %v21 = vld [vmem:[%s0] sm:$0xff]
  %v22 = vld [vmem:[%s0 + $0x8] sm:$0xff]
  %vm23 = vcmask 261120
  %v24 = vsel %vm23, %v21, 0.0
  %25 = vadd.xlane.f32.xlu0 %v24
  %v26 = vpop.xlane.xlu0 %25
  %v27 = vsel %vm23, %v22, 0.0
  %28 = vadd.xlane.f32.xlu0 %v27
  %v29 = vpop.xlane.xlu0 %28
  %v30 = vrcp.pop 32.0
  %v31 = vmul.f32 %v26, %v30
  %v32 = vmul.f32 %v29, %v30
  %v33 = vsub.f32 %v21, %v31
  %v34 = vsub.f32 %v22, %v32
  %v35 = vmul.f32 %v33, %v33
  %v36 = vmul.f32 %v34, %v34
  %v37 = vsel %vm23, %v35, 0.0
  %38 = vadd.xlane.f32.xlu0 %v37
  %v39 = vpop.xlane.xlu0 %38
  %v40 = vsel %vm23, %v36, 0.0
  %41 = vadd.xlane.f32.xlu0 %v40
  %v42 = vpop.xlane.xlu0 %41
  %v43 = vmul.f32 %v39, %v30
  %v44 = vmul.f32 %v42, %v30
  %v45 = vadd.f32 %v43, 1e-05
  %v46 = vadd.f32 %v44, 1e-05
  %v47 = vrsqrt.pop %v45
  %v48 = vrsqrt.pop %v46
  %v49 = vmul.f32 %v33, %v47
  %v50 = vmul.f32 %v34, %v48
  %v51 = vld [vmem:[%s1] sm:$0x1]
  %v53 = vlaneseq
  %v54 = vshrl.u32 %v53, 7
  %v55 = vsub.s32 0, %v54
  %v56 = vrot.slane %v51, %v55
  %v58 = vmul.f32 %v49, %v56
  %v59 = vmul.f32 %v50, %v56
  %v60 = vld [vmem:[%s2] sm:$0x1]
  %v62 = vlaneseq
  %v63 = vshrl.u32 %v62, 7
  %v64 = vsub.s32 0, %v63
  %v65 = vrot.slane %v60, %v64
  %v67 = vadd.f32 %v58, %v65
  %v68 = vadd.f32 %v59, %v65
  %v69 = vpack.c.bf16 %v68, %v67
  %v70 = vld [vmem:[%s3] sm:$0xf]
  %v71 = vld [vmem:[%s3 + $0x4] sm:$0xf]
  %v72 = vld [vmem:[%s3 + $0x8] sm:$0xf]
  %v73 = vld [vmem:[%s3 + $0xc] sm:$0xf]
  %v74 = vld [vmem:[%s4] sm:$0x1]
  %v76 = vlaneseq
  %v77 = vshrl.u32 %v76, 7
  %v78 = vsub.s32 0, %v77
  %v79 = vrot.slane %v74, %v78
  %v85 = vunpack.c.l.b16 %v70
  %v86 = vunpack.c.l.b16 %v71
  %v87 = vunpack.c.l.b16 %v72
  %v88 = vunpack.c.l.b16 %v73
  %v89 = vpack.c.b16 %v86, %v85
  %v90 = vpack.c.b16 %v88, %v87
  %v94 = vsel %vm23, %v69, 0
  %96 = vmatprep.subr.bf16.mxu0 0
  %97 = vmatpush1.bf16.msra.mxu0 0
  %98 = vmatprep.subr.bf16.mxu0 0
  %99 = vmatpush1.bf16.msra.mxu0 0
  %100 = vmatprep.subr.bf16.mxu0 0
  %101 = vmatpush1.bf16.msra.mxu0 0
  %102 = vmatprep.subr.bf16.mxu0 0
  %103 = vmatpush1.bf16.msra.mxu0 0
  %104 = vmatprep.subr.bf16.mxu0 0
  %105 = vmatpush1.bf16.msra.mxu0 0
  %106 = vmatprep.subr.bf16.mxu0 0
  %107 = vmatpush1.bf16.msra.mxu0 0
  %108 = vmatprep.subr.bf16.mxu0 0
  %109 = vmatpush1.bf16.msra.mxu0 %v90
  %110 = vmatprep.subr.bf16.mxu0 0
  %111 = vmatpush1.bf16.msra.mxu0 %v89
  %112 = vmatprep.subr.bf16.mxu0 0
  %113 = vmatpush2.bf16.msra.mxu0 0
  %114 = vmatprep.subr.bf16.mxu0 0
  %115 = vmatpush2.bf16.msra.mxu0 0
  %116 = vmatprep.subr.bf16.mxu0 0
  %117 = vmatpush2.bf16.msra.mxu0 0
  %118 = vmatprep.subr.bf16.mxu0 0
  %119 = vmatpush2.bf16.msra.mxu0 0
  %120 = vmatprep.subr.bf16.mxu0 0
  %121 = vmatpush2.bf16.msra.mxu0 0
  %122 = vmatprep.subr.bf16.mxu0 0
  %123 = vmatpush2.bf16.msra.mxu0 0
  %124 = vmatprep.subr.bf16.mxu0 0
  %125 = vmatpush2.bf16.msra.mxu0 0
  %126 = vmatprep.subr.bf16.mxu0 0
  %127 = vmatpush2.bf16.msra.mxu0 0
  %128 = vmatprep.mubr.bf16.mxu0 0
  %129 = vmatmul.mubr.bf16.gmra.mxu0 %v94
  %v130 = vpop.f32.mrf.mxu0
  %v131 = vadd.f32 %v79, %v130
  %v132 = vpop.f32.mrf.mxu0
  %v133 = vpop.f32.mrf.mxu0
  %v134 = vadd.f32 %v79, %v133
  %v135 = vpop.f32.mrf.mxu0
  %136 = vdwg.mxu0
  %137 = vst [vmem:[%s5] sm:$0xff] %v131
  %138 = vst [vmem:[%s5 + $0x8] sm:$0xff] %v134
  // Predicated region
  $region22: #{vit_forward.23} parent=0 // pred_check
    _
  $region23: #{vit_forward.23} parent=0 // pred_check_branch
    %140 = sbr.rel (0) target = $region25
  $region24: #{vit_forward.23} parent=0 // pred_region
    _
  $region25: #{vit_forward.23} parent=0 // pred_fallthru
    _
  // Predicated region
  $region26: #{vit_forward.23} parent=0 // pred_check
    _
  $region27: #{vit_forward.23} parent=0 // pred_check_branch
    %142 = sbr.rel (0) target = $region29
  $region28: #{vit_forward.23} parent=0 // pred_region
    _
  $region29: #{vit_forward.23} parent=0 // pred_fallthru
    _

// kernel: vit_forward.14
$region0: #{vit_forward.14}
  #allocation0 [shape = 'u32[]', space=smem, size = 0x4, offset = 0x4, fixed_abs, tag = 'smem constant byte address 0x4 - core index']
  #allocation1 [shape = 'u32[144,128]{1,0:T(1,128)}', space=vmem, size = 0x12000, scoped, tag = 'internal scratch']
  %s0 = inlined_call_operand.vmem [shape: bf16[68,2,8], index: 0, kind: input, shape index: {}]
  %s1 = inlined_call_operand.vmem [shape: bf16[68,2,8], index: 1, kind: input, shape index: {}]
  %s2 = inlined_call_operand.vmem [shape: bf16[68,2,8], index: 2, kind: input, shape index: {}]
  %s3 = inlined_call_operand.vmem [shape: bf16[68,2,8], index: 3, kind: output, shape index: {}]
  %s4 = sld [smem:[#allocation0]]
  $region22: #{vit_forward.14} parent=0
    _
  %s6 = ssub.s32 1, %s4
  %s7 = scalar_select 0, %s6, %s4
  // Predicated region
  $region2: #{vit_forward.14} parent=0 // pred_check
    _
  $region3: #{vit_forward.14} parent=0 // pred_check_branch
    %9 = sbr.rel (0) target = $region5
  $region4: #{vit_forward.14} parent=0 // pred_region
    _
  $region5: #{vit_forward.14} parent=0 // pred_fallthru
    _
  // Predicated region
  $region6: #{vit_forward.14} parent=0 // pred_check
    _
  $region7: #{vit_forward.14} parent=0 // pred_check_branch
    %11 = sbr.rel (0) target = $region9
  $region8: #{vit_forward.14} parent=0 // pred_region
    _
  $region9: #{vit_forward.14} parent=0 // pred_fallthru
    _
  // Predicated region
  $region10: #{vit_forward.14} parent=0 // pred_check
    _
  $region11: #{vit_forward.14} parent=0 // pred_check_branch
    %13 = sbr.rel (0) target = $region13
  $region12: #{vit_forward.14} parent=0 // pred_region
    _
  $region13: #{vit_forward.14} parent=0 // pred_fallthru
    _
  %v15 = vld [vmem:[%s0] sm:$0x1]
  %v16 = vld [vmem:[%s0 + $0x1] sm:$0x1]
  %v17 = vld [vmem:[%s0 + $0x2] sm:$0x1]
  %v18 = vld [vmem:[%s0 + $0x3] sm:$0x1]
  %v19 = vld [vmem:[%s0 + $0x4] sm:$0x1]
  %v20 = vld [vmem:[%s0 + $0x5] sm:$0x1]
  %v21 = vld [vmem:[%s0 + $0x6] sm:$0x1]
  %v22 = vld [vmem:[%s0 + $0x7] sm:$0x1]
  %v23 = vld [vmem:[%s0 + $0x8] sm:$0x1]
  %v24 = vld [vmem:[%s0 + $0x9] sm:$0x1]
  %v25 = vld [vmem:[%s0 + $0xa] sm:$0x1]
  %v26 = vld [vmem:[%s0 + $0xb] sm:$0x1]
  %v27 = vld [vmem:[%s0 + $0xc] sm:$0x1]
  %v28 = vld [vmem:[%s0 + $0xd] sm:$0x1]
  %v29 = vld [vmem:[%s0 + $0xe] sm:$0x1]
  %v30 = vld [vmem:[%s0 + $0xf] sm:$0x1]
  %v31 = vld [vmem:[%s0 + $0x10] sm:$0x1]
  %v32 = vld [vmem:[%s0 + $0x11] sm:$0x1]
  %v33 = vld [vmem:[%s0 + $0x12] sm:$0x1]
  %v34 = vld [vmem:[%s0 + $0x13] sm:$0x1]
  %v35 = vld [vmem:[%s0 + $0x14] sm:$0x1]
  %v36 = vld [vmem:[%s0 + $0x15] sm:$0x1]
  %v37 = vld [vmem:[%s0 + $0x16] sm:$0x1]
  %v38 = vld [vmem:[%s0 + $0x17] sm:$0x1]
  %v39 = vld [vmem:[%s0 + $0x18] sm:$0x1]
  %v40 = vld [vmem:[%s0 + $0x19] sm:$0x1]
  %v41 = vld [vmem:[%s0 + $0x1a] sm:$0x1]
  %v42 = vld [vmem:[%s0 + $0x1b] sm:$0x1]
  %v43 = vld [vmem:[%s0 + $0x1c] sm:$0x1]
  %v44 = vld [vmem:[%s0 + $0x1d] sm:$0x1]
  %v45 = vld [vmem:[%s0 + $0x1e] sm:$0x1]
  %v46 = vld [vmem:[%s0 + $0x1f] sm:$0x1]
  %v47 = vld [vmem:[%s0 + $0x20] sm:$0x1]
  %v48 = vld [vmem:[%s0 + $0x21] sm:$0x1]
  %v49 = vld [vmem:[%s0 + $0x22] sm:$0x1]
  %v50 = vld [vmem:[%s0 + $0x23] sm:$0x1]
  %v51 = vld [vmem:[%s0 + $0x24] sm:$0x1]
  %v52 = vld [vmem:[%s0 + $0x25] sm:$0x1]
  %v53 = vld [vmem:[%s0 + $0x26] sm:$0x1]
  %v54 = vld [vmem:[%s0 + $0x27] sm:$0x1]
  %v55 = vld [vmem:[%s0 + $0x28] sm:$0x1]
  %v56 = vld [vmem:[%s0 + $0x29] sm:$0x1]
  %v57 = vld [vmem:[%s0 + $0x2a] sm:$0x1]
  %v58 = vld [vmem:[%s0 + $0x2b] sm:$0x1]
  %v59 = vld [vmem:[%s0 + $0x2c] sm:$0x1]
  %v60 = vld [vmem:[%s0 + $0x2d] sm:$0x1]
  %v61 = vld [vmem:[%s0 + $0x2e] sm:$0x1]
  %v62 = vld [vmem:[%s0 + $0x2f] sm:$0x1]
  %v63 = vld [vmem:[%s0 + $0x30] sm:$0x1]
  %v64 = vld [vmem:[%s0 + $0x31] sm:$0x1]
  %v65 = vld [vmem:[%s0 + $0x32] sm:$0x1]
  %v66 = vld [vmem:[%s0 + $0x33] sm:$0x1]
  %v67 = vld [vmem:[%s0 + $0x34] sm:$0x1]
  %v68 = vld [vmem:[%s0 + $0x35] sm:$0x1]
  %v69 = vld [vmem:[%s0 + $0x36] sm:$0x1]
  %v70 = vld [vmem:[%s0 + $0x37] sm:$0x1]
  %v71 = vld [vmem:[%s0 + $0x38] sm:$0x1]
  %v72 = vld [vmem:[%s0 + $0x39] sm:$0x1]
  %v73 = vld [vmem:[%s0 + $0x3a] sm:$0x1]
  %v74 = vld [vmem:[%s0 + $0x3b] sm:$0x1]
  %v75 = vld [vmem:[%s0 + $0x3c] sm:$0x1]
  %v76 = vld [vmem:[%s0 + $0x3d] sm:$0x1]
  %v77 = vld [vmem:[%s0 + $0x3e] sm:$0x1]
  %v78 = vld [vmem:[%s0 + $0x3f] sm:$0x1]
  %v79 = vld [vmem:[%s0 + $0x40] sm:$0x1]
  %v80 = vld [vmem:[%s0 + $0x41] sm:$0x1]
  %v81 = vld [vmem:[%s0 + $0x42] sm:$0x1]
  %v82 = vld [vmem:[%s0 + $0x43] sm:$0x1]
  %v83 = vld [vmem:[%s1] sm:$0x1]
  %v84 = vld [vmem:[%s1 + $0x1] sm:$0x1]
  %v85 = vld [vmem:[%s1 + $0x2] sm:$0x1]
  %v86 = vld [vmem:[%s1 + $0x3] sm:$0x1]
  %v87 = vld [vmem:[%s1 + $0x4] sm:$0x1]
  %v88 = vld [vmem:[%s1 + $0x5] sm:$0x1]
  %v89 = vld [vmem:[%s1 + $0x6] sm:$0x1]
  %v90 = vld [vmem:[%s1 + $0x7] sm:$0x1]
  %v91 = vld [vmem:[%s1 + $0x8] sm:$0x1]
  %v92 = vld [vmem:[%s1 + $0x9] sm:$0x1]
  %v93 = vld [vmem:[%s1 + $0xa] sm:$0x1]
  %v94 = vld [vmem:[%s1 + $0xb] sm:$0x1]
  %v95 = vld [vmem:[%s1 + $0xc] sm:$0x1]
  %v96 = vld [vmem:[%s1 + $0xd] sm:$0x1]
  %v97 = vld [vmem:[%s1 + $0xe] sm:$0x1]
  %v98 = vld [vmem:[%s1 + $0xf] sm:$0x1]
  %v99 = vld [vmem:[%s1 + $0x10] sm:$0x1]
  %v100 = vld [vmem:[%s1 + $0x11] sm:$0x1]
  %v101 = vld [vmem:[%s1 + $0x12] sm:$0x1]
  %v102 = vld [vmem:[%s1 + $0x13] sm:$0x1]
  %v103 = vld [vmem:[%s1 + $0x14] sm:$0x1]
  %v104 = vld [vmem:[%s1 + $0x15] sm:$0x1]
  %v105 = vld [vmem:[%s1 + $0x16] sm:$0x1]
  %v106 = vld [vmem:[%s1 + $0x17] sm:$0x1]
  %v107 = vld [vmem:[%s1 + $0x18] sm:$0x1]
  %v108 = vld [vmem:[%s1 + $0x19] sm:$0x1]
  %v109 = vld [vmem:[%s1 + $0x1a] sm:$0x1]
  %v110 = vld [vmem:[%s1 + $0x1b] sm:$0x1]
  %v111 = vld [vmem:[%s1 + $0x1c] sm:$0x1]
  %v112 = vld [vmem:[%s1 + $0x1d] sm:$0x1]
  %v113 = vld [vmem:[%s1 + $0x1e] sm:$0x1]
  %v114 = vld [vmem:[%s1 + $0x1f] sm:$0x1]
  %v115 = vld [vmem:[%s1 + $0x20] sm:$0x1]
  %v116 = vld [vmem:[%s1 + $0x21] sm:$0x1]
  %v117 = vld [vmem:[%s1 + $0x22] sm:$0x1]
  %v118 = vld [vmem:[%s1 + $0x23] sm:$0x1]
  %v119 = vld [vmem:[%s1 + $0x24] sm:$0x1]
  %v120 = vld [vmem:[%s1 + $0x25] sm:$0x1]
  %v121 = vld [vmem:[%s1 + $0x26] sm:$0x1]
  %v122 = vld [vmem:[%s1 + $0x27] sm:$0x1]
  %v123 = vld [vmem:[%s1 + $0x28] sm:$0x1]
  %v124 = vld [vmem:[%s1 + $0x29] sm:$0x1]
  %v125 = vld [vmem:[%s1 + $0x2a] sm:$0x1]
  %v126 = vld [vmem:[%s1 + $0x2b] sm:$0x1]
  %v127 = vld [vmem:[%s1 + $0x2c] sm:$0x1]
  %v128 = vld [vmem:[%s1 + $0x2d] sm:$0x1]
  %v129 = vld [vmem:[%s1 + $0x2e] sm:$0x1]
  %v130 = vld [vmem:[%s1 + $0x2f] sm:$0x1]
  %v131 = vld [vmem:[%s1 + $0x30] sm:$0x1]
  %v132 = vld [vmem:[%s1 + $0x31] sm:$0x1]
  %v133 = vld [vmem:[%s1 + $0x32] sm:$0x1]
  %v134 = vld [vmem:[%s1 + $0x33] sm:$0x1]
  %v135 = vld [vmem:[%s1 + $0x34] sm:$0x1]
  %v136 = vld [vmem:[%s1 + $0x35] sm:$0x1]
  %v137 = vld [vmem:[%s1 + $0x36] sm:$0x1]
  %v138 = vld [vmem:[%s1 + $0x37] sm:$0x1]
  %v139 = vld [vmem:[%s1 + $0x38] sm:$0x1]
  %v140 = vld [vmem:[%s1 + $0x39] sm:$0x1]
  %v141 = vld [vmem:[%s1 + $0x3a] sm:$0x1]
  %v142 = vld [vmem:[%s1 + $0x3b] sm:$0x1]
  %v143 = vld [vmem:[%s1 + $0x3c] sm:$0x1]
  %v144 = vld [vmem:[%s1 + $0x3d] sm:$0x1]
  %v145 = vld [vmem:[%s1 + $0x3e] sm:$0x1]
  %v146 = vld [vmem:[%s1 + $0x3f] sm:$0x1]
  %v147 = vld [vmem:[%s1 + $0x40] sm:$0x1]
  %v148 = vld [vmem:[%s1 + $0x41] sm:$0x1]
  %v149 = vld [vmem:[%s1 + $0x42] sm:$0x1]
  %v150 = vld [vmem:[%s1 + $0x43] sm:$0x1]
  %vm151 = vcmask 64512
  %v153 = vsel %vm151, %v15, 0
  %v156 = vsel %vm151, %v83, 0
  %158 = vmatprep.subr.bf16.mxu0 0
  %159 = vmatpush1.bf16.xpose.msra.mxu0 0
  %160 = vmatprep.subr.bf16.mxu0 0
  %161 = vmatpush1.bf16.xpose.msra.mxu0 0
  %162 = vmatprep.subr.bf16.mxu0 0
  %163 = vmatpush1.bf16.xpose.msra.mxu0 0
  %164 = vmatprep.subr.bf16.mxu0 0
  %165 = vmatpush1.bf16.xpose.msra.mxu0 0
  %166 = vmatprep.subr.bf16.mxu0 0
  %167 = vmatpush1.bf16.xpose.msra.mxu0 0
  %168 = vmatprep.subr.bf16.mxu0 0
  %169 = vmatpush1.bf16.xpose.msra.mxu0 0
  %170 = vmatprep.subr.bf16.mxu0 0
  %171 = vmatpush1.bf16.xpose.msra.mxu0 0
  %172 = vmatprep.subr.bf16.mxu0 0
  %173 = vmatpush1.bf16.xpose.msra.mxu0 %v156
  %174 = vmatprep.subr.bf16.mxu0 0
  %175 = vmatpush2.bf16.xpose.msra.mxu0 0
  %176 = vmatprep.subr.bf16.mxu0 0
  %177 = vmatpush2.bf16.xpose.msra.mxu0 0
  %178 = vmatprep.subr.bf16.mxu0 0
  %179 = vmatpush2.bf16.xpose.msra.mxu0 0
  %180 = vmatprep.subr.bf16.mxu0 0
  %181 = vmatpush2.bf16.xpose.msra.mxu0 0
  %182 = vmatprep.subr.bf16.mxu0 0
  %183 = vmatpush2.bf16.xpose.msra.mxu0 0
  %184 = vmatprep.subr.bf16.mxu0 0
  %185 = vmatpush2.bf16.xpose.msra.mxu0 0
  %186 = vmatprep.subr.bf16.mxu0 0
  %187 = vmatpush2.bf16.xpose.msra.mxu0 0
  %188 = vmatprep.subr.bf16.mxu0 0
  %189 = vmatpush2.bf16.xpose.msra.mxu0 0
  %190 = vmatprep.mubr.bf16.mxu0 0
  %191 = vmatmul.mubr.bf16.gmra.mxu0 %v153
  %v192 = vpop.f32.mrf.mxu0
  %v193 = vadd.f32 0.0, %v192
  %v194 = vpop.f32.mrf.mxu0
  %v195 = vpop.f32.mrf.mxu0
  %v196 = vpop.f32.mrf.mxu0
  %197 = vdwg.mxu0
  %v199 = vsel %vm151, %v16, 0
  %v202 = vsel %vm151, %v84, 0
  %204 = vmatprep.subr.bf16.mxu0 0
  %205 = vmatpush1.bf16.xpose.msra.mxu0 0
  %206 = vmatprep.subr.bf16.mxu0 0
  %207 = vmatpush1.bf16.xpose.msra.mxu0 0
  %208 = vmatprep.subr.bf16.mxu0 0
  %209 = vmatpush1.bf16.xpose.msra.mxu0 0
  %210 = vmatprep.subr.bf16.mxu0 0
  %211 = vmatpush1.bf16.xpose.msra.mxu0 0
  %212 = vmatprep.subr.bf16.mxu0 0
  %213 = vmatpush1.bf16.xpose.msra.mxu0 0
  %214 = vmatprep.subr.bf16.mxu0 0
  %215 = vmatpush1.bf16.xpose.msra.mxu0 0
  %216 = vmatprep.subr.bf16.mxu0 0
  %217 = vmatpush1.bf16.xpose.msra.mxu0 0
  %218 = vmatprep.subr.bf16.mxu0 0
  %219 = vmatpush1.bf16.xpose.msra.mxu0 %v202
  %220 = vmatprep.subr.bf16.mxu0 0
  %221 = vmatpush2.bf16.xpose.msra.mxu0 0
  %222 = vmatprep.subr.bf16.mxu0 0
  %223 = vmatpush2.bf16.xpose.msra.mxu0 0
  %224 = vmatprep.subr.bf16.mxu0 0
  %225 = vmatpush2.bf16.xpose.msra.mxu0 0
  %226 = vmatprep.subr.bf16.mxu0 0
  %227 = vmatpush2.bf16.xpose.msra.mxu0 0
  %228 = vmatprep.subr.bf16.mxu0 0
  %229 = vmatpush2.bf16.xpose.msra.mxu0 0
  %230 = vmatprep.subr.bf16.mxu0 0
  %231 = vmatpush2.bf16.xpose.msra.mxu0 0
  %232 = vmatprep.subr.bf16.mxu0 0
  %233 = vmatpush2.bf16.xpose.msra.mxu0 0
  %234 = vmatprep.subr.bf16.mxu0 0
  %235 = vmatpush2.bf16.xpose.msra.mxu0 0
  %236 = vmatprep.mubr.bf16.mxu0 0
  %237 = vmatmul.mubr.bf16.gmra.mxu0 %v199
  %v238 = vpop.f32.mrf.mxu0
  %v239 = vadd.f32 0.0, %v238
  %v240 = vpop.f32.mrf.mxu0
  %v241 = vpop.f32.mrf.mxu0
  %v242 = vpop.f32.mrf.mxu0
  %243 = vdwg.mxu0
  %v245 = vsel %vm151, %v17, 0
  %v248 = vsel %vm151, %v85, 0
  %250 = vmatprep.subr.bf16.mxu0 0
  %251 = vmatpush1.bf16.xpose.msra.mxu0 0
  %252 = vmatprep.subr.bf16.mxu0 0
  %253 = vmatpush1.bf16.xpose.msra.mxu0 0
  %254 = vmatprep.subr.bf16.mxu0 0
  %255 = vmatpush1.bf16.xpose.msra.mxu0 0
  %256 = vmatprep.subr.bf16.mxu0 0
  %257 = vmatpush1.bf16.xpose.msra.mxu0 0
  %258 = vmatprep.subr.bf16.mxu0 0
  %259 = vmatpush1.bf16.xpose.msra.mxu0 0
  %260 = vmatprep.subr.bf16.mxu0 0
  %261 = vmatpush1.bf16.xpose.msra.mxu0 0
  %262 = vmatprep.subr.bf16.mxu0 0
  %263 = vmatpush1.bf16.xpose.msra.mxu0 0
  %264 = vmatprep.subr.bf16.mxu0 0
  %265 = vmatpush1.bf16.xpose.msra.mxu0 %v248
  %266 = vmatprep.subr.bf16.mxu0 0
  %267 = vmatpush2.bf16.xpose.msra.mxu0 0
  %268 = vmatprep.subr.bf16.mxu0 0
  %269 = vmatpush2.bf16.xpose.msra.mxu0 0
  %270 = vmatprep.subr.bf16.mxu0 0
  %271 = vmatpush2.bf16.xpose.msra.mxu0 0
  %272 = vmatprep.subr.bf16.mxu0 0
  %273 = vmatpush2.bf16.xpose.msra.mxu0 0
  %274 = vmatprep.subr.bf16.mxu0 0
  %275 = vmatpush2.bf16.xpose.msra.mxu0 0
  %276 = vmatprep.subr.bf16.mxu0 0
  %277 = vmatpush2.bf16.xpose.msra.mxu0 0
  %278 = vmatprep.subr.bf16.mxu0 0
  %279 = vmatpush2.bf16.xpose.msra.mxu0 0
  %280 = vmatprep.subr.bf16.mxu0 0
  %281 = vmatpush2.bf16.xpose.msra.mxu0 0
  %282 = vmatprep.mubr.bf16.mxu0 0
  %283 = vmatmul.mubr.bf16.gmra.mxu0 %v245
  %v284 = vpop.f32.mrf.mxu0
  %v285 = vadd.f32 0.0, %v284
  %v286 = vpop.f32.mrf.mxu0
  %v287 = vpop.f32.mrf.mxu0
  %v288 = vpop.f32.mrf.mxu0
  %289 = vdwg.mxu0
  %v291 = vsel %vm151, %v18, 0
  %v294 = vsel %vm151, %v86, 0
  %296 = vmatprep.subr.bf16.mxu0 0
  %297 = vmatpush1.bf16.xpose.msra.mxu0 0
  %298 = vmatprep.subr.bf16.mxu0 0
  %299 = vmatpush1.bf16.xpose.msra.mxu0 0
  %300 = vmatprep.subr.bf16.mxu0 0
  %301 = vmatpush1.bf16.xpose.msra.mxu0 0
  %302 = vmatprep.subr.bf16.mxu0 0
  %303 = vmatpush1.bf16.xpose.msra.mxu0 0
  %304 = vmatprep.subr.bf16.mxu0 0
  %305 = vmatpush1.bf16.xpose.msra.mxu0 0
  %306 = vmatprep.subr.bf16.mxu0 0
  %307 = vmatpush1.bf16.xpose.msra.mxu0 0
  %308 = vmatprep.subr.bf16.mxu0 0
  %309 = vmatpush1.bf16.xpose.msra.mxu0 0
  %310 = vmatprep.subr.bf16.mxu0 0
  %311 = vmatpush1.bf16.xpose.msra.mxu0 %v294
  %312 = vmatprep.subr.bf16.mxu0 0
  %313 = vmatpush2.bf16.xpose.msra.mxu0 0
  %314 = vmatprep.subr.bf16.mxu0 0
  %315 = vmatpush2.bf16.xpose.msra.mxu0 0
  %316 = vmatprep.subr.bf16.mxu0 0
  %317 = vmatpush2.bf16.xpose.msra.mxu0 0
  %318 = vmatprep.subr.bf16.mxu0 0
  %319 = vmatpush2.bf16.xpose.msra.mxu0 0
  %320 = vmatprep.subr.bf16.mxu0 0
  %321 = vmatpush2.bf16.xpose.msra.mxu0 0
  %322 = vmatprep.subr.bf16.mxu0 0
  %323 = vmatpush2.bf16.xpose.msra.mxu0 0
  %324 = vmatprep.subr.bf16.mxu0 0
  %325 = vmatpush2.bf16.xpose.msra.mxu0 0
  %326 = vmatprep.subr.bf16.mxu0 0
  %327 = vmatpush2.bf16.xpose.msra.mxu0 0
  %328 = vmatprep.mubr.bf16.mxu0 0
  %329 = vmatmul.mubr.bf16.gmra.mxu0 %v291
  %v330 = vpop.f32.mrf.mxu0
  %v331 = vadd.f32 0.0, %v330
  %v332 = vpop.f32.mrf.mxu0
  %v333 = vpop.f32.mrf.mxu0
  %v334 = vpop.f32.mrf.mxu0
  %335 = vdwg.mxu0
  %v337 = vsel %vm151, %v19, 0
  %v340 = vsel %vm151, %v87, 0
  %342 = vmatprep.subr.bf16.mxu0 0
  %343 = vmatpush1.bf16.xpose.msra.mxu0 0
  %344 = vmatprep.subr.bf16.mxu0 0
  %345 = vmatpush1.bf16.xpose.msra.mxu0 0
  %346 = vmatprep.subr.bf16.mxu0 0
  %347 = vmatpush1.bf16.xpose.msra.mxu0 0
  %348 = vmatprep.subr.bf16.mxu0 0
  %349 = vmatpush1.bf16.xpose.msra.mxu0 0
  %350 = vmatprep.subr.bf16.mxu0 0
  %351 = vmatpush1.bf16.xpose.msra.mxu0 0
  %352 = vmatprep.subr.bf16.mxu0 0
  %353 = vmatpush1.bf16.xpose.msra.mxu0 0
  %354 = vmatprep.subr.bf16.mxu0 0
  %355 = vmatpush1.bf16.xpose.msra.mxu0 0
  %356 = vmatprep.subr.bf16.mxu0 0
  %357 = vmatpush1.bf16.xpose.msra.mxu0 %v340
  %358 = vmatprep.subr.bf16.mxu0 0
  %359 = vmatpush2.bf16.xpose.msra.mxu0 0
  %360 = vmatprep.subr.bf16.mxu0 0
  %361 = vmatpush2.bf16.xpose.msra.mxu0 0
  %362 = vmatprep.subr.bf16.mxu0 0
  %363 = vmatpush2.bf16.xpose.msra.mxu0 0
  %364 = vmatprep.subr.bf16.mxu0 0
  %365 = vmatpush2.bf16.xpose.msra.mxu0 0
  %366 = vmatprep.subr.bf16.mxu0 0
  %367 = vmatpush2.bf16.xpose.msra.mxu0 0
  %368 = vmatprep.subr.bf16.mxu0 0
  %369 = vmatpush2.bf16.xpose.msra.mxu0 0
  %370 = vmatprep.subr.bf16.mxu0 0
  %371 = vmatpush2.bf16.xpose.msra.mxu0 0
  %372 = vmatprep.subr.bf16.mxu0 0
  %373 = vmatpush2.bf16.xpose.msra.mxu0 0
  %374 = vmatprep.mubr.bf16.mxu0 0
  %375 = vmatmul.mubr.bf16.gmra.mxu0 %v337
  %v376 = vpop.f32.mrf.mxu0
  %v377 = vadd.f32 0.0, %v376
  %v378 = vpop.f32.mrf.mxu0
  %v379 = vpop.f32.mrf.mxu0
  %v380 = vpop.f32.mrf.mxu0
  %381 = vdwg.mxu0
  %v383 = vsel %vm151, %v20, 0
  %v386 = vsel %vm151, %v88, 0
  %388 = vmatprep.subr.bf16.mxu0 0
  %389 = vmatpush1.bf16.xpose.msra.mxu0 0
  %390 = vmatprep.subr.bf16.mxu0 0
  %391 = vmatpush1.bf16.xpose.msra.mxu0 0
  %392 = vmatprep.subr.bf16.mxu0 0
  %393 = vmatpush1.bf16.xpose.msra.mxu0 0
  %394 = vmatprep.subr.bf16.mxu0 0
  %395 = vmatpush1.bf16.xpose.msra.mxu0 0
  %396 = vmatprep.subr.bf16.mxu0 0
  %397 = vmatpush1.bf16.xpose.msra.mxu0 0
  %398 = vmatprep.subr.bf16.mxu0 0
  %399 = vmatpush1.bf16.xpose.msra.mxu0 0
  %400 = vmatprep.subr.bf16.mxu0 0
  %401 = vmatpush1.bf16.xpose.msra.mxu0 0
  %402 = vmatprep.subr.bf16.mxu0 0
  %403 = vmatpush1.bf16.xpose.msra.mxu0 %v386
  %404 = vmatprep.subr.bf16.mxu0 0
  %405 = vmatpush2.bf16.xpose.msra.mxu0 0
  %406 = vmatprep.subr.bf16.mxu0 0
  %407 = vmatpush2.bf16.xpose.msra.mxu0 0
  %408 = vmatprep.subr.bf16.mxu0 0
  %409 = vmatpush2.bf16.xpose.msra.mxu0 0
  %410 = vmatprep.subr.bf16.mxu0 0
  %411 = vmatpush2.bf16.xpose.msra.mxu0 0
  %412 = vmatprep.subr.bf16.mxu0 0
  %413 = vmatpush2.bf16.xpose.msra.mxu0 0
  %414 = vmatprep.subr.bf16.mxu0 0
  %415 = vmatpush2.bf16.xpose.msra.mxu0 0
  %416 = vmatprep.subr.bf16.mxu0 0
  %417 = vmatpush2.bf16.xpose.msra.mxu0 0
  %418 = vmatprep.subr.bf16.mxu0 0
  %419 = vmatpush2.bf16.xpose.msra.mxu0 0
  %420 = vmatprep.mubr.bf16.mxu0 0
  %421 = vmatmul.mubr.bf16.gmra.mxu0 %v383
  %v422 = vpop.f32.mrf.mxu0
  %v423 = vadd.f32 0.0, %v422
  %v424 = vpop.f32.mrf.mxu0
  %v425 = vpop.f32.mrf.mxu0
  %v426 = vpop.f32.mrf.mxu0
  %427 = vdwg.mxu0
  %v429 = vsel %vm151, %v21, 0
  %v432 = vsel %vm151, %v89, 0
  %434 = vmatprep.subr.bf16.mxu0 0
  %435 = vmatpush1.bf16.xpose.msra.mxu0 0
  %436 = vmatprep.subr.bf16.mxu0 0
  %437 = vmatpush1.bf16.xpose.msra.mxu0 0
  %438 = vmatprep.subr.bf16.mxu0 0
  %439 = vmatpush1.bf16.xpose.msra.mxu0 0
  %440 = vmatprep.subr.bf16.mxu0 0
  %441 = vmatpush1.bf16.xpose.msra.mxu0 0
  %442 = vmatprep.subr.bf16.mxu0 0
  %443 = vmatpush1.bf16.xpose.msra.mxu0 0
  %444 = vmatprep.subr.bf16.mxu0 0
  %445 = vmatpush1.bf16.xpose.msra.mxu0 0
  %446 = vmatprep.subr.bf16.mxu0 0
  %447 = vmatpush1.bf16.xpose.msra.mxu0 0
  %448 = vmatprep.subr.bf16.mxu0 0
  %449 = vmatpush1.bf16.xpose.msra.mxu0 %v432
  %450 = vmatprep.subr.bf16.mxu0 0
  %451 = vmatpush2.bf16.xpose.msra.mxu0 0
  %452 = vmatprep.subr.bf16.mxu0 0
  %453 = vmatpush2.bf16.xpose.msra.mxu0 0
  %454 = vmatprep.subr.bf16.mxu0 0
  %455 = vmatpush2.bf16.xpose.msra.mxu0 0
  %456 = vmatprep.subr.bf16.mxu0 0
  %457 = vmatpush2.bf16.xpose.msra.mxu0 0
  %458 = vmatprep.subr.bf16.mxu0 0
  %459 = vmatpush2.bf16.xpose.msra.mxu0 0
  %460 = vmatprep.subr.bf16.mxu0 0
  %461 = vmatpush2.bf16.xpose.msra.mxu0 0
  %462 = vmatprep.subr.bf16.mxu0 0
  %463 = vmatpush2.bf16.xpose.msra.mxu0 0
  %464 = vmatprep.subr.bf16.mxu0 0
  %465 = vmatpush2.bf16.xpose.msra.mxu0 0
  %466 = vmatprep.mubr.bf16.mxu0 0
  %467 = vmatmul.mubr.bf16.gmra.mxu0 %v429
  %v468 = vpop.f32.mrf.mxu0
  %v469 = vadd.f32 0.0, %v468
  %v470 = vpop.f32.mrf.mxu0
  %v471 = vpop.f32.mrf.mxu0
  %v472 = vpop.f32.mrf.mxu0
  %473 = vdwg.mxu0
  %v475 = vsel %vm151, %v22, 0
  %v478 = vsel %vm151, %v90, 0
  %480 = vmatprep.subr.bf16.mxu0 0
  %481 = vmatpush1.bf16.xpose.msra.mxu0 0
  %482 = vmatprep.subr.bf16.mxu0 0
  %483 = vmatpush1.bf16.xpose.msra.mxu0 0
  %484 = vmatprep.subr.bf16.mxu0 0
  %485 = vmatpush1.bf16.xpose.msra.mxu0 0
  %486 = vmatprep.subr.bf16.mxu0 0
  %487 = vmatpush1.bf16.xpose.msra.mxu0 0
  %488 = vmatprep.subr.bf16.mxu0 0
  %489 = vmatpush1.bf16.xpose.msra.mxu0 0
  %490 = vmatprep.subr.bf16.mxu0 0
  %491 = vmatpush1.bf16.xpose.msra.mxu0 0
  %492 = vmatprep.subr.bf16.mxu0 0
  %493 = vmatpush1.bf16.xpose.msra.mxu0 0
  %494 = vmatprep.subr.bf16.mxu0 0
  %495 = vmatpush1.bf16.xpose.msra.mxu0 %v478
  %496 = vmatprep.subr.bf16.mxu0 0
  %497 = vmatpush2.bf16.xpose.msra.mxu0 0
  %498 = vmatprep.subr.bf16.mxu0 0
  %499 = vmatpush2.bf16.xpose.msra.mxu0 0
  %500 = vmatprep.subr.bf16.mxu0 0
  %501 = vmatpush2.bf16.xpose.msra.mxu0 0
  %502 = vmatprep.subr.bf16.mxu0 0
  %503 = vmatpush2.bf16.xpose.msra.mxu0 0
  %504 = vmatprep.subr.bf16.mxu0 0
  %505 = vmatpush2.bf16.xpose.msra.mxu0 0
  %506 = vmatprep.subr.bf16.mxu0 0
  %507 = vmatpush2.bf16.xpose.msra.mxu0 0
  %508 = vmatprep.subr.bf16.mxu0 0
  %509 = vmatpush2.bf16.xpose.msra.mxu0 0
  %510 = vmatprep.subr.bf16.mxu0 0
  %511 = vmatpush2.bf16.xpose.msra.mxu0 0
  %512 = vmatprep.mubr.bf16.mxu0 0
  %513 = vmatmul.mubr.bf16.gmra.mxu0 %v475
  %v514 = vpop.f32.mrf.mxu0
  %v515 = vadd.f32 0.0, %v514
  %v516 = vpop.f32.mrf.mxu0
  %v517 = vpop.f32.mrf.mxu0
  %v518 = vpop.f32.mrf.mxu0
  %519 = vdwg.mxu0
  %v521 = vsel %vm151, %v23, 0
  %v524 = vsel %vm151, %v91, 0
  %526 = vmatprep.subr.bf16.mxu0 0
  %527 = vmatpush1.bf16.xpose.msra.mxu0 0
  %528 = vmatprep.subr.bf16.mxu0 0
  %529 = vmatpush1.bf16.xpose.msra.mxu0 0
  %530 = vmatprep.subr.bf16.mxu0 0
  %531 = vmatpush1.bf16.xpose.msra.mxu0 0
  %532 = vmatprep.subr.bf16.mxu0 0
  %533 = vmatpush1.bf16.xpose.msra.mxu0 0
  %534 = vmatprep.subr.bf16.mxu0 0
  %535 = vmatpush1.bf16.xpose.msra.mxu0 0
  %536 = vmatprep.subr.bf16.mxu0 0
  %537 = vmatpush1.bf16.xpose.msra.mxu0 0
  %538 = vmatprep.subr.bf16.mxu0 0
  %539 = vmatpush1.bf16.xpose.msra.mxu0 0
  %540 = vmatprep.subr.bf16.mxu0 0
  %541 = vmatpush1.bf16.xpose.msra.mxu0 %v524
  %542 = vmatprep.subr.bf16.mxu0 0
  %543 = vmatpush2.bf16.xpose.msra.mxu0 0
  %544 = vmatprep.subr.bf16.mxu0 0
  %545 = vmatpush2.bf16.xpose.msra.mxu0 0
  %546 = vmatprep.subr.bf16.mxu0 0
  %547 = vmatpush2.bf16.xpose.msra.mxu0 0
  %548 = vmatprep.subr.bf16.mxu0 0
  %549 = vmatpush2.bf16.xpose.msra.mxu0 0
  %550 = vmatprep.subr.bf16.mxu0 0
  %551 = vmatpush2.bf16.xpose.msra.mxu0 0
  %552 = vmatprep.subr.bf16.mxu0 0
  %553 = vmatpush2.bf16.xpose.msra.mxu0 0
  %554 = vmatprep.subr.bf16.mxu0 0
  %555 = vmatpush2.bf16.xpose.msra.mxu0 0
  %556 = vmatprep.subr.bf16.mxu0 0
  %557 = vmatpush2.bf16.xpose.msra.mxu0 0
  %558 = vmatprep.mubr.bf16.mxu0 0
  %559 = vmatmul.mubr.bf16.gmra.mxu0 %v521
  %v560 = vpop.f32.mrf.mxu0
  %v561 = vadd.f32 0.0, %v560
  %v562 = vpop.f32.mrf.mxu0
  %v563 = vpop.f32.mrf.mxu0
  %v564 = vpop.f32.mrf.mxu0
  %565 = vdwg.mxu0
  %v567 = vsel %vm151, %v24, 0
  %v570 = vsel %vm151, %v92, 0
  %572 = vmatprep.subr.bf16.mxu0 0
  %573 = vmatpush1.bf16.xpose.msra.mxu0 0
  %574 = vmatprep.subr.bf16.mxu0 0
  %575 = vmatpush1.bf16.xpose.msra.mxu0 0
  %576 = vmatprep.subr.bf16.mxu0 0
  %577 = vmatpush1.bf16.xpose.msra.mxu0 0
  %578 = vmatprep.subr.bf16.mxu0 0
  %579 = vmatpush1.bf16.xpose.msra.mxu0 0
  %580 = vmatprep.subr.bf16.mxu0 0
  %581 = vmatpush1.bf16.xpose.msra.mxu0 0
  %582 = vmatprep.subr.bf16.mxu0 0
  %583 = vmatpush1.bf16.xpose.msra.mxu0 0
  %584 = vmatprep.subr.bf16.mxu0 0
  %585 = vmatpush1.bf16.xpose.msra.mxu0 0
  %586 = vmatprep.subr.bf16.mxu0 0
  %587 = vmatpush1.bf16.xpose.msra.mxu0 %v570
  %588 = vmatprep.subr.bf16.mxu0 0
  %589 = vmatpush2.bf16.xpose.msra.mxu0 0
  %590 = vmatprep.subr.bf16.mxu0 0
  %591 = vmatpush2.bf16.xpose.msra.mxu0 0
  %592 = vmatprep.subr.bf16.mxu0 0
  %593 = vmatpush2.bf16.xpose.msra.mxu0 0
  %594 = vmatprep.subr.bf16.mxu0 0
  %595 = vmatpush2.bf16.xpose.msra.mxu0 0
  %596 = vmatprep.subr.bf16.mxu0 0
  %597 = vmatpush2.bf16.xpose.msra.mxu0 0
  %598 = vmatprep.subr.bf16.mxu0 0
  %599 = vmatpush2.bf16.xpose.msra.mxu0 0
  %600 = vmatprep.subr.bf16.mxu0 0
  %601 = vmatpush2.bf16.xpose.msra.mxu0 0
  %602 = vmatprep.subr.bf16.mxu0 0
  %603 = vmatpush2.bf16.xpose.msra.mxu0 0
  %604 = vmatprep.mubr.bf16.mxu0 0
  %605 = vmatmul.mubr.bf16.gmra.mxu0 %v567
  %v606 = vpop.f32.mrf.mxu0
  %v607 = vadd.f32 0.0, %v606
  %v608 = vpop.f32.mrf.mxu0
  %v609 = vpop.f32.mrf.mxu0
  %v610 = vpop.f32.mrf.mxu0
  %611 = vdwg.mxu0
  %v613 = vsel %vm151, %v25, 0
  %v616 = vsel %vm151, %v93, 0
  %618 = vmatprep.subr.bf16.mxu0 0
  %619 = vmatpush1.bf16.xpose.msra.mxu0 0
  %620 = vmatprep.subr.bf16.mxu0 0
  %621 = vmatpush1.bf16.xpose.msra.mxu0 0
  %622 = vmatprep.subr.bf16.mxu0 0
  %623 = vmatpush1.bf16.xpose.msra.mxu0 0
  %624 = vmatprep.subr.bf16.mxu0 0
  %625 = vmatpush1.bf16.xpose.msra.mxu0 0
  %626 = vmatprep.subr.bf16.mxu0 0
  %627 = vmatpush1.bf16.xpose.msra.mxu0 0
  %628 = vmatprep.subr.bf16.mxu0 0
  %629 = vmatpush1.bf16.xpose.msra.mxu0 0
  %630 = vmatprep.subr.bf16.mxu0 0
  %631 = vmatpush1.bf16.xpose.msra.mxu0 0
  %632 = vmatprep.subr.bf16.mxu0 0
  %633 = vmatpush1.bf16.xpose.msra.mxu0 %v616
  %634 = vmatprep.subr.bf16.mxu0 0
  %635 = vmatpush2.bf16.xpose.msra.mxu0 0
  %636 = vmatprep.subr.bf16.mxu0 0
  %637 = vmatpush2.bf16.xpose.msra.mxu0 0
  %638 = vmatprep.subr.bf16.mxu0 0
  %639 = vmatpush2.bf16.xpose.msra.mxu0 0
  %640 = vmatprep.subr.bf16.mxu0 0
  %641 = vmatpush2.bf16.xpose.msra.mxu0 0
  %642 = vmatprep.subr.bf16.mxu0 0
  %643 = vmatpush2.bf16.xpose.msra.mxu0 0
  %644 = vmatprep.subr.bf16.mxu0 0
  %645 = vmatpush2.bf16.xpose.msra.mxu0 0
  %646 = vmatprep.subr.bf16.mxu0 0
  %647 = vmatpush2.bf16.xpose.msra.mxu0 0
  %648 = vmatprep.subr.bf16.mxu0 0
  %649 = vmatpush2.bf16.xpose.msra.mxu0 0
  %650 = vmatprep.mubr.bf16.mxu0 0
  %651 = vmatmul.mubr.bf16.gmra.mxu0 %v613
  %v652 = vpop.f32.mrf.mxu0
  %v653 = vadd.f32 0.0, %v652
  %v654 = vpop.f32.mrf.mxu0
  %v655 = vpop.f32.mrf.mxu0
  %v656 = vpop.f32.mrf.mxu0
  %657 = vdwg.mxu0
  %v659 = vsel %vm151, %v26, 0
  %v662 = vsel %vm151, %v94, 0
  %664 = vmatprep.subr.bf16.mxu0 0
  %665 = vmatpush1.bf16.xpose.msra.mxu0 0
  %666 = vmatprep.subr.bf16.mxu0 0
  %667 = vmatpush1.bf16.xpose.msra.mxu0 0
  %668 = vmatprep.subr.bf16.mxu0 0
  %669 = vmatpush1.bf16.xpose.msra.mxu0 0
  %670 = vmatprep.subr.bf16.mxu0 0
  %671 = vmatpush1.bf16.xpose.msra.mxu0 0
  %672 = vmatprep.subr.bf16.mxu0 0
  %673 = vmatpush1.bf16.xpose.msra.mxu0 0
  %674 = vmatprep.subr.bf16.mxu0 0
  %675 = vmatpush1.bf16.xpose.msra.mxu0 0
  %676 = vmatprep.subr.bf16.mxu0 0
  %677 = vmatpush1.bf16.xpose.msra.mxu0 0
  %678 = vmatprep.subr.bf16.mxu0 0
  %679 = vmatpush1.bf16.xpose.msra.mxu0 %v662
  %680 = vmatprep.subr.bf16.mxu0 0
  %681 = vmatpush2.bf16.xpose.msra.mxu0 0
  %682 = vmatprep.subr.bf16.mxu0 0
  %683 = vmatpush2.bf16.xpose.msra.mxu0 0
  %684 = vmatprep.subr.bf16.mxu0 0
  %685 = vmatpush2.bf16.xpose.msra.mxu0 0
  %686 = vmatprep.subr.bf16.mxu0 0
  %687 = vmatpush2.bf16.xpose.msra.mxu0 0
  %688 = vmatprep.subr.bf16.mxu0 0
  %689 = vmatpush2.bf16.xpose.msra.mxu0 0
  %690 = vmatprep.subr.bf16.mxu0 0
  %691 = vmatpush2.bf16.xpose.msra.mxu0 0
  %692 = vmatprep.subr.bf16.mxu0 0
  %693 = vmatpush2.bf16.xpose.msra.mxu0 0
  %694 = vmatprep.subr.bf16.mxu0 0
  %695 = vmatpush2.bf16.xpose.msra.mxu0 0
  %696 = vmatprep.mubr.bf16.mxu0 0
  %697 = vmatmul.mubr.bf16.gmra.mxu0 %v659
  %v698 = vpop.f32.mrf.mxu0
  %v699 = vadd.f32 0.0, %v698
  %v700 = vpop.f32.mrf.mxu0
  %v701 = vpop.f32.mrf.mxu0
  %v702 = vpop.f32.mrf.mxu0
  %703 = vdwg.mxu0
  %v705 = vsel %vm151, %v27, 0
  %v708 = vsel %vm151, %v95, 0
  %710 = vmatprep.subr.bf16.mxu0 0
  %711 = vmatpush1.bf16.xpose.msra.mxu0 0
  %712 = vmatprep.subr.bf16.mxu0 0
  %713 = vmatpush1.bf16.xpose.msra.mxu0 0
  %714 = vmatprep.subr.bf16.mxu0 0
  %715 = vmatpush1.bf16.xpose.msra.mxu0 0
  %716 = vmatprep.subr.bf16.mxu0 0
  %717 = vmatpush1.bf16.xpose.msra.mxu0 0
  %718 = vmatprep.subr.bf16.mxu0 0
  %719 = vmatpush1.bf16.xpose.msra.mxu0 0
  %720 = vmatprep.subr.bf16.mxu0 0
  %721 = vmatpush1.bf16.xpose.msra.mxu0 0
  %722 = vmatprep.subr.bf16.mxu0 0
  %723 = vmatpush1.bf16.xpose.msra.mxu0 0
  %724 = vmatprep.subr.bf16.mxu0 0
  %725 = vmatpush1.bf16.xpose.msra.mxu0 %v708
  %726 = vmatprep.subr.bf16.mxu0 0
  %727 = vmatpush2.bf16.xpose.msra.mxu0 0
  %728 = vmatprep.subr.bf16.mxu0 0
  %729 = vmatpush2.bf16.xpose.msra.mxu0 0
  %730 = vmatprep.subr.bf16.mxu0 0
  %731 = vmatpush2.bf16.xpose.msra.mxu0 0
  %732 = vmatprep.subr.bf16.mxu0 0
  %733 = vmatpush2.bf16.xpose.msra.mxu0 0
  %734 = vmatprep.subr.bf16.mxu0 0
  %735 = vmatpush2.bf16.xpose.msra.mxu0 0
  %736 = vmatprep.subr.bf16.mxu0 0
  %737 = vmatpush2.bf16.xpose.msra.mxu0 0
  %738 = vmatprep.subr.bf16.mxu0 0
  %739 = vmatpush2.bf16.xpose.msra.mxu0 0
  %740 = vmatprep.subr.bf16.mxu0 0
  %741 = vmatpush2.bf16.xpose.msra.mxu0 0
  %742 = vmatprep.mubr.bf16.mxu0 0
  %743 = vmatmul.mubr.bf16.gmra.mxu0 %v705
  %v744 = vpop.f32.mrf.mxu0
  %v745 = vadd.f32 0.0, %v744
  %v746 = vpop.f32.mrf.mxu0
  %v747 = vpop.f32.mrf.mxu0
  %v748 = vpop.f32.mrf.mxu0
  %749 = vdwg.mxu0
  %v751 = vsel %vm151, %v28, 0
  %v754 = vsel %vm151, %v96, 0
  %756 = vmatprep.subr.bf16.mxu0 0
  %757 = vmatpush1.bf16.xpose.msra.mxu0 0
  %758 = vmatprep.subr.bf16.mxu0 0
  %759 = vmatpush1.bf16.xpose.msra.mxu0 0
  %760 = vmatprep.subr.bf16.mxu0 0
  %761 = vmatpush1.bf16.xpose.msra.mxu0 0
  %762 = vmatprep.subr.bf16.mxu0 0
  %763 = vmatpush1.bf16.xpose.msra.mxu0 0
  %764 = vmatprep.subr.bf16.mxu0 0
  %765 = vmatpush1.bf16.xpose.msra.mxu0 0
  %766 = vmatprep.subr.bf16.mxu0 0
  %767 = vmatpush1.bf16.xpose.msra.mxu0 0
  %768 = vmatprep.subr.bf16.mxu0 0
  %769 = vmatpush1.bf16.xpose.msra.mxu0 0
  %770 = vmatprep.subr.bf16.mxu0 0
  %771 = vmatpush1.bf16.xpose.msra.mxu0 %v754
  %772 = vmatprep.subr.bf16.mxu0 0
  %773 = vmatpush2.bf16.xpose.msra.mxu0 0
  %774 = vmatprep.subr.bf16.mxu0 0
  %775 = vmatpush2.bf16.xpose.msra.mxu0 0
  %776 = vmatprep.subr.bf16.mxu0 0
  %777 = vmatpush2.bf16.xpose.msra.mxu0 0
  %778 = vmatprep.subr.bf16.mxu0 0
  %779 = vmatpush2.bf16.xpose.msra.mxu0 0
  %780 = vmatprep.subr.bf16.mxu0 0
  %781 = vmatpush2.bf16.xpose.msra.mxu0 0
  %782 = vmatprep.subr.bf16.mxu0 0
  %783 = vmatpush2.bf16.xpose.msra.mxu0 0
  %784 = vmatprep.subr.bf16.mxu0 0
  %785 = vmatpush2.bf16.xpose.msra.mxu0 0
  %786 = vmatprep.subr.bf16.mxu0 0
  %787 = vmatpush2.bf16.xpose.msra.mxu0 0
  %788 = vmatprep.mubr.bf16.mxu0 0
  %789 = vmatmul.mubr.bf16.gmra.mxu0 %v751
  %v790 = vpop.f32.mrf.mxu0
  %v791 = vadd.f32 0.0, %v790
  %v792 = vpop.f32.mrf.mxu0
  %v793 = vpop.f32.mrf.mxu0
  %v794 = vpop.f32.mrf.mxu0
  %795 = vdwg.mxu0
  %v797 = vsel %vm151, %v29, 0
  %v800 = vsel %vm151, %v97, 0
  %802 = vmatprep.subr.bf16.mxu0 0
  %803 = vmatpush1.bf16.xpose.msra.mxu0 0
  %804 = vmatprep.subr.bf16.mxu0 0
  %805 = vmatpush1.bf16.xpose.msra.mxu0 0
  %806 = vmatprep.subr.bf16.mxu0 0
  %807 = vmatpush1.bf16.xpose.msra.mxu0 0
  %808 = vmatprep.subr.bf16.mxu0 0
  %809 = vmatpush1.bf16.xpose.msra.mxu0 0
  %810 = vmatprep.subr.bf16.mxu0 0
  %811 = vmatpush1.bf16.xpose.msra.mxu0 0
  %812 = vmatprep.subr.bf16.mxu0 0
  %813 = vmatpush1.bf16.xpose.msra.mxu0 0
  %814 = vmatprep.subr.bf16.mxu0 0
  %815 = vmatpush1.bf16.xpose.msra.mxu0 0
  %816 = vmatprep.subr.bf16.mxu0 0
  %817 = vmatpush1.bf16.xpose.msra.mxu0 %v800
  %818 = vmatprep.subr.bf16.mxu0 0
  %819 = vmatpush2.bf16.xpose.msra.mxu0 0
  %820 = vmatprep.subr.bf16.mxu0 0
  %821 = vmatpush2.bf16.xpose.msra.mxu0 0
  %822 = vmatprep.subr.bf16.mxu0 0
  %823 = vmatpush2.bf16.xpose.msra.mxu0 0
  %824 = vmatprep.subr.bf16.mxu0 0
  %825 = vmatpush2.bf16.xpose.msra.mxu0 0
  %826 = vmatprep.subr.bf16.mxu0 0
  %827 = vmatpush2.bf16.xpose.msra.mxu0 0
  %828 = vmatprep.subr.bf16.mxu0 0
  %829 = vmatpush2.bf16.xpose.msra.mxu0 0
  %830 = vmatprep.subr.bf16.mxu0 0
  %831 = vmatpush2.bf16.xpose.msra.mxu0 0
  %832 = vmatprep.subr.bf16.mxu0 0
  %833 = vmatpush2.bf16.xpose.msra.mxu0 0
  %834 = vmatprep.mubr.bf16.mxu0 0
  %835 = vmatmul.mubr.bf16.gmra.mxu0 %v797
  %v836 = vpop.f32.mrf.mxu0
  %v837 = vadd.f32 0.0, %v836
  %v838 = vpop.f32.mrf.mxu0
  %v839 = vpop.f32.mrf.mxu0
  %v840 = vpop.f32.mrf.mxu0
  %841 = vdwg.mxu0
  %v843 = vsel %vm151, %v30, 0
  %v846 = vsel %vm151, %v98, 0
  %848 = vmatprep.subr.bf16.mxu0 0
  %849 = vmatpush1.bf16.xpose.msra.mxu0 0
  %850 = vmatprep.subr.bf16.mxu0 0
  %851 = vmatpush1.bf16.xpose.msra.mxu0 0
  %852 = vmatprep.subr.bf16.mxu0 0
  %853 = vmatpush1.bf16.xpose.msra.mxu0 0
  %854 = vmatprep.subr.bf16.mxu0 0
  %855 = vmatpush1.bf16.xpose.msra.mxu0 0
  %856 = vmatprep.subr.bf16.mxu0 0
  %857 = vmatpush1.bf16.xpose.msra.mxu0 0
  %858 = vmatprep.subr.bf16.mxu0 0
  %859 = vmatpush1.bf16.xpose.msra.mxu0 0
  %860 = vmatprep.subr.bf16.mxu0 0
  %861 = vmatpush1.bf16.xpose.msra.mxu0 0
  %862 = vmatprep.subr.bf16.mxu0 0
  %863 = vmatpush1.bf16.xpose.msra.mxu0 %v846
  %864 = vmatprep.subr.bf16.mxu0 0
  %865 = vmatpush2.bf16.xpose.msra.mxu0 0
  %866 = vmatprep.subr.bf16.mxu0 0
  %867 = vmatpush2.bf16.xpose.msra.mxu0 0
  %868 = vmatprep.subr.bf16.mxu0 0
  %869 = vmatpush2.bf16.xpose.msra.mxu0 0
  %870 = vmatprep.subr.bf16.mxu0 0
  %871 = vmatpush2.bf16.xpose.msra.mxu0 0
  %872 = vmatprep.subr.bf16.mxu0 0
  %873 = vmatpush2.bf16.xpose.msra.mxu0 0
  %874 = vmatprep.subr.bf16.mxu0 0
  %875 = vmatpush2.bf16.xpose.msra.mxu0 0
  %876 = vmatprep.subr.bf16.mxu0 0
  %877 = vmatpush2.bf16.xpose.msra.mxu0 0
  %878 = vmatprep.subr.bf16.mxu0 0
  %879 = vmatpush2.bf16.xpose.msra.mxu0 0
  %880 = vmatprep.mubr.bf16.mxu0 0
  %881 = vmatmul.mubr.bf16.gmra.mxu0 %v843
  %v882 = vpop.f32.mrf.mxu0
  %v883 = vadd.f32 0.0, %v882
  %v884 = vpop.f32.mrf.mxu0
  %v885 = vpop.f32.mrf.mxu0
  %v886 = vpop.f32.mrf.mxu0
  %887 = vdwg.mxu0
  %v889 = vsel %vm151, %v31, 0
  %v892 = vsel %vm151, %v99, 0
  %894 = vmatprep.subr.bf16.mxu0 0
  %895 = vmatpush1.bf16.xpose.msra.mxu0 0
  %896 = vmatprep.subr.bf16.mxu0 0
  %897 = vmatpush1.bf16.xpose.msra.mxu0 0
  %898 = vmatprep.subr.bf16.mxu0 0
  %899 = vmatpush1.bf16.xpose.msra.mxu0 0
  %900 = vmatprep.subr.bf16.mxu0 0
  %901 = vmatpush1.bf16.xpose.msra.mxu0 0
  %902 = vmatprep.subr.bf16.mxu0 0
  %903 = vmatpush1.bf16.xpose.msra.mxu0 0
  %904 = vmatprep.subr.bf16.mxu0 0
  %905 = vmatpush1.bf16.xpose.msra.mxu0 0
  %906 = vmatprep.subr.bf16.mxu0 0
  %907 = vmatpush1.bf16.xpose.msra.mxu0 0
  %908 = vmatprep.subr.bf16.mxu0 0
  %909 = vmatpush1.bf16.xpose.msra.mxu0 %v892
  %910 = vmatprep.subr.bf16.mxu0 0
  %911 = vmatpush2.bf16.xpose.msra.mxu0 0
  %912 = vmatprep.subr.bf16.mxu0 0
  %913 = vmatpush2.bf16.xpose.msra.mxu0 0
  %914 = vmatprep.subr.bf16.mxu0 0
  %915 = vmatpush2.bf16.xpose.msra.mxu0 0
  %916 = vmatprep.subr.bf16.mxu0 0
  %917 = vmatpush2.bf16.xpose.msra.mxu0 0
  %918 = vmatprep.subr.bf16.mxu0 0
  %919 = vmatpush2.bf16.xpose.msra.mxu0 0
  %920 = vmatprep.subr.bf16.mxu0 0
  %921 = vmatpush2.bf16.xpose.msra.mxu0 0
  %922 = vmatprep.subr.bf16.mxu0 0
  %923 = vmatpush2.bf16.xpose.msra.mxu0 0
  %924 = vmatprep.subr.bf16.mxu0 0
  %925 = vmatpush2.bf16.xpose.msra.mxu0 0
  %926 = vmatprep.mubr.bf16.mxu0 0
  %927 = vmatmul.mubr.bf16.gmra.mxu0 %v889
  %v928 = vpop.f32.mrf.mxu0
  %v929 = vadd.f32 0.0, %v928
  %v930 = vpop.f32.mrf.mxu0
  %v931 = vpop.f32.mrf.mxu0
  %v932 = vpop.f32.mrf.mxu0
  %933 = vdwg.mxu0
  %v935 = vsel %vm151, %v32, 0
  %v938 = vsel %vm151, %v100, 0
  %940 = vmatprep.subr.bf16.mxu0 0
  %941 = vmatpush1.bf16.xpose.msra.mxu0 0
  %942 = vmatprep.subr.bf16.mxu0 0
  %943 = vmatpush1.bf16.xpose.msra.mxu0 0
  %944 = vmatprep.subr.bf16.mxu0 0
  %945 = vmatpush1.bf16.xpose.msra.mxu0 0
  %946 = vmatprep.subr.bf16.mxu0 0
  %947 = vmatpush1.bf16.xpose.msra.mxu0 0
  %948 = vmatprep.subr.bf16.mxu0 0
  %949 = vmatpush1.bf16.xpose.msra.mxu0 0
  %950 = vmatprep.subr.bf16.mxu0 0
  %951 = vmatpush1.bf16.xpose.msra.mxu0 0
  %952 = vmatprep.subr.bf16.mxu0 0
  %953 = vmatpush1.bf16.xpose.msra.mxu0 0
  %954 = vmatprep.subr.bf16.mxu0 0
  %955 = vmatpush1.bf16.xpose.msra.mxu0 %v938
  %956 = vmatprep.subr.bf16.mxu0 0
  %957 = vmatpush2.bf16.xpose.msra.mxu0 0
  %958 = vmatprep.subr.bf16.mxu0 0
  %959 = vmatpush2.bf16.xpose.msra.mxu0 0
  %960 = vmatprep.subr.bf16.mxu0 0
  %961 = vmatpush2.bf16.xpose.msra.mxu0 0
  %962 = vmatprep.subr.bf16.mxu0 0
  %963 = vmatpush2.bf16.xpose.msra.mxu0 0
  %964 = vmatprep.subr.bf16.mxu0 0
  %965 = vmatpush2.bf16.xpose.msra.mxu0 0
  %966 = vmatprep.subr.bf16.mxu0 0
  %967 = vmatpush2.bf16.xpose.msra.mxu0 0
  %968 = vmatprep.subr.bf16.mxu0 0
  %969 = vmatpush2.bf16.xpose.msra.mxu0 0
  %970 = vmatprep.subr.bf16.mxu0 0
  %971 = vmatpush2.bf16.xpose.msra.mxu0 0
  %972 = vmatprep.mubr.bf16.mxu0 0
  %973 = vmatmul.mubr.bf16.gmra.mxu0 %v935
  %v974 = vpop.f32.mrf.mxu0
  %v975 = vadd.f32 0.0, %v974
  %v976 = vpop.f32.mrf.mxu0
  %v977 = vpop.f32.mrf.mxu0
  %v978 = vpop.f32.mrf.mxu0
  %979 = vdwg.mxu0
  %v981 = vsel %vm151, %v33, 0
  %v984 = vsel %vm151, %v101, 0
  %986 = vmatprep.subr.bf16.mxu0 0
  %987 = vmatpush1.bf16.xpose.msra.mxu0 0
  %988 = vmatprep.subr.bf16.mxu0 0
  %989 = vmatpush1.bf16.xpose.msra.mxu0 0
  %990 = vmatprep.subr.bf16.mxu0 0
  %991 = vmatpush1.bf16.xpose.msra.mxu0 0
  %992 = vmatprep.subr.bf16.mxu0 0
  %993 = vmatpush1.bf16.xpose.msra.mxu0 0
  %994 = vmatprep.subr.bf16.mxu0 0
  %995 = vmatpush1.bf16.xpose.msra.mxu0 0
  %996 = vmatprep.subr.bf16.mxu0 0
  %997 = vmatpush1.bf16.xpose.msra.mxu0 0
  %998 = vmatprep.subr.bf16.mxu0 0
  %999 = vmatpush1.bf16.xpose.msra.mxu0 0
  %1000 = vmatprep.subr.bf16.mxu0 0
  %1001 = vmatpush1.bf16.xpose.msra.mxu0 %v984
  %1002 = vmatprep.subr.bf16.mxu0 0
  %1003 = vmatpush2.bf16.xpose.msra.mxu0 0
  %1004 = vmatprep.subr.bf16.mxu0 0
  %1005 = vmatpush2.bf16.xpose.msra.mxu0 0
  %1006 = vmatprep.subr.bf16.mxu0 0
  %1007 = vmatpush2.bf16.xpose.msra.mxu0 0
  %1008 = vmatprep.subr.bf16.mxu0 0
  %1009 = vmatpush2.bf16.xpose.msra.mxu0 0
  %1010 = vmatprep.subr.bf16.mxu0 0
  %1011 = vmatpush2.bf16.xpose.msra.mxu0 0
  %1012 = vmatprep.subr.bf16.mxu0 0
  %1013 = vmatpush2.bf16.xpose.msra.mxu0 0
  %1014 = vmatprep.subr.bf16.mxu0 0
  %1015 = vmatpush2.bf16.xpose.msra.mxu0 0
  %1016 = vmatprep.subr.bf16.mxu0 0
  %1017 = vmatpush2.bf16.xpose.msra.mxu0 0
  %1018 = vmatprep.mubr.bf16.mxu0 0
  %1019 = vmatmul.mubr.bf16.gmra.mxu0 %v981
  %v1020 = vpop.f32.mrf.mxu0
  %v1021 = vadd.f32 0.0, %v1020
  %v1022 = vpop.f32.mrf.mxu0
  %v1023 = vpop.f32.mrf.mxu0
  %v1024 = vpop.f32.mrf.mxu0
  %1025 = vdwg.mxu0
  %v1027 = vsel %vm151, %v34, 0
  %v1030 = vsel %vm151, %v102, 0
  %1032 = vmatprep.subr.bf16.mxu0 0
  %1033 = vmatpush1.bf16.xpose.msra.mxu0 0
  %1034 = vmatprep.subr.bf16.mxu0 0
  %1035 = vmatpush1.bf16.xpose.msra.mxu0 0
  %1036 = vmatprep.subr.bf16.mxu0 0
  %1037 = vmatpush1.bf16.xpose.msra.mxu0 0
  %1038 = vmatprep.subr.bf16.mxu0 0
  %1039 = vmatpush1.bf16.xpose.msra.mxu0 0
  %1040 = vmatprep.subr.bf16.mxu0 0
  %1041 = vmatpush1.bf16.xpose.msra.mxu0 0
  %1042 = vmatprep.subr.bf16.mxu0 0
  %1043 = vmatpush1.bf16.xpose.msra.mxu0 0
  %1044 = vmatprep.subr.bf16.mxu0 0
  %1045 = vmatpush1.bf16.xpose.msra.mxu0 0
  %1046 = vmatprep.subr.bf16.mxu0 0
  %1047 = vmatpush1.bf16.xpose.msra.mxu0 %v1030
  %1048 = vmatprep.subr.bf16.mxu0 0
  %1049 = vmatpush2.bf16.xpose.msra.mxu0 0
  %1050 = vmatprep.subr.bf16.mxu0 0
  %1051 = vmatpush2.bf16.xpose.msra.mxu0 0
  %1052 = vmatprep.subr.bf16.mxu0 0
  %1053 = vmatpush2.bf16.xpose.msra.mxu0 0
  %1054 = vmatprep.subr.bf16.mxu0 0
  %1055 = vmatpush2.bf16.xpose.msra.mxu0 0
  %1056 = vmatprep.subr.bf16.mxu0 0
  %1057 = vmatpush2.bf16.xpose.msra.mxu0 0
  %1058 = vmatprep.subr.bf16.mxu0 0
  %1059 = vmatpush2.bf16.xpose.msra.mxu0 0
  %1060 = vmatprep.subr.bf16.mxu0 0
  %1061 = vmatpush2.bf16.xpose.msra.mxu0 0
  %1062 = vmatprep.subr.bf16.mxu0 0
  %1063 = vmatpush2.bf16.xpose.msra.mxu0 0
  %1064 = vmatprep.mubr.bf16.mxu0 0
  %1065 = vmatmul.mubr.bf16.gmra.mxu0 %v1027
  %v1066 = vpop.f32.mrf.mxu0
  %v1067 = vadd.f32 0.0, %v1066
  %v1068 = vpop.f32.mrf.mxu0
  %v1069 = vpop.f32.mrf.mxu0
  %v1070 = vpop.f32.mrf.mxu0
  %1071 = vdwg.mxu0
  %v1073 = vsel %vm151, %v35, 0
  %v1076 = vsel %vm151, %v103, 0
  %1078 = vmatprep.subr.bf16.mxu0 0
  %1079 = vmatpush1.bf16.xpose.msra.mxu0 0
  %1080 = vmatprep.subr.bf16.mxu0 0
  %1081 = vmatpush1.bf16.xpose.msra.mxu0 0
  %1082 = vmatprep.subr.bf16.mxu0 0
  %1083 = vmatpush1.bf16.xpose.msra.mxu0 0
  %1084 = vmatprep.subr.bf16.mxu0 0
  %1085 = vmatpush1.bf16.xpose.msra.mxu0 0
  %1086 = vmatprep.subr.bf16.mxu0 0
  %1087 = vmatpush1.bf16.xpose.msra.mxu0 0
  %1088 = vmatprep.subr.bf16.mxu0 0
  %1089 = vmatpush1.bf16.xpose.msra.mxu0 0
  %1090 = vmatprep.subr.bf16.mxu0 0
  %1091 = vmatpush1.bf16.xpose.msra.mxu0 0
  %1092 = vmatprep.subr.bf16.mxu0 0
  %1093 = vmatpush1.bf16.xpose.msra.mxu0 %v1076
  %1094 = vmatprep.subr.bf16.mxu0 0
  %1095 = vmatpush2.bf16.xpose.msra.mxu0 0
  %1096 = vmatprep.subr.bf16.mxu0 0
  %1097 = vmatpush2.bf16.xpose.msra.mxu0 0
  %1098 = vmatprep.subr.bf16.mxu0 0
  %1099 = vmatpush2.bf16.xpose.msra.mxu0 0
  %1100 = vmatprep.subr.bf16.mxu0 0
  %1101 = vmatpush2.bf16.xpose.msra.mxu0 0
  %1102 = vmatprep.subr.bf16.mxu0 0
  %1103 = vmatpush2.bf16.xpose.msra.mxu0 0
  %1104 = vmatprep.subr.bf16.mxu0 0
  %1105 = vmatpush2.bf16.xpose.msra.mxu0 0
  %1106 = vmatprep.subr.bf16.mxu0 0
  %1107 = vmatpush2.bf16.xpose.msra.mxu0 0
  %1108 = vmatprep.subr.bf16.mxu0 0
  %1109 = vmatpush2.bf16.xpose.msra.mxu0 0
  %1110 = vmatprep.mubr.bf16.mxu0 0
  %1111 = vmatmul.mubr.bf16.gmra.mxu0 %v1073
  %v1112 = vpop.f32.mrf.mxu0
  %v1113 = vadd.f32 0.0, %v1112
  %v1114 = vpop.f32.mrf.mxu0
  %v1115 = vpop.f32.mrf.mxu0
  %v1116 = vpop.f32.mrf.mxu0
  %1117 = vdwg.mxu0
  %v1119 = vsel %vm151, %v36, 0
  %v1122 = vsel %vm151, %v104, 0
  %1124 = vmatprep.subr.bf16.mxu0 0
  %1125 = vmatpush1.bf16.xpose.msra.mxu0 0
  %1126 = vmatprep.subr.bf16.mxu0 0
  %1127 = vmatpush1.bf16.xpose.msra.mxu0 0
  %1128 = vmatprep.subr.bf16.mxu0 0
  %1129 = vmatpush1.bf16.xpose.msra.mxu0 0
  %1130 = vmatprep.subr.bf16.mxu0 0
  %1131 = vmatpush1.bf16.xpose.msra.mxu0 0
  %1132 = vmatprep.subr.bf16.mxu0 0
  %1133 = vmatpush1.bf16.xpose.msra.mxu0 0
  %1134 = vmatprep.subr.bf16.mxu0 0
  %1135 = vmatpush1.bf16.xpose.msra.mxu0 0
  %1136 = vmatprep.subr.bf16.mxu0 0
  %1137 = vmatpush1.bf16.xpose.msra.mxu0 0
  %1138 = vmatprep.subr.bf16.mxu0 0
  %1139 = vmatpush1.bf16.xpose.msra.mxu0 %v1122
  %1140 = vmatprep.subr.bf16.mxu0 0
  %1141 = vmatpush2.bf16.xpose.msra.mxu0 0
  %1142 = vmatprep.subr.bf16.mxu0 0
  %1143 = vmatpush2.bf16.xpose.msra.mxu0 0
  %1144 = vmatprep.subr.bf16.mxu0 0
  %1145 = vmatpush2.bf16.xpose.msra.mxu0 0
  %1146 = vmatprep.subr.bf16.mxu0 0
  %1147 = vmatpush2.bf16.xpose.msra.mxu0 0
  %1148 = vmatprep.subr.bf16.mxu0 0
  %1149 = vmatpush2.bf16.xpose.msra.mxu0 0
  %1150 = vmatprep.subr.bf16.mxu0 0
  %1151 = vmatpush2.bf16.xpose.msra.mxu0 0
  %1152 = vmatprep.subr.bf16.mxu0 0
  %1153 = vmatpush2.bf16.xpose.msra.mxu0 0
  %1154 = vmatprep.subr.bf16.mxu0 0
  %1155 = vmatpush2.bf16.xpose.msra.mxu0 0
  %1156 = vmatprep.mubr.bf16.mxu0 0
  %1157 = vmatmul.mubr.bf16.gmra.mxu0 %v1119
  %v1158 = vpop.f32.mrf.mxu0
  %v1159 = vadd.f32 0.0, %v1158
  %v1160 = vpop.f32.mrf.mxu0
  %v1161 = vpop.f32.mrf.mxu0
  %v1162 = vpop.f32.mrf.mxu0
  %1163 = vdwg.mxu0
  %v1165 = vsel %vm151, %v37, 0
  %v1168 = vsel %vm151, %v105, 0
  %1170 = vmatprep.subr.bf16.mxu0 0
  %1171 = vmatpush1.bf16.xpose.msra.mxu0 0
  %1172 = vmatprep.subr.bf16.mxu0 0
  %1173 = vmatpush1.bf16.xpose.msra.mxu0 0
  %1174 = vmatprep.subr.bf16.mxu0 0
  %1175 = vmatpush1.bf16.xpose.msra.mxu0 0
  %1176 = vmatprep.subr.bf16.mxu0 0
  %1177 = vmatpush1.bf16.xpose.msra.mxu0 0
  %1178 = vmatprep.subr.bf16.mxu0 0
  %1179 = vmatpush1.bf16.xpose.msra.mxu0 0
  %1180 = vmatprep.subr.bf16.mxu0 0
  %1181 = vmatpush1.bf16.xpose.msra.mxu0 0
  %1182 = vmatprep.subr.bf16.mxu0 0
  %1183 = vmatpush1.bf16.xpose.msra.mxu0 0
  %1184 = vmatprep.subr.bf16.mxu0 0
  %1185 = vmatpush1.bf16.xpose.msra.mxu0 %v1168
  %1186 = vmatprep.subr.bf16.mxu0 0
  %1187 = vmatpush2.bf16.xpose.msra.mxu0 0
  %1188 = vmatprep.subr.bf16.mxu0 0
  %1189 = vmatpush2.bf16.xpose.msra.mxu0 0
  %1190 = vmatprep.subr.bf16.mxu0 0
  %1191 = vmatpush2.bf16.xpose.msra.mxu0 0
  %1192 = vmatprep.subr.bf16.mxu0 0
  %1193 = vmatpush2.bf16.xpose.msra.mxu0 0
  %1194 = vmatprep.subr.bf16.mxu0 0
  %1195 = vmatpush2.bf16.xpose.msra.mxu0 0
  %1196 = vmatprep.subr.bf16.mxu0 0
  %1197 = vmatpush2.bf16.xpose.msra.mxu0 0
  %1198 = vmatprep.subr.bf16.mxu0 0
  %1199 = vmatpush2.bf16.xpose.msra.mxu0 0
  %1200 = vmatprep.subr.bf16.mxu0 0
  %1201 = vmatpush2.bf16.xpose.msra.mxu0 0
  %1202 = vmatprep.mubr.bf16.mxu0 0
  %1203 = vmatmul.mubr.bf16.gmra.mxu0 %v1165
  %v1204 = vpop.f32.mrf.mxu0
  %v1205 = vadd.f32 0.0, %v1204
  %v1206 = vpop.f32.mrf.mxu0
  %v1207 = vpop.f32.mrf.mxu0
  %v1208 = vpop.f32.mrf.mxu0
  %1209 = vdwg.mxu0
  %v1211 = vsel %vm151, %v38, 0
  %v1214 = vsel %vm151, %v106, 0
  %1216 = vmatprep.subr.bf16.mxu0 0
  %1217 = vmatpush1.bf16.xpose.msra.mxu0 0
  %1218 = vmatprep.subr.bf16.mxu0 0
  %1219 = vmatpush1.bf16.xpose.msra.mxu0 0
  %1220 = vmatprep.subr.bf16.mxu0 0
  %1221 = vmatpush1.bf16.xpose.msra.mxu0 0
  %1222 = vmatprep.subr.bf16.mxu0 0
  %1223 = vmatpush1.bf16.xpose.msra.mxu0 0
  %1224 = vmatprep.subr.bf16.mxu0 0
  %1225 = vmatpush1.bf16.xpose.msra.mxu0 0
  %1226 = vmatprep.subr.bf16.mxu0 0
  %1227 = vmatpush1.bf16.xpose.msra.mxu0 0
  %1228 = vmatprep.subr.bf16.mxu0 0
  %1229 = vmatpush1.bf16.xpose.msra.mxu0 0
  %1230 = vmatprep.subr.bf16.mxu0 0
  %1231 = vmatpush1.bf16.xpose.msra.mxu0 %v1214
  %1232 = vmatprep.subr.bf16.mxu0 0
  %1233 = vmatpush2.bf16.xpose.msra.mxu0 0
  %1234 = vmatprep.subr.bf16.mxu0 0
  %1235 = vmatpush2.bf16.xpose.msra.mxu0 0
  %1236 = vmatprep.subr.bf16.mxu0 0
  %1237 = vmatpush2.bf16.xpose.msra.mxu0 0
  %1238 = vmatprep.subr.bf16.mxu0 0
  %1239 = vmatpush2.bf16.xpose.msra.mxu0 0
  %1240 = vmatprep.subr.bf16.mxu0 0
  %1241 = vmatpush2.bf16.xpose.msra.mxu0 0
  %1242 = vmatprep.subr.bf16.mxu0 0
  %1243 = vmatpush2.bf16.xpose.msra.mxu0 0
  %1244 = vmatprep.subr.bf16.mxu0 0
  %1245 = vmatpush2.bf16.xpose.msra.mxu0 0
  %1246 = vmatprep.subr.bf16.mxu0 0
  %1247 = vmatpush2.bf16.xpose.msra.mxu0 0
  %1248 = vmatprep.mubr.bf16.mxu0 0
  %1249 = vmatmul.mubr.bf16.gmra.mxu0 %v1211
  %v1250 = vpop.f32.mrf.mxu0
  %v1251 = vadd.f32 0.0, %v1250
  %v1252 = vpop.f32.mrf.mxu0
  %v1253 = vpop.f32.mrf.mxu0
  %v1254 = vpop.f32.mrf.mxu0
  %1255 = vdwg.mxu0
  %v1257 = vsel %vm151, %v39, 0
  %v1260 = vsel %vm151, %v107, 0
  %1262 = vmatprep.subr.bf16.mxu0 0
  %1263 = vmatpush1.bf16.xpose.msra.mxu0 0
  %1264 = vmatprep.subr.bf16.mxu0 0
  %1265 = vmatpush1.bf16.xpose.msra.mxu0 0
  %1266 = vmatprep.subr.bf16.mxu0 0
  %1267 = vmatpush1.bf16.xpose.msra.mxu0 0
  %1268 = vmatprep.subr.bf16.mxu0 0
  %1269 = vmatpush1.bf16.xpose.msra.mxu0 0
  %1270 = vmatprep.subr.bf16.mxu0 0
  %1271 = vmatpush1.bf16.xpose.msra.mxu0 0
  %1272 = vmatprep.subr.bf16.mxu0 0
  %1273 = vmatpush1.bf16.xpose.msra.mxu0 0
  %1274 = vmatprep.subr.bf16.mxu0 0
  %1275 = vmatpush1.bf16.xpose.msra.mxu0 0
  %1276 = vmatprep.subr.bf16.mxu0 0
  %1277 = vmatpush1.bf16.xpose.msra.mxu0 %v1260
  %1278 = vmatprep.subr.bf16.mxu0 0
  %1279 = vmatpush2.bf16.xpose.msra.mxu0 0
  %1280 = vmatprep.subr.bf16.mxu0 0
  %1281 = vmatpush2.bf16.xpose.msra.mxu0 0
  %1282 = vmatprep.subr.bf16.mxu0 0
  %1283 = vmatpush2.bf16.xpose.msra.mxu0 0
  %1284 = vmatprep.subr.bf16.mxu0 0
  %1285 = vmatpush2.bf16.xpose.msra.mxu0 0
  %1286 = vmatprep.subr.bf16.mxu0 0
  %1287 = vmatpush2.bf16.xpose.msra.mxu0 0
  %1288 = vmatprep.subr.bf16.mxu0 0
  %1289 = vmatpush2.bf16.xpose.msra.mxu0 0
  %1290 = vmatprep.subr.bf16.mxu0 0
  %1291 = vmatpush2.bf16.xpose.msra.mxu0 0
  %1292 = vmatprep.subr.bf16.mxu0 0
  %1293 = vmatpush2.bf16.xpose.msra.mxu0 0
  %1294 = vmatprep.mubr.bf16.mxu0 0
  %1295 = vmatmul.mubr.bf16.gmra.mxu0 %v1257
  %v1296 = vpop.f32.mrf.mxu0
  %v1297 = vadd.f32 0.0, %v1296
  %v1298 = vpop.f32.mrf.mxu0
  %v1299 = vpop.f32.mrf.mxu0
  %v1300 = vpop.f32.mrf.mxu0
  %1301 = vdwg.mxu0
  %v1303 = vsel %vm151, %v40, 0
  %v1306 = vsel %vm151, %v108, 0
  %1308 = vmatprep.subr.bf16.mxu0 0
  %1309 = vmatpush1.bf16.xpose.msra.mxu0 0
  %1310 = vmatprep.subr.bf16.mxu0 0
  %1311 = vmatpush1.bf16.xpose.msra.mxu0 0
  %1312 = vmatprep.subr.bf16.mxu0 0
  %1313 = vmatpush1.bf16.xpose.msra.mxu0 0
  %1314 = vmatprep.subr.bf16.mxu0 0
  %1315 = vmatpush1.bf16.xpose.msra.mxu0 0
  %1316 = vmatprep.subr.bf16.mxu0 0
  %1317 = vmatpush1.bf16.xpose.msra.mxu0 0
  %1318 = vmatprep.subr.bf16.mxu0 0
  %1319 = vmatpush1.bf16.xpose.msra.mxu0 0
  %1320 = vmatprep.subr.bf16.mxu0 0
  %1321 = vmatpush1.bf16.xpose.msra.mxu0 0
  %1322 = vmatprep.subr.bf16.mxu0 0
  %1323 = vmatpush1.bf16.xpose.msra.mxu0 %v1306
  %1324 = vmatprep.subr.bf16.mxu0 0
  %1325 = vmatpush2.bf16.xpose.msra.mxu0 0
  %1326 = vmatprep.subr.bf16.mxu0 0
  %1327 = vmatpush2.bf16.xpose.msra.mxu0 0
  %1328 = vmatprep.subr.bf16.mxu0 0
  %1329 = vmatpush2.bf16.xpose.msra.mxu0 0
  %1330 = vmatprep.subr.bf16.mxu0 0
  %1331 = vmatpush2.bf16.xpose.msra.mxu0 0
  %1332 = vmatprep.subr.bf16.mxu0 0
  %1333 = vmatpush2.bf16.xpose.msra.mxu0 0
  %1334 = vmatprep.subr.bf16.mxu0 0
  %1335 = vmatpush2.bf16.xpose.msra.mxu0 0
  %1336 = vmatprep.subr.bf16.mxu0 0
  %1337 = vmatpush2.bf16.xpose.msra.mxu0 0
  %1338 = vmatprep.subr.bf16.mxu0 0
  %1339 = vmatpush2.bf16.xpose.msra.mxu0 0
  %1340 = vmatprep.mubr.bf16.mxu0 0
  %1341 = vmatmul.mubr.bf16.gmra.mxu0 %v1303
  %v1342 = vpop.f32.mrf.mxu0
  %v1343 = vadd.f32 0.0, %v1342
  %v1344 = vpop.f32.mrf.mxu0
  %v1345 = vpop.f32.mrf.mxu0
  %v1346 = vpop.f32.mrf.mxu0
  %1347 = vdwg.mxu0
  %v1349 = vsel %vm151, %v41, 0
  %v1352 = vsel %vm151, %v109, 0
  %1354 = vmatprep.subr.bf16.mxu0 0
  %1355 = vmatpush1.bf16.xpose.msra.mxu0 0
  %1356 = vmatprep.subr.bf16.mxu0 0
  %1357 = vmatpush1.bf16.xpose.msra.mxu0 0
  %1358 = vmatprep.subr.bf16.mxu0 0
  %1359 = vmatpush1.bf16.xpose.msra.mxu0 0
  %1360 = vmatprep.subr.bf16.mxu0 0
  %1361 = vmatpush1.bf16.xpose.msra.mxu0 0
  %1362 = vmatprep.subr.bf16.mxu0 0
  %1363 = vmatpush1.bf16.xpose.msra.mxu0 0
  %1364 = vmatprep.subr.bf16.mxu0 0
  %1365 = vmatpush1.bf16.xpose.msra.mxu0 0
  %1366 = vmatprep.subr.bf16.mxu0 0
  %1367 = vmatpush1.bf16.xpose.msra.mxu0 0
  %1368 = vmatprep.subr.bf16.mxu0 0
  %1369 = vmatpush1.bf16.xpose.msra.mxu0 %v1352
  %1370 = vmatprep.subr.bf16.mxu0 0
  %1371 = vmatpush2.bf16.xpose.msra.mxu0 0
  %1372 = vmatprep.subr.bf16.mxu0 0
  %1373 = vmatpush2.bf16.xpose.msra.mxu0 0
  %1374 = vmatprep.subr.bf16.mxu0 0
  %1375 = vmatpush2.bf16.xpose.msra.mxu0 0
  %1376 = vmatprep.subr.bf16.mxu0 0
  %1377 = vmatpush2.bf16.xpose.msra.mxu0 0
  %1378 = vmatprep.subr.bf16.mxu0 0
  %1379 = vmatpush2.bf16.xpose.msra.mxu0 0
  %1380 = vmatprep.subr.bf16.mxu0 0
  %1381 = vmatpush2.bf16.xpose.msra.mxu0 0
  %1382 = vmatprep.subr.bf16.mxu0 0
  %1383 = vmatpush2.bf16.xpose.msra.mxu0 0
  %1384 = vmatprep.subr.bf16.mxu0 0
  %1385 = vmatpush2.bf16.xpose.msra.mxu0 0
  %1386 = vmatprep.mubr.bf16.mxu0 0
  %1387 = vmatmul.mubr.bf16.gmra.mxu0 %v1349
  %v1388 = vpop.f32.mrf.mxu0
  %v1389 = vadd.f32 0.0, %v1388
  %v1390 = vpop.f32.mrf.mxu0
  %v1391 = vpop.f32.mrf.mxu0
  %v1392 = vpop.f32.mrf.mxu0
  %1393 = vdwg.mxu0
  %v1395 = vsel %vm151, %v42, 0
  %v1398 = vsel %vm151, %v110, 0
  %1400 = vmatprep.subr.bf16.mxu0 0
  %1401 = vmatpush1.bf16.xpose.msra.mxu0 0
  %1402 = vmatprep.subr.bf16.mxu0 0
  %1403 = vmatpush1.bf16.xpose.msra.mxu0 0
  %1404 = vmatprep.subr.bf16.mxu0 0
  %1405 = vmatpush1.bf16.xpose.msra.mxu0 0
  %1406 = vmatprep.subr.bf16.mxu0 0
  %1407 = vmatpush1.bf16.xpose.msra.mxu0 0
  %1408 = vmatprep.subr.bf16.mxu0 0
  %1409 = vmatpush1.bf16.xpose.msra.mxu0 0
  %1410 = vmatprep.subr.bf16.mxu0 0
  %1411 = vmatpush1.bf16.xpose.msra.mxu0 0
  %1412 = vmatprep.subr.bf16.mxu0 0
  %1413 = vmatpush1.bf16.xpose.msra.mxu0 0
  %1414 = vmatprep.subr.bf16.mxu0 0
  %1415 = vmatpush1.bf16.xpose.msra.mxu0 %v1398
  %1416 = vmatprep.subr.bf16.mxu0 0
  %1417 = vmatpush2.bf16.xpose.msra.mxu0 0
  %1418 = vmatprep.subr.bf16.mxu0 0
  %1419 = vmatpush2.bf16.xpose.msra.mxu0 0
  %1420 = vmatprep.subr.bf16.mxu0 0
  %1421 = vmatpush2.bf16.xpose.msra.mxu0 0
  %1422 = vmatprep.subr.bf16.mxu0 0
  %1423 = vmatpush2.bf16.xpose.msra.mxu0 0
  %1424 = vmatprep.subr.bf16.mxu0 0
  %1425 = vmatpush2.bf16.xpose.msra.mxu0 0
  %1426 = vmatprep.subr.bf16.mxu0 0
  %1427 = vmatpush2.bf16.xpose.msra.mxu0 0
  %1428 = vmatprep.subr.bf16.mxu0 0
  %1429 = vmatpush2.bf16.xpose.msra.mxu0 0
  %1430 = vmatprep.subr.bf16.mxu0 0
  %1431 = vmatpush2.bf16.xpose.msra.mxu0 0
  %1432 = vmatprep.mubr.bf16.mxu0 0
  %1433 = vmatmul.mubr.bf16.gmra.mxu0 %v1395
  %v1434 = vpop.f32.mrf.mxu0
  %v1435 = vadd.f32 0.0, %v1434
  %v1436 = vpop.f32.mrf.mxu0
  %v1437 = vpop.f32.mrf.mxu0
  %v1438 = vpop.f32.mrf.mxu0
  %1439 = vdwg.mxu0
  %v1441 = vsel %vm151, %v43, 0
  %v1444 = vsel %vm151, %v111, 0
  %1446 = vmatprep.subr.bf16.mxu0 0
  %1447 = vmatpush1.bf16.xpose.msra.mxu0 0
  %1448 = vmatprep.subr.bf16.mxu0 0
  %1449 = vmatpush1.bf16.xpose.msra.mxu0 0
  %1450 = vmatprep.subr.bf16.mxu0 0
  %1451 = vmatpush1.bf16.xpose.msra.mxu0 0
  %1452 = vmatprep.subr.bf16.mxu0 0
  %1453 = vmatpush1.bf16.xpose.msra.mxu0 0
  %1454 = vmatprep.subr.bf16.mxu0 0
  %1455 = vmatpush1.bf16.xpose.msra.mxu0 0
  %1456 = vmatprep.subr.bf16.mxu0 0
  %1457 = vmatpush1.bf16.xpose.msra.mxu0 0
  %1458 = vmatprep.subr.bf16.mxu0 0
  %1459 = vmatpush1.bf16.xpose.msra.mxu0 0
  %1460 = vmatprep.subr.bf16.mxu0 0
  %1461 = vmatpush1.bf16.xpose.msra.mxu0 %v1444
  %1462 = vmatprep.subr.bf16.mxu0 0
  %1463 = vmatpush2.bf16.xpose.msra.mxu0 0
  %1464 = vmatprep.subr.bf16.mxu0 0
  %1465 = vmatpush2.bf16.xpose.msra.mxu0 0
  %1466 = vmatprep.subr.bf16.mxu0 0
  %1467 = vmatpush2.bf16.xpose.msra.mxu0 0
  %1468 = vmatprep.subr.bf16.mxu0 0
  %1469 = vmatpush2.bf16.xpose.msra.mxu0 0
  %1470 = vmatprep.subr.bf16.mxu0 0
  %1471 = vmatpush2.bf16.xpose.msra.mxu0 0
  %1472 = vmatprep.subr.bf16.mxu0 0
  %1473 = vmatpush2.bf16.xpose.msra.mxu0 0
  %1474 = vmatprep.subr.bf16.mxu0 0
  %1475 = vmatpush2.bf16.xpose.msra.mxu0 0
  %1476 = vmatprep.subr.bf16.mxu0 0
  %1477 = vmatpush2.bf16.xpose.msra.mxu0 0
  %1478 = vmatprep.mubr.bf16.mxu0 0
  %1479 = vmatmul.mubr.bf16.gmra.mxu0 %v1441
  %v1480 = vpop.f32.mrf.mxu0
  %v1481 = vadd.f32 0.0, %v1480
  %v1482 = vpop.f32.mrf.mxu0
  %v1483 = vpop.f32.mrf.mxu0
  %v1484 = vpop.f32.mrf.mxu0
  %1485 = vdwg.mxu0
  %v1487 = vsel %vm151, %v44, 0
  %v1490 = vsel %vm151, %v112, 0
  %1492 = vmatprep.subr.bf16.mxu0 0
  %1493 = vmatpush1.bf16.xpose.msra.mxu0 0
  %1494 = vmatprep.subr.bf16.mxu0 0
  %1495 = vmatpush1.bf16.xpose.msra.mxu0 0
  %1496 = vmatprep.subr.bf16.mxu0 0
  %1497 = vmatpush1.bf16.xpose.msra.mxu0 0
  %1498 = vmatprep.subr.bf16.mxu0 0
  %1499 = vmatpush1.bf16.xpose.msra.mxu0 0
  %1500 = vmatprep.subr.bf16.mxu0 0
  %1501 = vmatpush1.bf16.xpose.msra.mxu0 0
  %1502 = vmatprep.subr.bf16.mxu0 0
  %1503 = vmatpush1.bf16.xpose.msra.mxu0 0
  %1504 = vmatprep.subr.bf16.mxu0 0
  %1505 = vmatpush1.bf16.xpose.msra.mxu0 0
  %1506 = vmatprep.subr.bf16.mxu0 0
  %1507 = vmatpush1.bf16.xpose.msra.mxu0 %v1490
  %1508 = vmatprep.subr.bf16.mxu0 0
  %1509 = vmatpush2.bf16.xpose.msra.mxu0 0
  %1510 = vmatprep.subr.bf16.mxu0 0
  %1511 = vmatpush2.bf16.xpose.msra.mxu0 0
  %1512 = vmatprep.subr.bf16.mxu0 0
  %1513 = vmatpush2.bf16.xpose.msra.mxu0 0
  %1514 = vmatprep.subr.bf16.mxu0 0
  %1515 = vmatpush2.bf16.xpose.msra.mxu0 0
  %1516 = vmatprep.subr.bf16.mxu0 0
  %1517 = vmatpush2.bf16.xpose.msra.mxu0 0
  %1518 = vmatprep.subr.bf16.mxu0 0
  %1519 = vmatpush2.bf16.xpose.msra.mxu0 0
  %1520 = vmatprep.subr.bf16.mxu0 0
  %1521 = vmatpush2.bf16.xpose.msra.mxu0 0
  %1522 = vmatprep.subr.bf16.mxu0 0
  %1523 = vmatpush2.bf16.xpose.msra.mxu0 0
  %1524 = vmatprep.mubr.bf16.mxu0 0
  %1525 = vmatmul.mubr.bf16.gmra.mxu0 %v1487
  %v1526 = vpop.f32.mrf.mxu0
  %v1527 = vadd.f32 0.0, %v1526
  %v1528 = vpop.f32.mrf.mxu0
  %v1529 = vpop.f32.mrf.mxu0
  %v1530 = vpop.f32.mrf.mxu0
  %1531 = vdwg.mxu0
  %v1533 = vsel %vm151, %v45, 0
  %v1536 = vsel %vm151, %v113, 0
  %1538 = vmatprep.subr.bf16.mxu0 0
  %1539 = vmatpush1.bf16.xpose.msra.mxu0 0
  %1540 = vmatprep.subr.bf16.mxu0 0
  %1541 = vmatpush1.bf16.xpose.msra.mxu0 0
  %1542 = vmatprep.subr.bf16.mxu0 0
  %1543 = vmatpush1.bf16.xpose.msra.mxu0 0
  %1544 = vmatprep.subr.bf16.mxu0 0
  %1545 = vmatpush1.bf16.xpose.msra.mxu0 0
  %1546 = vmatprep.subr.bf16.mxu0 0
  %1547 = vmatpush1.bf16.xpose.msra.mxu0 0
  %1548 = vmatprep.subr.bf16.mxu0 0
  %1549 = vmatpush1.bf16.xpose.msra.mxu0 0
  %1550 = vmatprep.subr.bf16.mxu0 0
  %1551 = vmatpush1.bf16.xpose.msra.mxu0 0
  %1552 = vmatprep.subr.bf16.mxu0 0
  %1553 = vmatpush1.bf16.xpose.msra.mxu0 %v1536
  %1554 = vmatprep.subr.bf16.mxu0 0
  %1555 = vmatpush2.bf16.xpose.msra.mxu0 0
  %1556 = vmatprep.subr.bf16.mxu0 0
  %1557 = vmatpush2.bf16.xpose.msra.mxu0 0
  %1558 = vmatprep.subr.bf16.mxu0 0
  %1559 = vmatpush2.bf16.xpose.msra.mxu0 0
  %1560 = vmatprep.subr.bf16.mxu0 0
  %1561 = vmatpush2.bf16.xpose.msra.mxu0 0
  %1562 = vmatprep.subr.bf16.mxu0 0
  %1563 = vmatpush2.bf16.xpose.msra.mxu0 0
  %1564 = vmatprep.subr.bf16.mxu0 0
  %1565 = vmatpush2.bf16.xpose.msra.mxu0 0
  %1566 = vmatprep.subr.bf16.mxu0 0
  %1567 = vmatpush2.bf16.xpose.msra.mxu0 0
  %1568 = vmatprep.subr.bf16.mxu0 0
  %1569 = vmatpush2.bf16.xpose.msra.mxu0 0
  %1570 = vmatprep.mubr.bf16.mxu0 0
  %1571 = vmatmul.mubr.bf16.gmra.mxu0 %v1533
  %v1572 = vpop.f32.mrf.mxu0
  %v1573 = vadd.f32 0.0, %v1572
  %v1574 = vpop.f32.mrf.mxu0
  %v1575 = vpop.f32.mrf.mxu0
  %v1576 = vpop.f32.mrf.mxu0
  %1577 = vdwg.mxu0
  %v1579 = vsel %vm151, %v46, 0
  %v1582 = vsel %vm151, %v114, 0
  %1584 = vmatprep.subr.bf16.mxu0 0
  %1585 = vmatpush1.bf16.xpose.msra.mxu0 0
  %1586 = vmatprep.subr.bf16.mxu0 0
  %1587 = vmatpush1.bf16.xpose.msra.mxu0 0
  %1588 = vmatprep.subr.bf16.mxu0 0
  %1589 = vmatpush1.bf16.xpose.msra.mxu0 0
  %1590 = vmatprep.subr.bf16.mxu0 0
  %1591 = vmatpush1.bf16.xpose.msra.mxu0 0
  %1592 = vmatprep.subr.bf16.mxu0 0
  %1593 = vmatpush1.bf16.xpose.msra.mxu0 0
  %1594 = vmatprep.subr.bf16.mxu0 0
  %1595 = vmatpush1.bf16.xpose.msra.mxu0 0
  %1596 = vmatprep.subr.bf16.mxu0 0
  %1597 = vmatpush1.bf16.xpose.msra.mxu0 0
  %1598 = vmatprep.subr.bf16.mxu0 0
  %1599 = vmatpush1.bf16.xpose.msra.mxu0 %v1582
  %1600 = vmatprep.subr.bf16.mxu0 0
  %1601 = vmatpush2.bf16.xpose.msra.mxu0 0
  %1602 = vmatprep.subr.bf16.mxu0 0
  %1603 = vmatpush2.bf16.xpose.msra.mxu0 0
  %1604 = vmatprep.subr.bf16.mxu0 0
  %1605 = vmatpush2.bf16.xpose.msra.mxu0 0
  %1606 = vmatprep.subr.bf16.mxu0 0
  %1607 = vmatpush2.bf16.xpose.msra.mxu0 0
  %1608 = vmatprep.subr.bf16.mxu0 0
  %1609 = vmatpush2.bf16.xpose.msra.mxu0 0
  %1610 = vmatprep.subr.bf16.mxu0 0
  %1611 = vmatpush2.bf16.xpose.msra.mxu0 0
  %1612 = vmatprep.subr.bf16.mxu0 0
  %1613 = vmatpush2.bf16.xpose.msra.mxu0 0
  %1614 = vmatprep.subr.bf16.mxu0 0
  %1615 = vmatpush2.bf16.xpose.msra.mxu0 0
  %1616 = vmatprep.mubr.bf16.mxu0 0
  %1617 = vmatmul.mubr.bf16.gmra.mxu0 %v1579
  %v1618 = vpop.f32.mrf.mxu0
  %v1619 = vadd.f32 0.0, %v1618
  %v1620 = vpop.f32.mrf.mxu0
  %v1621 = vpop.f32.mrf.mxu0
  %v1622 = vpop.f32.mrf.mxu0
  %1623 = vdwg.mxu0
  %v1625 = vsel %vm151, %v47, 0
  %v1628 = vsel %vm151, %v115, 0
  %1630 = vmatprep.subr.bf16.mxu0 0
  %1631 = vmatpush1.bf16.xpose.msra.mxu0 0
  %1632 = vmatprep.subr.bf16.mxu0 0
  %1633 = vmatpush1.bf16.xpose.msra.mxu0 0
  %1634 = vmatprep.subr.bf16.mxu0 0
  %1635 = vmatpush1.bf16.xpose.msra.mxu0 0
  %1636 = vmatprep.subr.bf16.mxu0 0
  %1637 = vmatpush1.bf16.xpose.msra.mxu0 0
  %1638 = vmatprep.subr.bf16.mxu0 0
  %1639 = vmatpush1.bf16.xpose.msra.mxu0 0
  %1640 = vmatprep.subr.bf16.mxu0 0
  %1641 = vmatpush1.bf16.xpose.msra.mxu0 0
  %1642 = vmatprep.subr.bf16.mxu0 0
  %1643 = vmatpush1.bf16.xpose.msra.mxu0 0
  %1644 = vmatprep.subr.bf16.mxu0 0
  %1645 = vmatpush1.bf16.xpose.msra.mxu0 %v1628
  %1646 = vmatprep.subr.bf16.mxu0 0
  %1647 = vmatpush2.bf16.xpose.msra.mxu0 0
  %1648 = vmatprep.subr.bf16.mxu0 0
  %1649 = vmatpush2.bf16.xpose.msra.mxu0 0
  %1650 = vmatprep.subr.bf16.mxu0 0
  %1651 = vmatpush2.bf16.xpose.msra.mxu0 0
  %1652 = vmatprep.subr.bf16.mxu0 0
  %1653 = vmatpush2.bf16.xpose.msra.mxu0 0
  %1654 = vmatprep.subr.bf16.mxu0 0
  %1655 = vmatpush2.bf16.xpose.msra.mxu0 0
  %1656 = vmatprep.subr.bf16.mxu0 0
  %1657 = vmatpush2.bf16.xpose.msra.mxu0 0
  %1658 = vmatprep.subr.bf16.mxu0 0
  %1659 = vmatpush2.bf16.xpose.msra.mxu0 0
  %1660 = vmatprep.subr.bf16.mxu0 0
  %1661 = vmatpush2.bf16.xpose.msra.mxu0 0
  %1662 = vmatprep.mubr.bf16.mxu0 0
  %1663 = vmatmul.mubr.bf16.gmra.mxu0 %v1625
  %v1664 = vpop.f32.mrf.mxu0
  %v1665 = vadd.f32 0.0, %v1664
  %v1666 = vpop.f32.mrf.mxu0
  %v1667 = vpop.f32.mrf.mxu0
  %v1668 = vpop.f32.mrf.mxu0
  %1669 = vdwg.mxu0
  %v1671 = vsel %vm151, %v48, 0
  %v1674 = vsel %vm151, %v116, 0
  %1676 = vmatprep.subr.bf16.mxu0 0
  %1677 = vmatpush1.bf16.xpose.msra.mxu0 0
  %1678 = vmatprep.subr.bf16.mxu0 0
  %1679 = vmatpush1.bf16.xpose.msra.mxu0 0
  %1680 = vmatprep.subr.bf16.mxu0 0
  %1681 = vmatpush1.bf16.xpose.msra.mxu0 0
  %1682 = vmatprep.subr.bf16.mxu0 0
  %1683 = vmatpush1.bf16.xpose.msra.mxu0 0
  %1684 = vmatprep.subr.bf16.mxu0 0
  %1685 = vmatpush1.bf16.xpose.msra.mxu0 0
  %1686 = vmatprep.subr.bf16.mxu0 0
  %1687 = vmatpush1.bf16.xpose.msra.mxu0 0
  %1688 = vmatprep.subr.bf16.mxu0 0
  %1689 = vmatpush1.bf16.xpose.msra.mxu0 0
  %1690 = vmatprep.subr.bf16.mxu0 0
  %1691 = vmatpush1.bf16.xpose.msra.mxu0 %v1674
  %1692 = vmatprep.subr.bf16.mxu0 0
  %1693 = vmatpush2.bf16.xpose.msra.mxu0 0
  %1694 = vmatprep.subr.bf16.mxu0 0
  %1695 = vmatpush2.bf16.xpose.msra.mxu0 0
  %1696 = vmatprep.subr.bf16.mxu0 0
  %1697 = vmatpush2.bf16.xpose.msra.mxu0 0
  %1698 = vmatprep.subr.bf16.mxu0 0
  %1699 = vmatpush2.bf16.xpose.msra.mxu0 0
  %1700 = vmatprep.subr.bf16.mxu0 0
  %1701 = vmatpush2.bf16.xpose.msra.mxu0 0
  %1702 = vmatprep.subr.bf16.mxu0 0
  %1703 = vmatpush2.bf16.xpose.msra.mxu0 0
  %1704 = vmatprep.subr.bf16.mxu0 0
  %1705 = vmatpush2.bf16.xpose.msra.mxu0 0
  %1706 = vmatprep.subr.bf16.mxu0 0
  %1707 = vmatpush2.bf16.xpose.msra.mxu0 0
  %1708 = vmatprep.mubr.bf16.mxu0 0
  %1709 = vmatmul.mubr.bf16.gmra.mxu0 %v1671
  %v1710 = vpop.f32.mrf.mxu0
  %v1711 = vadd.f32 0.0, %v1710
  %v1712 = vpop.f32.mrf.mxu0
  %v1713 = vpop.f32.mrf.mxu0
  %v1714 = vpop.f32.mrf.mxu0
  %1715 = vdwg.mxu0
  %v1717 = vsel %vm151, %v49, 0
  %v1720 = vsel %vm151, %v117, 0
  %1722 = vmatprep.subr.bf16.mxu0 0
  %1723 = vmatpush1.bf16.xpose.msra.mxu0 0
  %1724 = vmatprep.subr.bf16.mxu0 0
  %1725 = vmatpush1.bf16.xpose.msra.mxu0 0
  %1726 = vmatprep.subr.bf16.mxu0 0
  %1727 = vmatpush1.bf16.xpose.msra.mxu0 0
  %1728 = vmatprep.subr.bf16.mxu0 0
  %1729 = vmatpush1.bf16.xpose.msra.mxu0 0
  %1730 = vmatprep.subr.bf16.mxu0 0
  %1731 = vmatpush1.bf16.xpose.msra.mxu0 0
  %1732 = vmatprep.subr.bf16.mxu0 0
  %1733 = vmatpush1.bf16.xpose.msra.mxu0 0
  %1734 = vmatprep.subr.bf16.mxu0 0
  %1735 = vmatpush1.bf16.xpose.msra.mxu0 0
  %1736 = vmatprep.subr.bf16.mxu0 0
  %1737 = vmatpush1.bf16.xpose.msra.mxu0 %v1720
  %1738 = vmatprep.subr.bf16.mxu0 0
  %1739 = vmatpush2.bf16.xpose.msra.mxu0 0
  %1740 = vmatprep.subr.bf16.mxu0 0
  %1741 = vmatpush2.bf16.xpose.msra.mxu0 0
  %1742 = vmatprep.subr.bf16.mxu0 0
  %1743 = vmatpush2.bf16.xpose.msra.mxu0 0
  %1744 = vmatprep.subr.bf16.mxu0 0
  %1745 = vmatpush2.bf16.xpose.msra.mxu0 0
  %1746 = vmatprep.subr.bf16.mxu0 0
  %1747 = vmatpush2.bf16.xpose.msra.mxu0 0
  %1748 = vmatprep.subr.bf16.mxu0 0
  %1749 = vmatpush2.bf16.xpose.msra.mxu0 0
  %1750 = vmatprep.subr.bf16.mxu0 0
  %1751 = vmatpush2.bf16.xpose.msra.mxu0 0
  %1752 = vmatprep.subr.bf16.mxu0 0
  %1753 = vmatpush2.bf16.xpose.msra.mxu0 0
  %1754 = vmatprep.mubr.bf16.mxu0 0
  %1755 = vmatmul.mubr.bf16.gmra.mxu0 %v1717
  %v1756 = vpop.f32.mrf.mxu0
  %v1757 = vadd.f32 0.0, %v1756
  %v1758 = vpop.f32.mrf.mxu0
  %v1759 = vpop.f32.mrf.mxu0
  %v1760 = vpop.f32.mrf.mxu0
  %1761 = vdwg.mxu0
  %v1763 = vsel %vm151, %v50, 0
  %v1766 = vsel %vm151, %v118, 0
  %1768 = vmatprep.subr.bf16.mxu0 0
  %1769 = vmatpush1.bf16.xpose.msra.mxu0 0
  %1770 = vmatprep.subr.bf16.mxu0 0
  %1771 = vmatpush1.bf16.xpose.msra.mxu0 0
  %1772 = vmatprep.subr.bf16.mxu0 0
  %1773 = vmatpush1.bf16.xpose.msra.mxu0 0
  %1774 = vmatprep.subr.bf16.mxu0 0
  %1775 = vmatpush1.bf16.xpose.msra.mxu0 0
  %1776 = vmatprep.subr.bf16.mxu0 0
  %1777 = vmatpush1.bf16.xpose.msra.mxu0 0
  %1778 = vmatprep.subr.bf16.mxu0 0
  %1779 = vmatpush1.bf16.xpose.msra.mxu0 0
  %1780 = vmatprep.subr.bf16.mxu0 0
  %1781 = vmatpush1.bf16.xpose.msra.mxu0 0
  %1782 = vmatprep.subr.bf16.mxu0 0
  %1783 = vmatpush1.bf16.xpose.msra.mxu0 %v1766
  %1784 = vmatprep.subr.bf16.mxu0 0
  %1785 = vmatpush2.bf16.xpose.msra.mxu0 0
  %1786 = vmatprep.subr.bf16.mxu0 0
  %1787 = vmatpush2.bf16.xpose.msra.mxu0 0
  %1788 = vmatprep.subr.bf16.mxu0 0
  %1789 = vmatpush2.bf16.xpose.msra.mxu0 0
  %1790 = vmatprep.subr.bf16.mxu0 0
  %1791 = vmatpush2.bf16.xpose.msra.mxu0 0
  %1792 = vmatprep.subr.bf16.mxu0 0
  %1793 = vmatpush2.bf16.xpose.msra.mxu0 0
  %1794 = vmatprep.subr.bf16.mxu0 0
  %1795 = vmatpush2.bf16.xpose.msra.mxu0 0
  %1796 = vmatprep.subr.bf16.mxu0 0
  %1797 = vmatpush2.bf16.xpose.msra.mxu0 0
  %1798 = vmatprep.subr.bf16.mxu0 0
  %1799 = vmatpush2.bf16.xpose.msra.mxu0 0
  %1800 = vmatprep.mubr.bf16.mxu0 0
  %1801 = vmatmul.mubr.bf16.gmra.mxu0 %v1763
  %v1802 = vpop.f32.mrf.mxu0
  %v1803 = vadd.f32 0.0, %v1802
  %v1804 = vpop.f32.mrf.mxu0
  %v1805 = vpop.f32.mrf.mxu0
  %v1806 = vpop.f32.mrf.mxu0
  %1807 = vdwg.mxu0
  %v1809 = vsel %vm151, %v51, 0
  %v1812 = vsel %vm151, %v119, 0
  %1814 = vmatprep.subr.bf16.mxu0 0
  %1815 = vmatpush1.bf16.xpose.msra.mxu0 0
  %1816 = vmatprep.subr.bf16.mxu0 0
  %1817 = vmatpush1.bf16.xpose.msra.mxu0 0
  %1818 = vmatprep.subr.bf16.mxu0 0
  %1819 = vmatpush1.bf16.xpose.msra.mxu0 0
  %1820 = vmatprep.subr.bf16.mxu0 0
  %1821 = vmatpush1.bf16.xpose.msra.mxu0 0
  %1822 = vmatprep.subr.bf16.mxu0 0
  %1823 = vmatpush1.bf16.xpose.msra.mxu0 0
  %1824 = vmatprep.subr.bf16.mxu0 0
  %1825 = vmatpush1.bf16.xpose.msra.mxu0 0
  %1826 = vmatprep.subr.bf16.mxu0 0
  %1827 = vmatpush1.bf16.xpose.msra.mxu0 0
  %1828 = vmatprep.subr.bf16.mxu0 0
  %1829 = vmatpush1.bf16.xpose.msra.mxu0 %v1812
  %1830 = vmatprep.subr.bf16.mxu0 0
  %1831 = vmatpush2.bf16.xpose.msra.mxu0 0
  %1832 = vmatprep.subr.bf16.mxu0 0
  %1833 = vmatpush2.bf16.xpose.msra.mxu0 0
  %1834 = vmatprep.subr.bf16.mxu0 0
  %1835 = vmatpush2.bf16.xpose.msra.mxu0 0
  %1836 = vmatprep.subr.bf16.mxu0 0
  %1837 = vmatpush2.bf16.xpose.msra.mxu0 0
  %1838 = vmatprep.subr.bf16.mxu0 0
  %1839 = vmatpush2.bf16.xpose.msra.mxu0 0
  %1840 = vmatprep.subr.bf16.mxu0 0
  %1841 = vmatpush2.bf16.xpose.msra.mxu0 0
  %1842 = vmatprep.subr.bf16.mxu0 0
  %1843 = vmatpush2.bf16.xpose.msra.mxu0 0
  %1844 = vmatprep.subr.bf16.mxu0 0
  %1845 = vmatpush2.bf16.xpose.msra.mxu0 0
  %1846 = vmatprep.mubr.bf16.mxu0 0
  %1847 = vmatmul.mubr.bf16.gmra.mxu0 %v1809
  %v1848 = vpop.f32.mrf.mxu0
  %v1849 = vadd.f32 0.0, %v1848
  %v1850 = vpop.f32.mrf.mxu0
  %v1851 = vpop.f32.mrf.mxu0
  %v1852 = vpop.f32.mrf.mxu0
  %1853 = vdwg.mxu0
  %v1855 = vsel %vm151, %v52, 0
  %v1858 = vsel %vm151, %v120, 0
  %1860 = vmatprep.subr.bf16.mxu0 0
  %1861 = vmatpush1.bf16.xpose.msra.mxu0 0
  %1862 = vmatprep.subr.bf16.mxu0 0
  %1863 = vmatpush1.bf16.xpose.msra.mxu0 0
  %1864 = vmatprep.subr.bf16.mxu0 0
  %1865 = vmatpush1.bf16.xpose.msra.mxu0 0
  %1866 = vmatprep.subr.bf16.mxu0 0
  %1867 = vmatpush1.bf16.xpose.msra.mxu0 0
  %1868 = vmatprep.subr.bf16.mxu0 0
  %1869 = vmatpush1.bf16.xpose.msra.mxu0 0
  %1870 = vmatprep.subr.bf16.mxu0 0
  %1871 = vmatpush1.bf16.xpose.msra.mxu0 0
  %1872 = vmatprep.subr.bf16.mxu0 0
  %1873 = vmatpush1.bf16.xpose.msra.mxu0 0
  %1874 = vmatprep.subr.bf16.mxu0 0
  %1875 = vmatpush1.bf16.xpose.msra.mxu0 %v1858
  %1876 = vmatprep.subr.bf16.mxu0 0
  %1877 = vmatpush2.bf16.xpose.msra.mxu0 0
  %1878 = vmatprep.subr.bf16.mxu0 0
  %1879 = vmatpush2.bf16.xpose.msra.mxu0 0
  %1880 = vmatprep.subr.bf16.mxu0 0
  %1881 = vmatpush2.bf16.xpose.msra.mxu0 0
  %1882 = vmatprep.subr.bf16.mxu0 0
  %1883 = vmatpush2.bf16.xpose.msra.mxu0 0
  %1884 = vmatprep.subr.bf16.mxu0 0
  %1885 = vmatpush2.bf16.xpose.msra.mxu0 0
  %1886 = vmatprep.subr.bf16.mxu0 0
  %1887 = vmatpush2.bf16.xpose.msra.mxu0 0
  %1888 = vmatprep.subr.bf16.mxu0 0
  %1889 = vmatpush2.bf16.xpose.msra.mxu0 0
  %1890 = vmatprep.subr.bf16.mxu0 0
  %1891 = vmatpush2.bf16.xpose.msra.mxu0 0
  %1892 = vmatprep.mubr.bf16.mxu0 0
  %1893 = vmatmul.mubr.bf16.gmra.mxu0 %v1855
  %v1894 = vpop.f32.mrf.mxu0
  %v1895 = vadd.f32 0.0, %v1894
  %v1896 = vpop.f32.mrf.mxu0
  %v1897 = vpop.f32.mrf.mxu0
  %v1898 = vpop.f32.mrf.mxu0
  %1899 = vdwg.mxu0
  %v1901 = vsel %vm151, %v53, 0
  %v1904 = vsel %vm151, %v121, 0
  %1906 = vmatprep.subr.bf16.mxu0 0
  %1907 = vmatpush1.bf16.xpose.msra.mxu0 0
  %1908 = vmatprep.subr.bf16.mxu0 0
  %1909 = vmatpush1.bf16.xpose.msra.mxu0 0
  %1910 = vmatprep.subr.bf16.mxu0 0
  %1911 = vmatpush1.bf16.xpose.msra.mxu0 0
  %1912 = vmatprep.subr.bf16.mxu0 0
  %1913 = vmatpush1.bf16.xpose.msra.mxu0 0
  %1914 = vmatprep.subr.bf16.mxu0 0
  %1915 = vmatpush1.bf16.xpose.msra.mxu0 0
  %1916 = vmatprep.subr.bf16.mxu0 0
  %1917 = vmatpush1.bf16.xpose.msra.mxu0 0
  %1918 = vmatprep.subr.bf16.mxu0 0
  %1919 = vmatpush1.bf16.xpose.msra.mxu0 0
  %1920 = vmatprep.subr.bf16.mxu0 0
  %1921 = vmatpush1.bf16.xpose.msra.mxu0 %v1904
  %1922 = vmatprep.subr.bf16.mxu0 0
  %1923 = vmatpush2.bf16.xpose.msra.mxu0 0
  %1924 = vmatprep.subr.bf16.mxu0 0
  %1925 = vmatpush2.bf16.xpose.msra.mxu0 0
  %1926 = vmatprep.subr.bf16.mxu0 0
  %1927 = vmatpush2.bf16.xpose.msra.mxu0 0
  %1928 = vmatprep.subr.bf16.mxu0 0
  %1929 = vmatpush2.bf16.xpose.msra.mxu0 0
  %1930 = vmatprep.subr.bf16.mxu0 0
  %1931 = vmatpush2.bf16.xpose.msra.mxu0 0
  %1932 = vmatprep.subr.bf16.mxu0 0
  %1933 = vmatpush2.bf16.xpose.msra.mxu0 0
  %1934 = vmatprep.subr.bf16.mxu0 0
  %1935 = vmatpush2.bf16.xpose.msra.mxu0 0
  %1936 = vmatprep.subr.bf16.mxu0 0
  %1937 = vmatpush2.bf16.xpose.msra.mxu0 0
  %1938 = vmatprep.mubr.bf16.mxu0 0
  %1939 = vmatmul.mubr.bf16.gmra.mxu0 %v1901
  %v1940 = vpop.f32.mrf.mxu0
  %v1941 = vadd.f32 0.0, %v1940
  %v1942 = vpop.f32.mrf.mxu0
  %v1943 = vpop.f32.mrf.mxu0
  %v1944 = vpop.f32.mrf.mxu0
  %1945 = vdwg.mxu0
  %v1947 = vsel %vm151, %v54, 0
  %v1950 = vsel %vm151, %v122, 0
  %1952 = vmatprep.subr.bf16.mxu0 0
  %1953 = vmatpush1.bf16.xpose.msra.mxu0 0
  %1954 = vmatprep.subr.bf16.mxu0 0
  %1955 = vmatpush1.bf16.xpose.msra.mxu0 0
  %1956 = vmatprep.subr.bf16.mxu0 0
  %1957 = vmatpush1.bf16.xpose.msra.mxu0 0
  %1958 = vmatprep.subr.bf16.mxu0 0
  %1959 = vmatpush1.bf16.xpose.msra.mxu0 0
  %1960 = vmatprep.subr.bf16.mxu0 0
  %1961 = vmatpush1.bf16.xpose.msra.mxu0 0
  %1962 = vmatprep.subr.bf16.mxu0 0
  %1963 = vmatpush1.bf16.xpose.msra.mxu0 0
  %1964 = vmatprep.subr.bf16.mxu0 0
  %1965 = vmatpush1.bf16.xpose.msra.mxu0 0
  %1966 = vmatprep.subr.bf16.mxu0 0
  %1967 = vmatpush1.bf16.xpose.msra.mxu0 %v1950
  %1968 = vmatprep.subr.bf16.mxu0 0
  %1969 = vmatpush2.bf16.xpose.msra.mxu0 0
  %1970 = vmatprep.subr.bf16.mxu0 0
  %1971 = vmatpush2.bf16.xpose.msra.mxu0 0
  %1972 = vmatprep.subr.bf16.mxu0 0
  %1973 = vmatpush2.bf16.xpose.msra.mxu0 0
  %1974 = vmatprep.subr.bf16.mxu0 0
  %1975 = vmatpush2.bf16.xpose.msra.mxu0 0
  %1976 = vmatprep.subr.bf16.mxu0 0
  %1977 = vmatpush2.bf16.xpose.msra.mxu0 0
  %1978 = vmatprep.subr.bf16.mxu0 0
  %1979 = vmatpush2.bf16.xpose.msra.mxu0 0
  %1980 = vmatprep.subr.bf16.mxu0 0
  %1981 = vmatpush2.bf16.xpose.msra.mxu0 0
  %1982 = vmatprep.subr.bf16.mxu0 0
  %1983 = vmatpush2.bf16.xpose.msra.mxu0 0
  %1984 = vmatprep.mubr.bf16.mxu0 0
  %1985 = vmatmul.mubr.bf16.gmra.mxu0 %v1947
  %v1986 = vpop.f32.mrf.mxu0
  %v1987 = vadd.f32 0.0, %v1986
  %v1988 = vpop.f32.mrf.mxu0
  %v1989 = vpop.f32.mrf.mxu0
  %v1990 = vpop.f32.mrf.mxu0
  %1991 = vdwg.mxu0
  %v1993 = vsel %vm151, %v55, 0
  %v1996 = vsel %vm151, %v123, 0
  %1998 = vmatprep.subr.bf16.mxu0 0
  %1999 = vmatpush1.bf16.xpose.msra.mxu0 0
  %2000 = vmatprep.subr.bf16.mxu0 0
  %2001 = vmatpush1.bf16.xpose.msra.mxu0 0
  %2002 = vmatprep.subr.bf16.mxu0 0
  %2003 = vmatpush1.bf16.xpose.msra.mxu0 0
  %2004 = vmatprep.subr.bf16.mxu0 0
  %2005 = vmatpush1.bf16.xpose.msra.mxu0 0
  %2006 = vmatprep.subr.bf16.mxu0 0
  %2007 = vmatpush1.bf16.xpose.msra.mxu0 0
  %2008 = vmatprep.subr.bf16.mxu0 0
  %2009 = vmatpush1.bf16.xpose.msra.mxu0 0
  %2010 = vmatprep.subr.bf16.mxu0 0
  %2011 = vmatpush1.bf16.xpose.msra.mxu0 0
  %2012 = vmatprep.subr.bf16.mxu0 0
  %2013 = vmatpush1.bf16.xpose.msra.mxu0 %v1996
  %2014 = vmatprep.subr.bf16.mxu0 0
  %2015 = vmatpush2.bf16.xpose.msra.mxu0 0
  %2016 = vmatprep.subr.bf16.mxu0 0
  %2017 = vmatpush2.bf16.xpose.msra.mxu0 0
  %2018 = vmatprep.subr.bf16.mxu0 0
  %2019 = vmatpush2.bf16.xpose.msra.mxu0 0
  %2020 = vmatprep.subr.bf16.mxu0 0
  %2021 = vmatpush2.bf16.xpose.msra.mxu0 0
  %2022 = vmatprep.subr.bf16.mxu0 0
  %2023 = vmatpush2.bf16.xpose.msra.mxu0 0
  %2024 = vmatprep.subr.bf16.mxu0 0
  %2025 = vmatpush2.bf16.xpose.msra.mxu0 0
  %2026 = vmatprep.subr.bf16.mxu0 0
  %2027 = vmatpush2.bf16.xpose.msra.mxu0 0
  %2028 = vmatprep.subr.bf16.mxu0 0
  %2029 = vmatpush2.bf16.xpose.msra.mxu0 0
  %2030 = vmatprep.mubr.bf16.mxu0 0
  %2031 = vmatmul.mubr.bf16.gmra.mxu0 %v1993
  %v2032 = vpop.f32.mrf.mxu0
  %v2033 = vadd.f32 0.0, %v2032
  %v2034 = vpop.f32.mrf.mxu0
  %v2035 = vpop.f32.mrf.mxu0
  %v2036 = vpop.f32.mrf.mxu0
  %2037 = vdwg.mxu0
  %v2039 = vsel %vm151, %v56, 0
  %v2042 = vsel %vm151, %v124, 0
  %2044 = vmatprep.subr.bf16.mxu0 0
  %2045 = vmatpush1.bf16.xpose.msra.mxu0 0
  %2046 = vmatprep.subr.bf16.mxu0 0
  %2047 = vmatpush1.bf16.xpose.msra.mxu0 0
  %2048 = vmatprep.subr.bf16.mxu0 0
  %2049 = vmatpush1.bf16.xpose.msra.mxu0 0
  %2050 = vmatprep.subr.bf16.mxu0 0
  %2051 = vmatpush1.bf16.xpose.msra.mxu0 0
  %2052 = vmatprep.subr.bf16.mxu0 0
  %2053 = vmatpush1.bf16.xpose.msra.mxu0 0
  %2054 = vmatprep.subr.bf16.mxu0 0
  %2055 = vmatpush1.bf16.xpose.msra.mxu0 0
  %2056 = vmatprep.subr.bf16.mxu0 0
  %2057 = vmatpush1.bf16.xpose.msra.mxu0 0
  %2058 = vmatprep.subr.bf16.mxu0 0
  %2059 = vmatpush1.bf16.xpose.msra.mxu0 %v2042
  %2060 = vmatprep.subr.bf16.mxu0 0
  %2061 = vmatpush2.bf16.xpose.msra.mxu0 0
  %2062 = vmatprep.subr.bf16.mxu0 0
  %2063 = vmatpush2.bf16.xpose.msra.mxu0 0
  %2064 = vmatprep.subr.bf16.mxu0 0
  %2065 = vmatpush2.bf16.xpose.msra.mxu0 0
  %2066 = vmatprep.subr.bf16.mxu0 0
  %2067 = vmatpush2.bf16.xpose.msra.mxu0 0
  %2068 = vmatprep.subr.bf16.mxu0 0
  %2069 = vmatpush2.bf16.xpose.msra.mxu0 0
  %2070 = vmatprep.subr.bf16.mxu0 0
  %2071 = vmatpush2.bf16.xpose.msra.mxu0 0
  %2072 = vmatprep.subr.bf16.mxu0 0
  %2073 = vmatpush2.bf16.xpose.msra.mxu0 0
  %2074 = vmatprep.subr.bf16.mxu0 0
  %2075 = vmatpush2.bf16.xpose.msra.mxu0 0
  %2076 = vmatprep.mubr.bf16.mxu0 0
  %2077 = vmatmul.mubr.bf16.gmra.mxu0 %v2039
  %v2078 = vpop.f32.mrf.mxu0
  %v2079 = vadd.f32 0.0, %v2078
  %v2080 = vpop.f32.mrf.mxu0
  %v2081 = vpop.f32.mrf.mxu0
  %v2082 = vpop.f32.mrf.mxu0
  %2083 = vdwg.mxu0
  %v2085 = vsel %vm151, %v57, 0
  %v2088 = vsel %vm151, %v125, 0
  %2090 = vmatprep.subr.bf16.mxu0 0
  %2091 = vmatpush1.bf16.xpose.msra.mxu0 0
  %2092 = vmatprep.subr.bf16.mxu0 0
  %2093 = vmatpush1.bf16.xpose.msra.mxu0 0
  %2094 = vmatprep.subr.bf16.mxu0 0
  %2095 = vmatpush1.bf16.xpose.msra.mxu0 0
  %2096 = vmatprep.subr.bf16.mxu0 0
  %2097 = vmatpush1.bf16.xpose.msra.mxu0 0
  %2098 = vmatprep.subr.bf16.mxu0 0
  %2099 = vmatpush1.bf16.xpose.msra.mxu0 0
  %2100 = vmatprep.subr.bf16.mxu0 0
  %2101 = vmatpush1.bf16.xpose.msra.mxu0 0
  %2102 = vmatprep.subr.bf16.mxu0 0
  %2103 = vmatpush1.bf16.xpose.msra.mxu0 0
  %2104 = vmatprep.subr.bf16.mxu0 0
  %2105 = vmatpush1.bf16.xpose.msra.mxu0 %v2088
  %2106 = vmatprep.subr.bf16.mxu0 0
  %2107 = vmatpush2.bf16.xpose.msra.mxu0 0
  %2108 = vmatprep.subr.bf16.mxu0 0
  %2109 = vmatpush2.bf16.xpose.msra.mxu0 0
  %2110 = vmatprep.subr.bf16.mxu0 0
  %2111 = vmatpush2.bf16.xpose.msra.mxu0 0
  %2112 = vmatprep.subr.bf16.mxu0 0
  %2113 = vmatpush2.bf16.xpose.msra.mxu0 0
  %2114 = vmatprep.subr.bf16.mxu0 0
  %2115 = vmatpush2.bf16.xpose.msra.mxu0 0
  %2116 = vmatprep.subr.bf16.mxu0 0
  %2117 = vmatpush2.bf16.xpose.msra.mxu0 0
  %2118 = vmatprep.subr.bf16.mxu0 0
  %2119 = vmatpush2.bf16.xpose.msra.mxu0 0
  %2120 = vmatprep.subr.bf16.mxu0 0
  %2121 = vmatpush2.bf16.xpose.msra.mxu0 0
  %2122 = vmatprep.mubr.bf16.mxu0 0
  %2123 = vmatmul.mubr.bf16.gmra.mxu0 %v2085
  %v2124 = vpop.f32.mrf.mxu0
  %v2125 = vadd.f32 0.0, %v2124
  %v2126 = vpop.f32.mrf.mxu0
  %v2127 = vpop.f32.mrf.mxu0
  %v2128 = vpop.f32.mrf.mxu0
  %2129 = vdwg.mxu0
  %v2131 = vsel %vm151, %v58, 0
  %v2134 = vsel %vm151, %v126, 0
  %2136 = vmatprep.subr.bf16.mxu0 0
  %2137 = vmatpush1.bf16.xpose.msra.mxu0 0
  %2138 = vmatprep.subr.bf16.mxu0 0
  %2139 = vmatpush1.bf16.xpose.msra.mxu0 0
  %2140 = vmatprep.subr.bf16.mxu0 0
  %2141 = vmatpush1.bf16.xpose.msra.mxu0 0
  %2142 = vmatprep.subr.bf16.mxu0 0
  %2143 = vmatpush1.bf16.xpose.msra.mxu0 0
  %2144 = vmatprep.subr.bf16.mxu0 0
  %2145 = vmatpush1.bf16.xpose.msra.mxu0 0
  %2146 = vmatprep.subr.bf16.mxu0 0
  %2147 = vmatpush1.bf16.xpose.msra.mxu0 0
  %2148 = vmatprep.subr.bf16.mxu0 0
  %2149 = vmatpush1.bf16.xpose.msra.mxu0 0
  %2150 = vmatprep.subr.bf16.mxu0 0
  %2151 = vmatpush1.bf16.xpose.msra.mxu0 %v2134
  %2152 = vmatprep.subr.bf16.mxu0 0
  %2153 = vmatpush2.bf16.xpose.msra.mxu0 0
  %2154 = vmatprep.subr.bf16.mxu0 0
  %2155 = vmatpush2.bf16.xpose.msra.mxu0 0
  %2156 = vmatprep.subr.bf16.mxu0 0
  %2157 = vmatpush2.bf16.xpose.msra.mxu0 0
  %2158 = vmatprep.subr.bf16.mxu0 0
  %2159 = vmatpush2.bf16.xpose.msra.mxu0 0
  %2160 = vmatprep.subr.bf16.mxu0 0
  %2161 = vmatpush2.bf16.xpose.msra.mxu0 0
  %2162 = vmatprep.subr.bf16.mxu0 0
  %2163 = vmatpush2.bf16.xpose.msra.mxu0 0
  %2164 = vmatprep.subr.bf16.mxu0 0
  %2165 = vmatpush2.bf16.xpose.msra.mxu0 0
  %2166 = vmatprep.subr.bf16.mxu0 0
  %2167 = vmatpush2.bf16.xpose.msra.mxu0 0
  %2168 = vmatprep.mubr.bf16.mxu0 0
  %2169 = vmatmul.mubr.bf16.gmra.mxu0 %v2131
  %v2170 = vpop.f32.mrf.mxu0
  %v2171 = vadd.f32 0.0, %v2170
  %v2172 = vpop.f32.mrf.mxu0
  %v2173 = vpop.f32.mrf.mxu0
  %v2174 = vpop.f32.mrf.mxu0
  %2175 = vdwg.mxu0
  %v2177 = vsel %vm151, %v59, 0
  %v2180 = vsel %vm151, %v127, 0
  %2182 = vmatprep.subr.bf16.mxu0 0
  %2183 = vmatpush1.bf16.xpose.msra.mxu0 0
  %2184 = vmatprep.subr.bf16.mxu0 0
  %2185 = vmatpush1.bf16.xpose.msra.mxu0 0
  %2186 = vmatprep.subr.bf16.mxu0 0
  %2187 = vmatpush1.bf16.xpose.msra.mxu0 0
  %2188 = vmatprep.subr.bf16.mxu0 0
  %2189 = vmatpush1.bf16.xpose.msra.mxu0 0
  %2190 = vmatprep.subr.bf16.mxu0 0
  %2191 = vmatpush1.bf16.xpose.msra.mxu0 0
  %2192 = vmatprep.subr.bf16.mxu0 0
  %2193 = vmatpush1.bf16.xpose.msra.mxu0 0
  %2194 = vmatprep.subr.bf16.mxu0 0
  %2195 = vmatpush1.bf16.xpose.msra.mxu0 0
  %2196 = vmatprep.subr.bf16.mxu0 0
  %2197 = vmatpush1.bf16.xpose.msra.mxu0 %v2180
  %2198 = vmatprep.subr.bf16.mxu0 0
  %2199 = vmatpush2.bf16.xpose.msra.mxu0 0
  %2200 = vmatprep.subr.bf16.mxu0 0
  %2201 = vmatpush2.bf16.xpose.msra.mxu0 0
  %2202 = vmatprep.subr.bf16.mxu0 0
  %2203 = vmatpush2.bf16.xpose.msra.mxu0 0
  %2204 = vmatprep.subr.bf16.mxu0 0
  %2205 = vmatpush2.bf16.xpose.msra.mxu0 0
  %2206 = vmatprep.subr.bf16.mxu0 0
  %2207 = vmatpush2.bf16.xpose.msra.mxu0 0
  %2208 = vmatprep.subr.bf16.mxu0 0
  %2209 = vmatpush2.bf16.xpose.msra.mxu0 0
  %2210 = vmatprep.subr.bf16.mxu0 0
  %2211 = vmatpush2.bf16.xpose.msra.mxu0 0
  %2212 = vmatprep.subr.bf16.mxu0 0
  %2213 = vmatpush2.bf16.xpose.msra.mxu0 0
  %2214 = vmatprep.mubr.bf16.mxu0 0
  %2215 = vmatmul.mubr.bf16.gmra.mxu0 %v2177
  %v2216 = vpop.f32.mrf.mxu0
  %v2217 = vadd.f32 0.0, %v2216
  %v2218 = vpop.f32.mrf.mxu0
  %v2219 = vpop.f32.mrf.mxu0
  %v2220 = vpop.f32.mrf.mxu0
  %2221 = vdwg.mxu0
  %v2223 = vsel %vm151, %v60, 0
  %v2226 = vsel %vm151, %v128, 0
  %2228 = vmatprep.subr.bf16.mxu0 0
  %2229 = vmatpush1.bf16.xpose.msra.mxu0 0
  %2230 = vmatprep.subr.bf16.mxu0 0
  %2231 = vmatpush1.bf16.xpose.msra.mxu0 0
  %2232 = vmatprep.subr.bf16.mxu0 0
  %2233 = vmatpush1.bf16.xpose.msra.mxu0 0
  %2234 = vmatprep.subr.bf16.mxu0 0
  %2235 = vmatpush1.bf16.xpose.msra.mxu0 0
  %2236 = vmatprep.subr.bf16.mxu0 0
  %2237 = vmatpush1.bf16.xpose.msra.mxu0 0
  %2238 = vmatprep.subr.bf16.mxu0 0
  %2239 = vmatpush1.bf16.xpose.msra.mxu0 0
  %2240 = vmatprep.subr.bf16.mxu0 0
  %2241 = vmatpush1.bf16.xpose.msra.mxu0 0
  %2242 = vmatprep.subr.bf16.mxu0 0
  %2243 = vmatpush1.bf16.xpose.msra.mxu0 %v2226
  %2244 = vmatprep.subr.bf16.mxu0 0
  %2245 = vmatpush2.bf16.xpose.msra.mxu0 0
  %2246 = vmatprep.subr.bf16.mxu0 0
  %2247 = vmatpush2.bf16.xpose.msra.mxu0 0
  %2248 = vmatprep.subr.bf16.mxu0 0
  %2249 = vmatpush2.bf16.xpose.msra.mxu0 0
  %2250 = vmatprep.subr.bf16.mxu0 0
  %2251 = vmatpush2.bf16.xpose.msra.mxu0 0
  %2252 = vmatprep.subr.bf16.mxu0 0
  %2253 = vmatpush2.bf16.xpose.msra.mxu0 0
  %2254 = vmatprep.subr.bf16.mxu0 0
  %2255 = vmatpush2.bf16.xpose.msra.mxu0 0
  %2256 = vmatprep.subr.bf16.mxu0 0
  %2257 = vmatpush2.bf16.xpose.msra.mxu0 0
  %2258 = vmatprep.subr.bf16.mxu0 0
  %2259 = vmatpush2.bf16.xpose.msra.mxu0 0
  %2260 = vmatprep.mubr.bf16.mxu0 0
  %2261 = vmatmul.mubr.bf16.gmra.mxu0 %v2223
  %v2262 = vpop.f32.mrf.mxu0
  %v2263 = vadd.f32 0.0, %v2262
  %v2264 = vpop.f32.mrf.mxu0
  %v2265 = vpop.f32.mrf.mxu0
  %v2266 = vpop.f32.mrf.mxu0
  %2267 = vdwg.mxu0
  %v2269 = vsel %vm151, %v61, 0
  %v2272 = vsel %vm151, %v129, 0
  %2274 = vmatprep.subr.bf16.mxu0 0
  %2275 = vmatpush1.bf16.xpose.msra.mxu0 0
  %2276 = vmatprep.subr.bf16.mxu0 0
  %2277 = vmatpush1.bf16.xpose.msra.mxu0 0
  %2278 = vmatprep.subr.bf16.mxu0 0
  %2279 = vmatpush1.bf16.xpose.msra.mxu0 0
  %2280 = vmatprep.subr.bf16.mxu0 0
  %2281 = vmatpush1.bf16.xpose.msra.mxu0 0
  %2282 = vmatprep.subr.bf16.mxu0 0
  %2283 = vmatpush1.bf16.xpose.msra.mxu0 0
  %2284 = vmatprep.subr.bf16.mxu0 0
  %2285 = vmatpush1.bf16.xpose.msra.mxu0 0
  %2286 = vmatprep.subr.bf16.mxu0 0
  %2287 = vmatpush1.bf16.xpose.msra.mxu0 0
  %2288 = vmatprep.subr.bf16.mxu0 0
  %2289 = vmatpush1.bf16.xpose.msra.mxu0 %v2272
  %2290 = vmatprep.subr.bf16.mxu0 0
  %2291 = vmatpush2.bf16.xpose.msra.mxu0 0
  %2292 = vmatprep.subr.bf16.mxu0 0
  %2293 = vmatpush2.bf16.xpose.msra.mxu0 0
  %2294 = vmatprep.subr.bf16.mxu0 0
  %2295 = vmatpush2.bf16.xpose.msra.mxu0 0
  %2296 = vmatprep.subr.bf16.mxu0 0
  %2297 = vmatpush2.bf16.xpose.msra.mxu0 0
  %2298 = vmatprep.subr.bf16.mxu0 0
  %2299 = vmatpush2.bf16.xpose.msra.mxu0 0
  %2300 = vmatprep.subr.bf16.mxu0 0
  %2301 = vmatpush2.bf16.xpose.msra.mxu0 0
  %2302 = vmatprep.subr.bf16.mxu0 0
  %2303 = vmatpush2.bf16.xpose.msra.mxu0 0
  %2304 = vmatprep.subr.bf16.mxu0 0
  %2305 = vmatpush2.bf16.xpose.msra.mxu0 0
  %2306 = vmatprep.mubr.bf16.mxu0 0
  %2307 = vmatmul.mubr.bf16.gmra.mxu0 %v2269
  %v2308 = vpop.f32.mrf.mxu0
  %v2309 = vadd.f32 0.0, %v2308
  %v2310 = vpop.f32.mrf.mxu0
  %v2311 = vpop.f32.mrf.mxu0
  %v2312 = vpop.f32.mrf.mxu0
  %2313 = vdwg.mxu0
  %v2315 = vsel %vm151, %v62, 0
  %v2318 = vsel %vm151, %v130, 0
  %2320 = vmatprep.subr.bf16.mxu0 0
  %2321 = vmatpush1.bf16.xpose.msra.mxu0 0
  %2322 = vmatprep.subr.bf16.mxu0 0
  %2323 = vmatpush1.bf16.xpose.msra.mxu0 0
  %2324 = vmatprep.subr.bf16.mxu0 0
  %2325 = vmatpush1.bf16.xpose.msra.mxu0 0
  %2326 = vmatprep.subr.bf16.mxu0 0
  %2327 = vmatpush1.bf16.xpose.msra.mxu0 0
  %2328 = vmatprep.subr.bf16.mxu0 0
  %2329 = vmatpush1.bf16.xpose.msra.mxu0 0
  %2330 = vmatprep.subr.bf16.mxu0 0
  %2331 = vmatpush1.bf16.xpose.msra.mxu0 0
  %2332 = vmatprep.subr.bf16.mxu0 0
  %2333 = vmatpush1.bf16.xpose.msra.mxu0 0
  %2334 = vmatprep.subr.bf16.mxu0 0
  %2335 = vmatpush1.bf16.xpose.msra.mxu0 %v2318
  %2336 = vmatprep.subr.bf16.mxu0 0
  %2337 = vmatpush2.bf16.xpose.msra.mxu0 0
  %2338 = vmatprep.subr.bf16.mxu0 0
  %2339 = vmatpush2.bf16.xpose.msra.mxu0 0
  %2340 = vmatprep.subr.bf16.mxu0 0
  %2341 = vmatpush2.bf16.xpose.msra.mxu0 0
  %2342 = vmatprep.subr.bf16.mxu0 0
  %2343 = vmatpush2.bf16.xpose.msra.mxu0 0
  %2344 = vmatprep.subr.bf16.mxu0 0
  %2345 = vmatpush2.bf16.xpose.msra.mxu0 0
  %2346 = vmatprep.subr.bf16.mxu0 0
  %2347 = vmatpush2.bf16.xpose.msra.mxu0 0
  %2348 = vmatprep.subr.bf16.mxu0 0
  %2349 = vmatpush2.bf16.xpose.msra.mxu0 0
  %2350 = vmatprep.subr.bf16.mxu0 0
  %2351 = vmatpush2.bf16.xpose.msra.mxu0 0
  %2352 = vmatprep.mubr.bf16.mxu0 0
  %2353 = vmatmul.mubr.bf16.gmra.mxu0 %v2315
  %v2354 = vpop.f32.mrf.mxu0
  %v2355 = vadd.f32 0.0, %v2354
  %v2356 = vpop.f32.mrf.mxu0
  %v2357 = vpop.f32.mrf.mxu0
  %v2358 = vpop.f32.mrf.mxu0
  %2359 = vdwg.mxu0
  %v2361 = vsel %vm151, %v63, 0
  %v2364 = vsel %vm151, %v131, 0
  %2366 = vmatprep.subr.bf16.mxu0 0
  %2367 = vmatpush1.bf16.xpose.msra.mxu0 0
  %2368 = vmatprep.subr.bf16.mxu0 0
  %2369 = vmatpush1.bf16.xpose.msra.mxu0 0
  %2370 = vmatprep.subr.bf16.mxu0 0
  %2371 = vmatpush1.bf16.xpose.msra.mxu0 0
  %2372 = vmatprep.subr.bf16.mxu0 0
  %2373 = vmatpush1.bf16.xpose.msra.mxu0 0
  %2374 = vmatprep.subr.bf16.mxu0 0
  %2375 = vmatpush1.bf16.xpose.msra.mxu0 0
  %2376 = vmatprep.subr.bf16.mxu0 0
  %2377 = vmatpush1.bf16.xpose.msra.mxu0 0
  %2378 = vmatprep.subr.bf16.mxu0 0
  %2379 = vmatpush1.bf16.xpose.msra.mxu0 0
  %2380 = vmatprep.subr.bf16.mxu0 0
  %2381 = vmatpush1.bf16.xpose.msra.mxu0 %v2364
  %2382 = vmatprep.subr.bf16.mxu0 0
  %2383 = vmatpush2.bf16.xpose.msra.mxu0 0
  %2384 = vmatprep.subr.bf16.mxu0 0
  %2385 = vmatpush2.bf16.xpose.msra.mxu0 0
  %2386 = vmatprep.subr.bf16.mxu0 0
  %2387 = vmatpush2.bf16.xpose.msra.mxu0 0
  %2388 = vmatprep.subr.bf16.mxu0 0
  %2389 = vmatpush2.bf16.xpose.msra.mxu0 0
  %2390 = vmatprep.subr.bf16.mxu0 0
  %2391 = vmatpush2.bf16.xpose.msra.mxu0 0
  %2392 = vmatprep.subr.bf16.mxu0 0
  %2393 = vmatpush2.bf16.xpose.msra.mxu0 0
  %2394 = vmatprep.subr.bf16.mxu0 0
  %2395 = vmatpush2.bf16.xpose.msra.mxu0 0
  %2396 = vmatprep.subr.bf16.mxu0 0
  %2397 = vmatpush2.bf16.xpose.msra.mxu0 0
  %2398 = vmatprep.mubr.bf16.mxu0 0
  %2399 = vmatmul.mubr.bf16.gmra.mxu0 %v2361
  %v2400 = vpop.f32.mrf.mxu0
  %v2401 = vadd.f32 0.0, %v2400
  %v2402 = vpop.f32.mrf.mxu0
  %v2403 = vpop.f32.mrf.mxu0
  %v2404 = vpop.f32.mrf.mxu0
  %2405 = vdwg.mxu0
  %v2407 = vsel %vm151, %v64, 0
  %v2410 = vsel %vm151, %v132, 0
  %2412 = vmatprep.subr.bf16.mxu0 0
  %2413 = vmatpush1.bf16.xpose.msra.mxu0 0
  %2414 = vmatprep.subr.bf16.mxu0 0
  %2415 = vmatpush1.bf16.xpose.msra.mxu0 0
  %2416 = vmatprep.subr.bf16.mxu0 0
  %2417 = vmatpush1.bf16.xpose.msra.mxu0 0
  %2418 = vmatprep.subr.bf16.mxu0 0
  %2419 = vmatpush1.bf16.xpose.msra.mxu0 0
  %2420 = vmatprep.subr.bf16.mxu0 0
  %2421 = vmatpush1.bf16.xpose.msra.mxu0 0
  %2422 = vmatprep.subr.bf16.mxu0 0
  %2423 = vmatpush1.bf16.xpose.msra.mxu0 0
  %2424 = vmatprep.subr.bf16.mxu0 0
  %2425 = vmatpush1.bf16.xpose.msra.mxu0 0
  %2426 = vmatprep.subr.bf16.mxu0 0
  %2427 = vmatpush1.bf16.xpose.msra.mxu0 %v2410
  %2428 = vmatprep.subr.bf16.mxu0 0
  %2429 = vmatpush2.bf16.xpose.msra.mxu0 0
  %2430 = vmatprep.subr.bf16.mxu0 0
  %2431 = vmatpush2.bf16.xpose.msra.mxu0 0
  %2432 = vmatprep.subr.bf16.mxu0 0
  %2433 = vmatpush2.bf16.xpose.msra.mxu0 0
  %2434 = vmatprep.subr.bf16.mxu0 0
  %2435 = vmatpush2.bf16.xpose.msra.mxu0 0
  %2436 = vmatprep.subr.bf16.mxu0 0
  %2437 = vmatpush2.bf16.xpose.msra.mxu0 0
  %2438 = vmatprep.subr.bf16.mxu0 0
  %2439 = vmatpush2.bf16.xpose.msra.mxu0 0
  %2440 = vmatprep.subr.bf16.mxu0 0
  %2441 = vmatpush2.bf16.xpose.msra.mxu0 0
  %2442 = vmatprep.subr.bf16.mxu0 0
  %2443 = vmatpush2.bf16.xpose.msra.mxu0 0
  %2444 = vmatprep.mubr.bf16.mxu0 0
  %2445 = vmatmul.mubr.bf16.gmra.mxu0 %v2407
  %v2446 = vpop.f32.mrf.mxu0
  %v2447 = vadd.f32 0.0, %v2446
  %v2448 = vpop.f32.mrf.mxu0
  %v2449 = vpop.f32.mrf.mxu0
  %v2450 = vpop.f32.mrf.mxu0
  %2451 = vdwg.mxu0
  %v2453 = vsel %vm151, %v65, 0
  %v2456 = vsel %vm151, %v133, 0
  %2458 = vmatprep.subr.bf16.mxu0 0
  %2459 = vmatpush1.bf16.xpose.msra.mxu0 0
  %2460 = vmatprep.subr.bf16.mxu0 0
  %2461 = vmatpush1.bf16.xpose.msra.mxu0 0
  %2462 = vmatprep.subr.bf16.mxu0 0
  %2463 = vmatpush1.bf16.xpose.msra.mxu0 0
  %2464 = vmatprep.subr.bf16.mxu0 0
  %2465 = vmatpush1.bf16.xpose.msra.mxu0 0
  %2466 = vmatprep.subr.bf16.mxu0 0
  %2467 = vmatpush1.bf16.xpose.msra.mxu0 0
  %2468 = vmatprep.subr.bf16.mxu0 0
  %2469 = vmatpush1.bf16.xpose.msra.mxu0 0
  %2470 = vmatprep.subr.bf16.mxu0 0
  %2471 = vmatpush1.bf16.xpose.msra.mxu0 0
  %2472 = vmatprep.subr.bf16.mxu0 0
  %2473 = vmatpush1.bf16.xpose.msra.mxu0 %v2456
  %2474 = vmatprep.subr.bf16.mxu0 0
  %2475 = vmatpush2.bf16.xpose.msra.mxu0 0
  %2476 = vmatprep.subr.bf16.mxu0 0
  %2477 = vmatpush2.bf16.xpose.msra.mxu0 0
  %2478 = vmatprep.subr.bf16.mxu0 0
  %2479 = vmatpush2.bf16.xpose.msra.mxu0 0
  %2480 = vmatprep.subr.bf16.mxu0 0
  %2481 = vmatpush2.bf16.xpose.msra.mxu0 0
  %2482 = vmatprep.subr.bf16.mxu0 0
  %2483 = vmatpush2.bf16.xpose.msra.mxu0 0
  %2484 = vmatprep.subr.bf16.mxu0 0
  %2485 = vmatpush2.bf16.xpose.msra.mxu0 0
  %2486 = vmatprep.subr.bf16.mxu0 0
  %2487 = vmatpush2.bf16.xpose.msra.mxu0 0
  %2488 = vmatprep.subr.bf16.mxu0 0
  %2489 = vmatpush2.bf16.xpose.msra.mxu0 0
  %2490 = vmatprep.mubr.bf16.mxu0 0
  %2491 = vmatmul.mubr.bf16.gmra.mxu0 %v2453
  %v2492 = vpop.f32.mrf.mxu0
  %v2493 = vadd.f32 0.0, %v2492
  %v2494 = vpop.f32.mrf.mxu0
  %v2495 = vpop.f32.mrf.mxu0
  %v2496 = vpop.f32.mrf.mxu0
  %2497 = vdwg.mxu0
  %v2499 = vsel %vm151, %v66, 0
  %v2502 = vsel %vm151, %v134, 0
  %2504 = vmatprep.subr.bf16.mxu0 0
  %2505 = vmatpush1.bf16.xpose.msra.mxu0 0
  %2506 = vmatprep.subr.bf16.mxu0 0
  %2507 = vmatpush1.bf16.xpose.msra.mxu0 0
  %2508 = vmatprep.subr.bf16.mxu0 0
  %2509 = vmatpush1.bf16.xpose.msra.mxu0 0
  %2510 = vmatprep.subr.bf16.mxu0 0
  %2511 = vmatpush1.bf16.xpose.msra.mxu0 0
  %2512 = vmatprep.subr.bf16.mxu0 0
  %2513 = vmatpush1.bf16.xpose.msra.mxu0 0
  %2514 = vmatprep.subr.bf16.mxu0 0
  %2515 = vmatpush1.bf16.xpose.msra.mxu0 0
  %2516 = vmatprep.subr.bf16.mxu0 0
  %2517 = vmatpush1.bf16.xpose.msra.mxu0 0
  %2518 = vmatprep.subr.bf16.mxu0 0
  %2519 = vmatpush1.bf16.xpose.msra.mxu0 %v2502
  %2520 = vmatprep.subr.bf16.mxu0 0
  %2521 = vmatpush2.bf16.xpose.msra.mxu0 0
  %2522 = vmatprep.subr.bf16.mxu0 0
  %2523 = vmatpush2.bf16.xpose.msra.mxu0 0
  %2524 = vmatprep.subr.bf16.mxu0 0
  %2525 = vmatpush2.bf16.xpose.msra.mxu0 0
  %2526 = vmatprep.subr.bf16.mxu0 0
  %2527 = vmatpush2.bf16.xpose.msra.mxu0 0
  %2528 = vmatprep.subr.bf16.mxu0 0
  %2529 = vmatpush2.bf16.xpose.msra.mxu0 0
  %2530 = vmatprep.subr.bf16.mxu0 0
  %2531 = vmatpush2.bf16.xpose.msra.mxu0 0
  %2532 = vmatprep.subr.bf16.mxu0 0
  %2533 = vmatpush2.bf16.xpose.msra.mxu0 0
  %2534 = vmatprep.subr.bf16.mxu0 0
  %2535 = vmatpush2.bf16.xpose.msra.mxu0 0
  %2536 = vmatprep.mubr.bf16.mxu0 0
  %2537 = vmatmul.mubr.bf16.gmra.mxu0 %v2499
  %v2538 = vpop.f32.mrf.mxu0
  %v2539 = vadd.f32 0.0, %v2538
  %v2540 = vpop.f32.mrf.mxu0
  %v2541 = vpop.f32.mrf.mxu0
  %v2542 = vpop.f32.mrf.mxu0
  %2543 = vdwg.mxu0
  %v2545 = vsel %vm151, %v67, 0
  %v2548 = vsel %vm151, %v135, 0
  %2550 = vmatprep.subr.bf16.mxu0 0
  %2551 = vmatpush1.bf16.xpose.msra.mxu0 0
  %2552 = vmatprep.subr.bf16.mxu0 0
  %2553 = vmatpush1.bf16.xpose.msra.mxu0 0
  %2554 = vmatprep.subr.bf16.mxu0 0
  %2555 = vmatpush1.bf16.xpose.msra.mxu0 0
  %2556 = vmatprep.subr.bf16.mxu0 0
  %2557 = vmatpush1.bf16.xpose.msra.mxu0 0
  %2558 = vmatprep.subr.bf16.mxu0 0
  %2559 = vmatpush1.bf16.xpose.msra.mxu0 0
  %2560 = vmatprep.subr.bf16.mxu0 0
  %2561 = vmatpush1.bf16.xpose.msra.mxu0 0
  %2562 = vmatprep.subr.bf16.mxu0 0
  %2563 = vmatpush1.bf16.xpose.msra.mxu0 0
  %2564 = vmatprep.subr.bf16.mxu0 0
  %2565 = vmatpush1.bf16.xpose.msra.mxu0 %v2548
  %2566 = vmatprep.subr.bf16.mxu0 0
  %2567 = vmatpush2.bf16.xpose.msra.mxu0 0
  %2568 = vmatprep.subr.bf16.mxu0 0
  %2569 = vmatpush2.bf16.xpose.msra.mxu0 0
  %2570 = vmatprep.subr.bf16.mxu0 0
  %2571 = vmatpush2.bf16.xpose.msra.mxu0 0
  %2572 = vmatprep.subr.bf16.mxu0 0
  %2573 = vmatpush2.bf16.xpose.msra.mxu0 0
  %2574 = vmatprep.subr.bf16.mxu0 0
  %2575 = vmatpush2.bf16.xpose.msra.mxu0 0
  %2576 = vmatprep.subr.bf16.mxu0 0
  %2577 = vmatpush2.bf16.xpose.msra.mxu0 0
  %2578 = vmatprep.subr.bf16.mxu0 0
  %2579 = vmatpush2.bf16.xpose.msra.mxu0 0
  %2580 = vmatprep.subr.bf16.mxu0 0
  %2581 = vmatpush2.bf16.xpose.msra.mxu0 0
  %2582 = vmatprep.mubr.bf16.mxu0 0
  %2583 = vmatmul.mubr.bf16.gmra.mxu0 %v2545
  %v2584 = vpop.f32.mrf.mxu0
  %v2585 = vadd.f32 0.0, %v2584
  %v2586 = vpop.f32.mrf.mxu0
  %v2587 = vpop.f32.mrf.mxu0
  %v2588 = vpop.f32.mrf.mxu0
  %2589 = vdwg.mxu0
  %v2591 = vsel %vm151, %v68, 0
  %v2594 = vsel %vm151, %v136, 0
  %2596 = vmatprep.subr.bf16.mxu0 0
  %2597 = vmatpush1.bf16.xpose.msra.mxu0 0
  %2598 = vmatprep.subr.bf16.mxu0 0
  %2599 = vmatpush1.bf16.xpose.msra.mxu0 0
  %2600 = vmatprep.subr.bf16.mxu0 0
  %2601 = vmatpush1.bf16.xpose.msra.mxu0 0
  %2602 = vmatprep.subr.bf16.mxu0 0
  %2603 = vmatpush1.bf16.xpose.msra.mxu0 0
  %2604 = vmatprep.subr.bf16.mxu0 0
  %2605 = vmatpush1.bf16.xpose.msra.mxu0 0
  %2606 = vmatprep.subr.bf16.mxu0 0
  %2607 = vmatpush1.bf16.xpose.msra.mxu0 0
  %2608 = vmatprep.subr.bf16.mxu0 0
  %2609 = vmatpush1.bf16.xpose.msra.mxu0 0
  %2610 = vmatprep.subr.bf16.mxu0 0
  %2611 = vmatpush1.bf16.xpose.msra.mxu0 %v2594
  %2612 = vmatprep.subr.bf16.mxu0 0
  %2613 = vmatpush2.bf16.xpose.msra.mxu0 0
  %2614 = vmatprep.subr.bf16.mxu0 0
  %2615 = vmatpush2.bf16.xpose.msra.mxu0 0
  %2616 = vmatprep.subr.bf16.mxu0 0
  %2617 = vmatpush2.bf16.xpose.msra.mxu0 0
  %2618 = vmatprep.subr.bf16.mxu0 0
  %2619 = vmatpush2.bf16.xpose.msra.mxu0 0
  %2620 = vmatprep.subr.bf16.mxu0 0
  %2621 = vmatpush2.bf16.xpose.msra.mxu0 0
  %2622 = vmatprep.subr.bf16.mxu0 0
  %2623 = vmatpush2.bf16.xpose.msra.mxu0 0
  %2624 = vmatprep.subr.bf16.mxu0 0
  %2625 = vmatpush2.bf16.xpose.msra.mxu0 0
  %2626 = vmatprep.subr.bf16.mxu0 0
  %2627 = vmatpush2.bf16.xpose.msra.mxu0 0
  %2628 = vmatprep.mubr.bf16.mxu0 0
  %2629 = vmatmul.mubr.bf16.gmra.mxu0 %v2591
  %v2630 = vpop.f32.mrf.mxu0
  %v2631 = vadd.f32 0.0, %v2630
  %v2632 = vpop.f32.mrf.mxu0
  %v2633 = vpop.f32.mrf.mxu0
  %v2634 = vpop.f32.mrf.mxu0
  %2635 = vdwg.mxu0
  %v2637 = vsel %vm151, %v69, 0
  %v2640 = vsel %vm151, %v137, 0
  %2642 = vmatprep.subr.bf16.mxu0 0
  %2643 = vmatpush1.bf16.xpose.msra.mxu0 0
  %2644 = vmatprep.subr.bf16.mxu0 0
  %2645 = vmatpush1.bf16.xpose.msra.mxu0 0
  %2646 = vmatprep.subr.bf16.mxu0 0
  %2647 = vmatpush1.bf16.xpose.msra.mxu0 0
  %2648 = vmatprep.subr.bf16.mxu0 0
  %2649 = vmatpush1.bf16.xpose.msra.mxu0 0
  %2650 = vmatprep.subr.bf16.mxu0 0
  %2651 = vmatpush1.bf16.xpose.msra.mxu0 0
  %2652 = vmatprep.subr.bf16.mxu0 0
  %2653 = vmatpush1.bf16.xpose.msra.mxu0 0
  %2654 = vmatprep.subr.bf16.mxu0 0
  %2655 = vmatpush1.bf16.xpose.msra.mxu0 0
  %2656 = vmatprep.subr.bf16.mxu0 0
  %2657 = vmatpush1.bf16.xpose.msra.mxu0 %v2640
  %2658 = vmatprep.subr.bf16.mxu0 0
  %2659 = vmatpush2.bf16.xpose.msra.mxu0 0
  %2660 = vmatprep.subr.bf16.mxu0 0
  %2661 = vmatpush2.bf16.xpose.msra.mxu0 0
  %2662 = vmatprep.subr.bf16.mxu0 0
  %2663 = vmatpush2.bf16.xpose.msra.mxu0 0
  %2664 = vmatprep.subr.bf16.mxu0 0
  %2665 = vmatpush2.bf16.xpose.msra.mxu0 0
  %2666 = vmatprep.subr.bf16.mxu0 0
  %2667 = vmatpush2.bf16.xpose.msra.mxu0 0
  %2668 = vmatprep.subr.bf16.mxu0 0
  %2669 = vmatpush2.bf16.xpose.msra.mxu0 0
  %2670 = vmatprep.subr.bf16.mxu0 0
  %2671 = vmatpush2.bf16.xpose.msra.mxu0 0
  %2672 = vmatprep.subr.bf16.mxu0 0
  %2673 = vmatpush2.bf16.xpose.msra.mxu0 0
  %2674 = vmatprep.mubr.bf16.mxu0 0
  %2675 = vmatmul.mubr.bf16.gmra.mxu0 %v2637
  %v2676 = vpop.f32.mrf.mxu0
  %v2677 = vadd.f32 0.0, %v2676
  %v2678 = vpop.f32.mrf.mxu0
  %v2679 = vpop.f32.mrf.mxu0
  %v2680 = vpop.f32.mrf.mxu0
  %2681 = vdwg.mxu0
  %v2683 = vsel %vm151, %v70, 0
  %v2686 = vsel %vm151, %v138, 0
  %2688 = vmatprep.subr.bf16.mxu0 0
  %2689 = vmatpush1.bf16.xpose.msra.mxu0 0
  %2690 = vmatprep.subr.bf16.mxu0 0
  %2691 = vmatpush1.bf16.xpose.msra.mxu0 0
  %2692 = vmatprep.subr.bf16.mxu0 0
  %2693 = vmatpush1.bf16.xpose.msra.mxu0 0
  %2694 = vmatprep.subr.bf16.mxu0 0
  %2695 = vmatpush1.bf16.xpose.msra.mxu0 0
  %2696 = vmatprep.subr.bf16.mxu0 0
  %2697 = vmatpush1.bf16.xpose.msra.mxu0 0
  %2698 = vmatprep.subr.bf16.mxu0 0
  %2699 = vmatpush1.bf16.xpose.msra.mxu0 0
  %2700 = vmatprep.subr.bf16.mxu0 0
  %2701 = vmatpush1.bf16.xpose.msra.mxu0 0
  %2702 = vmatprep.subr.bf16.mxu0 0
  %2703 = vmatpush1.bf16.xpose.msra.mxu0 %v2686
  %2704 = vmatprep.subr.bf16.mxu0 0
  %2705 = vmatpush2.bf16.xpose.msra.mxu0 0
  %2706 = vmatprep.subr.bf16.mxu0 0
  %2707 = vmatpush2.bf16.xpose.msra.mxu0 0
  %2708 = vmatprep.subr.bf16.mxu0 0
  %2709 = vmatpush2.bf16.xpose.msra.mxu0 0
  %2710 = vmatprep.subr.bf16.mxu0 0
  %2711 = vmatpush2.bf16.xpose.msra.mxu0 0
  %2712 = vmatprep.subr.bf16.mxu0 0
  %2713 = vmatpush2.bf16.xpose.msra.mxu0 0
  %2714 = vmatprep.subr.bf16.mxu0 0
  %2715 = vmatpush2.bf16.xpose.msra.mxu0 0
  %2716 = vmatprep.subr.bf16.mxu0 0
  %2717 = vmatpush2.bf16.xpose.msra.mxu0 0
  %2718 = vmatprep.subr.bf16.mxu0 0
  %2719 = vmatpush2.bf16.xpose.msra.mxu0 0
  %2720 = vmatprep.mubr.bf16.mxu0 0
  %2721 = vmatmul.mubr.bf16.gmra.mxu0 %v2683
  %v2722 = vpop.f32.mrf.mxu0
  %v2723 = vadd.f32 0.0, %v2722
  %v2724 = vpop.f32.mrf.mxu0
  %v2725 = vpop.f32.mrf.mxu0
  %v2726 = vpop.f32.mrf.mxu0
  %2727 = vdwg.mxu0
  %v2729 = vsel %vm151, %v71, 0
  %v2732 = vsel %vm151, %v139, 0
  %2734 = vmatprep.subr.bf16.mxu0 0
  %2735 = vmatpush1.bf16.xpose.msra.mxu0 0
  %2736 = vmatprep.subr.bf16.mxu0 0
  %2737 = vmatpush1.bf16.xpose.msra.mxu0 0
  %2738 = vmatprep.subr.bf16.mxu0 0
  %2739 = vmatpush1.bf16.xpose.msra.mxu0 0
  %2740 = vmatprep.subr.bf16.mxu0 0
  %2741 = vmatpush1.bf16.xpose.msra.mxu0 0
  %2742 = vmatprep.subr.bf16.mxu0 0
  %2743 = vmatpush1.bf16.xpose.msra.mxu0 0
  %2744 = vmatprep.subr.bf16.mxu0 0
  %2745 = vmatpush1.bf16.xpose.msra.mxu0 0
  %2746 = vmatprep.subr.bf16.mxu0 0
  %2747 = vmatpush1.bf16.xpose.msra.mxu0 0
  %2748 = vmatprep.subr.bf16.mxu0 0
  %2749 = vmatpush1.bf16.xpose.msra.mxu0 %v2732
  %2750 = vmatprep.subr.bf16.mxu0 0
  %2751 = vmatpush2.bf16.xpose.msra.mxu0 0
  %2752 = vmatprep.subr.bf16.mxu0 0
  %2753 = vmatpush2.bf16.xpose.msra.mxu0 0
  %2754 = vmatprep.subr.bf16.mxu0 0
  %2755 = vmatpush2.bf16.xpose.msra.mxu0 0
  %2756 = vmatprep.subr.bf16.mxu0 0
  %2757 = vmatpush2.bf16.xpose.msra.mxu0 0
  %2758 = vmatprep.subr.bf16.mxu0 0
  %2759 = vmatpush2.bf16.xpose.msra.mxu0 0
  %2760 = vmatprep.subr.bf16.mxu0 0
  %2761 = vmatpush2.bf16.xpose.msra.mxu0 0
  %2762 = vmatprep.subr.bf16.mxu0 0
  %2763 = vmatpush2.bf16.xpose.msra.mxu0 0
  %2764 = vmatprep.subr.bf16.mxu0 0
  %2765 = vmatpush2.bf16.xpose.msra.mxu0 0
  %2766 = vmatprep.mubr.bf16.mxu0 0
  %2767 = vmatmul.mubr.bf16.gmra.mxu0 %v2729
  %v2768 = vpop.f32.mrf.mxu0
  %v2769 = vadd.f32 0.0, %v2768
  %v2770 = vpop.f32.mrf.mxu0
  %v2771 = vpop.f32.mrf.mxu0
  %v2772 = vpop.f32.mrf.mxu0
  %2773 = vdwg.mxu0
  %v2775 = vsel %vm151, %v72, 0
  %v2778 = vsel %vm151, %v140, 0
  %2780 = vmatprep.subr.bf16.mxu0 0
  %2781 = vmatpush1.bf16.xpose.msra.mxu0 0
  %2782 = vmatprep.subr.bf16.mxu0 0
  %2783 = vmatpush1.bf16.xpose.msra.mxu0 0
  %2784 = vmatprep.subr.bf16.mxu0 0
  %2785 = vmatpush1.bf16.xpose.msra.mxu0 0
  %2786 = vmatprep.subr.bf16.mxu0 0
  %2787 = vmatpush1.bf16.xpose.msra.mxu0 0
  %2788 = vmatprep.subr.bf16.mxu0 0
  %2789 = vmatpush1.bf16.xpose.msra.mxu0 0
  %2790 = vmatprep.subr.bf16.mxu0 0
  %2791 = vmatpush1.bf16.xpose.msra.mxu0 0
  %2792 = vmatprep.subr.bf16.mxu0 0
  %2793 = vmatpush1.bf16.xpose.msra.mxu0 0
  %2794 = vmatprep.subr.bf16.mxu0 0
  %2795 = vmatpush1.bf16.xpose.msra.mxu0 %v2778
  %2796 = vmatprep.subr.bf16.mxu0 0
  %2797 = vmatpush2.bf16.xpose.msra.mxu0 0
  %2798 = vmatprep.subr.bf16.mxu0 0
  %2799 = vmatpush2.bf16.xpose.msra.mxu0 0
  %2800 = vmatprep.subr.bf16.mxu0 0
  %2801 = vmatpush2.bf16.xpose.msra.mxu0 0
  %2802 = vmatprep.subr.bf16.mxu0 0
  %2803 = vmatpush2.bf16.xpose.msra.mxu0 0
  %2804 = vmatprep.subr.bf16.mxu0 0
  %2805 = vmatpush2.bf16.xpose.msra.mxu0 0
  %2806 = vmatprep.subr.bf16.mxu0 0
  %2807 = vmatpush2.bf16.xpose.msra.mxu0 0
  %2808 = vmatprep.subr.bf16.mxu0 0
  %2809 = vmatpush2.bf16.xpose.msra.mxu0 0
  %2810 = vmatprep.subr.bf16.mxu0 0
  %2811 = vmatpush2.bf16.xpose.msra.mxu0 0
  %2812 = vmatprep.mubr.bf16.mxu0 0
  %2813 = vmatmul.mubr.bf16.gmra.mxu0 %v2775
  %v2814 = vpop.f32.mrf.mxu0
  %v2815 = vadd.f32 0.0, %v2814
  %v2816 = vpop.f32.mrf.mxu0
  %v2817 = vpop.f32.mrf.mxu0
  %v2818 = vpop.f32.mrf.mxu0
  %2819 = vdwg.mxu0
  %v2821 = vsel %vm151, %v73, 0
  %v2824 = vsel %vm151, %v141, 0
  %2826 = vmatprep.subr.bf16.mxu0 0
  %2827 = vmatpush1.bf16.xpose.msra.mxu0 0
  %2828 = vmatprep.subr.bf16.mxu0 0
  %2829 = vmatpush1.bf16.xpose.msra.mxu0 0
  %2830 = vmatprep.subr.bf16.mxu0 0
  %2831 = vmatpush1.bf16.xpose.msra.mxu0 0
  %2832 = vmatprep.subr.bf16.mxu0 0
  %2833 = vmatpush1.bf16.xpose.msra.mxu0 0
  %2834 = vmatprep.subr.bf16.mxu0 0
  %2835 = vmatpush1.bf16.xpose.msra.mxu0 0
  %2836 = vmatprep.subr.bf16.mxu0 0
  %2837 = vmatpush1.bf16.xpose.msra.mxu0 0
  %2838 = vmatprep.subr.bf16.mxu0 0
  %2839 = vmatpush1.bf16.xpose.msra.mxu0 0
  %2840 = vmatprep.subr.bf16.mxu0 0
  %2841 = vmatpush1.bf16.xpose.msra.mxu0 %v2824
  %2842 = vmatprep.subr.bf16.mxu0 0
  %2843 = vmatpush2.bf16.xpose.msra.mxu0 0
  %2844 = vmatprep.subr.bf16.mxu0 0
  %2845 = vmatpush2.bf16.xpose.msra.mxu0 0
  %2846 = vmatprep.subr.bf16.mxu0 0
  %2847 = vmatpush2.bf16.xpose.msra.mxu0 0
  %2848 = vmatprep.subr.bf16.mxu0 0
  %2849 = vmatpush2.bf16.xpose.msra.mxu0 0
  %2850 = vmatprep.subr.bf16.mxu0 0
  %2851 = vmatpush2.bf16.xpose.msra.mxu0 0
  %2852 = vmatprep.subr.bf16.mxu0 0
  %2853 = vmatpush2.bf16.xpose.msra.mxu0 0
  %2854 = vmatprep.subr.bf16.mxu0 0
  %2855 = vmatpush2.bf16.xpose.msra.mxu0 0
  %2856 = vmatprep.subr.bf16.mxu0 0
  %2857 = vmatpush2.bf16.xpose.msra.mxu0 0
  %2858 = vmatprep.mubr.bf16.mxu0 0
  %2859 = vmatmul.mubr.bf16.gmra.mxu0 %v2821
  %v2860 = vpop.f32.mrf.mxu0
  %v2861 = vadd.f32 0.0, %v2860
  %v2862 = vpop.f32.mrf.mxu0
  %v2863 = vpop.f32.mrf.mxu0
  %v2864 = vpop.f32.mrf.mxu0
  %2865 = vdwg.mxu0
  %v2867 = vsel %vm151, %v74, 0
  %v2870 = vsel %vm151, %v142, 0
  %2872 = vmatprep.subr.bf16.mxu0 0
  %2873 = vmatpush1.bf16.xpose.msra.mxu0 0
  %2874 = vmatprep.subr.bf16.mxu0 0
  %2875 = vmatpush1.bf16.xpose.msra.mxu0 0
  %2876 = vmatprep.subr.bf16.mxu0 0
  %2877 = vmatpush1.bf16.xpose.msra.mxu0 0
  %2878 = vmatprep.subr.bf16.mxu0 0
  %2879 = vmatpush1.bf16.xpose.msra.mxu0 0
  %2880 = vmatprep.subr.bf16.mxu0 0
  %2881 = vmatpush1.bf16.xpose.msra.mxu0 0
  %2882 = vmatprep.subr.bf16.mxu0 0
  %2883 = vmatpush1.bf16.xpose.msra.mxu0 0
  %2884 = vmatprep.subr.bf16.mxu0 0
  %2885 = vmatpush1.bf16.xpose.msra.mxu0 0
  %2886 = vmatprep.subr.bf16.mxu0 0
  %2887 = vmatpush1.bf16.xpose.msra.mxu0 %v2870
  %2888 = vmatprep.subr.bf16.mxu0 0
  %2889 = vmatpush2.bf16.xpose.msra.mxu0 0
  %2890 = vmatprep.subr.bf16.mxu0 0
  %2891 = vmatpush2.bf16.xpose.msra.mxu0 0
  %2892 = vmatprep.subr.bf16.mxu0 0
  %2893 = vmatpush2.bf16.xpose.msra.mxu0 0
  %2894 = vmatprep.subr.bf16.mxu0 0
  %2895 = vmatpush2.bf16.xpose.msra.mxu0 0
  %2896 = vmatprep.subr.bf16.mxu0 0
  %2897 = vmatpush2.bf16.xpose.msra.mxu0 0
  %2898 = vmatprep.subr.bf16.mxu0 0
  %2899 = vmatpush2.bf16.xpose.msra.mxu0 0
  %2900 = vmatprep.subr.bf16.mxu0 0
  %2901 = vmatpush2.bf16.xpose.msra.mxu0 0
  %2902 = vmatprep.subr.bf16.mxu0 0
  %2903 = vmatpush2.bf16.xpose.msra.mxu0 0
  %2904 = vmatprep.mubr.bf16.mxu0 0
  %2905 = vmatmul.mubr.bf16.gmra.mxu0 %v2867
  %v2906 = vpop.f32.mrf.mxu0
  %v2907 = vadd.f32 0.0, %v2906
  %v2908 = vpop.f32.mrf.mxu0
  %v2909 = vpop.f32.mrf.mxu0
  %v2910 = vpop.f32.mrf.mxu0
  %2911 = vdwg.mxu0
  %v2913 = vsel %vm151, %v75, 0
  %v2916 = vsel %vm151, %v143, 0
  %2918 = vmatprep.subr.bf16.mxu0 0
  %2919 = vmatpush1.bf16.xpose.msra.mxu0 0
  %2920 = vmatprep.subr.bf16.mxu0 0
  %2921 = vmatpush1.bf16.xpose.msra.mxu0 0
  %2922 = vmatprep.subr.bf16.mxu0 0
  %2923 = vmatpush1.bf16.xpose.msra.mxu0 0
  %2924 = vmatprep.subr.bf16.mxu0 0
  %2925 = vmatpush1.bf16.xpose.msra.mxu0 0
  %2926 = vmatprep.subr.bf16.mxu0 0
  %2927 = vmatpush1.bf16.xpose.msra.mxu0 0
  %2928 = vmatprep.subr.bf16.mxu0 0
  %2929 = vmatpush1.bf16.xpose.msra.mxu0 0
  %2930 = vmatprep.subr.bf16.mxu0 0
  %2931 = vmatpush1.bf16.xpose.msra.mxu0 0
  %2932 = vmatprep.subr.bf16.mxu0 0
  %2933 = vmatpush1.bf16.xpose.msra.mxu0 %v2916
  %2934 = vmatprep.subr.bf16.mxu0 0
  %2935 = vmatpush2.bf16.xpose.msra.mxu0 0
  %2936 = vmatprep.subr.bf16.mxu0 0
  %2937 = vmatpush2.bf16.xpose.msra.mxu0 0
  %2938 = vmatprep.subr.bf16.mxu0 0
  %2939 = vmatpush2.bf16.xpose.msra.mxu0 0
  %2940 = vmatprep.subr.bf16.mxu0 0
  %2941 = vmatpush2.bf16.xpose.msra.mxu0 0
  %2942 = vmatprep.subr.bf16.mxu0 0
  %2943 = vmatpush2.bf16.xpose.msra.mxu0 0
  %2944 = vmatprep.subr.bf16.mxu0 0
  %2945 = vmatpush2.bf16.xpose.msra.mxu0 0
  %2946 = vmatprep.subr.bf16.mxu0 0
  %2947 = vmatpush2.bf16.xpose.msra.mxu0 0
  %2948 = vmatprep.subr.bf16.mxu0 0
  %2949 = vmatpush2.bf16.xpose.msra.mxu0 0
  %2950 = vmatprep.mubr.bf16.mxu0 0
  %2951 = vmatmul.mubr.bf16.gmra.mxu0 %v2913
  %v2952 = vpop.f32.mrf.mxu0
  %v2953 = vadd.f32 0.0, %v2952
  %v2954 = vpop.f32.mrf.mxu0
  %v2955 = vpop.f32.mrf.mxu0
  %v2956 = vpop.f32.mrf.mxu0
  %2957 = vdwg.mxu0
  %v2959 = vsel %vm151, %v76, 0
  %v2962 = vsel %vm151, %v144, 0
  %2964 = vmatprep.subr.bf16.mxu0 0
  %2965 = vmatpush1.bf16.xpose.msra.mxu0 0
  %2966 = vmatprep.subr.bf16.mxu0 0
  %2967 = vmatpush1.bf16.xpose.msra.mxu0 0
  %2968 = vmatprep.subr.bf16.mxu0 0
  %2969 = vmatpush1.bf16.xpose.msra.mxu0 0
  %2970 = vmatprep.subr.bf16.mxu0 0
  %2971 = vmatpush1.bf16.xpose.msra.mxu0 0
  %2972 = vmatprep.subr.bf16.mxu0 0
  %2973 = vmatpush1.bf16.xpose.msra.mxu0 0
  %2974 = vmatprep.subr.bf16.mxu0 0
  %2975 = vmatpush1.bf16.xpose.msra.mxu0 0
  %2976 = vmatprep.subr.bf16.mxu0 0
  %2977 = vmatpush1.bf16.xpose.msra.mxu0 0
  %2978 = vmatprep.subr.bf16.mxu0 0
  %2979 = vmatpush1.bf16.xpose.msra.mxu0 %v2962
  %2980 = vmatprep.subr.bf16.mxu0 0
  %2981 = vmatpush2.bf16.xpose.msra.mxu0 0
  %2982 = vmatprep.subr.bf16.mxu0 0
  %2983 = vmatpush2.bf16.xpose.msra.mxu0 0
  %2984 = vmatprep.subr.bf16.mxu0 0
  %2985 = vmatpush2.bf16.xpose.msra.mxu0 0
  %2986 = vmatprep.subr.bf16.mxu0 0
  %2987 = vmatpush2.bf16.xpose.msra.mxu0 0
  %2988 = vmatprep.subr.bf16.mxu0 0
  %2989 = vmatpush2.bf16.xpose.msra.mxu0 0
  %2990 = vmatprep.subr.bf16.mxu0 0
  %2991 = vmatpush2.bf16.xpose.msra.mxu0 0
  %2992 = vmatprep.subr.bf16.mxu0 0
  %2993 = vmatpush2.bf16.xpose.msra.mxu0 0
  %2994 = vmatprep.subr.bf16.mxu0 0
  %2995 = vmatpush2.bf16.xpose.msra.mxu0 0
  %2996 = vmatprep.mubr.bf16.mxu0 0
  %2997 = vmatmul.mubr.bf16.gmra.mxu0 %v2959
  %v2998 = vpop.f32.mrf.mxu0
  %v2999 = vadd.f32 0.0, %v2998
  %v3000 = vpop.f32.mrf.mxu0
  %v3001 = vpop.f32.mrf.mxu0
  %v3002 = vpop.f32.mrf.mxu0
  %3003 = vdwg.mxu0
  %v3005 = vsel %vm151, %v77, 0
  %v3008 = vsel %vm151, %v145, 0
  %3010 = vmatprep.subr.bf16.mxu0 0
  %3011 = vmatpush1.bf16.xpose.msra.mxu0 0
  %3012 = vmatprep.subr.bf16.mxu0 0
  %3013 = vmatpush1.bf16.xpose.msra.mxu0 0
  %3014 = vmatprep.subr.bf16.mxu0 0
  %3015 = vmatpush1.bf16.xpose.msra.mxu0 0
  %3016 = vmatprep.subr.bf16.mxu0 0
  %3017 = vmatpush1.bf16.xpose.msra.mxu0 0
  %3018 = vmatprep.subr.bf16.mxu0 0
  %3019 = vmatpush1.bf16.xpose.msra.mxu0 0
  %3020 = vmatprep.subr.bf16.mxu0 0
  %3021 = vmatpush1.bf16.xpose.msra.mxu0 0
  %3022 = vmatprep.subr.bf16.mxu0 0
  %3023 = vmatpush1.bf16.xpose.msra.mxu0 0
  %3024 = vmatprep.subr.bf16.mxu0 0
  %3025 = vmatpush1.bf16.xpose.msra.mxu0 %v3008
  %3026 = vmatprep.subr.bf16.mxu0 0
  %3027 = vmatpush2.bf16.xpose.msra.mxu0 0
  %3028 = vmatprep.subr.bf16.mxu0 0
  %3029 = vmatpush2.bf16.xpose.msra.mxu0 0
  %3030 = vmatprep.subr.bf16.mxu0 0
  %3031 = vmatpush2.bf16.xpose.msra.mxu0 0
  %3032 = vmatprep.subr.bf16.mxu0 0
  %3033 = vmatpush2.bf16.xpose.msra.mxu0 0
  %3034 = vmatprep.subr.bf16.mxu0 0
  %3035 = vmatpush2.bf16.xpose.msra.mxu0 0
  %3036 = vmatprep.subr.bf16.mxu0 0
  %3037 = vmatpush2.bf16.xpose.msra.mxu0 0
  %3038 = vmatprep.subr.bf16.mxu0 0
  %3039 = vmatpush2.bf16.xpose.msra.mxu0 0
  %3040 = vmatprep.subr.bf16.mxu0 0
  %3041 = vmatpush2.bf16.xpose.msra.mxu0 0
  %3042 = vmatprep.mubr.bf16.mxu0 0
  %3043 = vmatmul.mubr.bf16.gmra.mxu0 %v3005
  %v3044 = vpop.f32.mrf.mxu0
  %v3045 = vadd.f32 0.0, %v3044
  %v3046 = vpop.f32.mrf.mxu0
  %v3047 = vpop.f32.mrf.mxu0
  %v3048 = vpop.f32.mrf.mxu0
  %3049 = vdwg.mxu0
  %v3051 = vsel %vm151, %v78, 0
  %v3054 = vsel %vm151, %v146, 0
  %3056 = vmatprep.subr.bf16.mxu0 0
  %3057 = vmatpush1.bf16.xpose.msra.mxu0 0
  %3058 = vmatprep.subr.bf16.mxu0 0
  %3059 = vmatpush1.bf16.xpose.msra.mxu0 0
  %3060 = vmatprep.subr.bf16.mxu0 0
  %3061 = vmatpush1.bf16.xpose.msra.mxu0 0
  %3062 = vmatprep.subr.bf16.mxu0 0
  %3063 = vmatpush1.bf16.xpose.msra.mxu0 0
  %3064 = vmatprep.subr.bf16.mxu0 0
  %3065 = vmatpush1.bf16.xpose.msra.mxu0 0
  %3066 = vmatprep.subr.bf16.mxu0 0
  %3067 = vmatpush1.bf16.xpose.msra.mxu0 0
  %3068 = vmatprep.subr.bf16.mxu0 0
  %3069 = vmatpush1.bf16.xpose.msra.mxu0 0
  %3070 = vmatprep.subr.bf16.mxu0 0
  %3071 = vmatpush1.bf16.xpose.msra.mxu0 %v3054
  %3072 = vmatprep.subr.bf16.mxu0 0
  %3073 = vmatpush2.bf16.xpose.msra.mxu0 0
  %3074 = vmatprep.subr.bf16.mxu0 0
  %3075 = vmatpush2.bf16.xpose.msra.mxu0 0
  %3076 = vmatprep.subr.bf16.mxu0 0
  %3077 = vmatpush2.bf16.xpose.msra.mxu0 0
  %3078 = vmatprep.subr.bf16.mxu0 0
  %3079 = vmatpush2.bf16.xpose.msra.mxu0 0
  %3080 = vmatprep.subr.bf16.mxu0 0
  %3081 = vmatpush2.bf16.xpose.msra.mxu0 0
  %3082 = vmatprep.subr.bf16.mxu0 0
  %3083 = vmatpush2.bf16.xpose.msra.mxu0 0
  %3084 = vmatprep.subr.bf16.mxu0 0
  %3085 = vmatpush2.bf16.xpose.msra.mxu0 0
  %3086 = vmatprep.subr.bf16.mxu0 0
  %3087 = vmatpush2.bf16.xpose.msra.mxu0 0
  %3088 = vmatprep.mubr.bf16.mxu0 0
  %3089 = vmatmul.mubr.bf16.gmra.mxu0 %v3051
  %v3090 = vpop.f32.mrf.mxu0
  %v3091 = vadd.f32 0.0, %v3090
  %v3092 = vpop.f32.mrf.mxu0
  %v3093 = vpop.f32.mrf.mxu0
  %v3094 = vpop.f32.mrf.mxu0
  %3095 = vdwg.mxu0
  %v3097 = vsel %vm151, %v79, 0
  %v3100 = vsel %vm151, %v147, 0
  %3102 = vmatprep.subr.bf16.mxu0 0
  %3103 = vmatpush1.bf16.xpose.msra.mxu0 0
  %3104 = vmatprep.subr.bf16.mxu0 0
  %3105 = vmatpush1.bf16.xpose.msra.mxu0 0
  %3106 = vmatprep.subr.bf16.mxu0 0
  %3107 = vmatpush1.bf16.xpose.msra.mxu0 0
  %3108 = vmatprep.subr.bf16.mxu0 0
  %3109 = vmatpush1.bf16.xpose.msra.mxu0 0
  %3110 = vmatprep.subr.bf16.mxu0 0
  %3111 = vmatpush1.bf16.xpose.msra.mxu0 0
  %3112 = vmatprep.subr.bf16.mxu0 0
  %3113 = vmatpush1.bf16.xpose.msra.mxu0 0
  %3114 = vmatprep.subr.bf16.mxu0 0
  %3115 = vmatpush1.bf16.xpose.msra.mxu0 0
  %3116 = vmatprep.subr.bf16.mxu0 0
  %3117 = vmatpush1.bf16.xpose.msra.mxu0 %v3100
  %3118 = vmatprep.subr.bf16.mxu0 0
  %3119 = vmatpush2.bf16.xpose.msra.mxu0 0
  %3120 = vmatprep.subr.bf16.mxu0 0
  %3121 = vmatpush2.bf16.xpose.msra.mxu0 0
  %3122 = vmatprep.subr.bf16.mxu0 0
  %3123 = vmatpush2.bf16.xpose.msra.mxu0 0
  %3124 = vmatprep.subr.bf16.mxu0 0
  %3125 = vmatpush2.bf16.xpose.msra.mxu0 0
  %3126 = vmatprep.subr.bf16.mxu0 0
  %3127 = vmatpush2.bf16.xpose.msra.mxu0 0
  %3128 = vmatprep.subr.bf16.mxu0 0
  %3129 = vmatpush2.bf16.xpose.msra.mxu0 0
  %3130 = vmatprep.subr.bf16.mxu0 0
  %3131 = vmatpush2.bf16.xpose.msra.mxu0 0
  %3132 = vmatprep.subr.bf16.mxu0 0
  %3133 = vmatpush2.bf16.xpose.msra.mxu0 0
  %3134 = vmatprep.mubr.bf16.mxu0 0
  %3135 = vmatmul.mubr.bf16.gmra.mxu0 %v3097
  %v3136 = vpop.f32.mrf.mxu0
  %v3137 = vadd.f32 0.0, %v3136
  %v3138 = vpop.f32.mrf.mxu0
  %v3139 = vpop.f32.mrf.mxu0
  %v3140 = vpop.f32.mrf.mxu0
  %3141 = vdwg.mxu0
  %v3143 = vsel %vm151, %v80, 0
  %v3146 = vsel %vm151, %v148, 0
  %3148 = vmatprep.subr.bf16.mxu0 0
  %3149 = vmatpush1.bf16.xpose.msra.mxu0 0
  %3150 = vmatprep.subr.bf16.mxu0 0
  %3151 = vmatpush1.bf16.xpose.msra.mxu0 0
  %3152 = vmatprep.subr.bf16.mxu0 0
  %3153 = vmatpush1.bf16.xpose.msra.mxu0 0
  %3154 = vmatprep.subr.bf16.mxu0 0
  %3155 = vmatpush1.bf16.xpose.msra.mxu0 0
  %3156 = vmatprep.subr.bf16.mxu0 0
  %3157 = vmatpush1.bf16.xpose.msra.mxu0 0
  %3158 = vmatprep.subr.bf16.mxu0 0
  %3159 = vmatpush1.bf16.xpose.msra.mxu0 0
  %3160 = vmatprep.subr.bf16.mxu0 0
  %3161 = vmatpush1.bf16.xpose.msra.mxu0 0
  %3162 = vmatprep.subr.bf16.mxu0 0
  %3163 = vmatpush1.bf16.xpose.msra.mxu0 %v3146
  %3164 = vmatprep.subr.bf16.mxu0 0
  %3165 = vmatpush2.bf16.xpose.msra.mxu0 0
  %3166 = vmatprep.subr.bf16.mxu0 0
  %3167 = vmatpush2.bf16.xpose.msra.mxu0 0
  %3168 = vmatprep.subr.bf16.mxu0 0
  %3169 = vmatpush2.bf16.xpose.msra.mxu0 0
  %3170 = vmatprep.subr.bf16.mxu0 0
  %3171 = vmatpush2.bf16.xpose.msra.mxu0 0
  %3172 = vmatprep.subr.bf16.mxu0 0
  %3173 = vmatpush2.bf16.xpose.msra.mxu0 0
  %3174 = vmatprep.subr.bf16.mxu0 0
  %3175 = vmatpush2.bf16.xpose.msra.mxu0 0
  %3176 = vmatprep.subr.bf16.mxu0 0
  %3177 = vmatpush2.bf16.xpose.msra.mxu0 0
  %3178 = vmatprep.subr.bf16.mxu0 0
  %3179 = vmatpush2.bf16.xpose.msra.mxu0 0
  %3180 = vmatprep.mubr.bf16.mxu0 0
  %3181 = vmatmul.mubr.bf16.gmra.mxu0 %v3143
  %v3182 = vpop.f32.mrf.mxu0
  %v3183 = vadd.f32 0.0, %v3182
  %v3184 = vpop.f32.mrf.mxu0
  %v3185 = vpop.f32.mrf.mxu0
  %v3186 = vpop.f32.mrf.mxu0
  %3187 = vdwg.mxu0
  %v3189 = vsel %vm151, %v81, 0
  %v3192 = vsel %vm151, %v149, 0
  %3194 = vmatprep.subr.bf16.mxu0 0
  %3195 = vmatpush1.bf16.xpose.msra.mxu0 0
  %3196 = vmatprep.subr.bf16.mxu0 0
  %3197 = vmatpush1.bf16.xpose.msra.mxu0 0
  %3198 = vmatprep.subr.bf16.mxu0 0
  %3199 = vmatpush1.bf16.xpose.msra.mxu0 0
  %3200 = vmatprep.subr.bf16.mxu0 0
  %3201 = vmatpush1.bf16.xpose.msra.mxu0 0
  %3202 = vmatprep.subr.bf16.mxu0 0
  %3203 = vmatpush1.bf16.xpose.msra.mxu0 0
  %3204 = vmatprep.subr.bf16.mxu0 0
  %3205 = vmatpush1.bf16.xpose.msra.mxu0 0
  %3206 = vmatprep.subr.bf16.mxu0 0
  %3207 = vmatpush1.bf16.xpose.msra.mxu0 0
  %3208 = vmatprep.subr.bf16.mxu0 0
  %3209 = vmatpush1.bf16.xpose.msra.mxu0 %v3192
  %3210 = vmatprep.subr.bf16.mxu0 0
  %3211 = vmatpush2.bf16.xpose.msra.mxu0 0
  %3212 = vmatprep.subr.bf16.mxu0 0
  %3213 = vmatpush2.bf16.xpose.msra.mxu0 0
  %3214 = vmatprep.subr.bf16.mxu0 0
  %3215 = vmatpush2.bf16.xpose.msra.mxu0 0
  %3216 = vmatprep.subr.bf16.mxu0 0
  %3217 = vmatpush2.bf16.xpose.msra.mxu0 0
  %3218 = vmatprep.subr.bf16.mxu0 0
  %3219 = vmatpush2.bf16.xpose.msra.mxu0 0
  %3220 = vmatprep.subr.bf16.mxu0 0
  %3221 = vmatpush2.bf16.xpose.msra.mxu0 0
  %3222 = vmatprep.subr.bf16.mxu0 0
  %3223 = vmatpush2.bf16.xpose.msra.mxu0 0
  %3224 = vmatprep.subr.bf16.mxu0 0
  %3225 = vmatpush2.bf16.xpose.msra.mxu0 0
  %3226 = vmatprep.mubr.bf16.mxu0 0
  %3227 = vmatmul.mubr.bf16.gmra.mxu0 %v3189
  %v3228 = vpop.f32.mrf.mxu0
  %v3229 = vadd.f32 0.0, %v3228
  %v3230 = vpop.f32.mrf.mxu0
  %v3231 = vpop.f32.mrf.mxu0
  %v3232 = vpop.f32.mrf.mxu0
  %3233 = vdwg.mxu0
  %v3235 = vsel %vm151, %v82, 0
  %v3238 = vsel %vm151, %v150, 0
  %3240 = vmatprep.subr.bf16.mxu0 0
  %3241 = vmatpush1.bf16.xpose.msra.mxu0 0
  %3242 = vmatprep.subr.bf16.mxu0 0
  %3243 = vmatpush1.bf16.xpose.msra.mxu0 0
  %3244 = vmatprep.subr.bf16.mxu0 0
  %3245 = vmatpush1.bf16.xpose.msra.mxu0 0
  %3246 = vmatprep.subr.bf16.mxu0 0
  %3247 = vmatpush1.bf16.xpose.msra.mxu0 0
  %3248 = vmatprep.subr.bf16.mxu0 0
  %3249 = vmatpush1.bf16.xpose.msra.mxu0 0
  %3250 = vmatprep.subr.bf16.mxu0 0
  %3251 = vmatpush1.bf16.xpose.msra.mxu0 0
  %3252 = vmatprep.subr.bf16.mxu0 0
  %3253 = vmatpush1.bf16.xpose.msra.mxu0 0
  %3254 = vmatprep.subr.bf16.mxu0 0
  %3255 = vmatpush1.bf16.xpose.msra.mxu0 %v3238
  %3256 = vmatprep.subr.bf16.mxu0 0
  %3257 = vmatpush2.bf16.xpose.msra.mxu0 0
  %3258 = vmatprep.subr.bf16.mxu0 0
  %3259 = vmatpush2.bf16.xpose.msra.mxu0 0
  %3260 = vmatprep.subr.bf16.mxu0 0
  %3261 = vmatpush2.bf16.xpose.msra.mxu0 0
  %3262 = vmatprep.subr.bf16.mxu0 0
  %3263 = vmatpush2.bf16.xpose.msra.mxu0 0
  %3264 = vmatprep.subr.bf16.mxu0 0
  %3265 = vmatpush2.bf16.xpose.msra.mxu0 0
  %3266 = vmatprep.subr.bf16.mxu0 0
  %3267 = vmatpush2.bf16.xpose.msra.mxu0 0
  %3268 = vmatprep.subr.bf16.mxu0 0
  %3269 = vmatpush2.bf16.xpose.msra.mxu0 0
  %3270 = vmatprep.subr.bf16.mxu0 0
  %3271 = vmatpush2.bf16.xpose.msra.mxu0 0
  %3272 = vmatprep.mubr.bf16.mxu0 0
  %3273 = vmatmul.mubr.bf16.gmra.mxu0 %v3235
  %v3274 = vpop.f32.mrf.mxu0
  %v3275 = vadd.f32 0.0, %v3274
  %v3276 = vpop.f32.mrf.mxu0
  %v3277 = vpop.f32.mrf.mxu0
  %v3278 = vpop.f32.mrf.mxu0
  %3279 = vdwg.mxu0
  %v3280 = vmul.f32 %v193, 0.35355338
  %v3281 = vmul.f32 %v239, 0.35355338
  %v3282 = vmul.f32 %v285, 0.35355338
  %v3283 = vmul.f32 %v331, 0.35355338
  %v3284 = vmul.f32 %v377, 0.35355338
  %v3285 = vmul.f32 %v423, 0.35355338
  %v3286 = vmul.f32 %v469, 0.35355338
  %v3287 = vmul.f32 %v515, 0.35355338
  %v3288 = vmul.f32 %v561, 0.35355338
  %v3289 = vmul.f32 %v607, 0.35355338
  %v3290 = vmul.f32 %v653, 0.35355338
  %v3291 = vmul.f32 %v699, 0.35355338
  %v3292 = vmul.f32 %v745, 0.35355338
  %v3293 = vmul.f32 %v791, 0.35355338
  %v3294 = vmul.f32 %v837, 0.35355338
  %v3295 = vmul.f32 %v883, 0.35355338
  %v3296 = vmul.f32 %v929, 0.35355338
  %v3297 = vmul.f32 %v975, 0.35355338
  %v3298 = vmul.f32 %v1021, 0.35355338
  %v3299 = vmul.f32 %v1067, 0.35355338
  %v3300 = vmul.f32 %v1113, 0.35355338
  %v3301 = vmul.f32 %v1159, 0.35355338
  %v3302 = vmul.f32 %v1205, 0.35355338
  %v3303 = vmul.f32 %v1251, 0.35355338
  %v3304 = vmul.f32 %v1297, 0.35355338
  %v3305 = vmul.f32 %v1343, 0.35355338
  %v3306 = vmul.f32 %v1389, 0.35355338
  %v3307 = vmul.f32 %v1435, 0.35355338
  %v3308 = vmul.f32 %v1481, 0.35355338
  %v3309 = vmul.f32 %v1527, 0.35355338
  %v3310 = vmul.f32 %v1573, 0.35355338
  %v3311 = vmul.f32 %v1619, 0.35355338
  %v3312 = vmul.f32 %v1665, 0.35355338
  %v3313 = vmul.f32 %v1711, 0.35355338
  %v3314 = vmul.f32 %v1757, 0.35355338
  %v3315 = vmul.f32 %v1803, 0.35355338
  %v3316 = vmul.f32 %v1849, 0.35355338
  %v3317 = vmul.f32 %v1895, 0.35355338
  %v3318 = vmul.f32 %v1941, 0.35355338
  %v3319 = vmul.f32 %v1987, 0.35355338
  %v3320 = vmul.f32 %v2033, 0.35355338
  %v3321 = vmul.f32 %v2079, 0.35355338
  %v3322 = vmul.f32 %v2125, 0.35355338
  %v3323 = vmul.f32 %v2171, 0.35355338
  %v3324 = vmul.f32 %v2217, 0.35355338
  %v3325 = vmul.f32 %v2263, 0.35355338
  %v3326 = vmul.f32 %v2309, 0.35355338
  %v3327 = vmul.f32 %v2355, 0.35355338
  %v3328 = vmul.f32 %v2401, 0.35355338
  %v3329 = vmul.f32 %v2447, 0.35355338
  %v3330 = vmul.f32 %v2493, 0.35355338
  %v3331 = vmul.f32 %v2539, 0.35355338
  %v3332 = vmul.f32 %v2585, 0.35355338
  %v3333 = vmul.f32 %v2631, 0.35355338
  %v3334 = vmul.f32 %v2677, 0.35355338
  %v3335 = vmul.f32 %v2723, 0.35355338
  %v3336 = vmul.f32 %v2769, 0.35355338
  %v3337 = vmul.f32 %v2815, 0.35355338
  %v3338 = vmul.f32 %v2861, 0.35355338
  %v3339 = vmul.f32 %v2907, 0.35355338
  %v3340 = vmul.f32 %v2953, 0.35355338
  %v3341 = vmul.f32 %v2999, 0.35355338
  %v3342 = vmul.f32 %v3045, 0.35355338
  %v3343 = vmul.f32 %v3091, 0.35355338
  %v3344 = vmul.f32 %v3137, 0.35355338
  %v3345 = vmul.f32 %v3183, 0.35355338
  %v3346 = vmul.f32 %v3229, 0.35355338
  %v3347 = vmul.f32 %v3275, 0.35355338
  %vm3348 = vcmask 9216
  %v3349 = vsel %vm3348, %v3280, -inf
  %3350 = vmax.xlane.f32.xlu0 %v3349
  %v3351 = vpop.xlane.xlu0 %3350
  %v3352 = vsel %vm3348, %v3281, -inf
  %3353 = vmax.xlane.f32.xlu0 %v3352
  %v3354 = vpop.xlane.xlu0 %3353
  %v3355 = vsel %vm3348, %v3282, -inf
  %3356 = vmax.xlane.f32.xlu0 %v3355
  %v3357 = vpop.xlane.xlu0 %3356
  %v3358 = vsel %vm3348, %v3283, -inf
  %3359 = vmax.xlane.f32.xlu0 %v3358
  %v3360 = vpop.xlane.xlu0 %3359
  %v3361 = vsel %vm3348, %v3284, -inf
  %3362 = vmax.xlane.f32.xlu0 %v3361
  %v3363 = vpop.xlane.xlu0 %3362
  %v3364 = vsel %vm3348, %v3285, -inf
  %3365 = vmax.xlane.f32.xlu0 %v3364
  %v3366 = vpop.xlane.xlu0 %3365
  %v3367 = vsel %vm3348, %v3286, -inf
  %3368 = vmax.xlane.f32.xlu0 %v3367
  %v3369 = vpop.xlane.xlu0 %3368
  %v3370 = vsel %vm3348, %v3287, -inf
  %3371 = vmax.xlane.f32.xlu0 %v3370
  %v3372 = vpop.xlane.xlu0 %3371
  %v3373 = vsel %vm3348, %v3288, -inf
  %3374 = vmax.xlane.f32.xlu0 %v3373
  %v3375 = vpop.xlane.xlu0 %3374
  %v3376 = vsel %vm3348, %v3289, -inf
  %3377 = vmax.xlane.f32.xlu0 %v3376
  %v3378 = vpop.xlane.xlu0 %3377
  %v3379 = vsel %vm3348, %v3290, -inf
  %3380 = vmax.xlane.f32.xlu0 %v3379
  %v3381 = vpop.xlane.xlu0 %3380
  %v3382 = vsel %vm3348, %v3291, -inf
  %3383 = vmax.xlane.f32.xlu0 %v3382
  %v3384 = vpop.xlane.xlu0 %3383
  %v3385 = vsel %vm3348, %v3292, -inf
  %3386 = vmax.xlane.f32.xlu0 %v3385
  %v3387 = vpop.xlane.xlu0 %3386
  %v3388 = vsel %vm3348, %v3293, -inf
  %3389 = vmax.xlane.f32.xlu0 %v3388
  %v3390 = vpop.xlane.xlu0 %3389
  %v3391 = vsel %vm3348, %v3294, -inf
  %3392 = vmax.xlane.f32.xlu0 %v3391
  %v3393 = vpop.xlane.xlu0 %3392
  %v3394 = vsel %vm3348, %v3295, -inf
  %3395 = vmax.xlane.f32.xlu0 %v3394
  %v3396 = vpop.xlane.xlu0 %3395
  %v3397 = vsel %vm3348, %v3296, -inf
  %3398 = vmax.xlane.f32.xlu0 %v3397
  %v3399 = vpop.xlane.xlu0 %3398
  %v3400 = vsel %vm3348, %v3297, -inf
  %3401 = vmax.xlane.f32.xlu0 %v3400
  %v3402 = vpop.xlane.xlu0 %3401
  %v3403 = vsel %vm3348, %v3298, -inf
  %3404 = vmax.xlane.f32.xlu0 %v3403
  %v3405 = vpop.xlane.xlu0 %3404
  %v3406 = vsel %vm3348, %v3299, -inf
  %3407 = vmax.xlane.f32.xlu0 %v3406
  %v3408 = vpop.xlane.xlu0 %3407
  %v3409 = vsel %vm3348, %v3300, -inf
  %3410 = vmax.xlane.f32.xlu0 %v3409
  %v3411 = vpop.xlane.xlu0 %3410
  %v3412 = vsel %vm3348, %v3301, -inf
  %3413 = vmax.xlane.f32.xlu0 %v3412
  %v3414 = vpop.xlane.xlu0 %3413
  %v3415 = vsel %vm3348, %v3302, -inf
  %3416 = vmax.xlane.f32.xlu0 %v3415
  %v3417 = vpop.xlane.xlu0 %3416
  %v3418 = vsel %vm3348, %v3303, -inf
  %3419 = vmax.xlane.f32.xlu0 %v3418
  %v3420 = vpop.xlane.xlu0 %3419
  %v3421 = vsel %vm3348, %v3304, -inf
  %3422 = vmax.xlane.f32.xlu0 %v3421
  %v3423 = vpop.xlane.xlu0 %3422
  %v3424 = vsel %vm3348, %v3305, -inf
  %3425 = vmax.xlane.f32.xlu0 %v3424
  %v3426 = vpop.xlane.xlu0 %3425
  %v3427 = vsel %vm3348, %v3306, -inf
  %3428 = vmax.xlane.f32.xlu0 %v3427
  %v3429 = vpop.xlane.xlu0 %3428
  %v3430 = vsel %vm3348, %v3307, -inf
  %3431 = vmax.xlane.f32.xlu0 %v3430
  %v3432 = vpop.xlane.xlu0 %3431
  %v3433 = vsel %vm3348, %v3308, -inf
  %3434 = vmax.xlane.f32.xlu0 %v3433
  %v3435 = vpop.xlane.xlu0 %3434
  %v3436 = vsel %vm3348, %v3309, -inf
  %3437 = vmax.xlane.f32.xlu0 %v3436
  %v3438 = vpop.xlane.xlu0 %3437
  %v3439 = vsel %vm3348, %v3310, -inf
  %3440 = vmax.xlane.f32.xlu0 %v3439
  %v3441 = vpop.xlane.xlu0 %3440
  %v3442 = vsel %vm3348, %v3311, -inf
  %3443 = vmax.xlane.f32.xlu0 %v3442
  %v3444 = vpop.xlane.xlu0 %3443
  %v3445 = vsel %vm3348, %v3312, -inf
  %3446 = vmax.xlane.f32.xlu0 %v3445
  %v3447 = vpop.xlane.xlu0 %3446
  %v3448 = vsel %vm3348, %v3313, -inf
  %3449 = vmax.xlane.f32.xlu0 %v3448
  %v3450 = vpop.xlane.xlu0 %3449
  %v3451 = vsel %vm3348, %v3314, -inf
  %3452 = vmax.xlane.f32.xlu0 %v3451
  %v3453 = vpop.xlane.xlu0 %3452
  %v3454 = vsel %vm3348, %v3315, -inf
  %3455 = vmax.xlane.f32.xlu0 %v3454
  %v3456 = vpop.xlane.xlu0 %3455
  %v3457 = vsel %vm3348, %v3316, -inf
  %3458 = vmax.xlane.f32.xlu0 %v3457
  %v3459 = vpop.xlane.xlu0 %3458
  %v3460 = vsel %vm3348, %v3317, -inf
  %3461 = vmax.xlane.f32.xlu0 %v3460
  %v3462 = vpop.xlane.xlu0 %3461
  %v3463 = vsel %vm3348, %v3318, -inf
  %3464 = vmax.xlane.f32.xlu0 %v3463
  %v3465 = vpop.xlane.xlu0 %3464
  %v3466 = vsel %vm3348, %v3319, -inf
  %3467 = vmax.xlane.f32.xlu0 %v3466
  %v3468 = vpop.xlane.xlu0 %3467
  %v3469 = vsel %vm3348, %v3320, -inf
  %3470 = vmax.xlane.f32.xlu0 %v3469
  %v3471 = vpop.xlane.xlu0 %3470
  %v3472 = vsel %vm3348, %v3321, -inf
  %3473 = vmax.xlane.f32.xlu0 %v3472
  %v3474 = vpop.xlane.xlu0 %3473
  %v3475 = vsel %vm3348, %v3322, -inf
  %3476 = vmax.xlane.f32.xlu0 %v3475
  %v3477 = vpop.xlane.xlu0 %3476
  %v3478 = vsel %vm3348, %v3323, -inf
  %3479 = vmax.xlane.f32.xlu0 %v3478
  %v3480 = vpop.xlane.xlu0 %3479
  %v3481 = vsel %vm3348, %v3324, -inf
  %3482 = vmax.xlane.f32.xlu0 %v3481
  %v3483 = vpop.xlane.xlu0 %3482
  %v3484 = vsel %vm3348, %v3325, -inf
  %3485 = vmax.xlane.f32.xlu0 %v3484
  %v3486 = vpop.xlane.xlu0 %3485
  %v3487 = vsel %vm3348, %v3326, -inf
  %3488 = vmax.xlane.f32.xlu0 %v3487
  %v3489 = vpop.xlane.xlu0 %3488
  %v3490 = vsel %vm3348, %v3327, -inf
  %3491 = vmax.xlane.f32.xlu0 %v3490
  %v3492 = vpop.xlane.xlu0 %3491
  %v3493 = vsel %vm3348, %v3328, -inf
  %3494 = vmax.xlane.f32.xlu0 %v3493
  %v3495 = vpop.xlane.xlu0 %3494
  %v3496 = vsel %vm3348, %v3329, -inf
  %3497 = vmax.xlane.f32.xlu0 %v3496
  %v3498 = vpop.xlane.xlu0 %3497
  %v3499 = vsel %vm3348, %v3330, -inf
  %3500 = vmax.xlane.f32.xlu0 %v3499
  %v3501 = vpop.xlane.xlu0 %3500
  %v3502 = vsel %vm3348, %v3331, -inf
  %3503 = vmax.xlane.f32.xlu0 %v3502
  %v3504 = vpop.xlane.xlu0 %3503
  %v3505 = vsel %vm3348, %v3332, -inf
  %3506 = vmax.xlane.f32.xlu0 %v3505
  %v3507 = vpop.xlane.xlu0 %3506
  %v3508 = vsel %vm3348, %v3333, -inf
  %3509 = vmax.xlane.f32.xlu0 %v3508
  %v3510 = vpop.xlane.xlu0 %3509
  %v3511 = vsel %vm3348, %v3334, -inf
  %3512 = vmax.xlane.f32.xlu0 %v3511
  %v3513 = vpop.xlane.xlu0 %3512
  %v3514 = vsel %vm3348, %v3335, -inf
  %3515 = vmax.xlane.f32.xlu0 %v3514
  %v3516 = vpop.xlane.xlu0 %3515
  %v3517 = vsel %vm3348, %v3336, -inf
  %3518 = vmax.xlane.f32.xlu0 %v3517
  %v3519 = vpop.xlane.xlu0 %3518
  %v3520 = vsel %vm3348, %v3337, -inf
  %3521 = vmax.xlane.f32.xlu0 %v3520
  %v3522 = vpop.xlane.xlu0 %3521
  %v3523 = vsel %vm3348, %v3338, -inf
  %3524 = vmax.xlane.f32.xlu0 %v3523
  %v3525 = vpop.xlane.xlu0 %3524
  %v3526 = vsel %vm3348, %v3339, -inf
  %3527 = vmax.xlane.f32.xlu0 %v3526
  %v3528 = vpop.xlane.xlu0 %3527
  %v3529 = vsel %vm3348, %v3340, -inf
  %3530 = vmax.xlane.f32.xlu0 %v3529
  %v3531 = vpop.xlane.xlu0 %3530
  %v3532 = vsel %vm3348, %v3341, -inf
  %3533 = vmax.xlane.f32.xlu0 %v3532
  %v3534 = vpop.xlane.xlu0 %3533
  %v3535 = vsel %vm3348, %v3342, -inf
  %3536 = vmax.xlane.f32.xlu0 %v3535
  %v3537 = vpop.xlane.xlu0 %3536
  %v3538 = vsel %vm3348, %v3343, -inf
  %3539 = vmax.xlane.f32.xlu0 %v3538
  %v3540 = vpop.xlane.xlu0 %3539
  %v3541 = vsel %vm3348, %v3344, -inf
  %3542 = vmax.xlane.f32.xlu0 %v3541
  %v3543 = vpop.xlane.xlu0 %3542
  %v3544 = vsel %vm3348, %v3345, -inf
  %3545 = vmax.xlane.f32.xlu0 %v3544
  %v3546 = vpop.xlane.xlu0 %3545
  %v3547 = vsel %vm3348, %v3346, -inf
  %3548 = vmax.xlane.f32.xlu0 %v3547
  %v3549 = vpop.xlane.xlu0 %3548
  %v3550 = vsel %vm3348, %v3347, -inf
  %3551 = vmax.xlane.f32.xlu0 %v3550
  %v3552 = vpop.xlane.xlu0 %3551
  %v3553 = vsub.f32 %v3280, %v3351
  %v3554 = vsub.f32 %v3281, %v3354
  %v3555 = vsub.f32 %v3282, %v3357
  %v3556 = vsub.f32 %v3283, %v3360
  %v3557 = vsub.f32 %v3284, %v3363
  %v3558 = vsub.f32 %v3285, %v3366
  %v3559 = vsub.f32 %v3286, %v3369
  %v3560 = vsub.f32 %v3287, %v3372
  %v3561 = vsub.f32 %v3288, %v3375
  %v3562 = vsub.f32 %v3289, %v3378
  %v3563 = vsub.f32 %v3290, %v3381
  %v3564 = vsub.f32 %v3291, %v3384
  %v3565 = vsub.f32 %v3292, %v3387
  %v3566 = vsub.f32 %v3293, %v3390
  %v3567 = vsub.f32 %v3294, %v3393
  %v3568 = vsub.f32 %v3295, %v3396
  %v3569 = vsub.f32 %v3296, %v3399
  %v3570 = vsub.f32 %v3297, %v3402
  %v3571 = vsub.f32 %v3298, %v3405
  %v3572 = vsub.f32 %v3299, %v3408
  %v3573 = vsub.f32 %v3300, %v3411
  %v3574 = vsub.f32 %v3301, %v3414
  %v3575 = vsub.f32 %v3302, %v3417
  %v3576 = vsub.f32 %v3303, %v3420
  %v3577 = vsub.f32 %v3304, %v3423
  %v3578 = vsub.f32 %v3305, %v3426
  %v3579 = vsub.f32 %v3306, %v3429
  %v3580 = vsub.f32 %v3307, %v3432
  %v3581 = vsub.f32 %v3308, %v3435
  %v3582 = vsub.f32 %v3309, %v3438
  %v3583 = vsub.f32 %v3310, %v3441
  %v3584 = vsub.f32 %v3311, %v3444
  %v3585 = vsub.f32 %v3312, %v3447
  %v3586 = vsub.f32 %v3313, %v3450
  %v3587 = vsub.f32 %v3314, %v3453
  %v3588 = vsub.f32 %v3315, %v3456
  %v3589 = vsub.f32 %v3316, %v3459
  %v3590 = vsub.f32 %v3317, %v3462
  %v3591 = vsub.f32 %v3318, %v3465
  %v3592 = vsub.f32 %v3319, %v3468
  %v3593 = vsub.f32 %v3320, %v3471
  %v3594 = vsub.f32 %v3321, %v3474
  %v3595 = vsub.f32 %v3322, %v3477
  %v3596 = vsub.f32 %v3323, %v3480
  %v3597 = vsub.f32 %v3324, %v3483
  %v3598 = vsub.f32 %v3325, %v3486
  %v3599 = vsub.f32 %v3326, %v3489
  %v3600 = vsub.f32 %v3327, %v3492
  %v3601 = vsub.f32 %v3328, %v3495
  %v3602 = vsub.f32 %v3329, %v3498
  %v3603 = vsub.f32 %v3330, %v3501
  %v3604 = vsub.f32 %v3331, %v3504
  %v3605 = vsub.f32 %v3332, %v3507
  %v3606 = vsub.f32 %v3333, %v3510
  %v3607 = vsub.f32 %v3334, %v3513
  %v3608 = vsub.f32 %v3335, %v3516
  %v3609 = vsub.f32 %v3336, %v3519
  %v3610 = vsub.f32 %v3337, %v3522
  %v3611 = vsub.f32 %v3338, %v3525
  %v3612 = vsub.f32 %v3339, %v3528
  %v3613 = vsub.f32 %v3340, %v3531
  %v3614 = vsub.f32 %v3341, %v3534
  %v3615 = vsub.f32 %v3342, %v3537
  %v3616 = vsub.f32 %v3343, %v3540
  %v3617 = vsub.f32 %v3344, %v3543
  %v3618 = vsub.f32 %v3345, %v3546
  %v3619 = vsub.f32 %v3346, %v3549
  %v3620 = vsub.f32 %v3347, %v3552
  %v3621 = vmul.f32 %v3553, 1.442695
  %v3622 = vpow.pop %v3621
  %v3623 = vmul.f32 %v3554, 1.442695
  %v3624 = vpow.pop %v3623
  %v3625 = vmul.f32 %v3555, 1.442695
  %v3626 = vpow.pop %v3625
  %v3627 = vmul.f32 %v3556, 1.442695
  %v3628 = vpow.pop %v3627
  %v3629 = vmul.f32 %v3557, 1.442695
  %v3630 = vpow.pop %v3629
  %v3631 = vmul.f32 %v3558, 1.442695
  %v3632 = vpow.pop %v3631
  %v3633 = vmul.f32 %v3559, 1.442695
  %v3634 = vpow.pop %v3633
  %v3635 = vmul.f32 %v3560, 1.442695
  %v3636 = vpow.pop %v3635
  %v3637 = vmul.f32 %v3561, 1.442695
  %v3638 = vpow.pop %v3637
  %v3639 = vmul.f32 %v3562, 1.442695
  %v3640 = vpow.pop %v3639
  %v3641 = vmul.f32 %v3563, 1.442695
  %v3642 = vpow.pop %v3641
  %v3643 = vmul.f32 %v3564, 1.442695
  %v3644 = vpow.pop %v3643
  %v3645 = vmul.f32 %v3565, 1.442695
  %v3646 = vpow.pop %v3645
  %v3647 = vmul.f32 %v3566, 1.442695
  %v3648 = vpow.pop %v3647
  %v3649 = vmul.f32 %v3567, 1.442695
  %v3650 = vpow.pop %v3649
  %v3651 = vmul.f32 %v3568, 1.442695
  %v3652 = vpow.pop %v3651
  %v3653 = vmul.f32 %v3569, 1.442695
  %v3654 = vpow.pop %v3653
  %v3655 = vmul.f32 %v3570, 1.442695
  %v3656 = vpow.pop %v3655
  %v3657 = vmul.f32 %v3571, 1.442695
  %v3658 = vpow.pop %v3657
  %v3659 = vmul.f32 %v3572, 1.442695
  %v3660 = vpow.pop %v3659
  %v3661 = vmul.f32 %v3573, 1.442695
  %v3662 = vpow.pop %v3661
  %v3663 = vmul.f32 %v3574, 1.442695
  %v3664 = vpow.pop %v3663
  %v3665 = vmul.f32 %v3575, 1.442695
  %v3666 = vpow.pop %v3665
  %v3667 = vmul.f32 %v3576, 1.442695
  %v3668 = vpow.pop %v3667
  %v3669 = vmul.f32 %v3577, 1.442695
  %v3670 = vpow.pop %v3669
  %v3671 = vmul.f32 %v3578, 1.442695
  %v3672 = vpow.pop %v3671
  %v3673 = vmul.f32 %v3579, 1.442695
  %v3674 = vpow.pop %v3673
  %v3675 = vmul.f32 %v3580, 1.442695
  %v3676 = vpow.pop %v3675
  %v3677 = vmul.f32 %v3581, 1.442695
  %v3678 = vpow.pop %v3677
  %v3679 = vmul.f32 %v3582, 1.442695
  %v3680 = vpow.pop %v3679
  %v3681 = vmul.f32 %v3583, 1.442695
  %v3682 = vpow.pop %v3681
  %v3683 = vmul.f32 %v3584, 1.442695
  %v3684 = vpow.pop %v3683
  %v3685 = vmul.f32 %v3585, 1.442695
  %v3686 = vpow.pop %v3685
  %v3687 = vmul.f32 %v3586, 1.442695
  %v3688 = vpow.pop %v3687
  %v3689 = vmul.f32 %v3587, 1.442695
  %v3690 = vpow.pop %v3689
  %v3691 = vmul.f32 %v3588, 1.442695
  %v3692 = vpow.pop %v3691
  %v3693 = vmul.f32 %v3589, 1.442695
  %v3694 = vpow.pop %v3693
  %v3695 = vmul.f32 %v3590, 1.442695
  %v3696 = vpow.pop %v3695
  %v3697 = vmul.f32 %v3591, 1.442695
  %v3698 = vpow.pop %v3697
  %v3699 = vmul.f32 %v3592, 1.442695
  %v3700 = vpow.pop %v3699
  %v3701 = vmul.f32 %v3593, 1.442695
  %v3702 = vpow.pop %v3701
  %v3703 = vmul.f32 %v3594, 1.442695
  %v3704 = vpow.pop %v3703
  %v3705 = vmul.f32 %v3595, 1.442695
  %v3706 = vpow.pop %v3705
  %v3707 = vmul.f32 %v3596, 1.442695
  %v3708 = vpow.pop %v3707
  %v3709 = vmul.f32 %v3597, 1.442695
  %v3710 = vpow.pop %v3709
  %v3711 = vmul.f32 %v3598, 1.442695
  %v3712 = vpow.pop %v3711
  %v3713 = vmul.f32 %v3599, 1.442695
  %v3714 = vpow.pop %v3713
  %v3715 = vmul.f32 %v3600, 1.442695
  %v3716 = vpow.pop %v3715
  %v3717 = vmul.f32 %v3601, 1.442695
  %v3718 = vpow.pop %v3717
  %v3719 = vmul.f32 %v3602, 1.442695
  %v3720 = vpow.pop %v3719
  %v3721 = vmul.f32 %v3603, 1.442695
  %v3722 = vpow.pop %v3721
  %v3723 = vmul.f32 %v3604, 1.442695
  %v3724 = vpow.pop %v3723
  %v3725 = vmul.f32 %v3605, 1.442695
  %v3726 = vpow.pop %v3725
  %v3727 = vmul.f32 %v3606, 1.442695
  %v3728 = vpow.pop %v3727
  %v3729 = vmul.f32 %v3607, 1.442695
  %v3730 = vpow.pop %v3729
  %v3731 = vmul.f32 %v3608, 1.442695
  %v3732 = vpow.pop %v3731
  %v3733 = vmul.f32 %v3609, 1.442695
  %v3734 = vpow.pop %v3733
  %v3735 = vmul.f32 %v3610, 1.442695
  %v3736 = vpow.pop %v3735
  %v3737 = vmul.f32 %v3611, 1.442695
  %v3738 = vpow.pop %v3737
  %v3739 = vmul.f32 %v3612, 1.442695
  %v3740 = vpow.pop %v3739
  %v3741 = vmul.f32 %v3613, 1.442695
  %v3742 = vpow.pop %v3741
  %v3743 = vmul.f32 %v3614, 1.442695
  %v3744 = vpow.pop %v3743
  %v3745 = vmul.f32 %v3615, 1.442695
  %v3746 = vpow.pop %v3745
  %v3747 = vmul.f32 %v3616, 1.442695
  %v3748 = vpow.pop %v3747
  %v3749 = vmul.f32 %v3617, 1.442695
  %v3750 = vpow.pop %v3749
  %v3751 = vmul.f32 %v3618, 1.442695
  %v3752 = vpow.pop %v3751
  %v3753 = vmul.f32 %v3619, 1.442695
  %v3754 = vpow.pop %v3753
  %v3755 = vmul.f32 %v3620, 1.442695
  %v3756 = vpow.pop %v3755
  %v3757 = vsel %vm3348, %v3622, 0.0
  %3758 = vadd.xlane.f32.xlu0 %v3757
  %v3759 = vpop.xlane.xlu0 %3758
  %v3760 = vsel %vm3348, %v3624, 0.0
  %3761 = vadd.xlane.f32.xlu0 %v3760
  %v3762 = vpop.xlane.xlu0 %3761
  %v3763 = vsel %vm3348, %v3626, 0.0
  %3764 = vadd.xlane.f32.xlu0 %v3763
  %v3765 = vpop.xlane.xlu0 %3764
  %v3766 = vsel %vm3348, %v3628, 0.0
  %3767 = vadd.xlane.f32.xlu0 %v3766
  %v3768 = vpop.xlane.xlu0 %3767
  %v3769 = vsel %vm3348, %v3630, 0.0
  %3770 = vadd.xlane.f32.xlu0 %v3769
  %v3771 = vpop.xlane.xlu0 %3770
  %v3772 = vsel %vm3348, %v3632, 0.0
  %3773 = vadd.xlane.f32.xlu0 %v3772
  %v3774 = vpop.xlane.xlu0 %3773
  %v3775 = vsel %vm3348, %v3634, 0.0
  %3776 = vadd.xlane.f32.xlu0 %v3775
  %v3777 = vpop.xlane.xlu0 %3776
  %v3778 = vsel %vm3348, %v3636, 0.0
  %3779 = vadd.xlane.f32.xlu0 %v3778
  %v3780 = vpop.xlane.xlu0 %3779
  %v3781 = vsel %vm3348, %v3638, 0.0
  %3782 = vadd.xlane.f32.xlu0 %v3781
  %v3783 = vpop.xlane.xlu0 %3782
  %v3784 = vsel %vm3348, %v3640, 0.0
  %3785 = vadd.xlane.f32.xlu0 %v3784
  %v3786 = vpop.xlane.xlu0 %3785
  %v3787 = vsel %vm3348, %v3642, 0.0
  %3788 = vadd.xlane.f32.xlu0 %v3787
  %v3789 = vpop.xlane.xlu0 %3788
  %v3790 = vsel %vm3348, %v3644, 0.0
  %3791 = vadd.xlane.f32.xlu0 %v3790
  %v3792 = vpop.xlane.xlu0 %3791
  %v3793 = vsel %vm3348, %v3646, 0.0
  %3794 = vadd.xlane.f32.xlu0 %v3793
  %v3795 = vpop.xlane.xlu0 %3794
  %v3796 = vsel %vm3348, %v3648, 0.0
  %3797 = vadd.xlane.f32.xlu0 %v3796
  %v3798 = vpop.xlane.xlu0 %3797
  %v3799 = vsel %vm3348, %v3650, 0.0
  %3800 = vadd.xlane.f32.xlu0 %v3799
  %v3801 = vpop.xlane.xlu0 %3800
  %v3802 = vsel %vm3348, %v3652, 0.0
  %3803 = vadd.xlane.f32.xlu0 %v3802
  %v3804 = vpop.xlane.xlu0 %3803
  %v3805 = vsel %vm3348, %v3654, 0.0
  %3806 = vadd.xlane.f32.xlu0 %v3805
  %v3807 = vpop.xlane.xlu0 %3806
  %v3808 = vsel %vm3348, %v3656, 0.0
  %3809 = vadd.xlane.f32.xlu0 %v3808
  %v3810 = vpop.xlane.xlu0 %3809
  %v3811 = vsel %vm3348, %v3658, 0.0
  %3812 = vadd.xlane.f32.xlu0 %v3811
  %v3813 = vpop.xlane.xlu0 %3812
  %v3814 = vsel %vm3348, %v3660, 0.0
  %3815 = vadd.xlane.f32.xlu0 %v3814
  %v3816 = vpop.xlane.xlu0 %3815
  %v3817 = vsel %vm3348, %v3662, 0.0
  %3818 = vadd.xlane.f32.xlu0 %v3817
  %v3819 = vpop.xlane.xlu0 %3818
  %v3820 = vsel %vm3348, %v3664, 0.0
  %3821 = vadd.xlane.f32.xlu0 %v3820
  %v3822 = vpop.xlane.xlu0 %3821
  %v3823 = vsel %vm3348, %v3666, 0.0
  %3824 = vadd.xlane.f32.xlu0 %v3823
  %v3825 = vpop.xlane.xlu0 %3824
  %v3826 = vsel %vm3348, %v3668, 0.0
  %3827 = vadd.xlane.f32.xlu0 %v3826
  %v3828 = vpop.xlane.xlu0 %3827
  %v3829 = vsel %vm3348, %v3670, 0.0
  %3830 = vadd.xlane.f32.xlu0 %v3829
  %v3831 = vpop.xlane.xlu0 %3830
  %v3832 = vsel %vm3348, %v3672, 0.0
  %3833 = vadd.xlane.f32.xlu0 %v3832
  %v3834 = vpop.xlane.xlu0 %3833
  %v3835 = vsel %vm3348, %v3674, 0.0
  %3836 = vadd.xlane.f32.xlu0 %v3835
  %v3837 = vpop.xlane.xlu0 %3836
  %v3838 = vsel %vm3348, %v3676, 0.0
  %3839 = vadd.xlane.f32.xlu0 %v3838
  %v3840 = vpop.xlane.xlu0 %3839
  %v3841 = vsel %vm3348, %v3678, 0.0
  %3842 = vadd.xlane.f32.xlu0 %v3841
  %v3843 = vpop.xlane.xlu0 %3842
  %v3844 = vsel %vm3348, %v3680, 0.0
  %3845 = vadd.xlane.f32.xlu0 %v3844
  %v3846 = vpop.xlane.xlu0 %3845
  %v3847 = vsel %vm3348, %v3682, 0.0
  %3848 = vadd.xlane.f32.xlu0 %v3847
  %v3849 = vpop.xlane.xlu0 %3848
  %v3850 = vsel %vm3348, %v3684, 0.0
  %3851 = vadd.xlane.f32.xlu0 %v3850
  %v3852 = vpop.xlane.xlu0 %3851
  %v3853 = vsel %vm3348, %v3686, 0.0
  %3854 = vadd.xlane.f32.xlu0 %v3853
  %v3855 = vpop.xlane.xlu0 %3854
  %v3856 = vsel %vm3348, %v3688, 0.0
  %3857 = vadd.xlane.f32.xlu0 %v3856
  %v3858 = vpop.xlane.xlu0 %3857
  %v3859 = vsel %vm3348, %v3690, 0.0
  %3860 = vadd.xlane.f32.xlu0 %v3859
  %v3861 = vpop.xlane.xlu0 %3860
  %v3862 = vsel %vm3348, %v3692, 0.0
  %3863 = vadd.xlane.f32.xlu0 %v3862
  %v3864 = vpop.xlane.xlu0 %3863
  %v3865 = vsel %vm3348, %v3694, 0.0
  %3866 = vadd.xlane.f32.xlu0 %v3865
  %v3867 = vpop.xlane.xlu0 %3866
  %v3868 = vsel %vm3348, %v3696, 0.0
  %3869 = vadd.xlane.f32.xlu0 %v3868
  %v3870 = vpop.xlane.xlu0 %3869
  %v3871 = vsel %vm3348, %v3698, 0.0
  %3872 = vadd.xlane.f32.xlu0 %v3871
  %v3873 = vpop.xlane.xlu0 %3872
  %v3874 = vsel %vm3348, %v3700, 0.0
  %3875 = vadd.xlane.f32.xlu0 %v3874
  %v3876 = vpop.xlane.xlu0 %3875
  %v3877 = vsel %vm3348, %v3702, 0.0
  %3878 = vadd.xlane.f32.xlu0 %v3877
  %v3879 = vpop.xlane.xlu0 %3878
  %v3880 = vsel %vm3348, %v3704, 0.0
  %3881 = vadd.xlane.f32.xlu0 %v3880
  %v3882 = vpop.xlane.xlu0 %3881
  %v3883 = vsel %vm3348, %v3706, 0.0
  %3884 = vadd.xlane.f32.xlu0 %v3883
  %v3885 = vpop.xlane.xlu0 %3884
  %v3886 = vsel %vm3348, %v3708, 0.0
  %3887 = vadd.xlane.f32.xlu0 %v3886
  %v3888 = vpop.xlane.xlu0 %3887
  %v3889 = vsel %vm3348, %v3710, 0.0
  %3890 = vadd.xlane.f32.xlu0 %v3889
  %v3891 = vpop.xlane.xlu0 %3890
  %v3892 = vsel %vm3348, %v3712, 0.0
  %3893 = vadd.xlane.f32.xlu0 %v3892
  %v3894 = vpop.xlane.xlu0 %3893
  %v3895 = vsel %vm3348, %v3714, 0.0
  %3896 = vadd.xlane.f32.xlu0 %v3895
  %v3897 = vpop.xlane.xlu0 %3896
  %v3898 = vsel %vm3348, %v3716, 0.0
  %3899 = vadd.xlane.f32.xlu0 %v3898
  %v3900 = vpop.xlane.xlu0 %3899
  %v3901 = vsel %vm3348, %v3718, 0.0
  %3902 = vadd.xlane.f32.xlu0 %v3901
  %v3903 = vpop.xlane.xlu0 %3902
  %v3904 = vsel %vm3348, %v3720, 0.0
  %3905 = vadd.xlane.f32.xlu0 %v3904
  %v3906 = vpop.xlane.xlu0 %3905
  %v3907 = vsel %vm3348, %v3722, 0.0
  %3908 = vadd.xlane.f32.xlu0 %v3907
  %v3909 = vpop.xlane.xlu0 %3908
  %v3910 = vsel %vm3348, %v3724, 0.0
  %3911 = vadd.xlane.f32.xlu0 %v3910
  %v3912 = vpop.xlane.xlu0 %3911
  %v3913 = vsel %vm3348, %v3726, 0.0
  %3914 = vadd.xlane.f32.xlu0 %v3913
  %v3915 = vpop.xlane.xlu0 %3914
  %v3916 = vsel %vm3348, %v3728, 0.0
  %3917 = vadd.xlane.f32.xlu0 %v3916
  %v3918 = vpop.xlane.xlu0 %3917
  %v3919 = vsel %vm3348, %v3730, 0.0
  %3920 = vadd.xlane.f32.xlu0 %v3919
  %v3921 = vpop.xlane.xlu0 %3920
  %v3922 = vsel %vm3348, %v3732, 0.0
  %3923 = vadd.xlane.f32.xlu0 %v3922
  %v3924 = vpop.xlane.xlu0 %3923
  %v3925 = vsel %vm3348, %v3734, 0.0
  %3926 = vadd.xlane.f32.xlu0 %v3925
  %v3927 = vpop.xlane.xlu0 %3926
  %v3928 = vsel %vm3348, %v3736, 0.0
  %3929 = vadd.xlane.f32.xlu0 %v3928
  %v3930 = vpop.xlane.xlu0 %3929
  %v3931 = vsel %vm3348, %v3738, 0.0
  %3932 = vadd.xlane.f32.xlu0 %v3931
  %v3933 = vpop.xlane.xlu0 %3932
  %v3934 = vsel %vm3348, %v3740, 0.0
  %3935 = vadd.xlane.f32.xlu0 %v3934
  %v3936 = vpop.xlane.xlu0 %3935
  %v3937 = vsel %vm3348, %v3742, 0.0
  %3938 = vadd.xlane.f32.xlu0 %v3937
  %v3939 = vpop.xlane.xlu0 %3938
  %v3940 = vsel %vm3348, %v3744, 0.0
  %3941 = vadd.xlane.f32.xlu0 %v3940
  %v3942 = vpop.xlane.xlu0 %3941
  %v3943 = vsel %vm3348, %v3746, 0.0
  %3944 = vadd.xlane.f32.xlu0 %v3943
  %v3945 = vpop.xlane.xlu0 %3944
  %v3946 = vsel %vm3348, %v3748, 0.0
  %3947 = vadd.xlane.f32.xlu0 %v3946
  %v3948 = vpop.xlane.xlu0 %3947
  %v3949 = vsel %vm3348, %v3750, 0.0
  %3950 = vadd.xlane.f32.xlu0 %v3949
  %v3951 = vpop.xlane.xlu0 %3950
  %v3952 = vsel %vm3348, %v3752, 0.0
  %3953 = vadd.xlane.f32.xlu0 %v3952
  %v3954 = vpop.xlane.xlu0 %3953
  %v3955 = vsel %vm3348, %v3754, 0.0
  %3956 = vadd.xlane.f32.xlu0 %v3955
  %v3957 = vpop.xlane.xlu0 %3956
  %v3958 = vsel %vm3348, %v3756, 0.0
  %3959 = vadd.xlane.f32.xlu0 %v3958
  %v3960 = vpop.xlane.xlu0 %3959
  %v3961 = vrcp.pop %v3759
  %v3962 = vrcp.pop %v3762
  %v3963 = vrcp.pop %v3765
  %v3964 = vrcp.pop %v3768
  %v3965 = vrcp.pop %v3771
  %v3966 = vrcp.pop %v3774
  %v3967 = vrcp.pop %v3777
  %v3968 = vrcp.pop %v3780
  %v3969 = vrcp.pop %v3783
  %v3970 = vrcp.pop %v3786
  %v3971 = vrcp.pop %v3789
  %v3972 = vrcp.pop %v3792
  %v3973 = vrcp.pop %v3795
  %v3974 = vrcp.pop %v3798
  %v3975 = vrcp.pop %v3801
  %v3976 = vrcp.pop %v3804
  %v3977 = vrcp.pop %v3807
  %v3978 = vrcp.pop %v3810
  %v3979 = vrcp.pop %v3813
  %v3980 = vrcp.pop %v3816
  %v3981 = vrcp.pop %v3819
  %v3982 = vrcp.pop %v3822
  %v3983 = vrcp.pop %v3825
  %v3984 = vrcp.pop %v3828
  %v3985 = vrcp.pop %v3831
  %v3986 = vrcp.pop %v3834
  %v3987 = vrcp.pop %v3837
  %v3988 = vrcp.pop %v3840
  %v3989 = vrcp.pop %v3843
  %v3990 = vrcp.pop %v3846
  %v3991 = vrcp.pop %v3849
  %v3992 = vrcp.pop %v3852
  %v3993 = vrcp.pop %v3855
  %v3994 = vrcp.pop %v3858
  %v3995 = vrcp.pop %v3861
  %v3996 = vrcp.pop %v3864
  %v3997 = vrcp.pop %v3867
  %v3998 = vrcp.pop %v3870
  %v3999 = vrcp.pop %v3873
  %v4000 = vrcp.pop %v3876
  %v4001 = vrcp.pop %v3879
  %v4002 = vrcp.pop %v3882
  %v4003 = vrcp.pop %v3885
  %v4004 = vrcp.pop %v3888
  %v4005 = vrcp.pop %v3891
  %v4006 = vrcp.pop %v3894
  %v4007 = vrcp.pop %v3897
  %v4008 = vrcp.pop %v3900
  %v4009 = vrcp.pop %v3903
  %v4010 = vrcp.pop %v3906
  %v4011 = vrcp.pop %v3909
  %v4012 = vrcp.pop %v3912
  %v4013 = vrcp.pop %v3915
  %v4014 = vrcp.pop %v3918
  %v4015 = vrcp.pop %v3921
  %v4016 = vrcp.pop %v3924
  %v4017 = vrcp.pop %v3927
  %v4018 = vrcp.pop %v3930
  %v4019 = vrcp.pop %v3933
  %v4020 = vrcp.pop %v3936
  %v4021 = vrcp.pop %v3939
  %v4022 = vrcp.pop %v3942
  %v4023 = vrcp.pop %v3945
  %v4024 = vrcp.pop %v3948
  %v4025 = vrcp.pop %v3951
  %v4026 = vrcp.pop %v3954
  %v4027 = vrcp.pop %v3957
  %v4028 = vrcp.pop %v3960
  %v4029 = vmul.f32 %v3622, %v3961
  %v4030 = vmul.f32 %v3624, %v3962
  %v4031 = vmul.f32 %v3626, %v3963
  %v4032 = vmul.f32 %v3628, %v3964
  %v4033 = vmul.f32 %v3630, %v3965
  %v4034 = vmul.f32 %v3632, %v3966
  %v4035 = vmul.f32 %v3634, %v3967
  %v4036 = vmul.f32 %v3636, %v3968
  %v4037 = vmul.f32 %v3638, %v3969
  %v4038 = vmul.f32 %v3640, %v3970
  %v4039 = vmul.f32 %v3642, %v3971
  %v4040 = vmul.f32 %v3644, %v3972
  %v4041 = vmul.f32 %v3646, %v3973
  %v4042 = vmul.f32 %v3648, %v3974
  %v4043 = vmul.f32 %v3650, %v3975
  %v4044 = vmul.f32 %v3652, %v3976
  %v4045 = vmul.f32 %v3654, %v3977
  %v4046 = vmul.f32 %v3656, %v3978
  %v4047 = vmul.f32 %v3658, %v3979
  %v4048 = vmul.f32 %v3660, %v3980
  %v4049 = vmul.f32 %v3662, %v3981
  %v4050 = vmul.f32 %v3664, %v3982
  %v4051 = vmul.f32 %v3666, %v3983
  %v4052 = vmul.f32 %v3668, %v3984
  %v4053 = vmul.f32 %v3670, %v3985
  %v4054 = vmul.f32 %v3672, %v3986
  %v4055 = vmul.f32 %v3674, %v3987
  %v4056 = vmul.f32 %v3676, %v3988
  %v4057 = vmul.f32 %v3678, %v3989
  %v4058 = vmul.f32 %v3680, %v3990
  %v4059 = vmul.f32 %v3682, %v3991
  %v4060 = vmul.f32 %v3684, %v3992
  %v4061 = vmul.f32 %v3686, %v3993
  %v4062 = vmul.f32 %v3688, %v3994
  %v4063 = vmul.f32 %v3690, %v3995
  %v4064 = vmul.f32 %v3692, %v3996
  %v4065 = vmul.f32 %v3694, %v3997
  %v4066 = vmul.f32 %v3696, %v3998
  %v4067 = vmul.f32 %v3698, %v3999
  %v4068 = vmul.f32 %v3700, %v4000
  %v4069 = vmul.f32 %v3702, %v4001
  %v4070 = vmul.f32 %v3704, %v4002
  %v4071 = vmul.f32 %v3706, %v4003
  %v4072 = vmul.f32 %v3708, %v4004
  %v4073 = vmul.f32 %v3710, %v4005
  %v4074 = vmul.f32 %v3712, %v4006
  %v4075 = vmul.f32 %v3714, %v4007
  %v4076 = vmul.f32 %v3716, %v4008
  %v4077 = vmul.f32 %v3718, %v4009
  %v4078 = vmul.f32 %v3720, %v4010
  %v4079 = vmul.f32 %v3722, %v4011
  %v4080 = vmul.f32 %v3724, %v4012
  %v4081 = vmul.f32 %v3726, %v4013
  %v4082 = vmul.f32 %v3728, %v4014
  %v4083 = vmul.f32 %v3730, %v4015
  %v4084 = vmul.f32 %v3732, %v4016
  %v4085 = vmul.f32 %v3734, %v4017
  %v4086 = vmul.f32 %v3736, %v4018
  %v4087 = vmul.f32 %v3738, %v4019
  %v4088 = vmul.f32 %v3740, %v4020
  %v4089 = vmul.f32 %v3742, %v4021
  %v4090 = vmul.f32 %v3744, %v4022
  %v4091 = vmul.f32 %v3746, %v4023
  %v4092 = vmul.f32 %v3748, %v4024
  %v4093 = vmul.f32 %v3750, %v4025
  %v4094 = vmul.f32 %v3752, %v4026
  %v4095 = vmul.f32 %v3754, %v4027
  %v4096 = vmul.f32 %v3756, %v4028
  %v4097 = vpack.c.bf16 %v4029, %v4029
  %v4098 = vpack.c.bf16 %v4030, %v4030
  %v4099 = vpack.c.bf16 %v4031, %v4031
  %v4100 = vpack.c.bf16 %v4032, %v4032
  %v4101 = vpack.c.bf16 %v4033, %v4033
  %v4102 = vpack.c.bf16 %v4034, %v4034
  %v4103 = vpack.c.bf16 %v4035, %v4035
  %v4104 = vpack.c.bf16 %v4036, %v4036
  %v4105 = vpack.c.bf16 %v4037, %v4037
  %v4106 = vpack.c.bf16 %v4038, %v4038
  %v4107 = vpack.c.bf16 %v4039, %v4039
  %v4108 = vpack.c.bf16 %v4040, %v4040
  %v4109 = vpack.c.bf16 %v4041, %v4041
  %v4110 = vpack.c.bf16 %v4042, %v4042
  %v4111 = vpack.c.bf16 %v4043, %v4043
  %v4112 = vpack.c.bf16 %v4044, %v4044
  %v4113 = vpack.c.bf16 %v4045, %v4045
  %v4114 = vpack.c.bf16 %v4046, %v4046
  %v4115 = vpack.c.bf16 %v4047, %v4047
  %v4116 = vpack.c.bf16 %v4048, %v4048
  %v4117 = vpack.c.bf16 %v4049, %v4049
  %v4118 = vpack.c.bf16 %v4050, %v4050
  %v4119 = vpack.c.bf16 %v4051, %v4051
  %v4120 = vpack.c.bf16 %v4052, %v4052
  %v4121 = vpack.c.bf16 %v4053, %v4053
  %v4122 = vpack.c.bf16 %v4054, %v4054
  %v4123 = vpack.c.bf16 %v4055, %v4055
  %v4124 = vpack.c.bf16 %v4056, %v4056
  %v4125 = vpack.c.bf16 %v4057, %v4057
  %v4126 = vpack.c.bf16 %v4058, %v4058
  %v4127 = vpack.c.bf16 %v4059, %v4059
  %v4128 = vpack.c.bf16 %v4060, %v4060
  %v4129 = vpack.c.bf16 %v4061, %v4061
  %v4130 = vpack.c.bf16 %v4062, %v4062
  %v4131 = vpack.c.bf16 %v4063, %v4063
  %v4132 = vpack.c.bf16 %v4064, %v4064
  %v4133 = vpack.c.bf16 %v4065, %v4065
  %v4134 = vpack.c.bf16 %v4066, %v4066
  %v4135 = vpack.c.bf16 %v4067, %v4067
  %v4136 = vpack.c.bf16 %v4068, %v4068
  %v4137 = vpack.c.bf16 %v4069, %v4069
  %v4138 = vpack.c.bf16 %v4070, %v4070
  %v4139 = vpack.c.bf16 %v4071, %v4071
  %v4140 = vpack.c.bf16 %v4072, %v4072
  %v4141 = vpack.c.bf16 %v4073, %v4073
  %v4142 = vpack.c.bf16 %v4074, %v4074
  %v4143 = vpack.c.bf16 %v4075, %v4075
  %v4144 = vpack.c.bf16 %v4076, %v4076
  %v4145 = vpack.c.bf16 %v4077, %v4077
  %v4146 = vpack.c.bf16 %v4078, %v4078
  %v4147 = vpack.c.bf16 %v4079, %v4079
  %v4148 = vpack.c.bf16 %v4080, %v4080
  %v4149 = vpack.c.bf16 %v4081, %v4081
  %v4150 = vpack.c.bf16 %v4082, %v4082
  %v4151 = vpack.c.bf16 %v4083, %v4083
  %v4152 = vpack.c.bf16 %v4084, %v4084
  %v4153 = vpack.c.bf16 %v4085, %v4085
  %v4154 = vpack.c.bf16 %v4086, %v4086
  %v4155 = vpack.c.bf16 %v4087, %v4087
  %v4156 = vpack.c.bf16 %v4088, %v4088
  %v4157 = vpack.c.bf16 %v4089, %v4089
  %v4158 = vpack.c.bf16 %v4090, %v4090
  %v4159 = vpack.c.bf16 %v4091, %v4091
  %v4160 = vpack.c.bf16 %v4092, %v4092
  %v4161 = vpack.c.bf16 %v4093, %v4093
  %v4162 = vpack.c.bf16 %v4094, %v4094
  %v4163 = vpack.c.bf16 %v4095, %v4095
  %v4164 = vpack.c.bf16 %v4096, %v4096
  %v4165 = vld [vmem:[%s2] sm:$0x1]
  %v4166 = vld [vmem:[%s2 + $0x1] sm:$0x1]
  %v4167 = vld [vmem:[%s2 + $0x2] sm:$0x1]
  %v4168 = vld [vmem:[%s2 + $0x3] sm:$0x1]
  %v4169 = vld [vmem:[%s2 + $0x4] sm:$0x1]
  %v4170 = vld [vmem:[%s2 + $0x5] sm:$0x1]
  %v4171 = vld [vmem:[%s2 + $0x6] sm:$0x1]
  %v4172 = vld [vmem:[%s2 + $0x7] sm:$0x1]
  %v4173 = vld [vmem:[%s2 + $0x8] sm:$0x1]
  %v4174 = vld [vmem:[%s2 + $0x9] sm:$0x1]
  %v4175 = vld [vmem:[%s2 + $0xa] sm:$0x1]
  %v4176 = vld [vmem:[%s2 + $0xb] sm:$0x1]
  %v4177 = vld [vmem:[%s2 + $0xc] sm:$0x1]
  %v4178 = vld [vmem:[%s2 + $0xd] sm:$0x1]
  %v4179 = vld [vmem:[%s2 + $0xe] sm:$0x1]
  %v4180 = vld [vmem:[%s2 + $0xf] sm:$0x1]
  %v4181 = vld [vmem:[%s2 + $0x10] sm:$0x1]
  %v4182 = vld [vmem:[%s2 + $0x11] sm:$0x1]
  %v4183 = vld [vmem:[%s2 + $0x12] sm:$0x1]
  %v4184 = vld [vmem:[%s2 + $0x13] sm:$0x1]
  %v4185 = vld [vmem:[%s2 + $0x14] sm:$0x1]
  %v4186 = vld [vmem:[%s2 + $0x15] sm:$0x1]
  %v4187 = vld [vmem:[%s2 + $0x16] sm:$0x1]
  %v4188 = vld [vmem:[%s2 + $0x17] sm:$0x1]
  %v4189 = vld [vmem:[%s2 + $0x18] sm:$0x1]
  %v4190 = vld [vmem:[%s2 + $0x19] sm:$0x1]
  %v4191 = vld [vmem:[%s2 + $0x1a] sm:$0x1]
  %v4192 = vld [vmem:[%s2 + $0x1b] sm:$0x1]
  %v4193 = vld [vmem:[%s2 + $0x1c] sm:$0x1]
  %v4194 = vld [vmem:[%s2 + $0x1d] sm:$0x1]
  %v4195 = vld [vmem:[%s2 + $0x1e] sm:$0x1]
  %v4196 = vld [vmem:[%s2 + $0x1f] sm:$0x1]
  %v4197 = vld [vmem:[%s2 + $0x20] sm:$0x1]
  %v4198 = vld [vmem:[%s2 + $0x21] sm:$0x1]
  %v4199 = vld [vmem:[%s2 + $0x22] sm:$0x1]
  %v4200 = vld [vmem:[%s2 + $0x23] sm:$0x1]
  %v4201 = vld [vmem:[%s2 + $0x24] sm:$0x1]
  %v4202 = vld [vmem:[%s2 + $0x25] sm:$0x1]
  %v4203 = vld [vmem:[%s2 + $0x26] sm:$0x1]
  %v4204 = vld [vmem:[%s2 + $0x27] sm:$0x1]
  %v4205 = vld [vmem:[%s2 + $0x28] sm:$0x1]
  %v4206 = vld [vmem:[%s2 + $0x29] sm:$0x1]
  %v4207 = vld [vmem:[%s2 + $0x2a] sm:$0x1]
  %v4208 = vld [vmem:[%s2 + $0x2b] sm:$0x1]
  %v4209 = vld [vmem:[%s2 + $0x2c] sm:$0x1]
  %v4210 = vld [vmem:[%s2 + $0x2d] sm:$0x1]
  %v4211 = vld [vmem:[%s2 + $0x2e] sm:$0x1]
  %v4212 = vld [vmem:[%s2 + $0x2f] sm:$0x1]
  %v4213 = vld [vmem:[%s2 + $0x30] sm:$0x1]
  %v4214 = vld [vmem:[%s2 + $0x31] sm:$0x1]
  %v4215 = vld [vmem:[%s2 + $0x32] sm:$0x1]
  %v4216 = vld [vmem:[%s2 + $0x33] sm:$0x1]
  %v4217 = vld [vmem:[%s2 + $0x34] sm:$0x1]
  %v4218 = vld [vmem:[%s2 + $0x35] sm:$0x1]
  %v4219 = vld [vmem:[%s2 + $0x36] sm:$0x1]
  %v4220 = vld [vmem:[%s2 + $0x37] sm:$0x1]
  %v4221 = vld [vmem:[%s2 + $0x38] sm:$0x1]
  %v4222 = vld [vmem:[%s2 + $0x39] sm:$0x1]
  %v4223 = vld [vmem:[%s2 + $0x3a] sm:$0x1]
  %v4224 = vld [vmem:[%s2 + $0x3b] sm:$0x1]
  %v4225 = vld [vmem:[%s2 + $0x3c] sm:$0x1]
  %v4226 = vld [vmem:[%s2 + $0x3d] sm:$0x1]
  %v4227 = vld [vmem:[%s2 + $0x3e] sm:$0x1]
  %v4228 = vld [vmem:[%s2 + $0x3f] sm:$0x1]
  %v4229 = vld [vmem:[%s2 + $0x40] sm:$0x1]
  %v4230 = vld [vmem:[%s2 + $0x41] sm:$0x1]
  %v4231 = vld [vmem:[%s2 + $0x42] sm:$0x1]
  %v4232 = vld [vmem:[%s2 + $0x43] sm:$0x1]
  %vm4233 = vcmask 15360
  %v4235 = vsel %vm4233, %v4097, 0
  %vm4237 = vcmask 1040384
  %v4239 = vsel %vm4237, %v4165, 0
  %4241 = vmatprep.subr.bf16.mxu0 0
  %4242 = vmatpush1.bf16.msra.mxu0 0
  %4243 = vmatprep.subr.bf16.mxu0 0
  %4244 = vmatpush1.bf16.msra.mxu0 0
  %4245 = vmatprep.subr.bf16.mxu0 0
  %4246 = vmatpush1.bf16.msra.mxu0 0
  %4247 = vmatprep.subr.bf16.mxu0 0
  %4248 = vmatpush1.bf16.msra.mxu0 0
  %4249 = vmatprep.subr.bf16.mxu0 0
  %4250 = vmatpush1.bf16.msra.mxu0 0
  %4251 = vmatprep.subr.bf16.mxu0 0
  %4252 = vmatpush1.bf16.msra.mxu0 0
  %4253 = vmatprep.subr.bf16.mxu0 0
  %4254 = vmatpush1.bf16.msra.mxu0 0
  %4255 = vmatprep.subr.bf16.mxu0 0
  %4256 = vmatpush1.bf16.msra.mxu0 %v4239
  %4257 = vmatprep.subr.bf16.mxu0 0
  %4258 = vmatpush2.bf16.msra.mxu0 0
  %4259 = vmatprep.subr.bf16.mxu0 0
  %4260 = vmatpush2.bf16.msra.mxu0 0
  %4261 = vmatprep.subr.bf16.mxu0 0
  %4262 = vmatpush2.bf16.msra.mxu0 0
  %4263 = vmatprep.subr.bf16.mxu0 0
  %4264 = vmatpush2.bf16.msra.mxu0 0
  %4265 = vmatprep.subr.bf16.mxu0 0
  %4266 = vmatpush2.bf16.msra.mxu0 0
  %4267 = vmatprep.subr.bf16.mxu0 0
  %4268 = vmatpush2.bf16.msra.mxu0 0
  %4269 = vmatprep.subr.bf16.mxu0 0
  %4270 = vmatpush2.bf16.msra.mxu0 0
  %4271 = vmatprep.subr.bf16.mxu0 0
  %4272 = vmatpush2.bf16.msra.mxu0 0
  %4273 = vmatprep.mubr.bf16.mxu0 0
  %4274 = vmatmul.mubr.bf16.gmra.mxu0 %v4235
  %v4275 = vpop.f32.mrf.mxu0
  %v4276 = vadd.f32 0.0, %v4275
  %v4277 = vpop.f32.mrf.mxu0
  %v4278 = vpop.f32.mrf.mxu0
  %v4279 = vpop.f32.mrf.mxu0
  %4280 = vdwg.mxu0
  %v4282 = vsel %vm4233, %v4098, 0
  %v4285 = vsel %vm4237, %v4166, 0
  %4287 = vmatprep.subr.bf16.mxu0 0
  %4288 = vmatpush1.bf16.msra.mxu0 0
  %4289 = vmatprep.subr.bf16.mxu0 0
  %4290 = vmatpush1.bf16.msra.mxu0 0
  %4291 = vmatprep.subr.bf16.mxu0 0
  %4292 = vmatpush1.bf16.msra.mxu0 0
  %4293 = vmatprep.subr.bf16.mxu0 0
  %4294 = vmatpush1.bf16.msra.mxu0 0
  %4295 = vmatprep.subr.bf16.mxu0 0
  %4296 = vmatpush1.bf16.msra.mxu0 0
  %4297 = vmatprep.subr.bf16.mxu0 0
  %4298 = vmatpush1.bf16.msra.mxu0 0
  %4299 = vmatprep.subr.bf16.mxu0 0
  %4300 = vmatpush1.bf16.msra.mxu0 0
  %4301 = vmatprep.subr.bf16.mxu0 0
  %4302 = vmatpush1.bf16.msra.mxu0 %v4285
  %4303 = vmatprep.subr.bf16.mxu0 0
  %4304 = vmatpush2.bf16.msra.mxu0 0
  %4305 = vmatprep.subr.bf16.mxu0 0
  %4306 = vmatpush2.bf16.msra.mxu0 0
  %4307 = vmatprep.subr.bf16.mxu0 0
  %4308 = vmatpush2.bf16.msra.mxu0 0
  %4309 = vmatprep.subr.bf16.mxu0 0
  %4310 = vmatpush2.bf16.msra.mxu0 0
  %4311 = vmatprep.subr.bf16.mxu0 0
  %4312 = vmatpush2.bf16.msra.mxu0 0
  %4313 = vmatprep.subr.bf16.mxu0 0
  %4314 = vmatpush2.bf16.msra.mxu0 0
  %4315 = vmatprep.subr.bf16.mxu0 0
  %4316 = vmatpush2.bf16.msra.mxu0 0
  %4317 = vmatprep.subr.bf16.mxu0 0
  %4318 = vmatpush2.bf16.msra.mxu0 0
  %4319 = vmatprep.mubr.bf16.mxu0 0
  %4320 = vmatmul.mubr.bf16.gmra.mxu0 %v4282
  %v4321 = vpop.f32.mrf.mxu0
  %v4322 = vadd.f32 0.0, %v4321
  %v4323 = vpop.f32.mrf.mxu0
  %v4324 = vpop.f32.mrf.mxu0
  %v4325 = vpop.f32.mrf.mxu0
  %4326 = vdwg.mxu0
  %v4328 = vsel %vm4233, %v4099, 0
  %v4331 = vsel %vm4237, %v4167, 0
  %4333 = vmatprep.subr.bf16.mxu0 0
  %4334 = vmatpush1.bf16.msra.mxu0 0
  %4335 = vmatprep.subr.bf16.mxu0 0
  %4336 = vmatpush1.bf16.msra.mxu0 0
  %4337 = vmatprep.subr.bf16.mxu0 0
  %4338 = vmatpush1.bf16.msra.mxu0 0
  %4339 = vmatprep.subr.bf16.mxu0 0
  %4340 = vmatpush1.bf16.msra.mxu0 0
  %4341 = vmatprep.subr.bf16.mxu0 0
  %4342 = vmatpush1.bf16.msra.mxu0 0
  %4343 = vmatprep.subr.bf16.mxu0 0
  %4344 = vmatpush1.bf16.msra.mxu0 0
  %4345 = vmatprep.subr.bf16.mxu0 0
  %4346 = vmatpush1.bf16.msra.mxu0 0
  %4347 = vmatprep.subr.bf16.mxu0 0
  %4348 = vmatpush1.bf16.msra.mxu0 %v4331
  %4349 = vmatprep.subr.bf16.mxu0 0
  %4350 = vmatpush2.bf16.msra.mxu0 0
  %4351 = vmatprep.subr.bf16.mxu0 0
  %4352 = vmatpush2.bf16.msra.mxu0 0
  %4353 = vmatprep.subr.bf16.mxu0 0
  %4354 = vmatpush2.bf16.msra.mxu0 0
  %4355 = vmatprep.subr.bf16.mxu0 0
  %4356 = vmatpush2.bf16.msra.mxu0 0
  %4357 = vmatprep.subr.bf16.mxu0 0
  %4358 = vmatpush2.bf16.msra.mxu0 0
  %4359 = vmatprep.subr.bf16.mxu0 0
  %4360 = vmatpush2.bf16.msra.mxu0 0
  %4361 = vmatprep.subr.bf16.mxu0 0
  %4362 = vmatpush2.bf16.msra.mxu0 0
  %4363 = vmatprep.subr.bf16.mxu0 0
  %4364 = vmatpush2.bf16.msra.mxu0 0
  %4365 = vmatprep.mubr.bf16.mxu0 0
  %4366 = vmatmul.mubr.bf16.gmra.mxu0 %v4328
  %v4367 = vpop.f32.mrf.mxu0
  %v4368 = vadd.f32 0.0, %v4367
  %v4369 = vpop.f32.mrf.mxu0
  %v4370 = vpop.f32.mrf.mxu0
  %v4371 = vpop.f32.mrf.mxu0
  %4372 = vdwg.mxu0
  %v4374 = vsel %vm4233, %v4100, 0
  %v4377 = vsel %vm4237, %v4168, 0
  %4379 = vmatprep.subr.bf16.mxu0 0
  %4380 = vmatpush1.bf16.msra.mxu0 0
  %4381 = vmatprep.subr.bf16.mxu0 0
  %4382 = vmatpush1.bf16.msra.mxu0 0
  %4383 = vmatprep.subr.bf16.mxu0 0
  %4384 = vmatpush1.bf16.msra.mxu0 0
  %4385 = vmatprep.subr.bf16.mxu0 0
  %4386 = vmatpush1.bf16.msra.mxu0 0
  %4387 = vmatprep.subr.bf16.mxu0 0
  %4388 = vmatpush1.bf16.msra.mxu0 0
  %4389 = vmatprep.subr.bf16.mxu0 0
  %4390 = vmatpush1.bf16.msra.mxu0 0
  %4391 = vmatprep.subr.bf16.mxu0 0
  %4392 = vmatpush1.bf16.msra.mxu0 0
  %4393 = vmatprep.subr.bf16.mxu0 0
  %4394 = vmatpush1.bf16.msra.mxu0 %v4377
  %4395 = vmatprep.subr.bf16.mxu0 0
  %4396 = vmatpush2.bf16.msra.mxu0 0
  %4397 = vmatprep.subr.bf16.mxu0 0
  %4398 = vmatpush2.bf16.msra.mxu0 0
  %4399 = vmatprep.subr.bf16.mxu0 0
  %4400 = vmatpush2.bf16.msra.mxu0 0
  %4401 = vmatprep.subr.bf16.mxu0 0
  %4402 = vmatpush2.bf16.msra.mxu0 0
  %4403 = vmatprep.subr.bf16.mxu0 0
  %4404 = vmatpush2.bf16.msra.mxu0 0
  %4405 = vmatprep.subr.bf16.mxu0 0
  %4406 = vmatpush2.bf16.msra.mxu0 0
  %4407 = vmatprep.subr.bf16.mxu0 0
  %4408 = vmatpush2.bf16.msra.mxu0 0
  %4409 = vmatprep.subr.bf16.mxu0 0
  %4410 = vmatpush2.bf16.msra.mxu0 0
  %4411 = vmatprep.mubr.bf16.mxu0 0
  %4412 = vmatmul.mubr.bf16.gmra.mxu0 %v4374
  %v4413 = vpop.f32.mrf.mxu0
  %v4414 = vadd.f32 0.0, %v4413
  %v4415 = vpop.f32.mrf.mxu0
  %v4416 = vpop.f32.mrf.mxu0
  %v4417 = vpop.f32.mrf.mxu0
  %4418 = vdwg.mxu0
  %v4420 = vsel %vm4233, %v4101, 0
  %v4423 = vsel %vm4237, %v4169, 0
  %4425 = vmatprep.subr.bf16.mxu0 0
  %4426 = vmatpush1.bf16.msra.mxu0 0
  %4427 = vmatprep.subr.bf16.mxu0 0
  %4428 = vmatpush1.bf16.msra.mxu0 0
  %4429 = vmatprep.subr.bf16.mxu0 0
  %4430 = vmatpush1.bf16.msra.mxu0 0
  %4431 = vmatprep.subr.bf16.mxu0 0
  %4432 = vmatpush1.bf16.msra.mxu0 0
  %4433 = vmatprep.subr.bf16.mxu0 0
  %4434 = vmatpush1.bf16.msra.mxu0 0
  %4435 = vmatprep.subr.bf16.mxu0 0
  %4436 = vmatpush1.bf16.msra.mxu0 0
  %4437 = vmatprep.subr.bf16.mxu0 0
  %4438 = vmatpush1.bf16.msra.mxu0 0
  %4439 = vmatprep.subr.bf16.mxu0 0
  %4440 = vmatpush1.bf16.msra.mxu0 %v4423
  %4441 = vmatprep.subr.bf16.mxu0 0
  %4442 = vmatpush2.bf16.msra.mxu0 0
  %4443 = vmatprep.subr.bf16.mxu0 0
  %4444 = vmatpush2.bf16.msra.mxu0 0
  %4445 = vmatprep.subr.bf16.mxu0 0
  %4446 = vmatpush2.bf16.msra.mxu0 0
  %4447 = vmatprep.subr.bf16.mxu0 0
  %4448 = vmatpush2.bf16.msra.mxu0 0
  %4449 = vmatprep.subr.bf16.mxu0 0
  %4450 = vmatpush2.bf16.msra.mxu0 0
  %4451 = vmatprep.subr.bf16.mxu0 0
  %4452 = vmatpush2.bf16.msra.mxu0 0
  %4453 = vmatprep.subr.bf16.mxu0 0
  %4454 = vmatpush2.bf16.msra.mxu0 0
  %4455 = vmatprep.subr.bf16.mxu0 0
  %4456 = vmatpush2.bf16.msra.mxu0 0
  %4457 = vmatprep.mubr.bf16.mxu0 0
  %4458 = vmatmul.mubr.bf16.gmra.mxu0 %v4420
  %v4459 = vpop.f32.mrf.mxu0
  %v4460 = vadd.f32 0.0, %v4459
  %v4461 = vpop.f32.mrf.mxu0
  %v4462 = vpop.f32.mrf.mxu0
  %v4463 = vpop.f32.mrf.mxu0
  %4464 = vdwg.mxu0
  %v4466 = vsel %vm4233, %v4102, 0
  %v4469 = vsel %vm4237, %v4170, 0
  %4471 = vmatprep.subr.bf16.mxu0 0
  %4472 = vmatpush1.bf16.msra.mxu0 0
  %4473 = vmatprep.subr.bf16.mxu0 0
  %4474 = vmatpush1.bf16.msra.mxu0 0
  %4475 = vmatprep.subr.bf16.mxu0 0
  %4476 = vmatpush1.bf16.msra.mxu0 0
  %4477 = vmatprep.subr.bf16.mxu0 0
  %4478 = vmatpush1.bf16.msra.mxu0 0
  %4479 = vmatprep.subr.bf16.mxu0 0
  %4480 = vmatpush1.bf16.msra.mxu0 0
  %4481 = vmatprep.subr.bf16.mxu0 0
  %4482 = vmatpush1.bf16.msra.mxu0 0
  %4483 = vmatprep.subr.bf16.mxu0 0
  %4484 = vmatpush1.bf16.msra.mxu0 0
  %4485 = vmatprep.subr.bf16.mxu0 0
  %4486 = vmatpush1.bf16.msra.mxu0 %v4469
  %4487 = vmatprep.subr.bf16.mxu0 0
  %4488 = vmatpush2.bf16.msra.mxu0 0
  %4489 = vmatprep.subr.bf16.mxu0 0
  %4490 = vmatpush2.bf16.msra.mxu0 0
  %4491 = vmatprep.subr.bf16.mxu0 0
  %4492 = vmatpush2.bf16.msra.mxu0 0
  %4493 = vmatprep.subr.bf16.mxu0 0
  %4494 = vmatpush2.bf16.msra.mxu0 0
  %4495 = vmatprep.subr.bf16.mxu0 0
  %4496 = vmatpush2.bf16.msra.mxu0 0
  %4497 = vmatprep.subr.bf16.mxu0 0
  %4498 = vmatpush2.bf16.msra.mxu0 0
  %4499 = vmatprep.subr.bf16.mxu0 0
  %4500 = vmatpush2.bf16.msra.mxu0 0
  %4501 = vmatprep.subr.bf16.mxu0 0
  %4502 = vmatpush2.bf16.msra.mxu0 0
  %4503 = vmatprep.mubr.bf16.mxu0 0
  %4504 = vmatmul.mubr.bf16.gmra.mxu0 %v4466
  %v4505 = vpop.f32.mrf.mxu0
  %v4506 = vadd.f32 0.0, %v4505
  %v4507 = vpop.f32.mrf.mxu0
  %v4508 = vpop.f32.mrf.mxu0
  %v4509 = vpop.f32.mrf.mxu0
  %4510 = vdwg.mxu0
  %v4512 = vsel %vm4233, %v4103, 0
  %v4515 = vsel %vm4237, %v4171, 0
  %4517 = vmatprep.subr.bf16.mxu0 0
  %4518 = vmatpush1.bf16.msra.mxu0 0
  %4519 = vmatprep.subr.bf16.mxu0 0
  %4520 = vmatpush1.bf16.msra.mxu0 0
  %4521 = vmatprep.subr.bf16.mxu0 0
  %4522 = vmatpush1.bf16.msra.mxu0 0
  %4523 = vmatprep.subr.bf16.mxu0 0
  %4524 = vmatpush1.bf16.msra.mxu0 0
  %4525 = vmatprep.subr.bf16.mxu0 0
  %4526 = vmatpush1.bf16.msra.mxu0 0
  %4527 = vmatprep.subr.bf16.mxu0 0
  %4528 = vmatpush1.bf16.msra.mxu0 0
  %4529 = vmatprep.subr.bf16.mxu0 0
  %4530 = vmatpush1.bf16.msra.mxu0 0
  %4531 = vmatprep.subr.bf16.mxu0 0
  %4532 = vmatpush1.bf16.msra.mxu0 %v4515
  %4533 = vmatprep.subr.bf16.mxu0 0
  %4534 = vmatpush2.bf16.msra.mxu0 0
  %4535 = vmatprep.subr.bf16.mxu0 0
  %4536 = vmatpush2.bf16.msra.mxu0 0
  %4537 = vmatprep.subr.bf16.mxu0 0
  %4538 = vmatpush2.bf16.msra.mxu0 0
  %4539 = vmatprep.subr.bf16.mxu0 0
  %4540 = vmatpush2.bf16.msra.mxu0 0
  %4541 = vmatprep.subr.bf16.mxu0 0
  %4542 = vmatpush2.bf16.msra.mxu0 0
  %4543 = vmatprep.subr.bf16.mxu0 0
  %4544 = vmatpush2.bf16.msra.mxu0 0
  %4545 = vmatprep.subr.bf16.mxu0 0
  %4546 = vmatpush2.bf16.msra.mxu0 0
  %4547 = vmatprep.subr.bf16.mxu0 0
  %4548 = vmatpush2.bf16.msra.mxu0 0
  %4549 = vmatprep.mubr.bf16.mxu0 0
  %4550 = vmatmul.mubr.bf16.gmra.mxu0 %v4512
  %v4551 = vpop.f32.mrf.mxu0
  %v4552 = vadd.f32 0.0, %v4551
  %v4553 = vpop.f32.mrf.mxu0
  %v4554 = vpop.f32.mrf.mxu0
  %v4555 = vpop.f32.mrf.mxu0
  %4556 = vdwg.mxu0
  %v4558 = vsel %vm4233, %v4104, 0
  %v4561 = vsel %vm4237, %v4172, 0
  %4563 = vmatprep.subr.bf16.mxu0 0
  %4564 = vmatpush1.bf16.msra.mxu0 0
  %4565 = vmatprep.subr.bf16.mxu0 0
  %4566 = vmatpush1.bf16.msra.mxu0 0
  %4567 = vmatprep.subr.bf16.mxu0 0
  %4568 = vmatpush1.bf16.msra.mxu0 0
  %4569 = vmatprep.subr.bf16.mxu0 0
  %4570 = vmatpush1.bf16.msra.mxu0 0
  %4571 = vmatprep.subr.bf16.mxu0 0
  %4572 = vmatpush1.bf16.msra.mxu0 0
  %4573 = vmatprep.subr.bf16.mxu0 0
  %4574 = vmatpush1.bf16.msra.mxu0 0
  %4575 = vmatprep.subr.bf16.mxu0 0
  %4576 = vmatpush1.bf16.msra.mxu0 0
  %4577 = vmatprep.subr.bf16.mxu0 0
  %4578 = vmatpush1.bf16.msra.mxu0 %v4561
  %4579 = vmatprep.subr.bf16.mxu0 0
  %4580 = vmatpush2.bf16.msra.mxu0 0
  %4581 = vmatprep.subr.bf16.mxu0 0
  %4582 = vmatpush2.bf16.msra.mxu0 0
  %4583 = vmatprep.subr.bf16.mxu0 0
  %4584 = vmatpush2.bf16.msra.mxu0 0
  %4585 = vmatprep.subr.bf16.mxu0 0
  %4586 = vmatpush2.bf16.msra.mxu0 0
  %4587 = vmatprep.subr.bf16.mxu0 0
  %4588 = vmatpush2.bf16.msra.mxu0 0
  %4589 = vmatprep.subr.bf16.mxu0 0
  %4590 = vmatpush2.bf16.msra.mxu0 0
  %4591 = vmatprep.subr.bf16.mxu0 0
  %4592 = vmatpush2.bf16.msra.mxu0 0
  %4593 = vmatprep.subr.bf16.mxu0 0
  %4594 = vmatpush2.bf16.msra.mxu0 0
  %4595 = vmatprep.mubr.bf16.mxu0 0
  %4596 = vmatmul.mubr.bf16.gmra.mxu0 %v4558
  %v4597 = vpop.f32.mrf.mxu0
  %v4598 = vadd.f32 0.0, %v4597
  %v4599 = vpop.f32.mrf.mxu0
  %v4600 = vpop.f32.mrf.mxu0
  %v4601 = vpop.f32.mrf.mxu0
  %4602 = vdwg.mxu0
  %v4604 = vsel %vm4233, %v4105, 0
  %v4607 = vsel %vm4237, %v4173, 0
  %4609 = vmatprep.subr.bf16.mxu0 0
  %4610 = vmatpush1.bf16.msra.mxu0 0
  %4611 = vmatprep.subr.bf16.mxu0 0
  %4612 = vmatpush1.bf16.msra.mxu0 0
  %4613 = vmatprep.subr.bf16.mxu0 0
  %4614 = vmatpush1.bf16.msra.mxu0 0
  %4615 = vmatprep.subr.bf16.mxu0 0
  %4616 = vmatpush1.bf16.msra.mxu0 0
  %4617 = vmatprep.subr.bf16.mxu0 0
  %4618 = vmatpush1.bf16.msra.mxu0 0
  %4619 = vmatprep.subr.bf16.mxu0 0
  %4620 = vmatpush1.bf16.msra.mxu0 0
  %4621 = vmatprep.subr.bf16.mxu0 0
  %4622 = vmatpush1.bf16.msra.mxu0 0
  %4623 = vmatprep.subr.bf16.mxu0 0
  %4624 = vmatpush1.bf16.msra.mxu0 %v4607
  %4625 = vmatprep.subr.bf16.mxu0 0
  %4626 = vmatpush2.bf16.msra.mxu0 0
  %4627 = vmatprep.subr.bf16.mxu0 0
  %4628 = vmatpush2.bf16.msra.mxu0 0
  %4629 = vmatprep.subr.bf16.mxu0 0
  %4630 = vmatpush2.bf16.msra.mxu0 0
  %4631 = vmatprep.subr.bf16.mxu0 0
  %4632 = vmatpush2.bf16.msra.mxu0 0
  %4633 = vmatprep.subr.bf16.mxu0 0
  %4634 = vmatpush2.bf16.msra.mxu0 0
  %4635 = vmatprep.subr.bf16.mxu0 0
  %4636 = vmatpush2.bf16.msra.mxu0 0
  %4637 = vmatprep.subr.bf16.mxu0 0
  %4638 = vmatpush2.bf16.msra.mxu0 0
  %4639 = vmatprep.subr.bf16.mxu0 0
  %4640 = vmatpush2.bf16.msra.mxu0 0
  %4641 = vmatprep.mubr.bf16.mxu0 0
  %4642 = vmatmul.mubr.bf16.gmra.mxu0 %v4604
  %v4643 = vpop.f32.mrf.mxu0
  %v4644 = vadd.f32 0.0, %v4643
  %v4645 = vpop.f32.mrf.mxu0
  %v4646 = vpop.f32.mrf.mxu0
  %v4647 = vpop.f32.mrf.mxu0
  %4648 = vdwg.mxu0
  %v4650 = vsel %vm4233, %v4106, 0
  %v4653 = vsel %vm4237, %v4174, 0
  %4655 = vmatprep.subr.bf16.mxu0 0
  %4656 = vmatpush1.bf16.msra.mxu0 0
  %4657 = vmatprep.subr.bf16.mxu0 0
  %4658 = vmatpush1.bf16.msra.mxu0 0
  %4659 = vmatprep.subr.bf16.mxu0 0
  %4660 = vmatpush1.bf16.msra.mxu0 0
  %4661 = vmatprep.subr.bf16.mxu0 0
  %4662 = vmatpush1.bf16.msra.mxu0 0
  %4663 = vmatprep.subr.bf16.mxu0 0
  %4664 = vmatpush1.bf16.msra.mxu0 0
  %4665 = vmatprep.subr.bf16.mxu0 0
  %4666 = vmatpush1.bf16.msra.mxu0 0
  %4667 = vmatprep.subr.bf16.mxu0 0
  %4668 = vmatpush1.bf16.msra.mxu0 0
  %4669 = vmatprep.subr.bf16.mxu0 0
  %4670 = vmatpush1.bf16.msra.mxu0 %v4653
  %4671 = vmatprep.subr.bf16.mxu0 0
  %4672 = vmatpush2.bf16.msra.mxu0 0
  %4673 = vmatprep.subr.bf16.mxu0 0
  %4674 = vmatpush2.bf16.msra.mxu0 0
  %4675 = vmatprep.subr.bf16.mxu0 0
  %4676 = vmatpush2.bf16.msra.mxu0 0
  %4677 = vmatprep.subr.bf16.mxu0 0
  %4678 = vmatpush2.bf16.msra.mxu0 0
  %4679 = vmatprep.subr.bf16.mxu0 0
  %4680 = vmatpush2.bf16.msra.mxu0 0
  %4681 = vmatprep.subr.bf16.mxu0 0
  %4682 = vmatpush2.bf16.msra.mxu0 0
  %4683 = vmatprep.subr.bf16.mxu0 0
  %4684 = vmatpush2.bf16.msra.mxu0 0
  %4685 = vmatprep.subr.bf16.mxu0 0
  %4686 = vmatpush2.bf16.msra.mxu0 0
  %4687 = vmatprep.mubr.bf16.mxu0 0
  %4688 = vmatmul.mubr.bf16.gmra.mxu0 %v4650
  %v4689 = vpop.f32.mrf.mxu0
  %v4690 = vadd.f32 0.0, %v4689
  %v4691 = vpop.f32.mrf.mxu0
  %v4692 = vpop.f32.mrf.mxu0
  %v4693 = vpop.f32.mrf.mxu0
  %4694 = vdwg.mxu0
  %v4696 = vsel %vm4233, %v4107, 0
  %v4699 = vsel %vm4237, %v4175, 0
  %4701 = vmatprep.subr.bf16.mxu0 0
  %4702 = vmatpush1.bf16.msra.mxu0 0
  %4703 = vmatprep.subr.bf16.mxu0 0
  %4704 = vmatpush1.bf16.msra.mxu0 0
  %4705 = vmatprep.subr.bf16.mxu0 0
  %4706 = vmatpush1.bf16.msra.mxu0 0
  %4707 = vmatprep.subr.bf16.mxu0 0
  %4708 = vmatpush1.bf16.msra.mxu0 0
  %4709 = vmatprep.subr.bf16.mxu0 0
  %4710 = vmatpush1.bf16.msra.mxu0 0
  %4711 = vmatprep.subr.bf16.mxu0 0
  %4712 = vmatpush1.bf16.msra.mxu0 0
  %4713 = vmatprep.subr.bf16.mxu0 0
  %4714 = vmatpush1.bf16.msra.mxu0 0
  %4715 = vmatprep.subr.bf16.mxu0 0
  %4716 = vmatpush1.bf16.msra.mxu0 %v4699
  %4717 = vmatprep.subr.bf16.mxu0 0
  %4718 = vmatpush2.bf16.msra.mxu0 0
  %4719 = vmatprep.subr.bf16.mxu0 0
  %4720 = vmatpush2.bf16.msra.mxu0 0
  %4721 = vmatprep.subr.bf16.mxu0 0
  %4722 = vmatpush2.bf16.msra.mxu0 0
  %4723 = vmatprep.subr.bf16.mxu0 0
  %4724 = vmatpush2.bf16.msra.mxu0 0
  %4725 = vmatprep.subr.bf16.mxu0 0
  %4726 = vmatpush2.bf16.msra.mxu0 0
  %4727 = vmatprep.subr.bf16.mxu0 0
  %4728 = vmatpush2.bf16.msra.mxu0 0
  %4729 = vmatprep.subr.bf16.mxu0 0
  %4730 = vmatpush2.bf16.msra.mxu0 0
  %4731 = vmatprep.subr.bf16.mxu0 0
  %4732 = vmatpush2.bf16.msra.mxu0 0
  %4733 = vmatprep.mubr.bf16.mxu0 0
  %4734 = vmatmul.mubr.bf16.gmra.mxu0 %v4696
  %v4735 = vpop.f32.mrf.mxu0
  %v4736 = vadd.f32 0.0, %v4735
  %v4737 = vpop.f32.mrf.mxu0
  %v4738 = vpop.f32.mrf.mxu0
  %v4739 = vpop.f32.mrf.mxu0
  %4740 = vdwg.mxu0
  %v4742 = vsel %vm4233, %v4108, 0
  %v4745 = vsel %vm4237, %v4176, 0
  %4747 = vmatprep.subr.bf16.mxu0 0
  %4748 = vmatpush1.bf16.msra.mxu0 0
  %4749 = vmatprep.subr.bf16.mxu0 0
  %4750 = vmatpush1.bf16.msra.mxu0 0
  %4751 = vmatprep.subr.bf16.mxu0 0
  %4752 = vmatpush1.bf16.msra.mxu0 0
  %4753 = vmatprep.subr.bf16.mxu0 0
  %4754 = vmatpush1.bf16.msra.mxu0 0
  %4755 = vmatprep.subr.bf16.mxu0 0
  %4756 = vmatpush1.bf16.msra.mxu0 0
  %4757 = vmatprep.subr.bf16.mxu0 0
  %4758 = vmatpush1.bf16.msra.mxu0 0
  %4759 = vmatprep.subr.bf16.mxu0 0
  %4760 = vmatpush1.bf16.msra.mxu0 0
  %4761 = vmatprep.subr.bf16.mxu0 0
  %4762 = vmatpush1.bf16.msra.mxu0 %v4745
  %4763 = vmatprep.subr.bf16.mxu0 0
  %4764 = vmatpush2.bf16.msra.mxu0 0
  %4765 = vmatprep.subr.bf16.mxu0 0
  %4766 = vmatpush2.bf16.msra.mxu0 0
  %4767 = vmatprep.subr.bf16.mxu0 0
  %4768 = vmatpush2.bf16.msra.mxu0 0
  %4769 = vmatprep.subr.bf16.mxu0 0
  %4770 = vmatpush2.bf16.msra.mxu0 0
  %4771 = vmatprep.subr.bf16.mxu0 0
  %4772 = vmatpush2.bf16.msra.mxu0 0
  %4773 = vmatprep.subr.bf16.mxu0 0
  %4774 = vmatpush2.bf16.msra.mxu0 0
  %4775 = vmatprep.subr.bf16.mxu0 0
  %4776 = vmatpush2.bf16.msra.mxu0 0
  %4777 = vmatprep.subr.bf16.mxu0 0
  %4778 = vmatpush2.bf16.msra.mxu0 0
  %4779 = vmatprep.mubr.bf16.mxu0 0
  %4780 = vmatmul.mubr.bf16.gmra.mxu0 %v4742
  %v4781 = vpop.f32.mrf.mxu0
  %v4782 = vadd.f32 0.0, %v4781
  %v4783 = vpop.f32.mrf.mxu0
  %v4784 = vpop.f32.mrf.mxu0
  %v4785 = vpop.f32.mrf.mxu0
  %4786 = vdwg.mxu0
  %v4788 = vsel %vm4233, %v4109, 0
  %v4791 = vsel %vm4237, %v4177, 0
  %4793 = vmatprep.subr.bf16.mxu0 0
  %4794 = vmatpush1.bf16.msra.mxu0 0
  %4795 = vmatprep.subr.bf16.mxu0 0
  %4796 = vmatpush1.bf16.msra.mxu0 0
  %4797 = vmatprep.subr.bf16.mxu0 0
  %4798 = vmatpush1.bf16.msra.mxu0 0
  %4799 = vmatprep.subr.bf16.mxu0 0
  %4800 = vmatpush1.bf16.msra.mxu0 0
  %4801 = vmatprep.subr.bf16.mxu0 0
  %4802 = vmatpush1.bf16.msra.mxu0 0
  %4803 = vmatprep.subr.bf16.mxu0 0
  %4804 = vmatpush1.bf16.msra.mxu0 0
  %4805 = vmatprep.subr.bf16.mxu0 0
  %4806 = vmatpush1.bf16.msra.mxu0 0
  %4807 = vmatprep.subr.bf16.mxu0 0
  %4808 = vmatpush1.bf16.msra.mxu0 %v4791
  %4809 = vmatprep.subr.bf16.mxu0 0
  %4810 = vmatpush2.bf16.msra.mxu0 0
  %4811 = vmatprep.subr.bf16.mxu0 0
  %4812 = vmatpush2.bf16.msra.mxu0 0
  %4813 = vmatprep.subr.bf16.mxu0 0
  %4814 = vmatpush2.bf16.msra.mxu0 0
  %4815 = vmatprep.subr.bf16.mxu0 0
  %4816 = vmatpush2.bf16.msra.mxu0 0
  %4817 = vmatprep.subr.bf16.mxu0 0
  %4818 = vmatpush2.bf16.msra.mxu0 0
  %4819 = vmatprep.subr.bf16.mxu0 0
  %4820 = vmatpush2.bf16.msra.mxu0 0
  %4821 = vmatprep.subr.bf16.mxu0 0
  %4822 = vmatpush2.bf16.msra.mxu0 0
  %4823 = vmatprep.subr.bf16.mxu0 0
  %4824 = vmatpush2.bf16.msra.mxu0 0
  %4825 = vmatprep.mubr.bf16.mxu0 0
  %4826 = vmatmul.mubr.bf16.gmra.mxu0 %v4788
  %v4827 = vpop.f32.mrf.mxu0
  %v4828 = vadd.f32 0.0, %v4827
  %v4829 = vpop.f32.mrf.mxu0
  %v4830 = vpop.f32.mrf.mxu0
  %v4831 = vpop.f32.mrf.mxu0
  %4832 = vdwg.mxu0
  %v4834 = vsel %vm4233, %v4110, 0
  %v4837 = vsel %vm4237, %v4178, 0
  %4839 = vmatprep.subr.bf16.mxu0 0
  %4840 = vmatpush1.bf16.msra.mxu0 0
  %4841 = vmatprep.subr.bf16.mxu0 0
  %4842 = vmatpush1.bf16.msra.mxu0 0
  %4843 = vmatprep.subr.bf16.mxu0 0
  %4844 = vmatpush1.bf16.msra.mxu0 0
  %4845 = vmatprep.subr.bf16.mxu0 0
  %4846 = vmatpush1.bf16.msra.mxu0 0
  %4847 = vmatprep.subr.bf16.mxu0 0
  %4848 = vmatpush1.bf16.msra.mxu0 0
  %4849 = vmatprep.subr.bf16.mxu0 0
  %4850 = vmatpush1.bf16.msra.mxu0 0
  %4851 = vmatprep.subr.bf16.mxu0 0
  %4852 = vmatpush1.bf16.msra.mxu0 0
  %4853 = vmatprep.subr.bf16.mxu0 0
  %4854 = vmatpush1.bf16.msra.mxu0 %v4837
  %4855 = vmatprep.subr.bf16.mxu0 0
  %4856 = vmatpush2.bf16.msra.mxu0 0
  %4857 = vmatprep.subr.bf16.mxu0 0
  %4858 = vmatpush2.bf16.msra.mxu0 0
  %4859 = vmatprep.subr.bf16.mxu0 0
  %4860 = vmatpush2.bf16.msra.mxu0 0
  %4861 = vmatprep.subr.bf16.mxu0 0
  %4862 = vmatpush2.bf16.msra.mxu0 0
  %4863 = vmatprep.subr.bf16.mxu0 0
  %4864 = vmatpush2.bf16.msra.mxu0 0
  %4865 = vmatprep.subr.bf16.mxu0 0
  %4866 = vmatpush2.bf16.msra.mxu0 0
  %4867 = vmatprep.subr.bf16.mxu0 0
  %4868 = vmatpush2.bf16.msra.mxu0 0
  %4869 = vmatprep.subr.bf16.mxu0 0
  %4870 = vmatpush2.bf16.msra.mxu0 0
  %4871 = vmatprep.mubr.bf16.mxu0 0
  %4872 = vmatmul.mubr.bf16.gmra.mxu0 %v4834
  %v4873 = vpop.f32.mrf.mxu0
  %v4874 = vadd.f32 0.0, %v4873
  %v4875 = vpop.f32.mrf.mxu0
  %v4876 = vpop.f32.mrf.mxu0
  %v4877 = vpop.f32.mrf.mxu0
  %4878 = vdwg.mxu0
  %v4880 = vsel %vm4233, %v4111, 0
  %v4883 = vsel %vm4237, %v4179, 0
  %4885 = vmatprep.subr.bf16.mxu0 0
  %4886 = vmatpush1.bf16.msra.mxu0 0
  %4887 = vmatprep.subr.bf16.mxu0 0
  %4888 = vmatpush1.bf16.msra.mxu0 0
  %4889 = vmatprep.subr.bf16.mxu0 0
  %4890 = vmatpush1.bf16.msra.mxu0 0
  %4891 = vmatprep.subr.bf16.mxu0 0
  %4892 = vmatpush1.bf16.msra.mxu0 0
  %4893 = vmatprep.subr.bf16.mxu0 0
  %4894 = vmatpush1.bf16.msra.mxu0 0
  %4895 = vmatprep.subr.bf16.mxu0 0
  %4896 = vmatpush1.bf16.msra.mxu0 0
  %4897 = vmatprep.subr.bf16.mxu0 0
  %4898 = vmatpush1.bf16.msra.mxu0 0
  %4899 = vmatprep.subr.bf16.mxu0 0
  %4900 = vmatpush1.bf16.msra.mxu0 %v4883
  %4901 = vmatprep.subr.bf16.mxu0 0
  %4902 = vmatpush2.bf16.msra.mxu0 0
  %4903 = vmatprep.subr.bf16.mxu0 0
  %4904 = vmatpush2.bf16.msra.mxu0 0
  %4905 = vmatprep.subr.bf16.mxu0 0
  %4906 = vmatpush2.bf16.msra.mxu0 0
  %4907 = vmatprep.subr.bf16.mxu0 0
  %4908 = vmatpush2.bf16.msra.mxu0 0
  %4909 = vmatprep.subr.bf16.mxu0 0
  %4910 = vmatpush2.bf16.msra.mxu0 0
  %4911 = vmatprep.subr.bf16.mxu0 0
  %4912 = vmatpush2.bf16.msra.mxu0 0
  %4913 = vmatprep.subr.bf16.mxu0 0
  %4914 = vmatpush2.bf16.msra.mxu0 0
  %4915 = vmatprep.subr.bf16.mxu0 0
  %4916 = vmatpush2.bf16.msra.mxu0 0
  %4917 = vmatprep.mubr.bf16.mxu0 0
  %4918 = vmatmul.mubr.bf16.gmra.mxu0 %v4880
  %v4919 = vpop.f32.mrf.mxu0
  %v4920 = vadd.f32 0.0, %v4919
  %v4921 = vpop.f32.mrf.mxu0
  %v4922 = vpop.f32.mrf.mxu0
  %v4923 = vpop.f32.mrf.mxu0
  %4924 = vdwg.mxu0
  %v4926 = vsel %vm4233, %v4112, 0
  %v4929 = vsel %vm4237, %v4180, 0
  %4931 = vmatprep.subr.bf16.mxu0 0
  %4932 = vmatpush1.bf16.msra.mxu0 0
  %4933 = vmatprep.subr.bf16.mxu0 0
  %4934 = vmatpush1.bf16.msra.mxu0 0
  %4935 = vmatprep.subr.bf16.mxu0 0
  %4936 = vmatpush1.bf16.msra.mxu0 0
  %4937 = vmatprep.subr.bf16.mxu0 0
  %4938 = vmatpush1.bf16.msra.mxu0 0
  %4939 = vmatprep.subr.bf16.mxu0 0
  %4940 = vmatpush1.bf16.msra.mxu0 0
  %4941 = vmatprep.subr.bf16.mxu0 0
  %4942 = vmatpush1.bf16.msra.mxu0 0
  %4943 = vmatprep.subr.bf16.mxu0 0
  %4944 = vmatpush1.bf16.msra.mxu0 0
  %4945 = vmatprep.subr.bf16.mxu0 0
  %4946 = vmatpush1.bf16.msra.mxu0 %v4929
  %4947 = vmatprep.subr.bf16.mxu0 0
  %4948 = vmatpush2.bf16.msra.mxu0 0
  %4949 = vmatprep.subr.bf16.mxu0 0
  %4950 = vmatpush2.bf16.msra.mxu0 0
  %4951 = vmatprep.subr.bf16.mxu0 0
  %4952 = vmatpush2.bf16.msra.mxu0 0
  %4953 = vmatprep.subr.bf16.mxu0 0
  %4954 = vmatpush2.bf16.msra.mxu0 0
  %4955 = vmatprep.subr.bf16.mxu0 0
  %4956 = vmatpush2.bf16.msra.mxu0 0
  %4957 = vmatprep.subr.bf16.mxu0 0
  %4958 = vmatpush2.bf16.msra.mxu0 0
  %4959 = vmatprep.subr.bf16.mxu0 0
  %4960 = vmatpush2.bf16.msra.mxu0 0
  %4961 = vmatprep.subr.bf16.mxu0 0
  %4962 = vmatpush2.bf16.msra.mxu0 0
  %4963 = vmatprep.mubr.bf16.mxu0 0
  %4964 = vmatmul.mubr.bf16.gmra.mxu0 %v4926
  %v4965 = vpop.f32.mrf.mxu0
  %v4966 = vadd.f32 0.0, %v4965
  %v4967 = vpop.f32.mrf.mxu0
  %v4968 = vpop.f32.mrf.mxu0
  %v4969 = vpop.f32.mrf.mxu0
  %4970 = vdwg.mxu0
  %v4972 = vsel %vm4233, %v4113, 0
  %v4975 = vsel %vm4237, %v4181, 0
  %4977 = vmatprep.subr.bf16.mxu0 0
  %4978 = vmatpush1.bf16.msra.mxu0 0
  %4979 = vmatprep.subr.bf16.mxu0 0
  %4980 = vmatpush1.bf16.msra.mxu0 0
  %4981 = vmatprep.subr.bf16.mxu0 0
  %4982 = vmatpush1.bf16.msra.mxu0 0
  %4983 = vmatprep.subr.bf16.mxu0 0
  %4984 = vmatpush1.bf16.msra.mxu0 0
  %4985 = vmatprep.subr.bf16.mxu0 0
  %4986 = vmatpush1.bf16.msra.mxu0 0
  %4987 = vmatprep.subr.bf16.mxu0 0
  %4988 = vmatpush1.bf16.msra.mxu0 0
  %4989 = vmatprep.subr.bf16.mxu0 0
  %4990 = vmatpush1.bf16.msra.mxu0 0
  %4991 = vmatprep.subr.bf16.mxu0 0
  %4992 = vmatpush1.bf16.msra.mxu0 %v4975
  %4993 = vmatprep.subr.bf16.mxu0 0
  %4994 = vmatpush2.bf16.msra.mxu0 0
  %4995 = vmatprep.subr.bf16.mxu0 0
  %4996 = vmatpush2.bf16.msra.mxu0 0
  %4997 = vmatprep.subr.bf16.mxu0 0
  %4998 = vmatpush2.bf16.msra.mxu0 0
  %4999 = vmatprep.subr.bf16.mxu0 0
  %5000 = vmatpush2.bf16.msra.mxu0 0
  %5001 = vmatprep.subr.bf16.mxu0 0
  %5002 = vmatpush2.bf16.msra.mxu0 0
  %5003 = vmatprep.subr.bf16.mxu0 0
  %5004 = vmatpush2.bf16.msra.mxu0 0
  %5005 = vmatprep.subr.bf16.mxu0 0
  %5006 = vmatpush2.bf16.msra.mxu0 0
  %5007 = vmatprep.subr.bf16.mxu0 0
  %5008 = vmatpush2.bf16.msra.mxu0 0
  %5009 = vmatprep.mubr.bf16.mxu0 0
  %5010 = vmatmul.mubr.bf16.gmra.mxu0 %v4972
  %v5011 = vpop.f32.mrf.mxu0
  %v5012 = vadd.f32 0.0, %v5011
  %v5013 = vpop.f32.mrf.mxu0
  %v5014 = vpop.f32.mrf.mxu0
  %v5015 = vpop.f32.mrf.mxu0
  %5016 = vdwg.mxu0
  %v5018 = vsel %vm4233, %v4114, 0
  %v5021 = vsel %vm4237, %v4182, 0
  %5023 = vmatprep.subr.bf16.mxu0 0
  %5024 = vmatpush1.bf16.msra.mxu0 0
  %5025 = vmatprep.subr.bf16.mxu0 0
  %5026 = vmatpush1.bf16.msra.mxu0 0
  %5027 = vmatprep.subr.bf16.mxu0 0
  %5028 = vmatpush1.bf16.msra.mxu0 0
  %5029 = vmatprep.subr.bf16.mxu0 0
  %5030 = vmatpush1.bf16.msra.mxu0 0
  %5031 = vmatprep.subr.bf16.mxu0 0
  %5032 = vmatpush1.bf16.msra.mxu0 0
  %5033 = vmatprep.subr.bf16.mxu0 0
  %5034 = vmatpush1.bf16.msra.mxu0 0
  %5035 = vmatprep.subr.bf16.mxu0 0
  %5036 = vmatpush1.bf16.msra.mxu0 0
  %5037 = vmatprep.subr.bf16.mxu0 0
  %5038 = vmatpush1.bf16.msra.mxu0 %v5021
  %5039 = vmatprep.subr.bf16.mxu0 0
  %5040 = vmatpush2.bf16.msra.mxu0 0
  %5041 = vmatprep.subr.bf16.mxu0 0
  %5042 = vmatpush2.bf16.msra.mxu0 0
  %5043 = vmatprep.subr.bf16.mxu0 0
  %5044 = vmatpush2.bf16.msra.mxu0 0
  %5045 = vmatprep.subr.bf16.mxu0 0
  %5046 = vmatpush2.bf16.msra.mxu0 0
  %5047 = vmatprep.subr.bf16.mxu0 0
  %5048 = vmatpush2.bf16.msra.mxu0 0
  %5049 = vmatprep.subr.bf16.mxu0 0
  %5050 = vmatpush2.bf16.msra.mxu0 0
  %5051 = vmatprep.subr.bf16.mxu0 0
  %5052 = vmatpush2.bf16.msra.mxu0 0
  %5053 = vmatprep.subr.bf16.mxu0 0
  %5054 = vmatpush2.bf16.msra.mxu0 0
  %5055 = vmatprep.mubr.bf16.mxu0 0
  %5056 = vmatmul.mubr.bf16.gmra.mxu0 %v5018
  %v5057 = vpop.f32.mrf.mxu0
  %v5058 = vadd.f32 0.0, %v5057
  %v5059 = vpop.f32.mrf.mxu0
  %v5060 = vpop.f32.mrf.mxu0
  %v5061 = vpop.f32.mrf.mxu0
  %5062 = vdwg.mxu0
  %v5064 = vsel %vm4233, %v4115, 0
  %v5067 = vsel %vm4237, %v4183, 0
  %5069 = vmatprep.subr.bf16.mxu0 0
  %5070 = vmatpush1.bf16.msra.mxu0 0
  %5071 = vmatprep.subr.bf16.mxu0 0
  %5072 = vmatpush1.bf16.msra.mxu0 0
  %5073 = vmatprep.subr.bf16.mxu0 0
  %5074 = vmatpush1.bf16.msra.mxu0 0
  %5075 = vmatprep.subr.bf16.mxu0 0
  %5076 = vmatpush1.bf16.msra.mxu0 0
  %5077 = vmatprep.subr.bf16.mxu0 0
  %5078 = vmatpush1.bf16.msra.mxu0 0
  %5079 = vmatprep.subr.bf16.mxu0 0
  %5080 = vmatpush1.bf16.msra.mxu0 0
  %5081 = vmatprep.subr.bf16.mxu0 0
  %5082 = vmatpush1.bf16.msra.mxu0 0
  %5083 = vmatprep.subr.bf16.mxu0 0
  %5084 = vmatpush1.bf16.msra.mxu0 %v5067
  %5085 = vmatprep.subr.bf16.mxu0 0
  %5086 = vmatpush2.bf16.msra.mxu0 0
  %5087 = vmatprep.subr.bf16.mxu0 0
  %5088 = vmatpush2.bf16.msra.mxu0 0
  %5089 = vmatprep.subr.bf16.mxu0 0
  %5090 = vmatpush2.bf16.msra.mxu0 0
  %5091 = vmatprep.subr.bf16.mxu0 0
  %5092 = vmatpush2.bf16.msra.mxu0 0
  %5093 = vmatprep.subr.bf16.mxu0 0
  %5094 = vmatpush2.bf16.msra.mxu0 0
  %5095 = vmatprep.subr.bf16.mxu0 0
  %5096 = vmatpush2.bf16.msra.mxu0 0
  %5097 = vmatprep.subr.bf16.mxu0 0
  %5098 = vmatpush2.bf16.msra.mxu0 0
  %5099 = vmatprep.subr.bf16.mxu0 0
  %5100 = vmatpush2.bf16.msra.mxu0 0
  %5101 = vmatprep.mubr.bf16.mxu0 0
  %5102 = vmatmul.mubr.bf16.gmra.mxu0 %v5064
  %v5103 = vpop.f32.mrf.mxu0
  %v5104 = vadd.f32 0.0, %v5103
  %v5105 = vpop.f32.mrf.mxu0
  %v5106 = vpop.f32.mrf.mxu0
  %v5107 = vpop.f32.mrf.mxu0
  %5108 = vdwg.mxu0
  %v5110 = vsel %vm4233, %v4116, 0
  %v5113 = vsel %vm4237, %v4184, 0
  %5115 = vmatprep.subr.bf16.mxu0 0
  %5116 = vmatpush1.bf16.msra.mxu0 0
  %5117 = vmatprep.subr.bf16.mxu0 0
  %5118 = vmatpush1.bf16.msra.mxu0 0
  %5119 = vmatprep.subr.bf16.mxu0 0
  %5120 = vmatpush1.bf16.msra.mxu0 0
  %5121 = vmatprep.subr.bf16.mxu0 0
  %5122 = vmatpush1.bf16.msra.mxu0 0
  %5123 = vmatprep.subr.bf16.mxu0 0
  %5124 = vmatpush1.bf16.msra.mxu0 0
  %5125 = vmatprep.subr.bf16.mxu0 0
  %5126 = vmatpush1.bf16.msra.mxu0 0
  %5127 = vmatprep.subr.bf16.mxu0 0
  %5128 = vmatpush1.bf16.msra.mxu0 0
  %5129 = vmatprep.subr.bf16.mxu0 0
  %5130 = vmatpush1.bf16.msra.mxu0 %v5113
  %5131 = vmatprep.subr.bf16.mxu0 0
  %5132 = vmatpush2.bf16.msra.mxu0 0
  %5133 = vmatprep.subr.bf16.mxu0 0
  %5134 = vmatpush2.bf16.msra.mxu0 0
  %5135 = vmatprep.subr.bf16.mxu0 0
  %5136 = vmatpush2.bf16.msra.mxu0 0
  %5137 = vmatprep.subr.bf16.mxu0 0
  %5138 = vmatpush2.bf16.msra.mxu0 0
  %5139 = vmatprep.subr.bf16.mxu0 0
  %5140 = vmatpush2.bf16.msra.mxu0 0
  %5141 = vmatprep.subr.bf16.mxu0 0
  %5142 = vmatpush2.bf16.msra.mxu0 0
  %5143 = vmatprep.subr.bf16.mxu0 0
  %5144 = vmatpush2.bf16.msra.mxu0 0
  %5145 = vmatprep.subr.bf16.mxu0 0
  %5146 = vmatpush2.bf16.msra.mxu0 0
  %5147 = vmatprep.mubr.bf16.mxu0 0
  %5148 = vmatmul.mubr.bf16.gmra.mxu0 %v5110
  %v5149 = vpop.f32.mrf.mxu0
  %v5150 = vadd.f32 0.0, %v5149
  %v5151 = vpop.f32.mrf.mxu0
  %v5152 = vpop.f32.mrf.mxu0
  %v5153 = vpop.f32.mrf.mxu0
  %5154 = vdwg.mxu0
  %v5156 = vsel %vm4233, %v4117, 0
  %v5159 = vsel %vm4237, %v4185, 0
  %5161 = vmatprep.subr.bf16.mxu0 0
  %5162 = vmatpush1.bf16.msra.mxu0 0
  %5163 = vmatprep.subr.bf16.mxu0 0
  %5164 = vmatpush1.bf16.msra.mxu0 0
  %5165 = vmatprep.subr.bf16.mxu0 0
  %5166 = vmatpush1.bf16.msra.mxu0 0
  %5167 = vmatprep.subr.bf16.mxu0 0
  %5168 = vmatpush1.bf16.msra.mxu0 0
  %5169 = vmatprep.subr.bf16.mxu0 0
  %5170 = vmatpush1.bf16.msra.mxu0 0
  %5171 = vmatprep.subr.bf16.mxu0 0
  %5172 = vmatpush1.bf16.msra.mxu0 0
  %5173 = vmatprep.subr.bf16.mxu0 0
  %5174 = vmatpush1.bf16.msra.mxu0 0
  %5175 = vmatprep.subr.bf16.mxu0 0
  %5176 = vmatpush1.bf16.msra.mxu0 %v5159
  %5177 = vmatprep.subr.bf16.mxu0 0
  %5178 = vmatpush2.bf16.msra.mxu0 0
  %5179 = vmatprep.subr.bf16.mxu0 0
  %5180 = vmatpush2.bf16.msra.mxu0 0
  %5181 = vmatprep.subr.bf16.mxu0 0
  %5182 = vmatpush2.bf16.msra.mxu0 0
  %5183 = vmatprep.subr.bf16.mxu0 0
  %5184 = vmatpush2.bf16.msra.mxu0 0
  %5185 = vmatprep.subr.bf16.mxu0 0
  %5186 = vmatpush2.bf16.msra.mxu0 0
  %5187 = vmatprep.subr.bf16.mxu0 0
  %5188 = vmatpush2.bf16.msra.mxu0 0
  %5189 = vmatprep.subr.bf16.mxu0 0
  %5190 = vmatpush2.bf16.msra.mxu0 0
  %5191 = vmatprep.subr.bf16.mxu0 0
  %5192 = vmatpush2.bf16.msra.mxu0 0
  %5193 = vmatprep.mubr.bf16.mxu0 0
  %5194 = vmatmul.mubr.bf16.gmra.mxu0 %v5156
  %v5195 = vpop.f32.mrf.mxu0
  %v5196 = vadd.f32 0.0, %v5195
  %v5197 = vpop.f32.mrf.mxu0
  %v5198 = vpop.f32.mrf.mxu0
  %v5199 = vpop.f32.mrf.mxu0
  %5200 = vdwg.mxu0
  %v5202 = vsel %vm4233, %v4118, 0
  %v5205 = vsel %vm4237, %v4186, 0
  %5207 = vmatprep.subr.bf16.mxu0 0
  %5208 = vmatpush1.bf16.msra.mxu0 0
  %5209 = vmatprep.subr.bf16.mxu0 0
  %5210 = vmatpush1.bf16.msra.mxu0 0
  %5211 = vmatprep.subr.bf16.mxu0 0
  %5212 = vmatpush1.bf16.msra.mxu0 0
  %5213 = vmatprep.subr.bf16.mxu0 0
  %5214 = vmatpush1.bf16.msra.mxu0 0
  %5215 = vmatprep.subr.bf16.mxu0 0
  %5216 = vmatpush1.bf16.msra.mxu0 0
  %5217 = vmatprep.subr.bf16.mxu0 0
  %5218 = vmatpush1.bf16.msra.mxu0 0
  %5219 = vmatprep.subr.bf16.mxu0 0
  %5220 = vmatpush1.bf16.msra.mxu0 0
  %5221 = vmatprep.subr.bf16.mxu0 0
  %5222 = vmatpush1.bf16.msra.mxu0 %v5205
  %5223 = vmatprep.subr.bf16.mxu0 0
  %5224 = vmatpush2.bf16.msra.mxu0 0
  %5225 = vmatprep.subr.bf16.mxu0 0
  %5226 = vmatpush2.bf16.msra.mxu0 0
  %5227 = vmatprep.subr.bf16.mxu0 0
  %5228 = vmatpush2.bf16.msra.mxu0 0
  %5229 = vmatprep.subr.bf16.mxu0 0
  %5230 = vmatpush2.bf16.msra.mxu0 0
  %5231 = vmatprep.subr.bf16.mxu0 0
  %5232 = vmatpush2.bf16.msra.mxu0 0
  %5233 = vmatprep.subr.bf16.mxu0 0
  %5234 = vmatpush2.bf16.msra.mxu0 0
  %5235 = vmatprep.subr.bf16.mxu0 0
  %5236 = vmatpush2.bf16.msra.mxu0 0
  %5237 = vmatprep.subr.bf16.mxu0 0
  %5238 = vmatpush2.bf16.msra.mxu0 0
  %5239 = vmatprep.mubr.bf16.mxu0 0
  %5240 = vmatmul.mubr.bf16.gmra.mxu0 %v5202
  %v5241 = vpop.f32.mrf.mxu0
  %v5242 = vadd.f32 0.0, %v5241
  %v5243 = vpop.f32.mrf.mxu0
  %v5244 = vpop.f32.mrf.mxu0
  %v5245 = vpop.f32.mrf.mxu0
  %5246 = vdwg.mxu0
  %v5248 = vsel %vm4233, %v4119, 0
  %v5251 = vsel %vm4237, %v4187, 0
  %5253 = vmatprep.subr.bf16.mxu0 0
  %5254 = vmatpush1.bf16.msra.mxu0 0
  %5255 = vmatprep.subr.bf16.mxu0 0
  %5256 = vmatpush1.bf16.msra.mxu0 0
  %5257 = vmatprep.subr.bf16.mxu0 0
  %5258 = vmatpush1.bf16.msra.mxu0 0
  %5259 = vmatprep.subr.bf16.mxu0 0
  %5260 = vmatpush1.bf16.msra.mxu0 0
  %5261 = vmatprep.subr.bf16.mxu0 0
  %5262 = vmatpush1.bf16.msra.mxu0 0
  %5263 = vmatprep.subr.bf16.mxu0 0
  %5264 = vmatpush1.bf16.msra.mxu0 0
  %5265 = vmatprep.subr.bf16.mxu0 0
  %5266 = vmatpush1.bf16.msra.mxu0 0
  %5267 = vmatprep.subr.bf16.mxu0 0
  %5268 = vmatpush1.bf16.msra.mxu0 %v5251
  %5269 = vmatprep.subr.bf16.mxu0 0
  %5270 = vmatpush2.bf16.msra.mxu0 0
  %5271 = vmatprep.subr.bf16.mxu0 0
  %5272 = vmatpush2.bf16.msra.mxu0 0
  %5273 = vmatprep.subr.bf16.mxu0 0
  %5274 = vmatpush2.bf16.msra.mxu0 0
  %5275 = vmatprep.subr.bf16.mxu0 0
  %5276 = vmatpush2.bf16.msra.mxu0 0
  %5277 = vmatprep.subr.bf16.mxu0 0
  %5278 = vmatpush2.bf16.msra.mxu0 0
  %5279 = vmatprep.subr.bf16.mxu0 0
  %5280 = vmatpush2.bf16.msra.mxu0 0
  %5281 = vmatprep.subr.bf16.mxu0 0
  %5282 = vmatpush2.bf16.msra.mxu0 0
  %5283 = vmatprep.subr.bf16.mxu0 0
  %5284 = vmatpush2.bf16.msra.mxu0 0
  %5285 = vmatprep.mubr.bf16.mxu0 0
  %5286 = vmatmul.mubr.bf16.gmra.mxu0 %v5248
  %v5287 = vpop.f32.mrf.mxu0
  %v5288 = vadd.f32 0.0, %v5287
  %v5289 = vpop.f32.mrf.mxu0
  %v5290 = vpop.f32.mrf.mxu0
  %v5291 = vpop.f32.mrf.mxu0
  %5292 = vdwg.mxu0
  %v5294 = vsel %vm4233, %v4120, 0
  %v5297 = vsel %vm4237, %v4188, 0
  %5299 = vmatprep.subr.bf16.mxu0 0
  %5300 = vmatpush1.bf16.msra.mxu0 0
  %5301 = vmatprep.subr.bf16.mxu0 0
  %5302 = vmatpush1.bf16.msra.mxu0 0
  %5303 = vmatprep.subr.bf16.mxu0 0
  %5304 = vmatpush1.bf16.msra.mxu0 0
  %5305 = vmatprep.subr.bf16.mxu0 0
  %5306 = vmatpush1.bf16.msra.mxu0 0
  %5307 = vmatprep.subr.bf16.mxu0 0
  %5308 = vmatpush1.bf16.msra.mxu0 0
  %5309 = vmatprep.subr.bf16.mxu0 0
  %5310 = vmatpush1.bf16.msra.mxu0 0
  %5311 = vmatprep.subr.bf16.mxu0 0
  %5312 = vmatpush1.bf16.msra.mxu0 0
  %5313 = vmatprep.subr.bf16.mxu0 0
  %5314 = vmatpush1.bf16.msra.mxu0 %v5297
  %5315 = vmatprep.subr.bf16.mxu0 0
  %5316 = vmatpush2.bf16.msra.mxu0 0
  %5317 = vmatprep.subr.bf16.mxu0 0
  %5318 = vmatpush2.bf16.msra.mxu0 0
  %5319 = vmatprep.subr.bf16.mxu0 0
  %5320 = vmatpush2.bf16.msra.mxu0 0
  %5321 = vmatprep.subr.bf16.mxu0 0
  %5322 = vmatpush2.bf16.msra.mxu0 0
  %5323 = vmatprep.subr.bf16.mxu0 0
  %5324 = vmatpush2.bf16.msra.mxu0 0
  %5325 = vmatprep.subr.bf16.mxu0 0
  %5326 = vmatpush2.bf16.msra.mxu0 0
  %5327 = vmatprep.subr.bf16.mxu0 0
  %5328 = vmatpush2.bf16.msra.mxu0 0
  %5329 = vmatprep.subr.bf16.mxu0 0
  %5330 = vmatpush2.bf16.msra.mxu0 0
  %5331 = vmatprep.mubr.bf16.mxu0 0
  %5332 = vmatmul.mubr.bf16.gmra.mxu0 %v5294
  %v5333 = vpop.f32.mrf.mxu0
  %v5334 = vadd.f32 0.0, %v5333
  %v5335 = vpop.f32.mrf.mxu0
  %v5336 = vpop.f32.mrf.mxu0
  %v5337 = vpop.f32.mrf.mxu0
  %5338 = vdwg.mxu0
  %v5340 = vsel %vm4233, %v4121, 0
  %v5343 = vsel %vm4237, %v4189, 0
  %5345 = vmatprep.subr.bf16.mxu0 0
  %5346 = vmatpush1.bf16.msra.mxu0 0
  %5347 = vmatprep.subr.bf16.mxu0 0
  %5348 = vmatpush1.bf16.msra.mxu0 0
  %5349 = vmatprep.subr.bf16.mxu0 0
  %5350 = vmatpush1.bf16.msra.mxu0 0
  %5351 = vmatprep.subr.bf16.mxu0 0
  %5352 = vmatpush1.bf16.msra.mxu0 0
  %5353 = vmatprep.subr.bf16.mxu0 0
  %5354 = vmatpush1.bf16.msra.mxu0 0
  %5355 = vmatprep.subr.bf16.mxu0 0
  %5356 = vmatpush1.bf16.msra.mxu0 0
  %5357 = vmatprep.subr.bf16.mxu0 0
  %5358 = vmatpush1.bf16.msra.mxu0 0
  %5359 = vmatprep.subr.bf16.mxu0 0
  %5360 = vmatpush1.bf16.msra.mxu0 %v5343
  %5361 = vmatprep.subr.bf16.mxu0 0
  %5362 = vmatpush2.bf16.msra.mxu0 0
  %5363 = vmatprep.subr.bf16.mxu0 0
  %5364 = vmatpush2.bf16.msra.mxu0 0
  %5365 = vmatprep.subr.bf16.mxu0 0
  %5366 = vmatpush2.bf16.msra.mxu0 0
  %5367 = vmatprep.subr.bf16.mxu0 0
  %5368 = vmatpush2.bf16.msra.mxu0 0
  %5369 = vmatprep.subr.bf16.mxu0 0
  %5370 = vmatpush2.bf16.msra.mxu0 0
  %5371 = vmatprep.subr.bf16.mxu0 0
  %5372 = vmatpush2.bf16.msra.mxu0 0
  %5373 = vmatprep.subr.bf16.mxu0 0
  %5374 = vmatpush2.bf16.msra.mxu0 0
  %5375 = vmatprep.subr.bf16.mxu0 0
  %5376 = vmatpush2.bf16.msra.mxu0 0
  %5377 = vmatprep.mubr.bf16.mxu0 0
  %5378 = vmatmul.mubr.bf16.gmra.mxu0 %v5340
  %v5379 = vpop.f32.mrf.mxu0
  %v5380 = vadd.f32 0.0, %v5379
  %v5381 = vpop.f32.mrf.mxu0
  %v5382 = vpop.f32.mrf.mxu0
  %v5383 = vpop.f32.mrf.mxu0
  %5384 = vdwg.mxu0
  %v5386 = vsel %vm4233, %v4122, 0
  %v5389 = vsel %vm4237, %v4190, 0
  %5391 = vmatprep.subr.bf16.mxu0 0
  %5392 = vmatpush1.bf16.msra.mxu0 0
  %5393 = vmatprep.subr.bf16.mxu0 0
  %5394 = vmatpush1.bf16.msra.mxu0 0
  %5395 = vmatprep.subr.bf16.mxu0 0
  %5396 = vmatpush1.bf16.msra.mxu0 0
  %5397 = vmatprep.subr.bf16.mxu0 0
  %5398 = vmatpush1.bf16.msra.mxu0 0
  %5399 = vmatprep.subr.bf16.mxu0 0
  %5400 = vmatpush1.bf16.msra.mxu0 0
  %5401 = vmatprep.subr.bf16.mxu0 0
  %5402 = vmatpush1.bf16.msra.mxu0 0
  %5403 = vmatprep.subr.bf16.mxu0 0
  %5404 = vmatpush1.bf16.msra.mxu0 0
  %5405 = vmatprep.subr.bf16.mxu0 0
  %5406 = vmatpush1.bf16.msra.mxu0 %v5389
  %5407 = vmatprep.subr.bf16.mxu0 0
  %5408 = vmatpush2.bf16.msra.mxu0 0
  %5409 = vmatprep.subr.bf16.mxu0 0
  %5410 = vmatpush2.bf16.msra.mxu0 0
  %5411 = vmatprep.subr.bf16.mxu0 0
  %5412 = vmatpush2.bf16.msra.mxu0 0
  %5413 = vmatprep.subr.bf16.mxu0 0
  %5414 = vmatpush2.bf16.msra.mxu0 0
  %5415 = vmatprep.subr.bf16.mxu0 0
  %5416 = vmatpush2.bf16.msra.mxu0 0
  %5417 = vmatprep.subr.bf16.mxu0 0
  %5418 = vmatpush2.bf16.msra.mxu0 0
  %5419 = vmatprep.subr.bf16.mxu0 0
  %5420 = vmatpush2.bf16.msra.mxu0 0
  %5421 = vmatprep.subr.bf16.mxu0 0
  %5422 = vmatpush2.bf16.msra.mxu0 0
  %5423 = vmatprep.mubr.bf16.mxu0 0
  %5424 = vmatmul.mubr.bf16.gmra.mxu0 %v5386
  %v5425 = vpop.f32.mrf.mxu0
  %v5426 = vadd.f32 0.0, %v5425
  %v5427 = vpop.f32.mrf.mxu0
  %v5428 = vpop.f32.mrf.mxu0
  %v5429 = vpop.f32.mrf.mxu0
  %5430 = vdwg.mxu0
  %v5432 = vsel %vm4233, %v4123, 0
  %v5435 = vsel %vm4237, %v4191, 0
  %5437 = vmatprep.subr.bf16.mxu0 0
  %5438 = vmatpush1.bf16.msra.mxu0 0
  %5439 = vmatprep.subr.bf16.mxu0 0
  %5440 = vmatpush1.bf16.msra.mxu0 0
  %5441 = vmatprep.subr.bf16.mxu0 0
  %5442 = vmatpush1.bf16.msra.mxu0 0
  %5443 = vmatprep.subr.bf16.mxu0 0
  %5444 = vmatpush1.bf16.msra.mxu0 0
  %5445 = vmatprep.subr.bf16.mxu0 0
  %5446 = vmatpush1.bf16.msra.mxu0 0
  %5447 = vmatprep.subr.bf16.mxu0 0
  %5448 = vmatpush1.bf16.msra.mxu0 0
  %5449 = vmatprep.subr.bf16.mxu0 0
  %5450 = vmatpush1.bf16.msra.mxu0 0
  %5451 = vmatprep.subr.bf16.mxu0 0
  %5452 = vmatpush1.bf16.msra.mxu0 %v5435
  %5453 = vmatprep.subr.bf16.mxu0 0
  %5454 = vmatpush2.bf16.msra.mxu0 0
  %5455 = vmatprep.subr.bf16.mxu0 0
  %5456 = vmatpush2.bf16.msra.mxu0 0
  %5457 = vmatprep.subr.bf16.mxu0 0
  %5458 = vmatpush2.bf16.msra.mxu0 0
  %5459 = vmatprep.subr.bf16.mxu0 0
  %5460 = vmatpush2.bf16.msra.mxu0 0
  %5461 = vmatprep.subr.bf16.mxu0 0
  %5462 = vmatpush2.bf16.msra.mxu0 0
  %5463 = vmatprep.subr.bf16.mxu0 0
  %5464 = vmatpush2.bf16.msra.mxu0 0
  %5465 = vmatprep.subr.bf16.mxu0 0
  %5466 = vmatpush2.bf16.msra.mxu0 0
  %5467 = vmatprep.subr.bf16.mxu0 0
  %5468 = vmatpush2.bf16.msra.mxu0 0
  %5469 = vmatprep.mubr.bf16.mxu0 0
  %5470 = vmatmul.mubr.bf16.gmra.mxu0 %v5432
  %v5471 = vpop.f32.mrf.mxu0
  %v5472 = vadd.f32 0.0, %v5471
  %v5473 = vpop.f32.mrf.mxu0
  %v5474 = vpop.f32.mrf.mxu0
  %v5475 = vpop.f32.mrf.mxu0
  %5476 = vdwg.mxu0
  %v5478 = vsel %vm4233, %v4124, 0
  %v5481 = vsel %vm4237, %v4192, 0
  %5483 = vmatprep.subr.bf16.mxu0 0
  %5484 = vmatpush1.bf16.msra.mxu0 0
  %5485 = vmatprep.subr.bf16.mxu0 0
  %5486 = vmatpush1.bf16.msra.mxu0 0
  %5487 = vmatprep.subr.bf16.mxu0 0
  %5488 = vmatpush1.bf16.msra.mxu0 0
  %5489 = vmatprep.subr.bf16.mxu0 0
  %5490 = vmatpush1.bf16.msra.mxu0 0
  %5491 = vmatprep.subr.bf16.mxu0 0
  %5492 = vmatpush1.bf16.msra.mxu0 0
  %5493 = vmatprep.subr.bf16.mxu0 0
  %5494 = vmatpush1.bf16.msra.mxu0 0
  %5495 = vmatprep.subr.bf16.mxu0 0
  %5496 = vmatpush1.bf16.msra.mxu0 0
  %5497 = vmatprep.subr.bf16.mxu0 0
  %5498 = vmatpush1.bf16.msra.mxu0 %v5481
  %5499 = vmatprep.subr.bf16.mxu0 0
  %5500 = vmatpush2.bf16.msra.mxu0 0
  %5501 = vmatprep.subr.bf16.mxu0 0
  %5502 = vmatpush2.bf16.msra.mxu0 0
  %5503 = vmatprep.subr.bf16.mxu0 0
  %5504 = vmatpush2.bf16.msra.mxu0 0
  %5505 = vmatprep.subr.bf16.mxu0 0
  %5506 = vmatpush2.bf16.msra.mxu0 0
  %5507 = vmatprep.subr.bf16.mxu0 0
  %5508 = vmatpush2.bf16.msra.mxu0 0
  %5509 = vmatprep.subr.bf16.mxu0 0
  %5510 = vmatpush2.bf16.msra.mxu0 0
  %5511 = vmatprep.subr.bf16.mxu0 0
  %5512 = vmatpush2.bf16.msra.mxu0 0
  %5513 = vmatprep.subr.bf16.mxu0 0
  %5514 = vmatpush2.bf16.msra.mxu0 0
  %5515 = vmatprep.mubr.bf16.mxu0 0
  %5516 = vmatmul.mubr.bf16.gmra.mxu0 %v5478
  %v5517 = vpop.f32.mrf.mxu0
  %v5518 = vadd.f32 0.0, %v5517
  %v5519 = vpop.f32.mrf.mxu0
  %v5520 = vpop.f32.mrf.mxu0
  %v5521 = vpop.f32.mrf.mxu0
  %5522 = vdwg.mxu0
  %v5524 = vsel %vm4233, %v4125, 0
  %v5527 = vsel %vm4237, %v4193, 0
  %5529 = vmatprep.subr.bf16.mxu0 0
  %5530 = vmatpush1.bf16.msra.mxu0 0
  %5531 = vmatprep.subr.bf16.mxu0 0
  %5532 = vmatpush1.bf16.msra.mxu0 0
  %5533 = vmatprep.subr.bf16.mxu0 0
  %5534 = vmatpush1.bf16.msra.mxu0 0
  %5535 = vmatprep.subr.bf16.mxu0 0
  %5536 = vmatpush1.bf16.msra.mxu0 0
  %5537 = vmatprep.subr.bf16.mxu0 0
  %5538 = vmatpush1.bf16.msra.mxu0 0
  %5539 = vmatprep.subr.bf16.mxu0 0
  %5540 = vmatpush1.bf16.msra.mxu0 0
  %5541 = vmatprep.subr.bf16.mxu0 0
  %5542 = vmatpush1.bf16.msra.mxu0 0
  %5543 = vmatprep.subr.bf16.mxu0 0
  %5544 = vmatpush1.bf16.msra.mxu0 %v5527
  %5545 = vmatprep.subr.bf16.mxu0 0
  %5546 = vmatpush2.bf16.msra.mxu0 0
  %5547 = vmatprep.subr.bf16.mxu0 0
  %5548 = vmatpush2.bf16.msra.mxu0 0
  %5549 = vmatprep.subr.bf16.mxu0 0
  %5550 = vmatpush2.bf16.msra.mxu0 0
  %5551 = vmatprep.subr.bf16.mxu0 0
  %5552 = vmatpush2.bf16.msra.mxu0 0
  %5553 = vmatprep.subr.bf16.mxu0 0
  %5554 = vmatpush2.bf16.msra.mxu0 0
  %5555 = vmatprep.subr.bf16.mxu0 0
  %5556 = vmatpush2.bf16.msra.mxu0 0
  %5557 = vmatprep.subr.bf16.mxu0 0
  %5558 = vmatpush2.bf16.msra.mxu0 0
  %5559 = vmatprep.subr.bf16.mxu0 0
  %5560 = vmatpush2.bf16.msra.mxu0 0
  %5561 = vmatprep.mubr.bf16.mxu0 0
  %5562 = vmatmul.mubr.bf16.gmra.mxu0 %v5524
  %v5563 = vpop.f32.mrf.mxu0
  %v5564 = vadd.f32 0.0, %v5563
  %v5565 = vpop.f32.mrf.mxu0
  %v5566 = vpop.f32.mrf.mxu0
  %v5567 = vpop.f32.mrf.mxu0
  %5568 = vdwg.mxu0
  %v5570 = vsel %vm4233, %v4126, 0
  %v5573 = vsel %vm4237, %v4194, 0
  %5575 = vmatprep.subr.bf16.mxu0 0
  %5576 = vmatpush1.bf16.msra.mxu0 0
  %5577 = vmatprep.subr.bf16.mxu0 0
  %5578 = vmatpush1.bf16.msra.mxu0 0
  %5579 = vmatprep.subr.bf16.mxu0 0
  %5580 = vmatpush1.bf16.msra.mxu0 0
  %5581 = vmatprep.subr.bf16.mxu0 0
  %5582 = vmatpush1.bf16.msra.mxu0 0
  %5583 = vmatprep.subr.bf16.mxu0 0
  %5584 = vmatpush1.bf16.msra.mxu0 0
  %5585 = vmatprep.subr.bf16.mxu0 0
  %5586 = vmatpush1.bf16.msra.mxu0 0
  %5587 = vmatprep.subr.bf16.mxu0 0
  %5588 = vmatpush1.bf16.msra.mxu0 0
  %5589 = vmatprep.subr.bf16.mxu0 0
  %5590 = vmatpush1.bf16.msra.mxu0 %v5573
  %5591 = vmatprep.subr.bf16.mxu0 0
  %5592 = vmatpush2.bf16.msra.mxu0 0
  %5593 = vmatprep.subr.bf16.mxu0 0
  %5594 = vmatpush2.bf16.msra.mxu0 0
  %5595 = vmatprep.subr.bf16.mxu0 0
  %5596 = vmatpush2.bf16.msra.mxu0 0
  %5597 = vmatprep.subr.bf16.mxu0 0
  %5598 = vmatpush2.bf16.msra.mxu0 0
  %5599 = vmatprep.subr.bf16.mxu0 0
  %5600 = vmatpush2.bf16.msra.mxu0 0
  %5601 = vmatprep.subr.bf16.mxu0 0
  %5602 = vmatpush2.bf16.msra.mxu0 0
  %5603 = vmatprep.subr.bf16.mxu0 0
  %5604 = vmatpush2.bf16.msra.mxu0 0
  %5605 = vmatprep.subr.bf16.mxu0 0
  %5606 = vmatpush2.bf16.msra.mxu0 0
  %5607 = vmatprep.mubr.bf16.mxu0 0
  %5608 = vmatmul.mubr.bf16.gmra.mxu0 %v5570
  %v5609 = vpop.f32.mrf.mxu0
  %v5610 = vadd.f32 0.0, %v5609
  %v5611 = vpop.f32.mrf.mxu0
  %v5612 = vpop.f32.mrf.mxu0
  %v5613 = vpop.f32.mrf.mxu0
  %5614 = vdwg.mxu0
  %v5616 = vsel %vm4233, %v4127, 0
  %v5619 = vsel %vm4237, %v4195, 0
  %5621 = vmatprep.subr.bf16.mxu0 0
  %5622 = vmatpush1.bf16.msra.mxu0 0
  %5623 = vmatprep.subr.bf16.mxu0 0
  %5624 = vmatpush1.bf16.msra.mxu0 0
  %5625 = vmatprep.subr.bf16.mxu0 0
  %5626 = vmatpush1.bf16.msra.mxu0 0
  %5627 = vmatprep.subr.bf16.mxu0 0
  %5628 = vmatpush1.bf16.msra.mxu0 0
  %5629 = vmatprep.subr.bf16.mxu0 0
  %5630 = vmatpush1.bf16.msra.mxu0 0
  %5631 = vmatprep.subr.bf16.mxu0 0
  %5632 = vmatpush1.bf16.msra.mxu0 0
  %5633 = vmatprep.subr.bf16.mxu0 0
  %5634 = vmatpush1.bf16.msra.mxu0 0
  %5635 = vmatprep.subr.bf16.mxu0 0
  %5636 = vmatpush1.bf16.msra.mxu0 %v5619
  %5637 = vmatprep.subr.bf16.mxu0 0
  %5638 = vmatpush2.bf16.msra.mxu0 0
  %5639 = vmatprep.subr.bf16.mxu0 0
  %5640 = vmatpush2.bf16.msra.mxu0 0
  %5641 = vmatprep.subr.bf16.mxu0 0
  %5642 = vmatpush2.bf16.msra.mxu0 0
  %5643 = vmatprep.subr.bf16.mxu0 0
  %5644 = vmatpush2.bf16.msra.mxu0 0
  %5645 = vmatprep.subr.bf16.mxu0 0
  %5646 = vmatpush2.bf16.msra.mxu0 0
  %5647 = vmatprep.subr.bf16.mxu0 0
  %5648 = vmatpush2.bf16.msra.mxu0 0
  %5649 = vmatprep.subr.bf16.mxu0 0
  %5650 = vmatpush2.bf16.msra.mxu0 0
  %5651 = vmatprep.subr.bf16.mxu0 0
  %5652 = vmatpush2.bf16.msra.mxu0 0
  %5653 = vmatprep.mubr.bf16.mxu0 0
  %5654 = vmatmul.mubr.bf16.gmra.mxu0 %v5616
  %v5655 = vpop.f32.mrf.mxu0
  %v5656 = vadd.f32 0.0, %v5655
  %v5657 = vpop.f32.mrf.mxu0
  %v5658 = vpop.f32.mrf.mxu0
  %v5659 = vpop.f32.mrf.mxu0
  %5660 = vdwg.mxu0
  %v5662 = vsel %vm4233, %v4128, 0
  %v5665 = vsel %vm4237, %v4196, 0
  %5667 = vmatprep.subr.bf16.mxu0 0
  %5668 = vmatpush1.bf16.msra.mxu0 0
  %5669 = vmatprep.subr.bf16.mxu0 0
  %5670 = vmatpush1.bf16.msra.mxu0 0
  %5671 = vmatprep.subr.bf16.mxu0 0
  %5672 = vmatpush1.bf16.msra.mxu0 0
  %5673 = vmatprep.subr.bf16.mxu0 0
  %5674 = vmatpush1.bf16.msra.mxu0 0
  %5675 = vmatprep.subr.bf16.mxu0 0
  %5676 = vmatpush1.bf16.msra.mxu0 0
  %5677 = vmatprep.subr.bf16.mxu0 0
  %5678 = vmatpush1.bf16.msra.mxu0 0
  %5679 = vmatprep.subr.bf16.mxu0 0
  %5680 = vmatpush1.bf16.msra.mxu0 0
  %5681 = vmatprep.subr.bf16.mxu0 0
  %5682 = vmatpush1.bf16.msra.mxu0 %v5665
  %5683 = vmatprep.subr.bf16.mxu0 0
  %5684 = vmatpush2.bf16.msra.mxu0 0
  %5685 = vmatprep.subr.bf16.mxu0 0
  %5686 = vmatpush2.bf16.msra.mxu0 0
  %5687 = vmatprep.subr.bf16.mxu0 0
  %5688 = vmatpush2.bf16.msra.mxu0 0
  %5689 = vmatprep.subr.bf16.mxu0 0
  %5690 = vmatpush2.bf16.msra.mxu0 0
  %5691 = vmatprep.subr.bf16.mxu0 0
  %5692 = vmatpush2.bf16.msra.mxu0 0
  %5693 = vmatprep.subr.bf16.mxu0 0
  %5694 = vmatpush2.bf16.msra.mxu0 0
  %5695 = vmatprep.subr.bf16.mxu0 0
  %5696 = vmatpush2.bf16.msra.mxu0 0
  %5697 = vmatprep.subr.bf16.mxu0 0
  %5698 = vmatpush2.bf16.msra.mxu0 0
  %5699 = vmatprep.mubr.bf16.mxu0 0
  %5700 = vmatmul.mubr.bf16.gmra.mxu0 %v5662
  %v5701 = vpop.f32.mrf.mxu0
  %v5702 = vadd.f32 0.0, %v5701
  %v5703 = vpop.f32.mrf.mxu0
  %v5704 = vpop.f32.mrf.mxu0
  %v5705 = vpop.f32.mrf.mxu0
  %5706 = vdwg.mxu0
  %v5708 = vsel %vm4233, %v4129, 0
  %v5711 = vsel %vm4237, %v4197, 0
  %5713 = vmatprep.subr.bf16.mxu0 0
  %5714 = vmatpush1.bf16.msra.mxu0 0
  %5715 = vmatprep.subr.bf16.mxu0 0
  %5716 = vmatpush1.bf16.msra.mxu0 0
  %5717 = vmatprep.subr.bf16.mxu0 0
  %5718 = vmatpush1.bf16.msra.mxu0 0
  %5719 = vmatprep.subr.bf16.mxu0 0
  %5720 = vmatpush1.bf16.msra.mxu0 0
  %5721 = vmatprep.subr.bf16.mxu0 0
  %5722 = vmatpush1.bf16.msra.mxu0 0
  %5723 = vmatprep.subr.bf16.mxu0 0
  %5724 = vmatpush1.bf16.msra.mxu0 0
  %5725 = vmatprep.subr.bf16.mxu0 0
  %5726 = vmatpush1.bf16.msra.mxu0 0
  %5727 = vmatprep.subr.bf16.mxu0 0
  %5728 = vmatpush1.bf16.msra.mxu0 %v5711
  %5729 = vmatprep.subr.bf16.mxu0 0
  %5730 = vmatpush2.bf16.msra.mxu0 0
  %5731 = vmatprep.subr.bf16.mxu0 0
  %5732 = vmatpush2.bf16.msra.mxu0 0
  %5733 = vmatprep.subr.bf16.mxu0 0
  %5734 = vmatpush2.bf16.msra.mxu0 0
  %5735 = vmatprep.subr.bf16.mxu0 0
  %5736 = vmatpush2.bf16.msra.mxu0 0
  %5737 = vmatprep.subr.bf16.mxu0 0
  %5738 = vmatpush2.bf16.msra.mxu0 0
  %5739 = vmatprep.subr.bf16.mxu0 0
  %5740 = vmatpush2.bf16.msra.mxu0 0
  %5741 = vmatprep.subr.bf16.mxu0 0
  %5742 = vmatpush2.bf16.msra.mxu0 0
  %5743 = vmatprep.subr.bf16.mxu0 0
  %5744 = vmatpush2.bf16.msra.mxu0 0
  %5745 = vmatprep.mubr.bf16.mxu0 0
  %5746 = vmatmul.mubr.bf16.gmra.mxu0 %v5708
  %v5747 = vpop.f32.mrf.mxu0
  %v5748 = vadd.f32 0.0, %v5747
  %v5749 = vpop.f32.mrf.mxu0
  %v5750 = vpop.f32.mrf.mxu0
  %v5751 = vpop.f32.mrf.mxu0
  %5752 = vdwg.mxu0
  %v5754 = vsel %vm4233, %v4130, 0
  %v5757 = vsel %vm4237, %v4198, 0
  %5759 = vmatprep.subr.bf16.mxu0 0
  %5760 = vmatpush1.bf16.msra.mxu0 0
  %5761 = vmatprep.subr.bf16.mxu0 0
  %5762 = vmatpush1.bf16.msra.mxu0 0
  %5763 = vmatprep.subr.bf16.mxu0 0
  %5764 = vmatpush1.bf16.msra.mxu0 0
  %5765 = vmatprep.subr.bf16.mxu0 0
  %5766 = vmatpush1.bf16.msra.mxu0 0
  %5767 = vmatprep.subr.bf16.mxu0 0
  %5768 = vmatpush1.bf16.msra.mxu0 0
  %5769 = vmatprep.subr.bf16.mxu0 0
  %5770 = vmatpush1.bf16.msra.mxu0 0
  %5771 = vmatprep.subr.bf16.mxu0 0
  %5772 = vmatpush1.bf16.msra.mxu0 0
  %5773 = vmatprep.subr.bf16.mxu0 0
  %5774 = vmatpush1.bf16.msra.mxu0 %v5757
  %5775 = vmatprep.subr.bf16.mxu0 0
  %5776 = vmatpush2.bf16.msra.mxu0 0
  %5777 = vmatprep.subr.bf16.mxu0 0
  %5778 = vmatpush2.bf16.msra.mxu0 0
  %5779 = vmatprep.subr.bf16.mxu0 0
  %5780 = vmatpush2.bf16.msra.mxu0 0
  %5781 = vmatprep.subr.bf16.mxu0 0
  %5782 = vmatpush2.bf16.msra.mxu0 0
  %5783 = vmatprep.subr.bf16.mxu0 0
  %5784 = vmatpush2.bf16.msra.mxu0 0
  %5785 = vmatprep.subr.bf16.mxu0 0
  %5786 = vmatpush2.bf16.msra.mxu0 0
  %5787 = vmatprep.subr.bf16.mxu0 0
  %5788 = vmatpush2.bf16.msra.mxu0 0
  %5789 = vmatprep.subr.bf16.mxu0 0
  %5790 = vmatpush2.bf16.msra.mxu0 0
  %5791 = vmatprep.mubr.bf16.mxu0 0
  %5792 = vmatmul.mubr.bf16.gmra.mxu0 %v5754
  %v5793 = vpop.f32.mrf.mxu0
  %v5794 = vadd.f32 0.0, %v5793
  %v5795 = vpop.f32.mrf.mxu0
  %v5796 = vpop.f32.mrf.mxu0
  %v5797 = vpop.f32.mrf.mxu0
  %5798 = vdwg.mxu0
  %v5800 = vsel %vm4233, %v4131, 0
  %v5803 = vsel %vm4237, %v4199, 0
  %5805 = vmatprep.subr.bf16.mxu0 0
  %5806 = vmatpush1.bf16.msra.mxu0 0
  %5807 = vmatprep.subr.bf16.mxu0 0
  %5808 = vmatpush1.bf16.msra.mxu0 0
  %5809 = vmatprep.subr.bf16.mxu0 0
  %5810 = vmatpush1.bf16.msra.mxu0 0
  %5811 = vmatprep.subr.bf16.mxu0 0
  %5812 = vmatpush1.bf16.msra.mxu0 0
  %5813 = vmatprep.subr.bf16.mxu0 0
  %5814 = vmatpush1.bf16.msra.mxu0 0
  %5815 = vmatprep.subr.bf16.mxu0 0
  %5816 = vmatpush1.bf16.msra.mxu0 0
  %5817 = vmatprep.subr.bf16.mxu0 0
  %5818 = vmatpush1.bf16.msra.mxu0 0
  %5819 = vmatprep.subr.bf16.mxu0 0
  %5820 = vmatpush1.bf16.msra.mxu0 %v5803
  %5821 = vmatprep.subr.bf16.mxu0 0
  %5822 = vmatpush2.bf16.msra.mxu0 0
  %5823 = vmatprep.subr.bf16.mxu0 0
  %5824 = vmatpush2.bf16.msra.mxu0 0
  %5825 = vmatprep.subr.bf16.mxu0 0
  %5826 = vmatpush2.bf16.msra.mxu0 0
  %5827 = vmatprep.subr.bf16.mxu0 0
  %5828 = vmatpush2.bf16.msra.mxu0 0
  %5829 = vmatprep.subr.bf16.mxu0 0
  %5830 = vmatpush2.bf16.msra.mxu0 0
  %5831 = vmatprep.subr.bf16.mxu0 0
  %5832 = vmatpush2.bf16.msra.mxu0 0
  %5833 = vmatprep.subr.bf16.mxu0 0
  %5834 = vmatpush2.bf16.msra.mxu0 0
  %5835 = vmatprep.subr.bf16.mxu0 0
  %5836 = vmatpush2.bf16.msra.mxu0 0
  %5837 = vmatprep.mubr.bf16.mxu0 0
  %5838 = vmatmul.mubr.bf16.gmra.mxu0 %v5800
  %v5839 = vpop.f32.mrf.mxu0
  %v5840 = vadd.f32 0.0, %v5839
  %v5841 = vpop.f32.mrf.mxu0
  %v5842 = vpop.f32.mrf.mxu0
  %v5843 = vpop.f32.mrf.mxu0
  %5844 = vdwg.mxu0
  %v5846 = vsel %vm4233, %v4132, 0
  %v5849 = vsel %vm4237, %v4200, 0
  %5851 = vmatprep.subr.bf16.mxu0 0
  %5852 = vmatpush1.bf16.msra.mxu0 0
  %5853 = vmatprep.subr.bf16.mxu0 0
  %5854 = vmatpush1.bf16.msra.mxu0 0
  %5855 = vmatprep.subr.bf16.mxu0 0
  %5856 = vmatpush1.bf16.msra.mxu0 0
  %5857 = vmatprep.subr.bf16.mxu0 0
  %5858 = vmatpush1.bf16.msra.mxu0 0
  %5859 = vmatprep.subr.bf16.mxu0 0
  %5860 = vmatpush1.bf16.msra.mxu0 0
  %5861 = vmatprep.subr.bf16.mxu0 0
  %5862 = vmatpush1.bf16.msra.mxu0 0
  %5863 = vmatprep.subr.bf16.mxu0 0
  %5864 = vmatpush1.bf16.msra.mxu0 0
  %5865 = vmatprep.subr.bf16.mxu0 0
  %5866 = vmatpush1.bf16.msra.mxu0 %v5849
  %5867 = vmatprep.subr.bf16.mxu0 0
  %5868 = vmatpush2.bf16.msra.mxu0 0
  %5869 = vmatprep.subr.bf16.mxu0 0
  %5870 = vmatpush2.bf16.msra.mxu0 0
  %5871 = vmatprep.subr.bf16.mxu0 0
  %5872 = vmatpush2.bf16.msra.mxu0 0
  %5873 = vmatprep.subr.bf16.mxu0 0
  %5874 = vmatpush2.bf16.msra.mxu0 0
  %5875 = vmatprep.subr.bf16.mxu0 0
  %5876 = vmatpush2.bf16.msra.mxu0 0
  %5877 = vmatprep.subr.bf16.mxu0 0
  %5878 = vmatpush2.bf16.msra.mxu0 0
  %5879 = vmatprep.subr.bf16.mxu0 0
  %5880 = vmatpush2.bf16.msra.mxu0 0
  %5881 = vmatprep.subr.bf16.mxu0 0
  %5882 = vmatpush2.bf16.msra.mxu0 0
  %5883 = vmatprep.mubr.bf16.mxu0 0
  %5884 = vmatmul.mubr.bf16.gmra.mxu0 %v5846
  %v5885 = vpop.f32.mrf.mxu0
  %v5886 = vadd.f32 0.0, %v5885
  %v5887 = vpop.f32.mrf.mxu0
  %v5888 = vpop.f32.mrf.mxu0
  %v5889 = vpop.f32.mrf.mxu0
  %5890 = vdwg.mxu0
  %v5892 = vsel %vm4233, %v4133, 0
  %v5895 = vsel %vm4237, %v4201, 0
  %5897 = vmatprep.subr.bf16.mxu0 0
  %5898 = vmatpush1.bf16.msra.mxu0 0
  %5899 = vmatprep.subr.bf16.mxu0 0
  %5900 = vmatpush1.bf16.msra.mxu0 0
  %5901 = vmatprep.subr.bf16.mxu0 0
  %5902 = vmatpush1.bf16.msra.mxu0 0
  %5903 = vmatprep.subr.bf16.mxu0 0
  %5904 = vmatpush1.bf16.msra.mxu0 0
  %5905 = vmatprep.subr.bf16.mxu0 0
  %5906 = vmatpush1.bf16.msra.mxu0 0
  %5907 = vmatprep.subr.bf16.mxu0 0
  %5908 = vmatpush1.bf16.msra.mxu0 0
  %5909 = vmatprep.subr.bf16.mxu0 0
  %5910 = vmatpush1.bf16.msra.mxu0 0
  %5911 = vmatprep.subr.bf16.mxu0 0
  %5912 = vmatpush1.bf16.msra.mxu0 %v5895
  %5913 = vmatprep.subr.bf16.mxu0 0
  %5914 = vmatpush2.bf16.msra.mxu0 0
  %5915 = vmatprep.subr.bf16.mxu0 0
  %5916 = vmatpush2.bf16.msra.mxu0 0
  %5917 = vmatprep.subr.bf16.mxu0 0
  %5918 = vmatpush2.bf16.msra.mxu0 0
  %5919 = vmatprep.subr.bf16.mxu0 0
  %5920 = vmatpush2.bf16.msra.mxu0 0
  %5921 = vmatprep.subr.bf16.mxu0 0
  %5922 = vmatpush2.bf16.msra.mxu0 0
  %5923 = vmatprep.subr.bf16.mxu0 0
  %5924 = vmatpush2.bf16.msra.mxu0 0
  %5925 = vmatprep.subr.bf16.mxu0 0
  %5926 = vmatpush2.bf16.msra.mxu0 0
  %5927 = vmatprep.subr.bf16.mxu0 0
  %5928 = vmatpush2.bf16.msra.mxu0 0
  %5929 = vmatprep.mubr.bf16.mxu0 0
  %5930 = vmatmul.mubr.bf16.gmra.mxu0 %v5892
  %v5931 = vpop.f32.mrf.mxu0
  %v5932 = vadd.f32 0.0, %v5931
  %v5933 = vpop.f32.mrf.mxu0
  %v5934 = vpop.f32.mrf.mxu0
  %v5935 = vpop.f32.mrf.mxu0
  %5936 = vdwg.mxu0
  %v5938 = vsel %vm4233, %v4134, 0
  %v5941 = vsel %vm4237, %v4202, 0
  %5943 = vmatprep.subr.bf16.mxu0 0
  %5944 = vmatpush1.bf16.msra.mxu0 0
  %5945 = vmatprep.subr.bf16.mxu0 0
  %5946 = vmatpush1.bf16.msra.mxu0 0
  %5947 = vmatprep.subr.bf16.mxu0 0
  %5948 = vmatpush1.bf16.msra.mxu0 0
  %5949 = vmatprep.subr.bf16.mxu0 0
  %5950 = vmatpush1.bf16.msra.mxu0 0
  %5951 = vmatprep.subr.bf16.mxu0 0
  %5952 = vmatpush1.bf16.msra.mxu0 0
  %5953 = vmatprep.subr.bf16.mxu0 0
  %5954 = vmatpush1.bf16.msra.mxu0 0
  %5955 = vmatprep.subr.bf16.mxu0 0
  %5956 = vmatpush1.bf16.msra.mxu0 0
  %5957 = vmatprep.subr.bf16.mxu0 0
  %5958 = vmatpush1.bf16.msra.mxu0 %v5941
  %5959 = vmatprep.subr.bf16.mxu0 0
  %5960 = vmatpush2.bf16.msra.mxu0 0
  %5961 = vmatprep.subr.bf16.mxu0 0
  %5962 = vmatpush2.bf16.msra.mxu0 0
  %5963 = vmatprep.subr.bf16.mxu0 0
  %5964 = vmatpush2.bf16.msra.mxu0 0
  %5965 = vmatprep.subr.bf16.mxu0 0
  %5966 = vmatpush2.bf16.msra.mxu0 0
  %5967 = vmatprep.subr.bf16.mxu0 0
  %5968 = vmatpush2.bf16.msra.mxu0 0
  %5969 = vmatprep.subr.bf16.mxu0 0
  %5970 = vmatpush2.bf16.msra.mxu0 0
  %5971 = vmatprep.subr.bf16.mxu0 0
  %5972 = vmatpush2.bf16.msra.mxu0 0
  %5973 = vmatprep.subr.bf16.mxu0 0
  %5974 = vmatpush2.bf16.msra.mxu0 0
  %5975 = vmatprep.mubr.bf16.mxu0 0
  %5976 = vmatmul.mubr.bf16.gmra.mxu0 %v5938
  %v5977 = vpop.f32.mrf.mxu0
  %v5978 = vadd.f32 0.0, %v5977
  %v5979 = vpop.f32.mrf.mxu0
  %v5980 = vpop.f32.mrf.mxu0
  %v5981 = vpop.f32.mrf.mxu0
  %5982 = vdwg.mxu0
  %v5984 = vsel %vm4233, %v4135, 0
  %v5987 = vsel %vm4237, %v4203, 0
  %5989 = vmatprep.subr.bf16.mxu0 0
  %5990 = vmatpush1.bf16.msra.mxu0 0
  %5991 = vmatprep.subr.bf16.mxu0 0
  %5992 = vmatpush1.bf16.msra.mxu0 0
  %5993 = vmatprep.subr.bf16.mxu0 0
  %5994 = vmatpush1.bf16.msra.mxu0 0
  %5995 = vmatprep.subr.bf16.mxu0 0
  %5996 = vmatpush1.bf16.msra.mxu0 0
  %5997 = vmatprep.subr.bf16.mxu0 0
  %5998 = vmatpush1.bf16.msra.mxu0 0
  %5999 = vmatprep.subr.bf16.mxu0 0
  %6000 = vmatpush1.bf16.msra.mxu0 0
  %6001 = vmatprep.subr.bf16.mxu0 0
  %6002 = vmatpush1.bf16.msra.mxu0 0
  %6003 = vmatprep.subr.bf16.mxu0 0
  %6004 = vmatpush1.bf16.msra.mxu0 %v5987
  %6005 = vmatprep.subr.bf16.mxu0 0
  %6006 = vmatpush2.bf16.msra.mxu0 0
  %6007 = vmatprep.subr.bf16.mxu0 0
  %6008 = vmatpush2.bf16.msra.mxu0 0
  %6009 = vmatprep.subr.bf16.mxu0 0
  %6010 = vmatpush2.bf16.msra.mxu0 0
  %6011 = vmatprep.subr.bf16.mxu0 0
  %6012 = vmatpush2.bf16.msra.mxu0 0
  %6013 = vmatprep.subr.bf16.mxu0 0
  %6014 = vmatpush2.bf16.msra.mxu0 0
  %6015 = vmatprep.subr.bf16.mxu0 0
  %6016 = vmatpush2.bf16.msra.mxu0 0
  %6017 = vmatprep.subr.bf16.mxu0 0
  %6018 = vmatpush2.bf16.msra.mxu0 0
  %6019 = vmatprep.subr.bf16.mxu0 0
  %6020 = vmatpush2.bf16.msra.mxu0 0
  %6021 = vmatprep.mubr.bf16.mxu0 0
  %6022 = vmatmul.mubr.bf16.gmra.mxu0 %v5984
  %v6023 = vpop.f32.mrf.mxu0
  %v6024 = vadd.f32 0.0, %v6023
  %v6025 = vpop.f32.mrf.mxu0
  %v6026 = vpop.f32.mrf.mxu0
  %v6027 = vpop.f32.mrf.mxu0
  %6028 = vdwg.mxu0
  %v6030 = vsel %vm4233, %v4136, 0
  %v6033 = vsel %vm4237, %v4204, 0
  %6035 = vmatprep.subr.bf16.mxu0 0
  %6036 = vmatpush1.bf16.msra.mxu0 0
  %6037 = vmatprep.subr.bf16.mxu0 0
  %6038 = vmatpush1.bf16.msra.mxu0 0
  %6039 = vmatprep.subr.bf16.mxu0 0
  %6040 = vmatpush1.bf16.msra.mxu0 0
  %6041 = vmatprep.subr.bf16.mxu0 0
  %6042 = vmatpush1.bf16.msra.mxu0 0
  %6043 = vmatprep.subr.bf16.mxu0 0
  %6044 = vmatpush1.bf16.msra.mxu0 0
  %6045 = vmatprep.subr.bf16.mxu0 0
  %6046 = vmatpush1.bf16.msra.mxu0 0
  %6047 = vmatprep.subr.bf16.mxu0 0
  %6048 = vmatpush1.bf16.msra.mxu0 0
  %6049 = vmatprep.subr.bf16.mxu0 0
  %6050 = vmatpush1.bf16.msra.mxu0 %v6033
  %6051 = vmatprep.subr.bf16.mxu0 0
  %6052 = vmatpush2.bf16.msra.mxu0 0
  %6053 = vmatprep.subr.bf16.mxu0 0
  %6054 = vmatpush2.bf16.msra.mxu0 0
  %6055 = vmatprep.subr.bf16.mxu0 0
  %6056 = vmatpush2.bf16.msra.mxu0 0
  %6057 = vmatprep.subr.bf16.mxu0 0
  %6058 = vmatpush2.bf16.msra.mxu0 0
  %6059 = vmatprep.subr.bf16.mxu0 0
  %6060 = vmatpush2.bf16.msra.mxu0 0
  %6061 = vmatprep.subr.bf16.mxu0 0
  %6062 = vmatpush2.bf16.msra.mxu0 0
  %6063 = vmatprep.subr.bf16.mxu0 0
  %6064 = vmatpush2.bf16.msra.mxu0 0
  %6065 = vmatprep.subr.bf16.mxu0 0
  %6066 = vmatpush2.bf16.msra.mxu0 0
  %6067 = vmatprep.mubr.bf16.mxu0 0
  %6068 = vmatmul.mubr.bf16.gmra.mxu0 %v6030
  %v6069 = vpop.f32.mrf.mxu0
  %v6070 = vadd.f32 0.0, %v6069
  %v6071 = vpop.f32.mrf.mxu0
  %v6072 = vpop.f32.mrf.mxu0
  %v6073 = vpop.f32.mrf.mxu0
  %6074 = vdwg.mxu0
  %v6076 = vsel %vm4233, %v4137, 0
  %v6079 = vsel %vm4237, %v4205, 0
  %6081 = vmatprep.subr.bf16.mxu0 0
  %6082 = vmatpush1.bf16.msra.mxu0 0
  %6083 = vmatprep.subr.bf16.mxu0 0
  %6084 = vmatpush1.bf16.msra.mxu0 0
  %6085 = vmatprep.subr.bf16.mxu0 0
  %6086 = vmatpush1.bf16.msra.mxu0 0
  %6087 = vmatprep.subr.bf16.mxu0 0
  %6088 = vmatpush1.bf16.msra.mxu0 0
  %6089 = vmatprep.subr.bf16.mxu0 0
  %6090 = vmatpush1.bf16.msra.mxu0 0
  %6091 = vmatprep.subr.bf16.mxu0 0
  %6092 = vmatpush1.bf16.msra.mxu0 0
  %6093 = vmatprep.subr.bf16.mxu0 0
  %6094 = vmatpush1.bf16.msra.mxu0 0
  %6095 = vmatprep.subr.bf16.mxu0 0
  %6096 = vmatpush1.bf16.msra.mxu0 %v6079
  %6097 = vmatprep.subr.bf16.mxu0 0
  %6098 = vmatpush2.bf16.msra.mxu0 0
  %6099 = vmatprep.subr.bf16.mxu0 0
  %6100 = vmatpush2.bf16.msra.mxu0 0
  %6101 = vmatprep.subr.bf16.mxu0 0
  %6102 = vmatpush2.bf16.msra.mxu0 0
  %6103 = vmatprep.subr.bf16.mxu0 0
  %6104 = vmatpush2.bf16.msra.mxu0 0
  %6105 = vmatprep.subr.bf16.mxu0 0
  %6106 = vmatpush2.bf16.msra.mxu0 0
  %6107 = vmatprep.subr.bf16.mxu0 0
  %6108 = vmatpush2.bf16.msra.mxu0 0
  %6109 = vmatprep.subr.bf16.mxu0 0
  %6110 = vmatpush2.bf16.msra.mxu0 0
  %6111 = vmatprep.subr.bf16.mxu0 0
  %6112 = vmatpush2.bf16.msra.mxu0 0
  %6113 = vmatprep.mubr.bf16.mxu0 0
  %6114 = vmatmul.mubr.bf16.gmra.mxu0 %v6076
  %v6115 = vpop.f32.mrf.mxu0
  %v6116 = vadd.f32 0.0, %v6115
  %v6117 = vpop.f32.mrf.mxu0
  %v6118 = vpop.f32.mrf.mxu0
  %v6119 = vpop.f32.mrf.mxu0
  %6120 = vdwg.mxu0
  %v6122 = vsel %vm4233, %v4138, 0
  %v6125 = vsel %vm4237, %v4206, 0
  %6127 = vmatprep.subr.bf16.mxu0 0
  %6128 = vmatpush1.bf16.msra.mxu0 0
  %6129 = vmatprep.subr.bf16.mxu0 0
  %6130 = vmatpush1.bf16.msra.mxu0 0
  %6131 = vmatprep.subr.bf16.mxu0 0
  %6132 = vmatpush1.bf16.msra.mxu0 0
  %6133 = vmatprep.subr.bf16.mxu0 0
  %6134 = vmatpush1.bf16.msra.mxu0 0
  %6135 = vmatprep.subr.bf16.mxu0 0
  %6136 = vmatpush1.bf16.msra.mxu0 0
  %6137 = vmatprep.subr.bf16.mxu0 0
  %6138 = vmatpush1.bf16.msra.mxu0 0
  %6139 = vmatprep.subr.bf16.mxu0 0
  %6140 = vmatpush1.bf16.msra.mxu0 0
  %6141 = vmatprep.subr.bf16.mxu0 0
  %6142 = vmatpush1.bf16.msra.mxu0 %v6125
  %6143 = vmatprep.subr.bf16.mxu0 0
  %6144 = vmatpush2.bf16.msra.mxu0 0
  %6145 = vmatprep.subr.bf16.mxu0 0
  %6146 = vmatpush2.bf16.msra.mxu0 0
  %6147 = vmatprep.subr.bf16.mxu0 0
  %6148 = vmatpush2.bf16.msra.mxu0 0
  %6149 = vmatprep.subr.bf16.mxu0 0
  %6150 = vmatpush2.bf16.msra.mxu0 0
  %6151 = vmatprep.subr.bf16.mxu0 0
  %6152 = vmatpush2.bf16.msra.mxu0 0
  %6153 = vmatprep.subr.bf16.mxu0 0
  %6154 = vmatpush2.bf16.msra.mxu0 0
  %6155 = vmatprep.subr.bf16.mxu0 0
  %6156 = vmatpush2.bf16.msra.mxu0 0
  %6157 = vmatprep.subr.bf16.mxu0 0
  %6158 = vmatpush2.bf16.msra.mxu0 0
  %6159 = vmatprep.mubr.bf16.mxu0 0
  %6160 = vmatmul.mubr.bf16.gmra.mxu0 %v6122
  %v6161 = vpop.f32.mrf.mxu0
  %v6162 = vadd.f32 0.0, %v6161
  %v6163 = vpop.f32.mrf.mxu0
  %v6164 = vpop.f32.mrf.mxu0
  %v6165 = vpop.f32.mrf.mxu0
  %6166 = vdwg.mxu0
  %v6168 = vsel %vm4233, %v4139, 0
  %v6171 = vsel %vm4237, %v4207, 0
  %6173 = vmatprep.subr.bf16.mxu0 0
  %6174 = vmatpush1.bf16.msra.mxu0 0
  %6175 = vmatprep.subr.bf16.mxu0 0
  %6176 = vmatpush1.bf16.msra.mxu0 0
  %6177 = vmatprep.subr.bf16.mxu0 0
  %6178 = vmatpush1.bf16.msra.mxu0 0
  %6179 = vmatprep.subr.bf16.mxu0 0
  %6180 = vmatpush1.bf16.msra.mxu0 0
  %6181 = vmatprep.subr.bf16.mxu0 0
  %6182 = vmatpush1.bf16.msra.mxu0 0
  %6183 = vmatprep.subr.bf16.mxu0 0
  %6184 = vmatpush1.bf16.msra.mxu0 0
  %6185 = vmatprep.subr.bf16.mxu0 0
  %6186 = vmatpush1.bf16.msra.mxu0 0
  %6187 = vmatprep.subr.bf16.mxu0 0
  %6188 = vmatpush1.bf16.msra.mxu0 %v6171
  %6189 = vmatprep.subr.bf16.mxu0 0
  %6190 = vmatpush2.bf16.msra.mxu0 0
  %6191 = vmatprep.subr.bf16.mxu0 0
  %6192 = vmatpush2.bf16.msra.mxu0 0
  %6193 = vmatprep.subr.bf16.mxu0 0
  %6194 = vmatpush2.bf16.msra.mxu0 0
  %6195 = vmatprep.subr.bf16.mxu0 0
  %6196 = vmatpush2.bf16.msra.mxu0 0
  %6197 = vmatprep.subr.bf16.mxu0 0
  %6198 = vmatpush2.bf16.msra.mxu0 0
  %6199 = vmatprep.subr.bf16.mxu0 0
  %6200 = vmatpush2.bf16.msra.mxu0 0
  %6201 = vmatprep.subr.bf16.mxu0 0
  %6202 = vmatpush2.bf16.msra.mxu0 0
  %6203 = vmatprep.subr.bf16.mxu0 0
  %6204 = vmatpush2.bf16.msra.mxu0 0
  %6205 = vmatprep.mubr.bf16.mxu0 0
  %6206 = vmatmul.mubr.bf16.gmra.mxu0 %v6168
  %v6207 = vpop.f32.mrf.mxu0
  %v6208 = vadd.f32 0.0, %v6207
  %v6209 = vpop.f32.mrf.mxu0
  %v6210 = vpop.f32.mrf.mxu0
  %v6211 = vpop.f32.mrf.mxu0
  %6212 = vdwg.mxu0
  %v6214 = vsel %vm4233, %v4140, 0
  %v6217 = vsel %vm4237, %v4208, 0
  %6219 = vmatprep.subr.bf16.mxu0 0
  %6220 = vmatpush1.bf16.msra.mxu0 0
  %6221 = vmatprep.subr.bf16.mxu0 0
  %6222 = vmatpush1.bf16.msra.mxu0 0
  %6223 = vmatprep.subr.bf16.mxu0 0
  %6224 = vmatpush1.bf16.msra.mxu0 0
  %6225 = vmatprep.subr.bf16.mxu0 0
  %6226 = vmatpush1.bf16.msra.mxu0 0
  %6227 = vmatprep.subr.bf16.mxu0 0
  %6228 = vmatpush1.bf16.msra.mxu0 0
  %6229 = vmatprep.subr.bf16.mxu0 0
  %6230 = vmatpush1.bf16.msra.mxu0 0
  %6231 = vmatprep.subr.bf16.mxu0 0
  %6232 = vmatpush1.bf16.msra.mxu0 0
  %6233 = vmatprep.subr.bf16.mxu0 0
  %6234 = vmatpush1.bf16.msra.mxu0 %v6217
  %6235 = vmatprep.subr.bf16.mxu0 0
  %6236 = vmatpush2.bf16.msra.mxu0 0
  %6237 = vmatprep.subr.bf16.mxu0 0
  %6238 = vmatpush2.bf16.msra.mxu0 0
  %6239 = vmatprep.subr.bf16.mxu0 0
  %6240 = vmatpush2.bf16.msra.mxu0 0
  %6241 = vmatprep.subr.bf16.mxu0 0
  %6242 = vmatpush2.bf16.msra.mxu0 0
  %6243 = vmatprep.subr.bf16.mxu0 0
  %6244 = vmatpush2.bf16.msra.mxu0 0
  %6245 = vmatprep.subr.bf16.mxu0 0
  %6246 = vmatpush2.bf16.msra.mxu0 0
  %6247 = vmatprep.subr.bf16.mxu0 0
  %6248 = vmatpush2.bf16.msra.mxu0 0
  %6249 = vmatprep.subr.bf16.mxu0 0
  %6250 = vmatpush2.bf16.msra.mxu0 0
  %6251 = vmatprep.mubr.bf16.mxu0 0
  %6252 = vmatmul.mubr.bf16.gmra.mxu0 %v6214
  %v6253 = vpop.f32.mrf.mxu0
  %v6254 = vadd.f32 0.0, %v6253
  %v6255 = vpop.f32.mrf.mxu0
  %v6256 = vpop.f32.mrf.mxu0
  %v6257 = vpop.f32.mrf.mxu0
  %6258 = vdwg.mxu0
  %v6260 = vsel %vm4233, %v4141, 0
  %v6263 = vsel %vm4237, %v4209, 0
  %6265 = vmatprep.subr.bf16.mxu0 0
  %6266 = vmatpush1.bf16.msra.mxu0 0
  %6267 = vmatprep.subr.bf16.mxu0 0
  %6268 = vmatpush1.bf16.msra.mxu0 0
  %6269 = vmatprep.subr.bf16.mxu0 0
  %6270 = vmatpush1.bf16.msra.mxu0 0
  %6271 = vmatprep.subr.bf16.mxu0 0
  %6272 = vmatpush1.bf16.msra.mxu0 0
  %6273 = vmatprep.subr.bf16.mxu0 0
  %6274 = vmatpush1.bf16.msra.mxu0 0
  %6275 = vmatprep.subr.bf16.mxu0 0
  %6276 = vmatpush1.bf16.msra.mxu0 0
  %6277 = vmatprep.subr.bf16.mxu0 0
  %6278 = vmatpush1.bf16.msra.mxu0 0
  %6279 = vmatprep.subr.bf16.mxu0 0
  %6280 = vmatpush1.bf16.msra.mxu0 %v6263
  %6281 = vmatprep.subr.bf16.mxu0 0
  %6282 = vmatpush2.bf16.msra.mxu0 0
  %6283 = vmatprep.subr.bf16.mxu0 0
  %6284 = vmatpush2.bf16.msra.mxu0 0
  %6285 = vmatprep.subr.bf16.mxu0 0
  %6286 = vmatpush2.bf16.msra.mxu0 0
  %6287 = vmatprep.subr.bf16.mxu0 0
  %6288 = vmatpush2.bf16.msra.mxu0 0
  %6289 = vmatprep.subr.bf16.mxu0 0
  %6290 = vmatpush2.bf16.msra.mxu0 0
  %6291 = vmatprep.subr.bf16.mxu0 0
  %6292 = vmatpush2.bf16.msra.mxu0 0
  %6293 = vmatprep.subr.bf16.mxu0 0
  %6294 = vmatpush2.bf16.msra.mxu0 0
  %6295 = vmatprep.subr.bf16.mxu0 0
  %6296 = vmatpush2.bf16.msra.mxu0 0
  %6297 = vmatprep.mubr.bf16.mxu0 0
  %6298 = vmatmul.mubr.bf16.gmra.mxu0 %v6260
  %v6299 = vpop.f32.mrf.mxu0
  %v6300 = vadd.f32 0.0, %v6299
  %v6301 = vpop.f32.mrf.mxu0
  %v6302 = vpop.f32.mrf.mxu0
  %v6303 = vpop.f32.mrf.mxu0
  %6304 = vdwg.mxu0
  %v6306 = vsel %vm4233, %v4142, 0
  %v6309 = vsel %vm4237, %v4210, 0
  %6311 = vmatprep.subr.bf16.mxu0 0
  %6312 = vmatpush1.bf16.msra.mxu0 0
  %6313 = vmatprep.subr.bf16.mxu0 0
  %6314 = vmatpush1.bf16.msra.mxu0 0
  %6315 = vmatprep.subr.bf16.mxu0 0
  %6316 = vmatpush1.bf16.msra.mxu0 0
  %6317 = vmatprep.subr.bf16.mxu0 0
  %6318 = vmatpush1.bf16.msra.mxu0 0
  %6319 = vmatprep.subr.bf16.mxu0 0
  %6320 = vmatpush1.bf16.msra.mxu0 0
  %6321 = vmatprep.subr.bf16.mxu0 0
  %6322 = vmatpush1.bf16.msra.mxu0 0
  %6323 = vmatprep.subr.bf16.mxu0 0
  %6324 = vmatpush1.bf16.msra.mxu0 0
  %6325 = vmatprep.subr.bf16.mxu0 0
  %6326 = vmatpush1.bf16.msra.mxu0 %v6309
  %6327 = vmatprep.subr.bf16.mxu0 0
  %6328 = vmatpush2.bf16.msra.mxu0 0
  %6329 = vmatprep.subr.bf16.mxu0 0
  %6330 = vmatpush2.bf16.msra.mxu0 0
  %6331 = vmatprep.subr.bf16.mxu0 0
  %6332 = vmatpush2.bf16.msra.mxu0 0
  %6333 = vmatprep.subr.bf16.mxu0 0
  %6334 = vmatpush2.bf16.msra.mxu0 0
  %6335 = vmatprep.subr.bf16.mxu0 0
  %6336 = vmatpush2.bf16.msra.mxu0 0
  %6337 = vmatprep.subr.bf16.mxu0 0
  %6338 = vmatpush2.bf16.msra.mxu0 0
  %6339 = vmatprep.subr.bf16.mxu0 0
  %6340 = vmatpush2.bf16.msra.mxu0 0
  %6341 = vmatprep.subr.bf16.mxu0 0
  %6342 = vmatpush2.bf16.msra.mxu0 0
  %6343 = vmatprep.mubr.bf16.mxu0 0
  %6344 = vmatmul.mubr.bf16.gmra.mxu0 %v6306
  %v6345 = vpop.f32.mrf.mxu0
  %v6346 = vadd.f32 0.0, %v6345
  %v6347 = vpop.f32.mrf.mxu0
  %v6348 = vpop.f32.mrf.mxu0
  %v6349 = vpop.f32.mrf.mxu0
  %6350 = vdwg.mxu0
  %v6352 = vsel %vm4233, %v4143, 0
  %v6355 = vsel %vm4237, %v4211, 0
  %6357 = vmatprep.subr.bf16.mxu0 0
  %6358 = vmatpush1.bf16.msra.mxu0 0
  %6359 = vmatprep.subr.bf16.mxu0 0
  %6360 = vmatpush1.bf16.msra.mxu0 0
  %6361 = vmatprep.subr.bf16.mxu0 0
  %6362 = vmatpush1.bf16.msra.mxu0 0
  %6363 = vmatprep.subr.bf16.mxu0 0
  %6364 = vmatpush1.bf16.msra.mxu0 0
  %6365 = vmatprep.subr.bf16.mxu0 0
  %6366 = vmatpush1.bf16.msra.mxu0 0
  %6367 = vmatprep.subr.bf16.mxu0 0
  %6368 = vmatpush1.bf16.msra.mxu0 0
  %6369 = vmatprep.subr.bf16.mxu0 0
  %6370 = vmatpush1.bf16.msra.mxu0 0
  %6371 = vmatprep.subr.bf16.mxu0 0
  %6372 = vmatpush1.bf16.msra.mxu0 %v6355
  %6373 = vmatprep.subr.bf16.mxu0 0
  %6374 = vmatpush2.bf16.msra.mxu0 0
  %6375 = vmatprep.subr.bf16.mxu0 0
  %6376 = vmatpush2.bf16.msra.mxu0 0
  %6377 = vmatprep.subr.bf16.mxu0 0
  %6378 = vmatpush2.bf16.msra.mxu0 0
  %6379 = vmatprep.subr.bf16.mxu0 0
  %6380 = vmatpush2.bf16.msra.mxu0 0
  %6381 = vmatprep.subr.bf16.mxu0 0
  %6382 = vmatpush2.bf16.msra.mxu0 0
  %6383 = vmatprep.subr.bf16.mxu0 0
  %6384 = vmatpush2.bf16.msra.mxu0 0
  %6385 = vmatprep.subr.bf16.mxu0 0
  %6386 = vmatpush2.bf16.msra.mxu0 0
  %6387 = vmatprep.subr.bf16.mxu0 0
  %6388 = vmatpush2.bf16.msra.mxu0 0
  %6389 = vmatprep.mubr.bf16.mxu0 0
  %6390 = vmatmul.mubr.bf16.gmra.mxu0 %v6352
  %v6391 = vpop.f32.mrf.mxu0
  %v6392 = vadd.f32 0.0, %v6391
  %v6393 = vpop.f32.mrf.mxu0
  %v6394 = vpop.f32.mrf.mxu0
  %v6395 = vpop.f32.mrf.mxu0
  %6396 = vdwg.mxu0
  %v6398 = vsel %vm4233, %v4144, 0
  %v6401 = vsel %vm4237, %v4212, 0
  %6403 = vmatprep.subr.bf16.mxu0 0
  %6404 = vmatpush1.bf16.msra.mxu0 0
  %6405 = vmatprep.subr.bf16.mxu0 0
  %6406 = vmatpush1.bf16.msra.mxu0 0
  %6407 = vmatprep.subr.bf16.mxu0 0
  %6408 = vmatpush1.bf16.msra.mxu0 0
  %6409 = vmatprep.subr.bf16.mxu0 0
  %6410 = vmatpush1.bf16.msra.mxu0 0
  %6411 = vmatprep.subr.bf16.mxu0 0
  %6412 = vmatpush1.bf16.msra.mxu0 0
  %6413 = vmatprep.subr.bf16.mxu0 0
  %6414 = vmatpush1.bf16.msra.mxu0 0
  %6415 = vmatprep.subr.bf16.mxu0 0
  %6416 = vmatpush1.bf16.msra.mxu0 0
  %6417 = vmatprep.subr.bf16.mxu0 0
  %6418 = vmatpush1.bf16.msra.mxu0 %v6401
  %6419 = vmatprep.subr.bf16.mxu0 0
  %6420 = vmatpush2.bf16.msra.mxu0 0
  %6421 = vmatprep.subr.bf16.mxu0 0
  %6422 = vmatpush2.bf16.msra.mxu0 0
  %6423 = vmatprep.subr.bf16.mxu0 0
  %6424 = vmatpush2.bf16.msra.mxu0 0
  %6425 = vmatprep.subr.bf16.mxu0 0
  %6426 = vmatpush2.bf16.msra.mxu0 0
  %6427 = vmatprep.subr.bf16.mxu0 0
  %6428 = vmatpush2.bf16.msra.mxu0 0
  %6429 = vmatprep.subr.bf16.mxu0 0
  %6430 = vmatpush2.bf16.msra.mxu0 0
  %6431 = vmatprep.subr.bf16.mxu0 0
  %6432 = vmatpush2.bf16.msra.mxu0 0
  %6433 = vmatprep.subr.bf16.mxu0 0
  %6434 = vmatpush2.bf16.msra.mxu0 0
  %6435 = vmatprep.mubr.bf16.mxu0 0
  %6436 = vmatmul.mubr.bf16.gmra.mxu0 %v6398
  %v6437 = vpop.f32.mrf.mxu0
  %v6438 = vadd.f32 0.0, %v6437
  %v6439 = vpop.f32.mrf.mxu0
  %v6440 = vpop.f32.mrf.mxu0
  %v6441 = vpop.f32.mrf.mxu0
  %6442 = vdwg.mxu0
  %v6444 = vsel %vm4233, %v4145, 0
  %v6447 = vsel %vm4237, %v4213, 0
  %6449 = vmatprep.subr.bf16.mxu0 0
  %6450 = vmatpush1.bf16.msra.mxu0 0
  %6451 = vmatprep.subr.bf16.mxu0 0
  %6452 = vmatpush1.bf16.msra.mxu0 0
  %6453 = vmatprep.subr.bf16.mxu0 0
  %6454 = vmatpush1.bf16.msra.mxu0 0
  %6455 = vmatprep.subr.bf16.mxu0 0
  %6456 = vmatpush1.bf16.msra.mxu0 0
  %6457 = vmatprep.subr.bf16.mxu0 0
  %6458 = vmatpush1.bf16.msra.mxu0 0
  %6459 = vmatprep.subr.bf16.mxu0 0
  %6460 = vmatpush1.bf16.msra.mxu0 0
  %6461 = vmatprep.subr.bf16.mxu0 0
  %6462 = vmatpush1.bf16.msra.mxu0 0
  %6463 = vmatprep.subr.bf16.mxu0 0
  %6464 = vmatpush1.bf16.msra.mxu0 %v6447
  %6465 = vmatprep.subr.bf16.mxu0 0
  %6466 = vmatpush2.bf16.msra.mxu0 0
  %6467 = vmatprep.subr.bf16.mxu0 0
  %6468 = vmatpush2.bf16.msra.mxu0 0
  %6469 = vmatprep.subr.bf16.mxu0 0
  %6470 = vmatpush2.bf16.msra.mxu0 0
  %6471 = vmatprep.subr.bf16.mxu0 0
  %6472 = vmatpush2.bf16.msra.mxu0 0
  %6473 = vmatprep.subr.bf16.mxu0 0
  %6474 = vmatpush2.bf16.msra.mxu0 0
  %6475 = vmatprep.subr.bf16.mxu0 0
  %6476 = vmatpush2.bf16.msra.mxu0 0
  %6477 = vmatprep.subr.bf16.mxu0 0
  %6478 = vmatpush2.bf16.msra.mxu0 0
  %6479 = vmatprep.subr.bf16.mxu0 0
  %6480 = vmatpush2.bf16.msra.mxu0 0
  %6481 = vmatprep.mubr.bf16.mxu0 0
  %6482 = vmatmul.mubr.bf16.gmra.mxu0 %v6444
  %v6483 = vpop.f32.mrf.mxu0
  %v6484 = vadd.f32 0.0, %v6483
  %v6485 = vpop.f32.mrf.mxu0
  %v6486 = vpop.f32.mrf.mxu0
  %v6487 = vpop.f32.mrf.mxu0
  %6488 = vdwg.mxu0
  %v6490 = vsel %vm4233, %v4146, 0
  %v6493 = vsel %vm4237, %v4214, 0
  %6495 = vmatprep.subr.bf16.mxu0 0
  %6496 = vmatpush1.bf16.msra.mxu0 0
  %6497 = vmatprep.subr.bf16.mxu0 0
  %6498 = vmatpush1.bf16.msra.mxu0 0
  %6499 = vmatprep.subr.bf16.mxu0 0
  %6500 = vmatpush1.bf16.msra.mxu0 0
  %6501 = vmatprep.subr.bf16.mxu0 0
  %6502 = vmatpush1.bf16.msra.mxu0 0
  %6503 = vmatprep.subr.bf16.mxu0 0
  %6504 = vmatpush1.bf16.msra.mxu0 0
  %6505 = vmatprep.subr.bf16.mxu0 0
  %6506 = vmatpush1.bf16.msra.mxu0 0
  %6507 = vmatprep.subr.bf16.mxu0 0
  %6508 = vmatpush1.bf16.msra.mxu0 0
  %6509 = vmatprep.subr.bf16.mxu0 0
  %6510 = vmatpush1.bf16.msra.mxu0 %v6493
  %6511 = vmatprep.subr.bf16.mxu0 0
  %6512 = vmatpush2.bf16.msra.mxu0 0
  %6513 = vmatprep.subr.bf16.mxu0 0
  %6514 = vmatpush2.bf16.msra.mxu0 0
  %6515 = vmatprep.subr.bf16.mxu0 0
  %6516 = vmatpush2.bf16.msra.mxu0 0
  %6517 = vmatprep.subr.bf16.mxu0 0
  %6518 = vmatpush2.bf16.msra.mxu0 0
  %6519 = vmatprep.subr.bf16.mxu0 0
  %6520 = vmatpush2.bf16.msra.mxu0 0
  %6521 = vmatprep.subr.bf16.mxu0 0
  %6522 = vmatpush2.bf16.msra.mxu0 0
  %6523 = vmatprep.subr.bf16.mxu0 0
  %6524 = vmatpush2.bf16.msra.mxu0 0
  %6525 = vmatprep.subr.bf16.mxu0 0
  %6526 = vmatpush2.bf16.msra.mxu0 0
  %6527 = vmatprep.mubr.bf16.mxu0 0
  %6528 = vmatmul.mubr.bf16.gmra.mxu0 %v6490
  %v6529 = vpop.f32.mrf.mxu0
  %v6530 = vadd.f32 0.0, %v6529
  %v6531 = vpop.f32.mrf.mxu0
  %v6532 = vpop.f32.mrf.mxu0
  %v6533 = vpop.f32.mrf.mxu0
  %6534 = vdwg.mxu0
  %v6536 = vsel %vm4233, %v4147, 0
  %v6539 = vsel %vm4237, %v4215, 0
  %6541 = vmatprep.subr.bf16.mxu0 0
  %6542 = vmatpush1.bf16.msra.mxu0 0
  %6543 = vmatprep.subr.bf16.mxu0 0
  %6544 = vmatpush1.bf16.msra.mxu0 0
  %6545 = vmatprep.subr.bf16.mxu0 0
  %6546 = vmatpush1.bf16.msra.mxu0 0
  %6547 = vmatprep.subr.bf16.mxu0 0
  %6548 = vmatpush1.bf16.msra.mxu0 0
  %6549 = vmatprep.subr.bf16.mxu0 0
  %6550 = vmatpush1.bf16.msra.mxu0 0
  %6551 = vmatprep.subr.bf16.mxu0 0
  %6552 = vmatpush1.bf16.msra.mxu0 0
  %6553 = vmatprep.subr.bf16.mxu0 0
  %6554 = vmatpush1.bf16.msra.mxu0 0
  %6555 = vmatprep.subr.bf16.mxu0 0
  %6556 = vmatpush1.bf16.msra.mxu0 %v6539
  %6557 = vmatprep.subr.bf16.mxu0 0
  %6558 = vmatpush2.bf16.msra.mxu0 0
  %6559 = vmatprep.subr.bf16.mxu0 0
  %6560 = vmatpush2.bf16.msra.mxu0 0
  %6561 = vmatprep.subr.bf16.mxu0 0
  %6562 = vmatpush2.bf16.msra.mxu0 0
  %6563 = vmatprep.subr.bf16.mxu0 0
  %6564 = vmatpush2.bf16.msra.mxu0 0
  %6565 = vmatprep.subr.bf16.mxu0 0
  %6566 = vmatpush2.bf16.msra.mxu0 0
  %6567 = vmatprep.subr.bf16.mxu0 0
  %6568 = vmatpush2.bf16.msra.mxu0 0
  %6569 = vmatprep.subr.bf16.mxu0 0
  %6570 = vmatpush2.bf16.msra.mxu0 0
  %6571 = vmatprep.subr.bf16.mxu0 0
  %6572 = vmatpush2.bf16.msra.mxu0 0
  %6573 = vmatprep.mubr.bf16.mxu0 0
  %6574 = vmatmul.mubr.bf16.gmra.mxu0 %v6536
  %v6575 = vpop.f32.mrf.mxu0
  %v6576 = vadd.f32 0.0, %v6575
  %v6577 = vpop.f32.mrf.mxu0
  %v6578 = vpop.f32.mrf.mxu0
  %v6579 = vpop.f32.mrf.mxu0
  %6580 = vdwg.mxu0
  %v6582 = vsel %vm4233, %v4148, 0
  %v6585 = vsel %vm4237, %v4216, 0
  %6587 = vmatprep.subr.bf16.mxu0 0
  %6588 = vmatpush1.bf16.msra.mxu0 0
  %6589 = vmatprep.subr.bf16.mxu0 0
  %6590 = vmatpush1.bf16.msra.mxu0 0
  %6591 = vmatprep.subr.bf16.mxu0 0
  %6592 = vmatpush1.bf16.msra.mxu0 0
  %6593 = vmatprep.subr.bf16.mxu0 0
  %6594 = vmatpush1.bf16.msra.mxu0 0
  %6595 = vmatprep.subr.bf16.mxu0 0
  %6596 = vmatpush1.bf16.msra.mxu0 0
  %6597 = vmatprep.subr.bf16.mxu0 0
  %6598 = vmatpush1.bf16.msra.mxu0 0
  %6599 = vmatprep.subr.bf16.mxu0 0
  %6600 = vmatpush1.bf16.msra.mxu0 0
  %6601 = vmatprep.subr.bf16.mxu0 0
  %6602 = vmatpush1.bf16.msra.mxu0 %v6585
  %6603 = vmatprep.subr.bf16.mxu0 0
  %6604 = vmatpush2.bf16.msra.mxu0 0
  %6605 = vmatprep.subr.bf16.mxu0 0
  %6606 = vmatpush2.bf16.msra.mxu0 0
  %6607 = vmatprep.subr.bf16.mxu0 0
  %6608 = vmatpush2.bf16.msra.mxu0 0
  %6609 = vmatprep.subr.bf16.mxu0 0
  %6610 = vmatpush2.bf16.msra.mxu0 0
  %6611 = vmatprep.subr.bf16.mxu0 0
  %6612 = vmatpush2.bf16.msra.mxu0 0
  %6613 = vmatprep.subr.bf16.mxu0 0
  %6614 = vmatpush2.bf16.msra.mxu0 0
  %6615 = vmatprep.subr.bf16.mxu0 0
  %6616 = vmatpush2.bf16.msra.mxu0 0
  %6617 = vmatprep.subr.bf16.mxu0 0
  %6618 = vmatpush2.bf16.msra.mxu0 0
  %6619 = vmatprep.mubr.bf16.mxu0 0
  %6620 = vmatmul.mubr.bf16.gmra.mxu0 %v6582
  %v6621 = vpop.f32.mrf.mxu0
  %v6622 = vadd.f32 0.0, %v6621
  %v6623 = vpop.f32.mrf.mxu0
  %v6624 = vpop.f32.mrf.mxu0
  %v6625 = vpop.f32.mrf.mxu0
  %6626 = vdwg.mxu0
  %v6628 = vsel %vm4233, %v4149, 0
  %v6631 = vsel %vm4237, %v4217, 0
  %6633 = vmatprep.subr.bf16.mxu0 0
  %6634 = vmatpush1.bf16.msra.mxu0 0
  %6635 = vmatprep.subr.bf16.mxu0 0
  %6636 = vmatpush1.bf16.msra.mxu0 0
  %6637 = vmatprep.subr.bf16.mxu0 0
  %6638 = vmatpush1.bf16.msra.mxu0 0
  %6639 = vmatprep.subr.bf16.mxu0 0
  %6640 = vmatpush1.bf16.msra.mxu0 0
  %6641 = vmatprep.subr.bf16.mxu0 0
  %6642 = vmatpush1.bf16.msra.mxu0 0
  %6643 = vmatprep.subr.bf16.mxu0 0
  %6644 = vmatpush1.bf16.msra.mxu0 0
  %6645 = vmatprep.subr.bf16.mxu0 0
  %6646 = vmatpush1.bf16.msra.mxu0 0
  %6647 = vmatprep.subr.bf16.mxu0 0
  %6648 = vmatpush1.bf16.msra.mxu0 %v6631
  %6649 = vmatprep.subr.bf16.mxu0 0
  %6650 = vmatpush2.bf16.msra.mxu0 0
  %6651 = vmatprep.subr.bf16.mxu0 0
  %6652 = vmatpush2.bf16.msra.mxu0 0
  %6653 = vmatprep.subr.bf16.mxu0 0
  %6654 = vmatpush2.bf16.msra.mxu0 0
  %6655 = vmatprep.subr.bf16.mxu0 0
  %6656 = vmatpush2.bf16.msra.mxu0 0
  %6657 = vmatprep.subr.bf16.mxu0 0
  %6658 = vmatpush2.bf16.msra.mxu0 0
  %6659 = vmatprep.subr.bf16.mxu0 0
  %6660 = vmatpush2.bf16.msra.mxu0 0
  %6661 = vmatprep.subr.bf16.mxu0 0
  %6662 = vmatpush2.bf16.msra.mxu0 0
  %6663 = vmatprep.subr.bf16.mxu0 0
  %6664 = vmatpush2.bf16.msra.mxu0 0
  %6665 = vmatprep.mubr.bf16.mxu0 0
  %6666 = vmatmul.mubr.bf16.gmra.mxu0 %v6628
  %v6667 = vpop.f32.mrf.mxu0
  %v6668 = vadd.f32 0.0, %v6667
  %v6669 = vpop.f32.mrf.mxu0
  %v6670 = vpop.f32.mrf.mxu0
  %v6671 = vpop.f32.mrf.mxu0
  %6672 = vdwg.mxu0
  %v6674 = vsel %vm4233, %v4150, 0
  %v6677 = vsel %vm4237, %v4218, 0
  %6679 = vmatprep.subr.bf16.mxu0 0
  %6680 = vmatpush1.bf16.msra.mxu0 0
  %6681 = vmatprep.subr.bf16.mxu0 0
  %6682 = vmatpush1.bf16.msra.mxu0 0
  %6683 = vmatprep.subr.bf16.mxu0 0
  %6684 = vmatpush1.bf16.msra.mxu0 0
  %6685 = vmatprep.subr.bf16.mxu0 0
  %6686 = vmatpush1.bf16.msra.mxu0 0
  %6687 = vmatprep.subr.bf16.mxu0 0
  %6688 = vmatpush1.bf16.msra.mxu0 0
  %6689 = vmatprep.subr.bf16.mxu0 0
  %6690 = vmatpush1.bf16.msra.mxu0 0
  %6691 = vmatprep.subr.bf16.mxu0 0
  %6692 = vmatpush1.bf16.msra.mxu0 0
  %6693 = vmatprep.subr.bf16.mxu0 0
  %6694 = vmatpush1.bf16.msra.mxu0 %v6677
  %6695 = vmatprep.subr.bf16.mxu0 0
  %6696 = vmatpush2.bf16.msra.mxu0 0
  %6697 = vmatprep.subr.bf16.mxu0 0
  %6698 = vmatpush2.bf16.msra.mxu0 0
  %6699 = vmatprep.subr.bf16.mxu0 0
  %6700 = vmatpush2.bf16.msra.mxu0 0
  %6701 = vmatprep.subr.bf16.mxu0 0
  %6702 = vmatpush2.bf16.msra.mxu0 0
  %6703 = vmatprep.subr.bf16.mxu0 0
  %6704 = vmatpush2.bf16.msra.mxu0 0
  %6705 = vmatprep.subr.bf16.mxu0 0
  %6706 = vmatpush2.bf16.msra.mxu0 0
  %6707 = vmatprep.subr.bf16.mxu0 0
  %6708 = vmatpush2.bf16.msra.mxu0 0
  %6709 = vmatprep.subr.bf16.mxu0 0
  %6710 = vmatpush2.bf16.msra.mxu0 0
  %6711 = vmatprep.mubr.bf16.mxu0 0
  %6712 = vmatmul.mubr.bf16.gmra.mxu0 %v6674
  %v6713 = vpop.f32.mrf.mxu0
  %v6714 = vadd.f32 0.0, %v6713
  %v6715 = vpop.f32.mrf.mxu0
  %v6716 = vpop.f32.mrf.mxu0
  %v6717 = vpop.f32.mrf.mxu0
  %6718 = vdwg.mxu0
  %v6720 = vsel %vm4233, %v4151, 0
  %v6723 = vsel %vm4237, %v4219, 0
  %6725 = vmatprep.subr.bf16.mxu0 0
  %6726 = vmatpush1.bf16.msra.mxu0 0
  %6727 = vmatprep.subr.bf16.mxu0 0
  %6728 = vmatpush1.bf16.msra.mxu0 0
  %6729 = vmatprep.subr.bf16.mxu0 0
  %6730 = vmatpush1.bf16.msra.mxu0 0
  %6731 = vmatprep.subr.bf16.mxu0 0
  %6732 = vmatpush1.bf16.msra.mxu0 0
  %6733 = vmatprep.subr.bf16.mxu0 0
  %6734 = vmatpush1.bf16.msra.mxu0 0
  %6735 = vmatprep.subr.bf16.mxu0 0
  %6736 = vmatpush1.bf16.msra.mxu0 0
  %6737 = vmatprep.subr.bf16.mxu0 0
  %6738 = vmatpush1.bf16.msra.mxu0 0
  %6739 = vmatprep.subr.bf16.mxu0 0
  %6740 = vmatpush1.bf16.msra.mxu0 %v6723
  %6741 = vmatprep.subr.bf16.mxu0 0
  %6742 = vmatpush2.bf16.msra.mxu0 0
  %6743 = vmatprep.subr.bf16.mxu0 0
  %6744 = vmatpush2.bf16.msra.mxu0 0
  %6745 = vmatprep.subr.bf16.mxu0 0
  %6746 = vmatpush2.bf16.msra.mxu0 0
  %6747 = vmatprep.subr.bf16.mxu0 0
  %6748 = vmatpush2.bf16.msra.mxu0 0
  %6749 = vmatprep.subr.bf16.mxu0 0
  %6750 = vmatpush2.bf16.msra.mxu0 0
  %6751 = vmatprep.subr.bf16.mxu0 0
  %6752 = vmatpush2.bf16.msra.mxu0 0
  %6753 = vmatprep.subr.bf16.mxu0 0
  %6754 = vmatpush2.bf16.msra.mxu0 0
  %6755 = vmatprep.subr.bf16.mxu0 0
  %6756 = vmatpush2.bf16.msra.mxu0 0
  %6757 = vmatprep.mubr.bf16.mxu0 0
  %6758 = vmatmul.mubr.bf16.gmra.mxu0 %v6720
  %v6759 = vpop.f32.mrf.mxu0
  %v6760 = vadd.f32 0.0, %v6759
  %v6761 = vpop.f32.mrf.mxu0
  %v6762 = vpop.f32.mrf.mxu0
  %v6763 = vpop.f32.mrf.mxu0
  %6764 = vdwg.mxu0
  %v6766 = vsel %vm4233, %v4152, 0
  %v6769 = vsel %vm4237, %v4220, 0
  %6771 = vmatprep.subr.bf16.mxu0 0
  %6772 = vmatpush1.bf16.msra.mxu0 0
  %6773 = vmatprep.subr.bf16.mxu0 0
  %6774 = vmatpush1.bf16.msra.mxu0 0
  %6775 = vmatprep.subr.bf16.mxu0 0
  %6776 = vmatpush1.bf16.msra.mxu0 0
  %6777 = vmatprep.subr.bf16.mxu0 0
  %6778 = vmatpush1.bf16.msra.mxu0 0
  %6779 = vmatprep.subr.bf16.mxu0 0
  %6780 = vmatpush1.bf16.msra.mxu0 0
  %6781 = vmatprep.subr.bf16.mxu0 0
  %6782 = vmatpush1.bf16.msra.mxu0 0
  %6783 = vmatprep.subr.bf16.mxu0 0
  %6784 = vmatpush1.bf16.msra.mxu0 0
  %6785 = vmatprep.subr.bf16.mxu0 0
  %6786 = vmatpush1.bf16.msra.mxu0 %v6769
  %6787 = vmatprep.subr.bf16.mxu0 0
  %6788 = vmatpush2.bf16.msra.mxu0 0
  %6789 = vmatprep.subr.bf16.mxu0 0
  %6790 = vmatpush2.bf16.msra.mxu0 0
  %6791 = vmatprep.subr.bf16.mxu0 0
  %6792 = vmatpush2.bf16.msra.mxu0 0
  %6793 = vmatprep.subr.bf16.mxu0 0
  %6794 = vmatpush2.bf16.msra.mxu0 0
  %6795 = vmatprep.subr.bf16.mxu0 0
  %6796 = vmatpush2.bf16.msra.mxu0 0
  %6797 = vmatprep.subr.bf16.mxu0 0
  %6798 = vmatpush2.bf16.msra.mxu0 0
  %6799 = vmatprep.subr.bf16.mxu0 0
  %6800 = vmatpush2.bf16.msra.mxu0 0
  %6801 = vmatprep.subr.bf16.mxu0 0
  %6802 = vmatpush2.bf16.msra.mxu0 0
  %6803 = vmatprep.mubr.bf16.mxu0 0
  %6804 = vmatmul.mubr.bf16.gmra.mxu0 %v6766
  %v6805 = vpop.f32.mrf.mxu0
  %v6806 = vadd.f32 0.0, %v6805
  %v6807 = vpop.f32.mrf.mxu0
  %v6808 = vpop.f32.mrf.mxu0
  %v6809 = vpop.f32.mrf.mxu0
  %6810 = vdwg.mxu0
  %v6812 = vsel %vm4233, %v4153, 0
  %v6815 = vsel %vm4237, %v4221, 0
  %6817 = vmatprep.subr.bf16.mxu0 0
  %6818 = vmatpush1.bf16.msra.mxu0 0
  %6819 = vmatprep.subr.bf16.mxu0 0
  %6820 = vmatpush1.bf16.msra.mxu0 0
  %6821 = vmatprep.subr.bf16.mxu0 0
  %6822 = vmatpush1.bf16.msra.mxu0 0
  %6823 = vmatprep.subr.bf16.mxu0 0
  %6824 = vmatpush1.bf16.msra.mxu0 0
  %6825 = vmatprep.subr.bf16.mxu0 0
  %6826 = vmatpush1.bf16.msra.mxu0 0
  %6827 = vmatprep.subr.bf16.mxu0 0
  %6828 = vmatpush1.bf16.msra.mxu0 0
  %6829 = vmatprep.subr.bf16.mxu0 0
  %6830 = vmatpush1.bf16.msra.mxu0 0
  %6831 = vmatprep.subr.bf16.mxu0 0
  %6832 = vmatpush1.bf16.msra.mxu0 %v6815
  %6833 = vmatprep.subr.bf16.mxu0 0
  %6834 = vmatpush2.bf16.msra.mxu0 0
  %6835 = vmatprep.subr.bf16.mxu0 0
  %6836 = vmatpush2.bf16.msra.mxu0 0
  %6837 = vmatprep.subr.bf16.mxu0 0
  %6838 = vmatpush2.bf16.msra.mxu0 0
  %6839 = vmatprep.subr.bf16.mxu0 0
  %6840 = vmatpush2.bf16.msra.mxu0 0
  %6841 = vmatprep.subr.bf16.mxu0 0
  %6842 = vmatpush2.bf16.msra.mxu0 0
  %6843 = vmatprep.subr.bf16.mxu0 0
  %6844 = vmatpush2.bf16.msra.mxu0 0
  %6845 = vmatprep.subr.bf16.mxu0 0
  %6846 = vmatpush2.bf16.msra.mxu0 0
  %6847 = vmatprep.subr.bf16.mxu0 0
  %6848 = vmatpush2.bf16.msra.mxu0 0
  %6849 = vmatprep.mubr.bf16.mxu0 0
  %6850 = vmatmul.mubr.bf16.gmra.mxu0 %v6812
  %v6851 = vpop.f32.mrf.mxu0
  %v6852 = vadd.f32 0.0, %v6851
  %v6853 = vpop.f32.mrf.mxu0
  %v6854 = vpop.f32.mrf.mxu0
  %v6855 = vpop.f32.mrf.mxu0
  %6856 = vdwg.mxu0
  %v6858 = vsel %vm4233, %v4154, 0
  %v6861 = vsel %vm4237, %v4222, 0
  %6863 = vmatprep.subr.bf16.mxu0 0
  %6864 = vmatpush1.bf16.msra.mxu0 0
  %6865 = vmatprep.subr.bf16.mxu0 0
  %6866 = vmatpush1.bf16.msra.mxu0 0
  %6867 = vmatprep.subr.bf16.mxu0 0
  %6868 = vmatpush1.bf16.msra.mxu0 0
  %6869 = vmatprep.subr.bf16.mxu0 0
  %6870 = vmatpush1.bf16.msra.mxu0 0
  %6871 = vmatprep.subr.bf16.mxu0 0
  %6872 = vmatpush1.bf16.msra.mxu0 0
  %6873 = vmatprep.subr.bf16.mxu0 0
  %6874 = vmatpush1.bf16.msra.mxu0 0
  %6875 = vmatprep.subr.bf16.mxu0 0
  %6876 = vmatpush1.bf16.msra.mxu0 0
  %6877 = vmatprep.subr.bf16.mxu0 0
  %6878 = vmatpush1.bf16.msra.mxu0 %v6861
  %6879 = vmatprep.subr.bf16.mxu0 0
  %6880 = vmatpush2.bf16.msra.mxu0 0
  %6881 = vmatprep.subr.bf16.mxu0 0
  %6882 = vmatpush2.bf16.msra.mxu0 0
  %6883 = vmatprep.subr.bf16.mxu0 0
  %6884 = vmatpush2.bf16.msra.mxu0 0
  %6885 = vmatprep.subr.bf16.mxu0 0
  %6886 = vmatpush2.bf16.msra.mxu0 0
  %6887 = vmatprep.subr.bf16.mxu0 0
  %6888 = vmatpush2.bf16.msra.mxu0 0
  %6889 = vmatprep.subr.bf16.mxu0 0
  %6890 = vmatpush2.bf16.msra.mxu0 0
  %6891 = vmatprep.subr.bf16.mxu0 0
  %6892 = vmatpush2.bf16.msra.mxu0 0
  %6893 = vmatprep.subr.bf16.mxu0 0
  %6894 = vmatpush2.bf16.msra.mxu0 0
  %6895 = vmatprep.mubr.bf16.mxu0 0
  %6896 = vmatmul.mubr.bf16.gmra.mxu0 %v6858
  %v6897 = vpop.f32.mrf.mxu0
  %v6898 = vadd.f32 0.0, %v6897
  %v6899 = vpop.f32.mrf.mxu0
  %v6900 = vpop.f32.mrf.mxu0
  %v6901 = vpop.f32.mrf.mxu0
  %6902 = vdwg.mxu0
  %v6904 = vsel %vm4233, %v4155, 0
  %v6907 = vsel %vm4237, %v4223, 0
  %6909 = vmatprep.subr.bf16.mxu0 0
  %6910 = vmatpush1.bf16.msra.mxu0 0
  %6911 = vmatprep.subr.bf16.mxu0 0
  %6912 = vmatpush1.bf16.msra.mxu0 0
  %6913 = vmatprep.subr.bf16.mxu0 0
  %6914 = vmatpush1.bf16.msra.mxu0 0
  %6915 = vmatprep.subr.bf16.mxu0 0
  %6916 = vmatpush1.bf16.msra.mxu0 0
  %6917 = vmatprep.subr.bf16.mxu0 0
  %6918 = vmatpush1.bf16.msra.mxu0 0
  %6919 = vmatprep.subr.bf16.mxu0 0
  %6920 = vmatpush1.bf16.msra.mxu0 0
  %6921 = vmatprep.subr.bf16.mxu0 0
  %6922 = vmatpush1.bf16.msra.mxu0 0
  %6923 = vmatprep.subr.bf16.mxu0 0
  %6924 = vmatpush1.bf16.msra.mxu0 %v6907
  %6925 = vmatprep.subr.bf16.mxu0 0
  %6926 = vmatpush2.bf16.msra.mxu0 0
  %6927 = vmatprep.subr.bf16.mxu0 0
  %6928 = vmatpush2.bf16.msra.mxu0 0
  %6929 = vmatprep.subr.bf16.mxu0 0
  %6930 = vmatpush2.bf16.msra.mxu0 0
  %6931 = vmatprep.subr.bf16.mxu0 0
  %6932 = vmatpush2.bf16.msra.mxu0 0
  %6933 = vmatprep.subr.bf16.mxu0 0
  %6934 = vmatpush2.bf16.msra.mxu0 0
  %6935 = vmatprep.subr.bf16.mxu0 0
  %6936 = vmatpush2.bf16.msra.mxu0 0
  %6937 = vmatprep.subr.bf16.mxu0 0
  %6938 = vmatpush2.bf16.msra.mxu0 0
  %6939 = vmatprep.subr.bf16.mxu0 0
  %6940 = vmatpush2.bf16.msra.mxu0 0
  %6941 = vmatprep.mubr.bf16.mxu0 0
  %6942 = vmatmul.mubr.bf16.gmra.mxu0 %v6904
  %v6943 = vpop.f32.mrf.mxu0
  %v6944 = vadd.f32 0.0, %v6943
  %v6945 = vpop.f32.mrf.mxu0
  %v6946 = vpop.f32.mrf.mxu0
  %v6947 = vpop.f32.mrf.mxu0
  %6948 = vdwg.mxu0
  %v6950 = vsel %vm4233, %v4156, 0
  %v6953 = vsel %vm4237, %v4224, 0
  %6955 = vmatprep.subr.bf16.mxu0 0
  %6956 = vmatpush1.bf16.msra.mxu0 0
  %6957 = vmatprep.subr.bf16.mxu0 0
  %6958 = vmatpush1.bf16.msra.mxu0 0
  %6959 = vmatprep.subr.bf16.mxu0 0
  %6960 = vmatpush1.bf16.msra.mxu0 0
  %6961 = vmatprep.subr.bf16.mxu0 0
  %6962 = vmatpush1.bf16.msra.mxu0 0
  %6963 = vmatprep.subr.bf16.mxu0 0
  %6964 = vmatpush1.bf16.msra.mxu0 0
  %6965 = vmatprep.subr.bf16.mxu0 0
  %6966 = vmatpush1.bf16.msra.mxu0 0
  %6967 = vmatprep.subr.bf16.mxu0 0
  %6968 = vmatpush1.bf16.msra.mxu0 0
  %6969 = vmatprep.subr.bf16.mxu0 0
  %6970 = vmatpush1.bf16.msra.mxu0 %v6953
  %6971 = vmatprep.subr.bf16.mxu0 0
  %6972 = vmatpush2.bf16.msra.mxu0 0
  %6973 = vmatprep.subr.bf16.mxu0 0
  %6974 = vmatpush2.bf16.msra.mxu0 0
  %6975 = vmatprep.subr.bf16.mxu0 0
  %6976 = vmatpush2.bf16.msra.mxu0 0
  %6977 = vmatprep.subr.bf16.mxu0 0
  %6978 = vmatpush2.bf16.msra.mxu0 0
  %6979 = vmatprep.subr.bf16.mxu0 0
  %6980 = vmatpush2.bf16.msra.mxu0 0
  %6981 = vmatprep.subr.bf16.mxu0 0
  %6982 = vmatpush2.bf16.msra.mxu0 0
  %6983 = vmatprep.subr.bf16.mxu0 0
  %6984 = vmatpush2.bf16.msra.mxu0 0
  %6985 = vmatprep.subr.bf16.mxu0 0
  %6986 = vmatpush2.bf16.msra.mxu0 0
  %6987 = vmatprep.mubr.bf16.mxu0 0
  %6988 = vmatmul.mubr.bf16.gmra.mxu0 %v6950
  %v6989 = vpop.f32.mrf.mxu0
  %v6990 = vadd.f32 0.0, %v6989
  %v6991 = vpop.f32.mrf.mxu0
  %v6992 = vpop.f32.mrf.mxu0
  %v6993 = vpop.f32.mrf.mxu0
  %6994 = vdwg.mxu0
  %v6996 = vsel %vm4233, %v4157, 0
  %v6999 = vsel %vm4237, %v4225, 0
  %7001 = vmatprep.subr.bf16.mxu0 0
  %7002 = vmatpush1.bf16.msra.mxu0 0
  %7003 = vmatprep.subr.bf16.mxu0 0
  %7004 = vmatpush1.bf16.msra.mxu0 0
  %7005 = vmatprep.subr.bf16.mxu0 0
  %7006 = vmatpush1.bf16.msra.mxu0 0
  %7007 = vmatprep.subr.bf16.mxu0 0
  %7008 = vmatpush1.bf16.msra.mxu0 0
  %7009 = vmatprep.subr.bf16.mxu0 0
  %7010 = vmatpush1.bf16.msra.mxu0 0
  %7011 = vmatprep.subr.bf16.mxu0 0
  %7012 = vmatpush1.bf16.msra.mxu0 0
  %7013 = vmatprep.subr.bf16.mxu0 0
  %7014 = vmatpush1.bf16.msra.mxu0 0
  %7015 = vmatprep.subr.bf16.mxu0 0
  %7016 = vmatpush1.bf16.msra.mxu0 %v6999
  %7017 = vmatprep.subr.bf16.mxu0 0
  %7018 = vmatpush2.bf16.msra.mxu0 0
  %7019 = vmatprep.subr.bf16.mxu0 0
  %7020 = vmatpush2.bf16.msra.mxu0 0
  %7021 = vmatprep.subr.bf16.mxu0 0
  %7022 = vmatpush2.bf16.msra.mxu0 0
  %7023 = vmatprep.subr.bf16.mxu0 0
  %7024 = vmatpush2.bf16.msra.mxu0 0
  %7025 = vmatprep.subr.bf16.mxu0 0
  %7026 = vmatpush2.bf16.msra.mxu0 0
  %7027 = vmatprep.subr.bf16.mxu0 0
  %7028 = vmatpush2.bf16.msra.mxu0 0
  %7029 = vmatprep.subr.bf16.mxu0 0
  %7030 = vmatpush2.bf16.msra.mxu0 0
  %7031 = vmatprep.subr.bf16.mxu0 0
  %7032 = vmatpush2.bf16.msra.mxu0 0
  %7033 = vmatprep.mubr.bf16.mxu0 0
  %7034 = vmatmul.mubr.bf16.gmra.mxu0 %v6996
  %v7035 = vpop.f32.mrf.mxu0
  %v7036 = vadd.f32 0.0, %v7035
  %v7037 = vpop.f32.mrf.mxu0
  %v7038 = vpop.f32.mrf.mxu0
  %v7039 = vpop.f32.mrf.mxu0
  %7040 = vdwg.mxu0
  %v7042 = vsel %vm4233, %v4158, 0
  %v7045 = vsel %vm4237, %v4226, 0
  %7047 = vmatprep.subr.bf16.mxu0 0
  %7048 = vmatpush1.bf16.msra.mxu0 0
  %7049 = vmatprep.subr.bf16.mxu0 0
  %7050 = vmatpush1.bf16.msra.mxu0 0
  %7051 = vmatprep.subr.bf16.mxu0 0
  %7052 = vmatpush1.bf16.msra.mxu0 0
  %7053 = vmatprep.subr.bf16.mxu0 0
  %7054 = vmatpush1.bf16.msra.mxu0 0
  %7055 = vmatprep.subr.bf16.mxu0 0
  %7056 = vmatpush1.bf16.msra.mxu0 0
  %7057 = vmatprep.subr.bf16.mxu0 0
  %7058 = vmatpush1.bf16.msra.mxu0 0
  %7059 = vmatprep.subr.bf16.mxu0 0
  %7060 = vmatpush1.bf16.msra.mxu0 0
  %7061 = vmatprep.subr.bf16.mxu0 0
  %7062 = vmatpush1.bf16.msra.mxu0 %v7045
  %7063 = vmatprep.subr.bf16.mxu0 0
  %7064 = vmatpush2.bf16.msra.mxu0 0
  %7065 = vmatprep.subr.bf16.mxu0 0
  %7066 = vmatpush2.bf16.msra.mxu0 0
  %7067 = vmatprep.subr.bf16.mxu0 0
  %7068 = vmatpush2.bf16.msra.mxu0 0
  %7069 = vmatprep.subr.bf16.mxu0 0
  %7070 = vmatpush2.bf16.msra.mxu0 0
  %7071 = vmatprep.subr.bf16.mxu0 0
  %7072 = vmatpush2.bf16.msra.mxu0 0
  %7073 = vmatprep.subr.bf16.mxu0 0
  %7074 = vmatpush2.bf16.msra.mxu0 0
  %7075 = vmatprep.subr.bf16.mxu0 0
  %7076 = vmatpush2.bf16.msra.mxu0 0
  %7077 = vmatprep.subr.bf16.mxu0 0
  %7078 = vmatpush2.bf16.msra.mxu0 0
  %7079 = vmatprep.mubr.bf16.mxu0 0
  %7080 = vmatmul.mubr.bf16.gmra.mxu0 %v7042
  %v7081 = vpop.f32.mrf.mxu0
  %v7082 = vadd.f32 0.0, %v7081
  %v7083 = vpop.f32.mrf.mxu0
  %v7084 = vpop.f32.mrf.mxu0
  %v7085 = vpop.f32.mrf.mxu0
  %7086 = vdwg.mxu0
  %v7088 = vsel %vm4233, %v4159, 0
  %v7091 = vsel %vm4237, %v4227, 0
  %7093 = vmatprep.subr.bf16.mxu0 0
  %7094 = vmatpush1.bf16.msra.mxu0 0
  %7095 = vmatprep.subr.bf16.mxu0 0
  %7096 = vmatpush1.bf16.msra.mxu0 0
  %7097 = vmatprep.subr.bf16.mxu0 0
  %7098 = vmatpush1.bf16.msra.mxu0 0
  %7099 = vmatprep.subr.bf16.mxu0 0
  %7100 = vmatpush1.bf16.msra.mxu0 0
  %7101 = vmatprep.subr.bf16.mxu0 0
  %7102 = vmatpush1.bf16.msra.mxu0 0
  %7103 = vmatprep.subr.bf16.mxu0 0
  %7104 = vmatpush1.bf16.msra.mxu0 0
  %7105 = vmatprep.subr.bf16.mxu0 0
  %7106 = vmatpush1.bf16.msra.mxu0 0
  %7107 = vmatprep.subr.bf16.mxu0 0
  %7108 = vmatpush1.bf16.msra.mxu0 %v7091
  %7109 = vmatprep.subr.bf16.mxu0 0
  %7110 = vmatpush2.bf16.msra.mxu0 0
  %7111 = vmatprep.subr.bf16.mxu0 0
  %7112 = vmatpush2.bf16.msra.mxu0 0
  %7113 = vmatprep.subr.bf16.mxu0 0
  %7114 = vmatpush2.bf16.msra.mxu0 0
  %7115 = vmatprep.subr.bf16.mxu0 0
  %7116 = vmatpush2.bf16.msra.mxu0 0
  %7117 = vmatprep.subr.bf16.mxu0 0
  %7118 = vmatpush2.bf16.msra.mxu0 0
  %7119 = vmatprep.subr.bf16.mxu0 0
  %7120 = vmatpush2.bf16.msra.mxu0 0
  %7121 = vmatprep.subr.bf16.mxu0 0
  %7122 = vmatpush2.bf16.msra.mxu0 0
  %7123 = vmatprep.subr.bf16.mxu0 0
  %7124 = vmatpush2.bf16.msra.mxu0 0
  %7125 = vmatprep.mubr.bf16.mxu0 0
  %7126 = vmatmul.mubr.bf16.gmra.mxu0 %v7088
  %v7127 = vpop.f32.mrf.mxu0
  %v7128 = vadd.f32 0.0, %v7127
  %v7129 = vpop.f32.mrf.mxu0
  %v7130 = vpop.f32.mrf.mxu0
  %v7131 = vpop.f32.mrf.mxu0
  %7132 = vdwg.mxu0
  %v7134 = vsel %vm4233, %v4160, 0
  %v7137 = vsel %vm4237, %v4228, 0
  %7139 = vmatprep.subr.bf16.mxu0 0
  %7140 = vmatpush1.bf16.msra.mxu0 0
  %7141 = vmatprep.subr.bf16.mxu0 0
  %7142 = vmatpush1.bf16.msra.mxu0 0
  %7143 = vmatprep.subr.bf16.mxu0 0
  %7144 = vmatpush1.bf16.msra.mxu0 0
  %7145 = vmatprep.subr.bf16.mxu0 0
  %7146 = vmatpush1.bf16.msra.mxu0 0
  %7147 = vmatprep.subr.bf16.mxu0 0
  %7148 = vmatpush1.bf16.msra.mxu0 0
  %7149 = vmatprep.subr.bf16.mxu0 0
  %7150 = vmatpush1.bf16.msra.mxu0 0
  %7151 = vmatprep.subr.bf16.mxu0 0
  %7152 = vmatpush1.bf16.msra.mxu0 0
  %7153 = vmatprep.subr.bf16.mxu0 0
  %7154 = vmatpush1.bf16.msra.mxu0 %v7137
  %7155 = vmatprep.subr.bf16.mxu0 0
  %7156 = vmatpush2.bf16.msra.mxu0 0
  %7157 = vmatprep.subr.bf16.mxu0 0
  %7158 = vmatpush2.bf16.msra.mxu0 0
  %7159 = vmatprep.subr.bf16.mxu0 0
  %7160 = vmatpush2.bf16.msra.mxu0 0
  %7161 = vmatprep.subr.bf16.mxu0 0
  %7162 = vmatpush2.bf16.msra.mxu0 0
  %7163 = vmatprep.subr.bf16.mxu0 0
  %7164 = vmatpush2.bf16.msra.mxu0 0
  %7165 = vmatprep.subr.bf16.mxu0 0
  %7166 = vmatpush2.bf16.msra.mxu0 0
  %7167 = vmatprep.subr.bf16.mxu0 0
  %7168 = vmatpush2.bf16.msra.mxu0 0
  %7169 = vmatprep.subr.bf16.mxu0 0
  %7170 = vmatpush2.bf16.msra.mxu0 0
  %7171 = vmatprep.mubr.bf16.mxu0 0
  %7172 = vmatmul.mubr.bf16.gmra.mxu0 %v7134
  %v7173 = vpop.f32.mrf.mxu0
  %v7174 = vadd.f32 0.0, %v7173
  %v7175 = vpop.f32.mrf.mxu0
  %v7176 = vpop.f32.mrf.mxu0
  %v7177 = vpop.f32.mrf.mxu0
  %7178 = vdwg.mxu0
  %v7180 = vsel %vm4233, %v4161, 0
  %v7183 = vsel %vm4237, %v4229, 0
  %7185 = vmatprep.subr.bf16.mxu0 0
  %7186 = vmatpush1.bf16.msra.mxu0 0
  %7187 = vmatprep.subr.bf16.mxu0 0
  %7188 = vmatpush1.bf16.msra.mxu0 0
  %7189 = vmatprep.subr.bf16.mxu0 0
  %7190 = vmatpush1.bf16.msra.mxu0 0
  %7191 = vmatprep.subr.bf16.mxu0 0
  %7192 = vmatpush1.bf16.msra.mxu0 0
  %7193 = vmatprep.subr.bf16.mxu0 0
  %7194 = vmatpush1.bf16.msra.mxu0 0
  %7195 = vmatprep.subr.bf16.mxu0 0
  %7196 = vmatpush1.bf16.msra.mxu0 0
  %7197 = vmatprep.subr.bf16.mxu0 0
  %7198 = vmatpush1.bf16.msra.mxu0 0
  %7199 = vmatprep.subr.bf16.mxu0 0
  %7200 = vmatpush1.bf16.msra.mxu0 %v7183
  %7201 = vmatprep.subr.bf16.mxu0 0
  %7202 = vmatpush2.bf16.msra.mxu0 0
  %7203 = vmatprep.subr.bf16.mxu0 0
  %7204 = vmatpush2.bf16.msra.mxu0 0
  %7205 = vmatprep.subr.bf16.mxu0 0
  %7206 = vmatpush2.bf16.msra.mxu0 0
  %7207 = vmatprep.subr.bf16.mxu0 0
  %7208 = vmatpush2.bf16.msra.mxu0 0
  %7209 = vmatprep.subr.bf16.mxu0 0
  %7210 = vmatpush2.bf16.msra.mxu0 0
  %7211 = vmatprep.subr.bf16.mxu0 0
  %7212 = vmatpush2.bf16.msra.mxu0 0
  %7213 = vmatprep.subr.bf16.mxu0 0
  %7214 = vmatpush2.bf16.msra.mxu0 0
  %7215 = vmatprep.subr.bf16.mxu0 0
  %7216 = vmatpush2.bf16.msra.mxu0 0
  %7217 = vmatprep.mubr.bf16.mxu0 0
  %7218 = vmatmul.mubr.bf16.gmra.mxu0 %v7180
  %v7219 = vpop.f32.mrf.mxu0
  %v7220 = vadd.f32 0.0, %v7219
  %v7221 = vpop.f32.mrf.mxu0
  %v7222 = vpop.f32.mrf.mxu0
  %v7223 = vpop.f32.mrf.mxu0
  %7224 = vdwg.mxu0
  %v7226 = vsel %vm4233, %v4162, 0
  %v7229 = vsel %vm4237, %v4230, 0
  %7231 = vmatprep.subr.bf16.mxu0 0
  %7232 = vmatpush1.bf16.msra.mxu0 0
  %7233 = vmatprep.subr.bf16.mxu0 0
  %7234 = vmatpush1.bf16.msra.mxu0 0
  %7235 = vmatprep.subr.bf16.mxu0 0
  %7236 = vmatpush1.bf16.msra.mxu0 0
  %7237 = vmatprep.subr.bf16.mxu0 0
  %7238 = vmatpush1.bf16.msra.mxu0 0
  %7239 = vmatprep.subr.bf16.mxu0 0
  %7240 = vmatpush1.bf16.msra.mxu0 0
  %7241 = vmatprep.subr.bf16.mxu0 0
  %7242 = vmatpush1.bf16.msra.mxu0 0
  %7243 = vmatprep.subr.bf16.mxu0 0
  %7244 = vmatpush1.bf16.msra.mxu0 0
  %7245 = vmatprep.subr.bf16.mxu0 0
  %7246 = vmatpush1.bf16.msra.mxu0 %v7229
  %7247 = vmatprep.subr.bf16.mxu0 0
  %7248 = vmatpush2.bf16.msra.mxu0 0
  %7249 = vmatprep.subr.bf16.mxu0 0
  %7250 = vmatpush2.bf16.msra.mxu0 0
  %7251 = vmatprep.subr.bf16.mxu0 0
  %7252 = vmatpush2.bf16.msra.mxu0 0
  %7253 = vmatprep.subr.bf16.mxu0 0
  %7254 = vmatpush2.bf16.msra.mxu0 0
  %7255 = vmatprep.subr.bf16.mxu0 0
  %7256 = vmatpush2.bf16.msra.mxu0 0
  %7257 = vmatprep.subr.bf16.mxu0 0
  %7258 = vmatpush2.bf16.msra.mxu0 0
  %7259 = vmatprep.subr.bf16.mxu0 0
  %7260 = vmatpush2.bf16.msra.mxu0 0
  %7261 = vmatprep.subr.bf16.mxu0 0
  %7262 = vmatpush2.bf16.msra.mxu0 0
  %7263 = vmatprep.mubr.bf16.mxu0 0
  %7264 = vmatmul.mubr.bf16.gmra.mxu0 %v7226
  %v7265 = vpop.f32.mrf.mxu0
  %v7266 = vadd.f32 0.0, %v7265
  %v7267 = vpop.f32.mrf.mxu0
  %v7268 = vpop.f32.mrf.mxu0
  %v7269 = vpop.f32.mrf.mxu0
  %7270 = vdwg.mxu0
  %v7272 = vsel %vm4233, %v4163, 0
  %v7275 = vsel %vm4237, %v4231, 0
  %7277 = vmatprep.subr.bf16.mxu0 0
  %7278 = vmatpush1.bf16.msra.mxu0 0
  %7279 = vmatprep.subr.bf16.mxu0 0
  %7280 = vmatpush1.bf16.msra.mxu0 0
  %7281 = vmatprep.subr.bf16.mxu0 0
  %7282 = vmatpush1.bf16.msra.mxu0 0
  %7283 = vmatprep.subr.bf16.mxu0 0
  %7284 = vmatpush1.bf16.msra.mxu0 0
  %7285 = vmatprep.subr.bf16.mxu0 0
  %7286 = vmatpush1.bf16.msra.mxu0 0
  %7287 = vmatprep.subr.bf16.mxu0 0
  %7288 = vmatpush1.bf16.msra.mxu0 0
  %7289 = vmatprep.subr.bf16.mxu0 0
  %7290 = vmatpush1.bf16.msra.mxu0 0
  %7291 = vmatprep.subr.bf16.mxu0 0
  %7292 = vmatpush1.bf16.msra.mxu0 %v7275
  %7293 = vmatprep.subr.bf16.mxu0 0
  %7294 = vmatpush2.bf16.msra.mxu0 0
  %7295 = vmatprep.subr.bf16.mxu0 0
  %7296 = vmatpush2.bf16.msra.mxu0 0
  %7297 = vmatprep.subr.bf16.mxu0 0
  %7298 = vmatpush2.bf16.msra.mxu0 0
  %7299 = vmatprep.subr.bf16.mxu0 0
  %7300 = vmatpush2.bf16.msra.mxu0 0
  %7301 = vmatprep.subr.bf16.mxu0 0
  %7302 = vmatpush2.bf16.msra.mxu0 0
  %7303 = vmatprep.subr.bf16.mxu0 0
  %7304 = vmatpush2.bf16.msra.mxu0 0
  %7305 = vmatprep.subr.bf16.mxu0 0
  %7306 = vmatpush2.bf16.msra.mxu0 0
  %7307 = vmatprep.subr.bf16.mxu0 0
  %7308 = vmatpush2.bf16.msra.mxu0 0
  %7309 = vmatprep.mubr.bf16.mxu0 0
  %7310 = vmatmul.mubr.bf16.gmra.mxu0 %v7272
  %v7311 = vpop.f32.mrf.mxu0
  %v7312 = vadd.f32 0.0, %v7311
  %v7313 = vpop.f32.mrf.mxu0
  %v7314 = vpop.f32.mrf.mxu0
  %v7315 = vpop.f32.mrf.mxu0
  %7316 = vdwg.mxu0
  %v7318 = vsel %vm4233, %v4164, 0
  %v7321 = vsel %vm4237, %v4232, 0
  %7323 = vmatprep.subr.bf16.mxu0 0
  %7324 = vmatpush1.bf16.msra.mxu0 0
  %7325 = vmatprep.subr.bf16.mxu0 0
  %7326 = vmatpush1.bf16.msra.mxu0 0
  %7327 = vmatprep.subr.bf16.mxu0 0
  %7328 = vmatpush1.bf16.msra.mxu0 0
  %7329 = vmatprep.subr.bf16.mxu0 0
  %7330 = vmatpush1.bf16.msra.mxu0 0
  %7331 = vmatprep.subr.bf16.mxu0 0
  %7332 = vmatpush1.bf16.msra.mxu0 0
  %7333 = vmatprep.subr.bf16.mxu0 0
  %7334 = vmatpush1.bf16.msra.mxu0 0
  %7335 = vmatprep.subr.bf16.mxu0 0
  %7336 = vmatpush1.bf16.msra.mxu0 0
  %7337 = vmatprep.subr.bf16.mxu0 0
  %7338 = vmatpush1.bf16.msra.mxu0 %v7321
  %7339 = vmatprep.subr.bf16.mxu0 0
  %7340 = vmatpush2.bf16.msra.mxu0 0
  %7341 = vmatprep.subr.bf16.mxu0 0
  %7342 = vmatpush2.bf16.msra.mxu0 0
  %7343 = vmatprep.subr.bf16.mxu0 0
  %7344 = vmatpush2.bf16.msra.mxu0 0
  %7345 = vmatprep.subr.bf16.mxu0 0
  %7346 = vmatpush2.bf16.msra.mxu0 0
  %7347 = vmatprep.subr.bf16.mxu0 0
  %7348 = vmatpush2.bf16.msra.mxu0 0
  %7349 = vmatprep.subr.bf16.mxu0 0
  %7350 = vmatpush2.bf16.msra.mxu0 0
  %7351 = vmatprep.subr.bf16.mxu0 0
  %7352 = vmatpush2.bf16.msra.mxu0 0
  %7353 = vmatprep.subr.bf16.mxu0 0
  %7354 = vmatpush2.bf16.msra.mxu0 0
  %7355 = vmatprep.mubr.bf16.mxu0 0
  %7356 = vmatmul.mubr.bf16.gmra.mxu0 %v7318
  %v7357 = vpop.f32.mrf.mxu0
  %v7358 = vadd.f32 0.0, %v7357
  %v7359 = vpop.f32.mrf.mxu0
  %v7360 = vpop.f32.mrf.mxu0
  %v7361 = vpop.f32.mrf.mxu0
  %7362 = vdwg.mxu0
  %v7363 = vpack.c.bf16 %v4276, %v4276
  %v7364 = vpack.c.bf16 %v4322, %v4322
  %v7365 = vpack.c.bf16 %v4368, %v4368
  %v7366 = vpack.c.bf16 %v4414, %v4414
  %v7367 = vpack.c.bf16 %v4460, %v4460
  %v7368 = vpack.c.bf16 %v4506, %v4506
  %v7369 = vpack.c.bf16 %v4552, %v4552
  %v7370 = vpack.c.bf16 %v4598, %v4598
  %v7371 = vpack.c.bf16 %v4644, %v4644
  %v7372 = vpack.c.bf16 %v4690, %v4690
  %v7373 = vpack.c.bf16 %v4736, %v4736
  %v7374 = vpack.c.bf16 %v4782, %v4782
  %v7375 = vpack.c.bf16 %v4828, %v4828
  %v7376 = vpack.c.bf16 %v4874, %v4874
  %v7377 = vpack.c.bf16 %v4920, %v4920
  %v7378 = vpack.c.bf16 %v4966, %v4966
  %v7379 = vpack.c.bf16 %v5012, %v5012
  %v7380 = vpack.c.bf16 %v5058, %v5058
  %v7381 = vpack.c.bf16 %v5104, %v5104
  %v7382 = vpack.c.bf16 %v5150, %v5150
  %v7383 = vpack.c.bf16 %v5196, %v5196
  %v7384 = vpack.c.bf16 %v5242, %v5242
  %v7385 = vpack.c.bf16 %v5288, %v5288
  %v7386 = vpack.c.bf16 %v5334, %v5334
  %v7387 = vpack.c.bf16 %v5380, %v5380
  %v7388 = vpack.c.bf16 %v5426, %v5426
  %v7389 = vpack.c.bf16 %v5472, %v5472
  %v7390 = vpack.c.bf16 %v5518, %v5518
  %v7391 = vpack.c.bf16 %v5564, %v5564
  %v7392 = vpack.c.bf16 %v5610, %v5610
  %v7393 = vpack.c.bf16 %v5656, %v5656
  %v7394 = vpack.c.bf16 %v5702, %v5702
  %v7395 = vpack.c.bf16 %v5748, %v5748
  %v7396 = vpack.c.bf16 %v5794, %v5794
  %v7397 = vpack.c.bf16 %v5840, %v5840
  %v7398 = vpack.c.bf16 %v5886, %v5886
  %v7399 = vpack.c.bf16 %v5932, %v5932
  %v7400 = vpack.c.bf16 %v5978, %v5978
  %v7401 = vpack.c.bf16 %v6024, %v6024
  %v7402 = vpack.c.bf16 %v6070, %v6070
  %v7403 = vpack.c.bf16 %v6116, %v6116
  %v7404 = vpack.c.bf16 %v6162, %v6162
  %v7405 = vpack.c.bf16 %v6208, %v6208
  %v7406 = vpack.c.bf16 %v6254, %v6254
  %v7407 = vpack.c.bf16 %v6300, %v6300
  %v7408 = vpack.c.bf16 %v6346, %v6346
  %v7409 = vpack.c.bf16 %v6392, %v6392
  %v7410 = vpack.c.bf16 %v6438, %v6438
  %v7411 = vpack.c.bf16 %v6484, %v6484
  %v7412 = vpack.c.bf16 %v6530, %v6530
  %v7413 = vpack.c.bf16 %v6576, %v6576
  %v7414 = vpack.c.bf16 %v6622, %v6622
  %v7415 = vpack.c.bf16 %v6668, %v6668
  %v7416 = vpack.c.bf16 %v6714, %v6714
  %v7417 = vpack.c.bf16 %v6760, %v6760
  %v7418 = vpack.c.bf16 %v6806, %v6806
  %v7419 = vpack.c.bf16 %v6852, %v6852
  %v7420 = vpack.c.bf16 %v6898, %v6898
  %v7421 = vpack.c.bf16 %v6944, %v6944
  %v7422 = vpack.c.bf16 %v6990, %v6990
  %v7423 = vpack.c.bf16 %v7036, %v7036
  %v7424 = vpack.c.bf16 %v7082, %v7082
  %v7425 = vpack.c.bf16 %v7128, %v7128
  %v7426 = vpack.c.bf16 %v7174, %v7174
  %v7427 = vpack.c.bf16 %v7220, %v7220
  %v7428 = vpack.c.bf16 %v7266, %v7266
  %v7429 = vpack.c.bf16 %v7312, %v7312
  %v7430 = vpack.c.bf16 %v7358, %v7358
  %vm7431 = vcmask 57344
  %7432 = vst.msk [vmem:[%s3] sm:$0x1] %vm7431, %v7363
  %7433 = vst.msk [vmem:[%s3 + $0x1] sm:$0x1] %vm7431, %v7364
  %7434 = vst.msk [vmem:[%s3 + $0x2] sm:$0x1] %vm7431, %v7365
  %7435 = vst.msk [vmem:[%s3 + $0x3] sm:$0x1] %vm7431, %v7366
  %7436 = vst.msk [vmem:[%s3 + $0x4] sm:$0x1] %vm7431, %v7367
  %7437 = vst.msk [vmem:[%s3 + $0x5] sm:$0x1] %vm7431, %v7368
  %7438 = vst.msk [vmem:[%s3 + $0x6] sm:$0x1] %vm7431, %v7369
  %7439 = vst.msk [vmem:[%s3 + $0x7] sm:$0x1] %vm7431, %v7370
  %7440 = vst.msk [vmem:[%s3 + $0x8] sm:$0x1] %vm7431, %v7371
  %7441 = vst.msk [vmem:[%s3 + $0x9] sm:$0x1] %vm7431, %v7372
  %7442 = vst.msk [vmem:[%s3 + $0xa] sm:$0x1] %vm7431, %v7373
  %7443 = vst.msk [vmem:[%s3 + $0xb] sm:$0x1] %vm7431, %v7374
  %7444 = vst.msk [vmem:[%s3 + $0xc] sm:$0x1] %vm7431, %v7375
  %7445 = vst.msk [vmem:[%s3 + $0xd] sm:$0x1] %vm7431, %v7376
  %7446 = vst.msk [vmem:[%s3 + $0xe] sm:$0x1] %vm7431, %v7377
  %7447 = vst.msk [vmem:[%s3 + $0xf] sm:$0x1] %vm7431, %v7378
  %7448 = vst.msk [vmem:[%s3 + $0x10] sm:$0x1] %vm7431, %v7379
  %7449 = vst.msk [vmem:[%s3 + $0x11] sm:$0x1] %vm7431, %v7380
  %7450 = vst.msk [vmem:[%s3 + $0x12] sm:$0x1] %vm7431, %v7381
  %7451 = vst.msk [vmem:[%s3 + $0x13] sm:$0x1] %vm7431, %v7382
  %7452 = vst.msk [vmem:[%s3 + $0x14] sm:$0x1] %vm7431, %v7383
  %7453 = vst.msk [vmem:[%s3 + $0x15] sm:$0x1] %vm7431, %v7384
  %7454 = vst.msk [vmem:[%s3 + $0x16] sm:$0x1] %vm7431, %v7385
  %7455 = vst.msk [vmem:[%s3 + $0x17] sm:$0x1] %vm7431, %v7386
  %7456 = vst.msk [vmem:[%s3 + $0x18] sm:$0x1] %vm7431, %v7387
  %7457 = vst.msk [vmem:[%s3 + $0x19] sm:$0x1] %vm7431, %v7388
  %7458 = vst.msk [vmem:[%s3 + $0x1a] sm:$0x1] %vm7431, %v7389
  %7459 = vst.msk [vmem:[%s3 + $0x1b] sm:$0x1] %vm7431, %v7390
  %7460 = vst.msk [vmem:[%s3 + $0x1c] sm:$0x1] %vm7431, %v7391
  %7461 = vst.msk [vmem:[%s3 + $0x1d] sm:$0x1] %vm7431, %v7392
  %7462 = vst.msk [vmem:[%s3 + $0x1e] sm:$0x1] %vm7431, %v7393
  %7463 = vst.msk [vmem:[%s3 + $0x1f] sm:$0x1] %vm7431, %v7394
  %7464 = vst.msk [vmem:[%s3 + $0x20] sm:$0x1] %vm7431, %v7395
  %7465 = vst.msk [vmem:[%s3 + $0x21] sm:$0x1] %vm7431, %v7396
  %7466 = vst.msk [vmem:[%s3 + $0x22] sm:$0x1] %vm7431, %v7397
  %7467 = vst.msk [vmem:[%s3 + $0x23] sm:$0x1] %vm7431, %v7398
  %7468 = vst.msk [vmem:[%s3 + $0x24] sm:$0x1] %vm7431, %v7399
  %7469 = vst.msk [vmem:[%s3 + $0x25] sm:$0x1] %vm7431, %v7400
  %7470 = vst.msk [vmem:[%s3 + $0x26] sm:$0x1] %vm7431, %v7401
  %7471 = vst.msk [vmem:[%s3 + $0x27] sm:$0x1] %vm7431, %v7402
  %7472 = vst.msk [vmem:[%s3 + $0x28] sm:$0x1] %vm7431, %v7403
  %7473 = vst.msk [vmem:[%s3 + $0x29] sm:$0x1] %vm7431, %v7404
  %7474 = vst.msk [vmem:[%s3 + $0x2a] sm:$0x1] %vm7431, %v7405
  %7475 = vst.msk [vmem:[%s3 + $0x2b] sm:$0x1] %vm7431, %v7406
  %7476 = vst.msk [vmem:[%s3 + $0x2c] sm:$0x1] %vm7431, %v7407
  %7477 = vst.msk [vmem:[%s3 + $0x2d] sm:$0x1] %vm7431, %v7408
  %7478 = vst.msk [vmem:[%s3 + $0x2e] sm:$0x1] %vm7431, %v7409
  %7479 = vst.msk [vmem:[%s3 + $0x2f] sm:$0x1] %vm7431, %v7410
  %7480 = vst.msk [vmem:[%s3 + $0x30] sm:$0x1] %vm7431, %v7411
  %7481 = vst.msk [vmem:[%s3 + $0x31] sm:$0x1] %vm7431, %v7412
  %7482 = vst.msk [vmem:[%s3 + $0x32] sm:$0x1] %vm7431, %v7413
  %7483 = vst.msk [vmem:[%s3 + $0x33] sm:$0x1] %vm7431, %v7414
  %7484 = vst.msk [vmem:[%s3 + $0x34] sm:$0x1] %vm7431, %v7415
  %7485 = vst.msk [vmem:[%s3 + $0x35] sm:$0x1] %vm7431, %v7416
  %7486 = vst.msk [vmem:[%s3 + $0x36] sm:$0x1] %vm7431, %v7417
  %7487 = vst.msk [vmem:[%s3 + $0x37] sm:$0x1] %vm7431, %v7418
  %7488 = vst.msk [vmem:[%s3 + $0x38] sm:$0x1] %vm7431, %v7419
  %7489 = vst.msk [vmem:[%s3 + $0x39] sm:$0x1] %vm7431, %v7420
  %7490 = vst.msk [vmem:[%s3 + $0x3a] sm:$0x1] %vm7431, %v7421
  %7491 = vst.msk [vmem:[%s3 + $0x3b] sm:$0x1] %vm7431, %v7422
  %7492 = vst.msk [vmem:[%s3 + $0x3c] sm:$0x1] %vm7431, %v7423
  %7493 = vst.msk [vmem:[%s3 + $0x3d] sm:$0x1] %vm7431, %v7424
  %7494 = vst.msk [vmem:[%s3 + $0x3e] sm:$0x1] %vm7431, %v7425
  %7495 = vst.msk [vmem:[%s3 + $0x3f] sm:$0x1] %vm7431, %v7426
  %7496 = vst.msk [vmem:[%s3 + $0x40] sm:$0x1] %vm7431, %v7427
  %7497 = vst.msk [vmem:[%s3 + $0x41] sm:$0x1] %vm7431, %v7428
  %7498 = vst.msk [vmem:[%s3 + $0x42] sm:$0x1] %vm7431, %v7429
  %7499 = vst.msk [vmem:[%s3 + $0x43] sm:$0x1] %vm7431, %v7430
  // Predicated region
  $region14: #{vit_forward.14} parent=0 // pred_check
    _
  $region15: #{vit_forward.14} parent=0 // pred_check_branch
    %7501 = sbr.rel (0) target = $region17
  $region16: #{vit_forward.14} parent=0 // pred_region
    _
  $region17: #{vit_forward.14} parent=0 // pred_fallthru
    _
  // Predicated region
  $region18: #{vit_forward.14} parent=0 // pred_check
    _
  $region19: #{vit_forward.14} parent=0 // pred_check_branch
    %7503 = sbr.rel (0) target = $region21
  $region20: #{vit_forward.14} parent=0 // pred_region
    _
  $region21: #{vit_forward.14} parent=0 // pred_fallthru
    _

</llo_original>
